<compile_context>
chip_gen: v7x
topology: tpu7x:2x2x1
jax: 0.10.0
libtpu: 0.0.40
codegen_flags: <defaults>
</compile_context>

<pallas_src>
import math
import functools

import jax
import jax.numpy as jnp
from jax.experimental import pallas as pl
from jax.experimental.pallas import tpu as pltpu


# ----------------------------- in-kernel helpers -----------------------------

def _layernorm(x, w, b, eps=1e-5):
    mu = jnp.mean(x, axis=-1, keepdims=True)
    xc = x - mu
    var = jnp.mean(xc * xc, axis=-1, keepdims=True)
    return xc * jax.lax.rsqrt(var + eps) * w + b


def _gelu_tanh(x):
    # tanh-form GELU: single EUP tanh instead of a long VALU erf polynomial.
    c = math.sqrt(2.0 / math.pi)
    return 0.5 * x * (1.0 + jnp.tanh(c * (x + 0.044715 * x * x * x)))


def _mha(q_rows, k_rows, v_rows, wq, bq, wk, bk, wv, bv, wo, bo,
         *, num_heads, b, Lq, Lk, cdt):
    """nn.MultiheadAttention math for `b` batch elements with rows batch-fused.

    q_rows: (b*Lq, C) f32; k_rows / v_rows: (b*Lk, C) f32.
    wq/wk/wv/wo: (C, C) pre-transposed (wq pre-scaled by 1/sqrt(hd)), compute dtype.
    bq/bk/bv/bo: (1, C) f32 biases (bq pre-scaled).
    """
    C = wq.shape[0]
    H = num_heads
    hd = C // H

    # Full-width batch-fused projections (single MXU pass each, K = C); cast the
    # results to the compute dtype immediately so no extra f32 copies stay live.
    q = (jnp.dot(q_rows.astype(cdt), wq, preferred_element_type=jnp.float32) + bq).astype(cdt)
    k = (jnp.dot(k_rows.astype(cdt), wk, preferred_element_type=jnp.float32) + bk).astype(cdt)
    v = (jnp.dot(v_rows.astype(cdt), wv, preferred_element_type=jnp.float32) + bv).astype(cdt)

    q3 = q.reshape(b, Lq, C)
    k3 = k.reshape(b, Lk, C)
    v3 = v.reshape(b, Lk, C)

    # Head-batched attention: collapse (head, batch) into one leading batch dim so
    # score / softmax / PV are two batched einsums (no per-head matmul loop and no
    # 4-D transposes — only static lane slices + leading-axis concat).
    qh = jnp.concatenate([q3[:, :, h * hd:(h + 1) * hd] for h in range(H)], axis=0)  # (H*b, Lq, hd)
    kh = jnp.concatenate([k3[:, :, h * hd:(h + 1) * hd] for h in range(H)], axis=0)  # (H*b, Lk, hd)
    vh = jnp.concatenate([v3[:, :, h * hd:(h + 1) * hd] for h in range(H)], axis=0)  # (H*b, Lk, hd)

    s = jnp.einsum('bqd,bkd->bqk', qh, kh,
                   preferred_element_type=jnp.float32)                               # (H*b, Lq, Lk)
    s = s - jnp.max(s, axis=-1, keepdims=True)
    p = jnp.exp(s)
    p = p * pl.reciprocal(jnp.sum(p, axis=-1, keepdims=True), approx=True)
    oh = jnp.einsum('bqk,bkd->bqd', p.astype(cdt), vh,
                    preferred_element_type=jnp.float32)                              # (H*b, Lq, hd)

    # Re-interleave heads along lanes (head-major, matching torch's concat) and run
    # ONE full-K output projection with the original (C, C) out weight.
    o = jnp.concatenate([oh[h * b:(h + 1) * b] for h in range(H)], axis=-1)          # (b, Lq, C)
    o = o.reshape(b * Lq, C)
    return jnp.dot(o.astype(cdt), wo, preferred_element_type=jnp.float32) + bo


# ------------------------------- fused kernel --------------------------------

def _decoder_layer_kernel(num_heads, *refs):
    (q_ref, mz_ref, mx_ref, pz_ref, px_ref, qpos_ref, ide_ref,
     ln1_w, ln1_b,
     sa_wq, sa_bq, sa_wk, sa_bk, sa_wv, sa_bv, sa_wo, sa_bo,
     ln2q_w, ln2q_b, ln2m_w, ln2m_b,
     ca_wq, ca_bq, ca_wk, ca_bk, ca_wv, ca_bv, ca_wo, ca_bo,
     ln3_w, ln3_b,
     fc1_w, fc1_b, fc2_w, fc2_b,
     out_ref) = refs

    bb, Nq, C = q_ref.shape
    Lz = mz_ref.shape[1]
    Lx = mx_ref.shape[1]
    L = Lz + Lx
    cdt = sa_wq.dtype    # matmul compute dtype (bf16); LN/softmax/GELU stay f32
    f32 = jnp.float32

    query3 = q_ref[...].astype(f32)            # (bb, Nq, C) residual stream, exact f32
    qpos3 = qpos_ref[...].astype(f32)          # (1 or bb, Nq, C); leading-dim broadcast is free

    # ---- self attention block ----
    qk3 = _layernorm(query3, ln1_w[...], ln1_b[...]) + qpos3
    sa = _mha(qk3.reshape(bb * Nq, C), qk3.reshape(bb * Nq, C), query3.reshape(bb * Nq, C),
              sa_wq[...], sa_bq[...], sa_wk[...], sa_bk[...],
              sa_wv[...], sa_bv[...], sa_wo[...], sa_bo[...],
              num_heads=num_heads, b=bb, Lq=Nq, Lk=Nq, cdt=cdt)
    query3 = query3 + sa.reshape(bb, Nq, C)

    # ---- cross attention block ----
    q2 = (_layernorm(query3, ln2q_w[...], ln2q_b[...]) + qpos3).reshape(bb * Nq, C)

    # concat + (pos + identity) glue computed in VMEM (no HBM glue tensors)
    mem3 = jnp.concatenate([mz_ref[...], mx_ref[...]], axis=1).astype(f32)            # (bb, L, C)
    ide = ide_ref[...].astype(f32)                                                    # (1, 2, C)
    kadd3 = jnp.concatenate([pz_ref[...].astype(f32) + ide[:, 0:1, :],
                             px_ref[...].astype(f32) + ide[:, 1:2, :]], axis=1)       # (bb, L, C)
    k2 = (_layernorm(mem3, ln2m_w[...], ln2m_b[...]) + kadd3).reshape(bb * L, C)
    ca = _mha(q2, k2, mem3.reshape(bb * L, C),
              ca_wq[...], ca_bq[...], ca_wk[...], ca_bk[...],
              ca_wv[...], ca_bv[...], ca_wo[...], ca_bo[...],
              num_heads=num_heads, b=bb, Lq=Nq, Lk=L, cdt=cdt)
    query3 = query3 + ca.reshape(bb, Nq, C)

    # ---- MLP block ----
    x = _layernorm(query3, ln3_w[...], ln3_b[...]).reshape(bb * Nq, C)
    hid = jnp.dot(x.astype(cdt), fc1_w[...], preferred_element_type=f32) + fc1_b[...]
    hid = _gelu_tanh(hid)
    y = jnp.dot(hid.astype(cdt), fc2_w[...], preferred_element_type=f32) + fc2_b[...]
    query3 = query3 + y.reshape(bb, Nq, C)

    # NOTE: at production C (>=128) this store is lane-dense; for tiny C a
    # (bb, Nq*C) packing would avoid masked partial stores.
    out_ref[...] = query3.astype(out_ref.dtype)


# ------------------------- host-side weight preparation -----------------------

def _prep_weights(params, num_heads, compute_dtype):
    """Split/transpose/scale weights once on the host (PyTorch layouts in).

    All vectors are shipped as (1, N) so every kernel operand is >= 2-D.
    """
    C = params["ln1_w"].shape[0]
    hd = C // num_heads
    scale = 1.0 / math.sqrt(hd)
    f32 = jnp.float32

    def vec(x, dtype=f32):
        return x.reshape(1, -1).astype(dtype)

    def attn(prefix):
        in_w = params[f"{prefix}_in_w"]    # (3C, C)
        in_b = params[f"{prefix}_in_b"]    # (3C,)
        out_w = params[f"{prefix}_out_w"]  # (C, C)
        out_b = params[f"{prefix}_out_b"]  # (C,)
        wq = (in_w[:C].T * scale).astype(compute_dtype)        # scale folded in
        wk = in_w[C:2 * C].T.astype(compute_dtype)
        wv = in_w[2 * C:].T.astype(compute_dtype)
        bq = vec(in_b[:C] * scale)
        bk = vec(in_b[C:2 * C])
        bv = vec(in_b[2 * C:])
        wo = out_w.T.astype(compute_dtype)                     # full (C, C) out proj
        bo = vec(out_b)
        return [wq, bq, wk, bk, wv, bv, wo, bo]

    plist = [vec(params["ln1_w"]), vec(params["ln1_b"])]
    plist += attn("sa")
    plist += [vec(params["ln2q_w"]), vec(params["ln2q_b"]),
              vec(params["ln2m_w"]), vec(params["ln2m_b"])]
    plist += attn("ca")
    plist += [vec(params["ln3_w"]), vec(params["ln3_b"]),
              params["fc1_w"].T.astype(compute_dtype), vec(params["fc1_b"]),
              params["fc2_w"].T.astype(compute_dtype), vec(params["fc2_b"])]
    return plist


# -------------------------------- wrapper -------------------------------------

def target_query_decoder_layer(params, query, memoryz, memoryx, query_pos,
                               pos_z, pos_x, identity, identity_search=None,
                               *, num_heads, batch_block=None,
                               compute_dtype=jnp.bfloat16):
    # query: (Nq, B, C) seq-first; memoryz/x, pos_z/x: (B, Lz/Lx, C); identity: (1, 2, C)
    Nq, B, C = query.shape
    Lz, Lx = memoryz.shape[1], memoryx.shape[1]

    # seq-first -> batch-first for the (tiny) query tensors; keep them f32 so the
    # residual stream seed stays exact.
    q_b = jnp.transpose(query, (1, 0, 2))                 # (B, Nq, C) f32
    qpos_b = jnp.transpose(query_pos, (1, 0, 2))          # (1 or B, Nq, C) f32
    Bq = qpos_b.shape[0]

    # Large memory-side activations travel in bf16 (half the HBM<->VMEM bytes);
    # upcast to f32 inside the kernel for LayerNorm.
    mz = memoryz.astype(compute_dtype)
    mx = memoryx.astype(compute_dtype)
    pz = pos_z.astype(compute_dtype)
    px = pos_x.astype(compute_dtype)
    ide = identity.astype(jnp.float32)                    # tiny (1, 2, C), stays f32

    if batch_block is None:
        # The grid is a serial loop on single-TC v5e/v6e: keep the whole batch in
        # one step (maximal matmul M).  Only multi-TC chips (v4 megacore / v7x)
        # gain from >1 parallel grid step.
        batch_block = B
        try:
            kind = jax.devices()[0].device_kind.lower()
            if any(t in kind for t in ("v4", "v7")) and B >= 2 and B % 2 == 0:
                batch_block = B // 2
        except Exception:
            pass
    assert B % batch_block == 0, "batch_block must divide B"
    bb = batch_block
    nblk = B // bb
    bbq = bb if Bq == B else 1

    plist = _prep_weights(params, num_heads, compute_dtype)

    data = [q_b, mz, mx, pz, px, qpos_b, ide]
    data_specs = [
        pl.BlockSpec((bb, Nq, C), lambda i: (i, 0, 0)),
        pl.BlockSpec((bb, Lz, C), lambda i: (i, 0, 0)),
        pl.BlockSpec((bb, Lx, C), lambda i: (i, 0, 0)),
        pl.BlockSpec((bb, Lz, C), lambda i: (i, 0, 0)),
        pl.BlockSpec((bb, Lx, C), lambda i: (i, 0, 0)),
        pl.BlockSpec((bbq, Nq, C),
                     (lambda i: (i, 0, 0)) if Bq == B else (lambda i: (0, 0, 0))),
        pl.BlockSpec((1, 2, C), lambda i: (0, 0, 0)),
    ]
    out_spec = pl.BlockSpec((bb, Nq, C), lambda i: (i, 0, 0))

    # Explicit scoped-VMEM limit (matters on v7x's 64 MiB VMEM at large C).
    try:
        vmem_cap = int(pltpu.get_tpu_info().vmem_capacity_bytes)
    except Exception:
        vmem_cap = 64 * 1024 * 1024
    vmem_limit = max(32 * 1024 * 1024, (vmem_cap * 3) // 4)

    def _param_spec(p, buffered):
        idx = lambda i, _nd=p.ndim: (0,) * _nd
        if buffered:
            # Grid-invariant weights: a second pipeline buffer is pure VMEM waste.
            return pl.BlockSpec(p.shape, idx, pipeline_mode=pl.Buffered(1))
        return pl.BlockSpec(p.shape, idx)

    def _call(buffered_params):
        in_specs = data_specs + [_param_spec(p, buffered_params) for p in plist]
        return pl.pallas_call(
            functools.partial(_decoder_layer_kernel, num_heads),
            out_shape=jax.ShapeDtypeStruct((B, Nq, C), query.dtype),
            grid_spec=pltpu.PrefetchScalarGridSpec(
                num_scalar_prefetch=0,
                grid=(nblk,),
                in_specs=in_specs,
                out_specs=out_spec,
            ),
            compiler_params=pltpu.CompilerParams(
                dimension_semantics=("parallel",),
                vmem_limit_bytes=vmem_limit,
            ),
        )(*data, *plist)

    try:
        out = _call(True)
    except Exception:
        # TODO(synk): pipeline_mode=pl.Buffered(1) not accepted on this JAX build;
        # fall back to default double-buffered (still correct) weight specs.
        out = _call(False)

    return jnp.transpose(out, (1, 0, 2))  # back to (Nq, B, C) PyTorch layout


# ----------------------------- pure-JAX reference -----------------------------

def _ref_ln(x, w, b, eps=1e-5):
    mu = jnp.mean(x, axis=-1, keepdims=True)
    var = jnp.mean((x - mu) ** 2, axis=-1, keepdims=True)
    return (x - mu) / jnp.sqrt(var + eps) * w + b


def _ref_mha(q, k, v, in_w, in_b, out_w, out_b, H):
    Lq, B, C = q.shape
    Lk = k.shape[0]
    hd = C // H
    qp = q @ in_w[:C].T + in_b[:C]
    kp = k @ in_w[C:2 * C].T + in_b[C:2 * C]
    vp = v @ in_w[2 * C:].T + in_b[2 * C:]
    qh = qp.reshape(Lq, B * H, hd).transpose(1, 0, 2) / math.sqrt(hd)
    kh = kp.reshape(Lk, B * H, hd).transpose(1, 0, 2)
    vh = vp.reshape(Lk, B * H, hd).transpose(1, 0, 2)
    s = jnp.einsum("bqd,bkd->bqk", qh, kh)
    p = jax.nn.softmax(s, axis=-1)
    o = jnp.einsum("bqk,bkd->bqd", p, vh)
    o = o.transpose(1, 0, 2).reshape(Lq, B, C)
    return o @ out_w.T + out_b


def reference_forward(p, query, memoryz, memoryx, query_pos, pos_z, pos_x, identity, H):
    Nq, B, C = query.shape
    Lz, Lx = memoryz.shape[1], memoryx.shape[1]
    tgt = query
    qk = _ref_ln(query, p["ln1_w"], p["ln1_b"]) + query_pos
    query = query + _ref_mha(qk, qk, tgt, p["sa_in_w"], p["sa_in_b"],
                             p["sa_out_w"], p["sa_out_b"], H)
    q2 = _ref_ln(query, p["ln2q_w"], p["ln2q_b"]) + query_pos
    memory = jnp.concatenate([memoryz, memoryx], axis=1)
    pos = jnp.concatenate([pos_z, pos_x], axis=1)
    ide = jnp.concatenate([jnp.tile(identity[:, 0:1, :], (1, Lz, 1)),
                           jnp.tile(identity[:, 1:2, :], (1, Lx, 1))], axis=1)
    k2 = (_ref_ln(memory, p["ln2m_w"], p["ln2m_b"]) + pos + ide).transpose(1, 0, 2)
    memory_in = memory.transpose(1, 0, 2)
    query = query + _ref_mha(q2, k2, memory_in, p["ca_in_w"], p["ca_in_b"],
                             p["ca_out_w"], p["ca_out_b"], H)
    x = _ref_ln(query, p["ln3_w"], p["ln3_b"])
    h = x @ p["fc1_w"].T + p["fc1_b"]
    h = 0.5 * h * (1.0 + jax.scipy.special.erf(h / math.sqrt(2.0)))  # exact erf GELU
    y = h @ p["fc2_w"].T + p["fc2_b"]
    return query + y


# ------------------------------- param init -----------------------------------

def init_params(key, dim, mlp_ratio=4.0):
    hidden = int(dim * mlp_ratio)
    ks = jax.random.split(key, 24)

    def w(k, shape, scale=0.02):
        return scale * jax.random.normal(k, shape, jnp.float32)

    return {
        "ln1_w": 1.0 + w(ks[0], (dim,), 0.1), "ln1_b": w(ks[1], (dim,), 0.1),
        "sa_in_w": w(ks[2], (3 * dim, dim)), "sa_in_b": w(ks[3], (3 * dim,)),
        "sa_out_w": w(ks[4], (dim, dim)), "sa_out_b": w(ks[5], (dim,)),
        "ln2q_w": 1.0 + w(ks[6], (dim,), 0.1), "ln2q_b": w(ks[7], (dim,), 0.1),
        "ln2m_w": 1.0 + w(ks[8], (dim,), 0.1), "ln2m_b": w(ks[9], (dim,), 0.1),
        "ca_in_w": w(ks[10], (3 * dim, dim)), "ca_in_b": w(ks[11], (3 * dim,)),
        "ca_out_w": w(ks[12], (dim, dim)), "ca_out_b": w(ks[13], (dim,)),
        "ln3_w": 1.0 + w(ks[14], (dim,), 0.1), "ln3_b": w(ks[15], (dim,), 0.1),
        "fc1_w": w(ks[16], (hidden, dim)), "fc1_b": w(ks[17], (hidden,)),
        "fc2_w": w(ks[18], (dim, hidden)), "fc2_b": w(ks[19], (dim,)),
    }


# ---------------------------------- main ---------------------------------------

if __name__ == "__main__":
    B, Nq, C, H = 2, 8, 32, 4
    Lz, Lx = 16, 16

    key = jax.random.PRNGKey(0)
    kp, k0, k1, k2, k3, k4, k5, k6, k7 = jax.random.split(key, 9)
    params = init_params(kp, C)

    query = 0.5 * jax.random.normal(k0, (Nq, B, C), jnp.float32)      # seq-first
    memoryz = 0.5 * jax.random.normal(k1, (B, Lz, C), jnp.float32)
    memoryx = 0.5 * jax.random.normal(k2, (B, Lx, C), jnp.float32)
    query_pos = 0.5 * jax.random.normal(k3, (Nq, 1, C), jnp.float32)  # broadcast over batch
    pos_z = 0.5 * jax.random.normal(k4, (B, Lz, C), jnp.float32)
    pos_x = 0.5 * jax.random.normal(k5, (B, Lx, C), jnp.float32)
    identity = 0.5 * jax.random.normal(k6, (1, 2, C), jnp.float32)
    identity_search = 0.5 * jax.random.normal(k7, (1, Lx, C), jnp.float32)  # unused by forward

    out = target_query_decoder_layer(params, query, memoryz, memoryx, query_pos,
                                     pos_z, pos_x, identity, identity_search,
                                     num_heads=H)
    out = jax.block_until_ready(out)

    ref = reference_forward(params, query, memoryz, memoryx, query_pos,
                            pos_z, pos_x, identity, H)
    assert out.shape == (Nq, B, C)
    max_err = float(jnp.max(jnp.abs(out - ref)))
    assert jnp.allclose(out, ref, atol=1e-2, rtol=1e-2), f"max abs err {max_err}"

    print("KERNEL_OK")
</pallas_src>

<mosaic_0001>
module attributes {stable_mosaic.version = 11 : i64} {
  func.func @_decoder_layer_kernel(%arg0: i32, %arg1: memref<2x8x32xf32, #tpu.memory_space<vmem>>, %arg2: memref<2x16x32xbf16, #tpu.memory_space<vmem>>, %arg3: memref<2x16x32xbf16, #tpu.memory_space<vmem>>, %arg4: memref<2x16x32xbf16, #tpu.memory_space<vmem>>, %arg5: memref<2x16x32xbf16, #tpu.memory_space<vmem>>, %arg6: memref<1x8x32xf32, #tpu.memory_space<vmem>>, %arg7: memref<1x2x32xf32, #tpu.memory_space<vmem>>, %arg8: memref<1x32xf32, #tpu.memory_space<vmem>>, %arg9: memref<1x32xf32, #tpu.memory_space<vmem>>, %arg10: memref<32x32xbf16, #tpu.memory_space<vmem>>, %arg11: memref<1x32xf32, #tpu.memory_space<vmem>>, %arg12: memref<32x32xbf16, #tpu.memory_space<vmem>>, %arg13: memref<1x32xf32, #tpu.memory_space<vmem>>, %arg14: memref<32x32xbf16, #tpu.memory_space<vmem>>, %arg15: memref<1x32xf32, #tpu.memory_space<vmem>>, %arg16: memref<32x32xbf16, #tpu.memory_space<vmem>>, %arg17: memref<1x32xf32, #tpu.memory_space<vmem>>, %arg18: memref<1x32xf32, #tpu.memory_space<vmem>>, %arg19: memref<1x32xf32, #tpu.memory_space<vmem>>, %arg20: memref<1x32xf32, #tpu.memory_space<vmem>>, %arg21: memref<1x32xf32, #tpu.memory_space<vmem>>, %arg22: memref<32x32xbf16, #tpu.memory_space<vmem>>, %arg23: memref<1x32xf32, #tpu.memory_space<vmem>>, %arg24: memref<32x32xbf16, #tpu.memory_space<vmem>>, %arg25: memref<1x32xf32, #tpu.memory_space<vmem>>, %arg26: memref<32x32xbf16, #tpu.memory_space<vmem>>, %arg27: memref<1x32xf32, #tpu.memory_space<vmem>>, %arg28: memref<32x32xbf16, #tpu.memory_space<vmem>>, %arg29: memref<1x32xf32, #tpu.memory_space<vmem>>, %arg30: memref<1x32xf32, #tpu.memory_space<vmem>>, %arg31: memref<1x32xf32, #tpu.memory_space<vmem>>, %arg32: memref<32x128xbf16, #tpu.memory_space<vmem>>, %arg33: memref<1x128xf32, #tpu.memory_space<vmem>>, %arg34: memref<128x32xbf16, #tpu.memory_space<vmem>>, %arg35: memref<1x32xf32, #tpu.memory_space<vmem>>, %arg36: memref<2x8x32xf32, #tpu.memory_space<vmem>>) attributes {dimension_semantics = [#tpu.dimension_semantics<parallel>], iteration_bounds = array<i64: 1>, scalar_prefetch = 0 : i64, scratch_operands = 0 : i64, tpu.core_type = #tpu.core_type<tc>, window_params = [{transform_indices = @transform_0, window_bounds = array<i64: 2, 8, 32>}, {transform_indices = @transform_1, window_bounds = array<i64: 2, 16, 32>}, {transform_indices = @transform_2, window_bounds = array<i64: 2, 16, 32>}, {transform_indices = @transform_3, window_bounds = array<i64: 2, 16, 32>}, {transform_indices = @transform_4, window_bounds = array<i64: 2, 16, 32>}, {pipeline_mode = #tpu.pipeline_mode<synchronous>, transform_indices = @transform_5, window_bounds = array<i64: 1, 8, 32>}, {pipeline_mode = #tpu.pipeline_mode<synchronous>, transform_indices = @transform_6, window_bounds = array<i64: 1, 2, 32>}, {pipeline_mode = #tpu.pipeline_mode<synchronous>, transform_indices = @transform_7, window_bounds = array<i64: 1, 32>}, {pipeline_mode = #tpu.pipeline_mode<synchronous>, transform_indices = @transform_8, window_bounds = array<i64: 1, 32>}, {pipeline_mode = #tpu.pipeline_mode<synchronous>, transform_indices = @transform_9, window_bounds = array<i64: 32, 32>}, {pipeline_mode = #tpu.pipeline_mode<synchronous>, transform_indices = @transform_10, window_bounds = array<i64: 1, 32>}, {pipeline_mode = #tpu.pipeline_mode<synchronous>, transform_indices = @transform_11, window_bounds = array<i64: 32, 32>}, {pipeline_mode = #tpu.pipeline_mode<synchronous>, transform_indices = @transform_12, window_bounds = array<i64: 1, 32>}, {pipeline_mode = #tpu.pipeline_mode<synchronous>, transform_indices = @transform_13, window_bounds = array<i64: 32, 32>}, {pipeline_mode = #tpu.pipeline_mode<synchronous>, transform_indices = @transform_14, window_bounds = array<i64: 1, 32>}, {pipeline_mode = #tpu.pipeline_mode<synchronous>, transform_indices = @transform_15, window_bounds = array<i64: 32, 32>}, {pipeline_mode = #tpu.pipeline_mode<synchronous>, transform_indices = @transform_16, window_bounds = array<i64: 1, 32>}, {pipeline_mode = #tpu.pipeline_mode<synchronous>, transform_indices = @transform_17, window_bounds = array<i64: 1, 32>}, {pipeline_mode = #tpu.pipeline_mode<synchronous>, transform_indices = @transform_18, window_bounds = array<i64: 1, 32>}, {pipeline_mode = #tpu.pipeline_mode<synchronous>, transform_indices = @transform_19, window_bounds = array<i64: 1, 32>}, {pipeline_mode = #tpu.pipeline_mode<synchronous>, transform_indices = @transform_20, window_bounds = array<i64: 1, 32>}, {pipeline_mode = #tpu.pipeline_mode<synchronous>, transform_indices = @transform_21, window_bounds = array<i64: 32, 32>}, {pipeline_mode = #tpu.pipeline_mode<synchronous>, transform_indices = @transform_22, window_bounds = array<i64: 1, 32>}, {pipeline_mode = #tpu.pipeline_mode<synchronous>, transform_indices = @transform_23, window_bounds = array<i64: 32, 32>}, {pipeline_mode = #tpu.pipeline_mode<synchronous>, transform_indices = @transform_24, window_bounds = array<i64: 1, 32>}, {pipeline_mode = #tpu.pipeline_mode<synchronous>, transform_indices = @transform_25, window_bounds = array<i64: 32, 32>}, {pipeline_mode = #tpu.pipeline_mode<synchronous>, transform_indices = @transform_26, window_bounds = array<i64: 1, 32>}, {pipeline_mode = #tpu.pipeline_mode<synchronous>, transform_indices = @transform_27, window_bounds = array<i64: 32, 32>}, {pipeline_mode = #tpu.pipeline_mode<synchronous>, transform_indices = @transform_28, window_bounds = array<i64: 1, 32>}, {pipeline_mode = #tpu.pipeline_mode<synchronous>, transform_indices = @transform_29, window_bounds = array<i64: 1, 32>}, {pipeline_mode = #tpu.pipeline_mode<synchronous>, transform_indices = @transform_30, window_bounds = array<i64: 1, 32>}, {pipeline_mode = #tpu.pipeline_mode<synchronous>, transform_indices = @transform_31, window_bounds = array<i64: 32, 128>}, {pipeline_mode = #tpu.pipeline_mode<synchronous>, transform_indices = @transform_32, window_bounds = array<i64: 1, 128>}, {pipeline_mode = #tpu.pipeline_mode<synchronous>, transform_indices = @transform_33, window_bounds = array<i64: 128, 32>}, {pipeline_mode = #tpu.pipeline_mode<synchronous>, transform_indices = @transform_34, window_bounds = array<i64: 1, 32>}, {transform_indices = @transform_35, window_bounds = array<i64: 2, 8, 32>}]} {
    %c0 = arith.constant 0 : index
    %c0_0 = arith.constant 0 : index
    %c0_1 = arith.constant 0 : index
    %0 = vector.load %arg1[%c0, %c0_0, %c0_1] : memref<2x8x32xf32, #tpu.memory_space<vmem>>, vector<2x8x32xf32>
    %c0_2 = arith.constant 0 : index
    %c0_3 = arith.constant 0 : index
    %c0_4 = arith.constant 0 : index
    %1 = vector.load %arg6[%c0_2, %c0_3, %c0_4] : memref<1x8x32xf32, #tpu.memory_space<vmem>>, vector<1x8x32xf32>
    %c0_5 = arith.constant 0 : index
    %c0_6 = arith.constant 0 : index
    %2 = vector.load %arg8[%c0_5, %c0_6] : memref<1x32xf32, #tpu.memory_space<vmem>>, vector<1x32xf32>
    %c0_7 = arith.constant 0 : index
    %c0_8 = arith.constant 0 : index
    %3 = vector.load %arg9[%c0_7, %c0_8] : memref<1x32xf32, #tpu.memory_space<vmem>>, vector<1x32xf32>
    %cst = arith.constant dense<0.000000e+00> : vector<2x8xf32>
    %4 = vector.multi_reduction <add>, %0, %cst [2] : vector<2x8x32xf32> to vector<2x8xf32>
    %5 = vector.shape_cast %4 : vector<2x8xf32> to vector<2x8x1xf32>
    %cst_9 = arith.constant 3.200000e+01 : f32
    %6 = vector.broadcast %cst_9 : f32 to vector<2x8x1xf32>
    %7 = arith.divf %5, %6 : vector<2x8x1xf32>
    %8 = vector.broadcast %7 : vector<2x8x1xf32> to vector<2x8x32xf32>
    %9 = arith.subf %0, %8 : vector<2x8x32xf32>
    %10 = arith.mulf %9, %9 : vector<2x8x32xf32>
    %cst_10 = arith.constant dense<0.000000e+00> : vector<2x8xf32>
    %11 = vector.multi_reduction <add>, %10, %cst_10 [2] : vector<2x8x32xf32> to vector<2x8xf32>
    %12 = vector.shape_cast %11 : vector<2x8xf32> to vector<2x8x1xf32>
    %cst_11 = arith.constant 3.200000e+01 : f32
    %13 = vector.broadcast %cst_11 : f32 to vector<2x8x1xf32>
    %14 = arith.divf %12, %13 : vector<2x8x1xf32>
    %cst_12 = arith.constant 9.99999974E-6 : f32
    %15 = vector.broadcast %cst_12 : f32 to vector<2x8x1xf32>
    %16 = arith.addf %14, %15 : vector<2x8x1xf32>
    %17 = math.rsqrt %16 : vector<2x8x1xf32>
    %18 = vector.broadcast %17 : vector<2x8x1xf32> to vector<2x8x32xf32>
    %19 = arith.mulf %9, %18 : vector<2x8x32xf32>
    %20 = vector.shape_cast %2 : vector<1x32xf32> to vector<1x1x32xf32>
    %21 = vector.broadcast %20 : vector<1x1x32xf32> to vector<2x8x32xf32>
    %22 = arith.mulf %19, %21 : vector<2x8x32xf32>
    %23 = vector.shape_cast %3 : vector<1x32xf32> to vector<1x1x32xf32>
    %24 = vector.broadcast %23 : vector<1x1x32xf32> to vector<2x8x32xf32>
    %25 = arith.addf %22, %24 : vector<2x8x32xf32>
    %26 = vector.broadcast %1 : vector<1x8x32xf32> to vector<2x8x32xf32>
    %27 = arith.addf %25, %26 : vector<2x8x32xf32>
    %28 = vector.shape_cast %27 : vector<2x8x32xf32> to vector<16x32xf32>
    %29 = vector.shape_cast %27 : vector<2x8x32xf32> to vector<16x32xf32>
    %30 = vector.shape_cast %0 : vector<2x8x32xf32> to vector<16x32xf32>
    %c0_13 = arith.constant 0 : index
    %c0_14 = arith.constant 0 : index
    %31 = vector.load %arg10[%c0_13, %c0_14] : memref<32x32xbf16, #tpu.memory_space<vmem>>, vector<32x32xbf16>
    %c0_15 = arith.constant 0 : index
    %c0_16 = arith.constant 0 : index
    %32 = vector.load %arg11[%c0_15, %c0_16] : memref<1x32xf32, #tpu.memory_space<vmem>>, vector<1x32xf32>
    %c0_17 = arith.constant 0 : index
    %c0_18 = arith.constant 0 : index
    %33 = vector.load %arg12[%c0_17, %c0_18] : memref<32x32xbf16, #tpu.memory_space<vmem>>, vector<32x32xbf16>
    %c0_19 = arith.constant 0 : index
    %c0_20 = arith.constant 0 : index
    %34 = vector.load %arg13[%c0_19, %c0_20] : memref<1x32xf32, #tpu.memory_space<vmem>>, vector<1x32xf32>
    %c0_21 = arith.constant 0 : index
    %c0_22 = arith.constant 0 : index
    %35 = vector.load %arg14[%c0_21, %c0_22] : memref<32x32xbf16, #tpu.memory_space<vmem>>, vector<32x32xbf16>
    %c0_23 = arith.constant 0 : index
    %c0_24 = arith.constant 0 : index
    %36 = vector.load %arg15[%c0_23, %c0_24] : memref<1x32xf32, #tpu.memory_space<vmem>>, vector<1x32xf32>
    %c0_25 = arith.constant 0 : index
    %c0_26 = arith.constant 0 : index
    %37 = vector.load %arg16[%c0_25, %c0_26] : memref<32x32xbf16, #tpu.memory_space<vmem>>, vector<32x32xbf16>
    %c0_27 = arith.constant 0 : index
    %c0_28 = arith.constant 0 : index
    %38 = vector.load %arg17[%c0_27, %c0_28] : memref<1x32xf32, #tpu.memory_space<vmem>>, vector<1x32xf32>
    %39 = arith.truncf %28 : vector<16x32xf32> to vector<16x32xbf16>
    %cst_29 = arith.constant dense<0.000000e+00> : vector<16x32xf32>
    %40 = tpu.matmul %39, %31, %cst_29 {dimension_numbers = #tpu.dot_dimension_numbers<[1], [0], [0], [1], [0, 0, 1, 1], [], []>} : vector<16x32xbf16>, vector<32x32xbf16>, vector<16x32xf32> -> vector<16x32xf32>
    %41 = vector.broadcast %32 : vector<1x32xf32> to vector<16x32xf32>
    %42 = arith.addf %40, %41 : vector<16x32xf32>
    %43 = arith.truncf %42 : vector<16x32xf32> to vector<16x32xbf16>
    %44 = arith.truncf %29 : vector<16x32xf32> to vector<16x32xbf16>
    %cst_30 = arith.constant dense<0.000000e+00> : vector<16x32xf32>
    %45 = tpu.matmul %44, %33, %cst_30 {dimension_numbers = #tpu.dot_dimension_numbers<[1], [0], [0], [1], [0, 0, 1, 1], [], []>} : vector<16x32xbf16>, vector<32x32xbf16>, vector<16x32xf32> -> vector<16x32xf32>
    %46 = vector.broadcast %34 : vector<1x32xf32> to vector<16x32xf32>
    %47 = arith.addf %45, %46 : vector<16x32xf32>
    %48 = arith.truncf %47 : vector<16x32xf32> to vector<16x32xbf16>
    %49 = arith.truncf %30 : vector<16x32xf32> to vector<16x32xbf16>
    %cst_31 = arith.constant dense<0.000000e+00> : vector<16x32xf32>
    %50 = tpu.matmul %49, %35, %cst_31 {dimension_numbers = #tpu.dot_dimension_numbers<[1], [0], [0], [1], [0, 0, 1, 1], [], []>} : vector<16x32xbf16>, vector<32x32xbf16>, vector<16x32xf32> -> vector<16x32xf32>
    %51 = vector.broadcast %36 : vector<1x32xf32> to vector<16x32xf32>
    %52 = arith.addf %50, %51 : vector<16x32xf32>
    %53 = arith.truncf %52 : vector<16x32xf32> to vector<16x32xbf16>
    %54 = vector.shape_cast %43 : vector<16x32xbf16> to vector<2x8x32xbf16>
    %55 = vector.shape_cast %48 : vector<16x32xbf16> to vector<2x8x32xbf16>
    %56 = vector.shape_cast %53 : vector<16x32xbf16> to vector<2x8x32xbf16>
    %57 = vector.extract_strided_slice %54 {offsets = [0, 0, 0], sizes = [2, 8, 8], strides = [1, 1, 1]} : vector<2x8x32xbf16> to vector<2x8x8xbf16>
    %58 = vector.extract_strided_slice %54 {offsets = [0, 0, 8], sizes = [2, 8, 8], strides = [1, 1, 1]} : vector<2x8x32xbf16> to vector<2x8x8xbf16>
    %59 = vector.extract_strided_slice %54 {offsets = [0, 0, 16], sizes = [2, 8, 8], strides = [1, 1, 1]} : vector<2x8x32xbf16> to vector<2x8x8xbf16>
    %60 = vector.extract_strided_slice %54 {offsets = [0, 0, 24], sizes = [2, 8, 8], strides = [1, 1, 1]} : vector<2x8x32xbf16> to vector<2x8x8xbf16>
    %61 = tpu.concatenate %57, %58, %59, %60 in 0 : vector<2x8x8xbf16>, vector<2x8x8xbf16>, vector<2x8x8xbf16>, vector<2x8x8xbf16> -> vector<8x8x8xbf16>
    %62 = vector.extract_strided_slice %55 {offsets = [0, 0, 0], sizes = [2, 8, 8], strides = [1, 1, 1]} : vector<2x8x32xbf16> to vector<2x8x8xbf16>
    %63 = vector.extract_strided_slice %55 {offsets = [0, 0, 8], sizes = [2, 8, 8], strides = [1, 1, 1]} : vector<2x8x32xbf16> to vector<2x8x8xbf16>
    %64 = vector.extract_strided_slice %55 {offsets = [0, 0, 16], sizes = [2, 8, 8], strides = [1, 1, 1]} : vector<2x8x32xbf16> to vector<2x8x8xbf16>
    %65 = vector.extract_strided_slice %55 {offsets = [0, 0, 24], sizes = [2, 8, 8], strides = [1, 1, 1]} : vector<2x8x32xbf16> to vector<2x8x8xbf16>
    %66 = tpu.concatenate %62, %63, %64, %65 in 0 : vector<2x8x8xbf16>, vector<2x8x8xbf16>, vector<2x8x8xbf16>, vector<2x8x8xbf16> -> vector<8x8x8xbf16>
    %67 = vector.extract_strided_slice %56 {offsets = [0, 0, 0], sizes = [2, 8, 8], strides = [1, 1, 1]} : vector<2x8x32xbf16> to vector<2x8x8xbf16>
    %68 = vector.extract_strided_slice %56 {offsets = [0, 0, 8], sizes = [2, 8, 8], strides = [1, 1, 1]} : vector<2x8x32xbf16> to vector<2x8x8xbf16>
    %69 = vector.extract_strided_slice %56 {offsets = [0, 0, 16], sizes = [2, 8, 8], strides = [1, 1, 1]} : vector<2x8x32xbf16> to vector<2x8x8xbf16>
    %70 = vector.extract_strided_slice %56 {offsets = [0, 0, 24], sizes = [2, 8, 8], strides = [1, 1, 1]} : vector<2x8x32xbf16> to vector<2x8x8xbf16>
    %71 = tpu.concatenate %67, %68, %69, %70 in 0 : vector<2x8x8xbf16>, vector<2x8x8xbf16>, vector<2x8x8xbf16>, vector<2x8x8xbf16> -> vector<8x8x8xbf16>
    "tpu.trace_start"() <{level = 10 : i32, message = "bqd,bkd->bqk"}> : () -> ()
    %cst_32 = arith.constant dense<0.000000e+00> : vector<8x8x8xf32>
    %72 = tpu.matmul %61, %66, %cst_32 {dimension_numbers = #tpu.dot_dimension_numbers<[2], [2], [1], [1], [0, 0, 0, 1, 1, 1], [0], [0]>} : vector<8x8x8xbf16>, vector<8x8x8xbf16>, vector<8x8x8xf32> -> vector<8x8x8xf32>
    "tpu.trace_stop"() : () -> ()
    %cst_33 = arith.constant dense<0xFF800000> : vector<8x8xf32>
    %73 = vector.multi_reduction <maximumf>, %72, %cst_33 [2] : vector<8x8x8xf32> to vector<8x8xf32>
    %74 = vector.shape_cast %73 : vector<8x8xf32> to vector<8x8x1xf32>
    %75 = vector.broadcast %74 : vector<8x8x1xf32> to vector<8x8x8xf32>
    %76 = arith.subf %72, %75 : vector<8x8x8xf32>
    %77 = math.exp %76 : vector<8x8x8xf32>
    %cst_34 = arith.constant dense<0.000000e+00> : vector<8x8xf32>
    %78 = vector.multi_reduction <add>, %77, %cst_34 [2] : vector<8x8x8xf32> to vector<8x8xf32>
    %79 = vector.shape_cast %78 : vector<8x8xf32> to vector<8x8x1xf32>
    %80 = tpu.reciprocal %79 {approx = true} : vector<8x8x1xf32> -> vector<8x8x1xf32>
    %81 = vector.broadcast %80 : vector<8x8x1xf32> to vector<8x8x8xf32>
    %82 = arith.mulf %77, %81 : vector<8x8x8xf32>
    %83 = arith.truncf %82 : vector<8x8x8xf32> to vector<8x8x8xbf16>
    "tpu.trace_start"() <{level = 10 : i32, message = "bqk,bkd->bqd"}> : () -> ()
    %cst_35 = arith.constant dense<0.000000e+00> : vector<8x8x8xf32>
    %84 = tpu.matmul %83, %71, %cst_35 {dimension_numbers = #tpu.dot_dimension_numbers<[2], [1], [1], [2], [0, 0, 0, 1, 1, 2], [0], [0]>} : vector<8x8x8xbf16>, vector<8x8x8xbf16>, vector<8x8x8xf32> -> vector<8x8x8xf32>
    "tpu.trace_stop"() : () -> ()
    %85 = vector.extract_strided_slice %84 {offsets = [0, 0, 0], sizes = [2, 8, 8], strides = [1, 1, 1]} : vector<8x8x8xf32> to vector<2x8x8xf32>
    %86 = vector.extract_strided_slice %84 {offsets = [2, 0, 0], sizes = [2, 8, 8], strides = [1, 1, 1]} : vector<8x8x8xf32> to vector<2x8x8xf32>
    %87 = vector.extract_strided_slice %84 {offsets = [4, 0, 0], sizes = [2, 8, 8], strides = [1, 1, 1]} : vector<8x8x8xf32> to vector<2x8x8xf32>
    %88 = vector.extract_strided_slice %84 {offsets = [6, 0, 0], sizes = [2, 8, 8], strides = [1, 1, 1]} : vector<8x8x8xf32> to vector<2x8x8xf32>
    %89 = tpu.concatenate %85, %86, %87, %88 in 2 : vector<2x8x8xf32>, vector<2x8x8xf32>, vector<2x8x8xf32>, vector<2x8x8xf32> -> vector<2x8x32xf32>
    %90 = vector.shape_cast %89 : vector<2x8x32xf32> to vector<16x32xf32>
    %91 = arith.truncf %90 : vector<16x32xf32> to vector<16x32xbf16>
    %cst_36 = arith.constant dense<0.000000e+00> : vector<16x32xf32>
    %92 = tpu.matmul %91, %37, %cst_36 {dimension_numbers = #tpu.dot_dimension_numbers<[1], [0], [0], [1], [0, 0, 1, 1], [], []>} : vector<16x32xbf16>, vector<32x32xbf16>, vector<16x32xf32> -> vector<16x32xf32>
    %93 = vector.broadcast %38 : vector<1x32xf32> to vector<16x32xf32>
    %94 = arith.addf %92, %93 : vector<16x32xf32>
    %95 = vector.shape_cast %94 : vector<16x32xf32> to vector<2x8x32xf32>
    %96 = arith.addf %0, %95 : vector<2x8x32xf32>
    %c0_37 = arith.constant 0 : index
    %c0_38 = arith.constant 0 : index
    %97 = vector.load %arg18[%c0_37, %c0_38] : memref<1x32xf32, #tpu.memory_space<vmem>>, vector<1x32xf32>
    %c0_39 = arith.constant 0 : index
    %c0_40 = arith.constant 0 : index
    %98 = vector.load %arg19[%c0_39, %c0_40] : memref<1x32xf32, #tpu.memory_space<vmem>>, vector<1x32xf32>
    %cst_41 = arith.constant dense<0.000000e+00> : vector<2x8xf32>
    %99 = vector.multi_reduction <add>, %96, %cst_41 [2] : vector<2x8x32xf32> to vector<2x8xf32>
    %100 = vector.shape_cast %99 : vector<2x8xf32> to vector<2x8x1xf32>
    %cst_42 = arith.constant 3.200000e+01 : f32
    %101 = vector.broadcast %cst_42 : f32 to vector<2x8x1xf32>
    %102 = arith.divf %100, %101 : vector<2x8x1xf32>
    %103 = vector.broadcast %102 : vector<2x8x1xf32> to vector<2x8x32xf32>
    %104 = arith.subf %96, %103 : vector<2x8x32xf32>
    %105 = arith.mulf %104, %104 : vector<2x8x32xf32>
    %cst_43 = arith.constant dense<0.000000e+00> : vector<2x8xf32>
    %106 = vector.multi_reduction <add>, %105, %cst_43 [2] : vector<2x8x32xf32> to vector<2x8xf32>
    %107 = vector.shape_cast %106 : vector<2x8xf32> to vector<2x8x1xf32>
    %cst_44 = arith.constant 3.200000e+01 : f32
    %108 = vector.broadcast %cst_44 : f32 to vector<2x8x1xf32>
    %109 = arith.divf %107, %108 : vector<2x8x1xf32>
    %cst_45 = arith.constant 9.99999974E-6 : f32
    %110 = vector.broadcast %cst_45 : f32 to vector<2x8x1xf32>
    %111 = arith.addf %109, %110 : vector<2x8x1xf32>
    %112 = math.rsqrt %111 : vector<2x8x1xf32>
    %113 = vector.broadcast %112 : vector<2x8x1xf32> to vector<2x8x32xf32>
    %114 = arith.mulf %104, %113 : vector<2x8x32xf32>
    %115 = vector.shape_cast %97 : vector<1x32xf32> to vector<1x1x32xf32>
    %116 = vector.broadcast %115 : vector<1x1x32xf32> to vector<2x8x32xf32>
    %117 = arith.mulf %114, %116 : vector<2x8x32xf32>
    %118 = vector.shape_cast %98 : vector<1x32xf32> to vector<1x1x32xf32>
    %119 = vector.broadcast %118 : vector<1x1x32xf32> to vector<2x8x32xf32>
    %120 = arith.addf %117, %119 : vector<2x8x32xf32>
    %121 = vector.broadcast %1 : vector<1x8x32xf32> to vector<2x8x32xf32>
    %122 = arith.addf %120, %121 : vector<2x8x32xf32>
    %123 = vector.shape_cast %122 : vector<2x8x32xf32> to vector<16x32xf32>
    %c0_46 = arith.constant 0 : index
    %c0_47 = arith.constant 0 : index
    %c0_48 = arith.constant 0 : index
    %124 = vector.load %arg2[%c0_46, %c0_47, %c0_48] : memref<2x16x32xbf16, #tpu.memory_space<vmem>>, vector<2x16x32xbf16>
    %c0_49 = arith.constant 0 : index
    %c0_50 = arith.constant 0 : index
    %c0_51 = arith.constant 0 : index
    %125 = vector.load %arg3[%c0_49, %c0_50, %c0_51] : memref<2x16x32xbf16, #tpu.memory_space<vmem>>, vector<2x16x32xbf16>
    %126 = tpu.concatenate %124, %125 in 1 : vector<2x16x32xbf16>, vector<2x16x32xbf16> -> vector<2x32x32xbf16>
    %127 = arith.extf %126 : vector<2x32x32xbf16> to vector<2x32x32xf32>
    %c0_52 = arith.constant 0 : index
    %c0_53 = arith.constant 0 : index
    %c0_54 = arith.constant 0 : index
    %128 = vector.load %arg7[%c0_52, %c0_53, %c0_54] : memref<1x2x32xf32, #tpu.memory_space<vmem>>, vector<1x2x32xf32>
    %c0_55 = arith.constant 0 : index
    %c0_56 = arith.constant 0 : index
    %c0_57 = arith.constant 0 : index
    %129 = vector.load %arg4[%c0_55, %c0_56, %c0_57] : memref<2x16x32xbf16, #tpu.memory_space<vmem>>, vector<2x16x32xbf16>
    %130 = arith.extf %129 : vector<2x16x32xbf16> to vector<2x16x32xf32>
    %131 = vector.extract_strided_slice %128 {offsets = [0, 0, 0], sizes = [1, 1, 32], strides = [1, 1, 1]} : vector<1x2x32xf32> to vector<1x1x32xf32>
    %132 = vector.broadcast %131 : vector<1x1x32xf32> to vector<2x16x32xf32>
    %133 = arith.addf %130, %132 : vector<2x16x32xf32>
    %c0_58 = arith.constant 0 : index
    %c0_59 = arith.constant 0 : index
    %c0_60 = arith.constant 0 : index
    %134 = vector.load %arg5[%c0_58, %c0_59, %c0_60] : memref<2x16x32xbf16, #tpu.memory_space<vmem>>, vector<2x16x32xbf16>
    %135 = arith.extf %134 : vector<2x16x32xbf16> to vector<2x16x32xf32>
    %136 = vector.extract_strided_slice %128 {offsets = [0, 1, 0], sizes = [1, 1, 32], strides = [1, 1, 1]} : vector<1x2x32xf32> to vector<1x1x32xf32>
    %137 = vector.broadcast %136 : vector<1x1x32xf32> to vector<2x16x32xf32>
    %138 = arith.addf %135, %137 : vector<2x16x32xf32>
    %139 = tpu.concatenate %133, %138 in 1 : vector<2x16x32xf32>, vector<2x16x32xf32> -> vector<2x32x32xf32>
    %c0_61 = arith.constant 0 : index
    %c0_62 = arith.constant 0 : index
    %140 = vector.load %arg20[%c0_61, %c0_62] : memref<1x32xf32, #tpu.memory_space<vmem>>, vector<1x32xf32>
    %c0_63 = arith.constant 0 : index
    %c0_64 = arith.constant 0 : index
    %141 = vector.load %arg21[%c0_63, %c0_64] : memref<1x32xf32, #tpu.memory_space<vmem>>, vector<1x32xf32>
    %cst_65 = arith.constant dense<0.000000e+00> : vector<2x32xf32>
    %142 = vector.multi_reduction <add>, %127, %cst_65 [2] : vector<2x32x32xf32> to vector<2x32xf32>
    %143 = vector.shape_cast %142 : vector<2x32xf32> to vector<2x32x1xf32>
    %cst_66 = arith.constant 3.200000e+01 : f32
    %144 = vector.broadcast %cst_66 : f32 to vector<2x32x1xf32>
    %145 = arith.divf %143, %144 : vector<2x32x1xf32>
    %146 = vector.broadcast %145 : vector<2x32x1xf32> to vector<2x32x32xf32>
    %147 = arith.subf %127, %146 : vector<2x32x32xf32>
    %148 = arith.mulf %147, %147 : vector<2x32x32xf32>
    %cst_67 = arith.constant dense<0.000000e+00> : vector<2x32xf32>
    %149 = vector.multi_reduction <add>, %148, %cst_67 [2] : vector<2x32x32xf32> to vector<2x32xf32>
    %150 = vector.shape_cast %149 : vector<2x32xf32> to vector<2x32x1xf32>
    %cst_68 = arith.constant 3.200000e+01 : f32
    %151 = vector.broadcast %cst_68 : f32 to vector<2x32x1xf32>
    %152 = arith.divf %150, %151 : vector<2x32x1xf32>
    %cst_69 = arith.constant 9.99999974E-6 : f32
    %153 = vector.broadcast %cst_69 : f32 to vector<2x32x1xf32>
    %154 = arith.addf %152, %153 : vector<2x32x1xf32>
    %155 = math.rsqrt %154 : vector<2x32x1xf32>
    %156 = vector.broadcast %155 : vector<2x32x1xf32> to vector<2x32x32xf32>
    %157 = arith.mulf %147, %156 : vector<2x32x32xf32>
    %158 = vector.shape_cast %140 : vector<1x32xf32> to vector<1x1x32xf32>
    %159 = vector.broadcast %158 : vector<1x1x32xf32> to vector<2x32x32xf32>
    %160 = arith.mulf %157, %159 : vector<2x32x32xf32>
    %161 = vector.shape_cast %141 : vector<1x32xf32> to vector<1x1x32xf32>
    %162 = vector.broadcast %161 : vector<1x1x32xf32> to vector<2x32x32xf32>
    %163 = arith.addf %160, %162 : vector<2x32x32xf32>
    %164 = arith.addf %163, %139 : vector<2x32x32xf32>
    %165 = vector.shape_cast %164 : vector<2x32x32xf32> to vector<64x32xf32>
    %166 = vector.shape_cast %127 : vector<2x32x32xf32> to vector<64x32xf32>
    %c0_70 = arith.constant 0 : index
    %c0_71 = arith.constant 0 : index
    %167 = vector.load %arg22[%c0_70, %c0_71] : memref<32x32xbf16, #tpu.memory_space<vmem>>, vector<32x32xbf16>
    %c0_72 = arith.constant 0 : index
    %c0_73 = arith.constant 0 : index
    %168 = vector.load %arg23[%c0_72, %c0_73] : memref<1x32xf32, #tpu.memory_space<vmem>>, vector<1x32xf32>
    %c0_74 = arith.constant 0 : index
    %c0_75 = arith.constant 0 : index
    %169 = vector.load %arg24[%c0_74, %c0_75] : memref<32x32xbf16, #tpu.memory_space<vmem>>, vector<32x32xbf16>
    %c0_76 = arith.constant 0 : index
    %c0_77 = arith.constant 0 : index
    %170 = vector.load %arg25[%c0_76, %c0_77] : memref<1x32xf32, #tpu.memory_space<vmem>>, vector<1x32xf32>
    %c0_78 = arith.constant 0 : index
    %c0_79 = arith.constant 0 : index
    %171 = vector.load %arg26[%c0_78, %c0_79] : memref<32x32xbf16, #tpu.memory_space<vmem>>, vector<32x32xbf16>
    %c0_80 = arith.constant 0 : index
    %c0_81 = arith.constant 0 : index
    %172 = vector.load %arg27[%c0_80, %c0_81] : memref<1x32xf32, #tpu.memory_space<vmem>>, vector<1x32xf32>
    %c0_82 = arith.constant 0 : index
    %c0_83 = arith.constant 0 : index
    %173 = vector.load %arg28[%c0_82, %c0_83] : memref<32x32xbf16, #tpu.memory_space<vmem>>, vector<32x32xbf16>
    %c0_84 = arith.constant 0 : index
    %c0_85 = arith.constant 0 : index
    %174 = vector.load %arg29[%c0_84, %c0_85] : memref<1x32xf32, #tpu.memory_space<vmem>>, vector<1x32xf32>
    %175 = arith.truncf %123 : vector<16x32xf32> to vector<16x32xbf16>
    %cst_86 = arith.constant dense<0.000000e+00> : vector<16x32xf32>
    %176 = tpu.matmul %175, %167, %cst_86 {dimension_numbers = #tpu.dot_dimension_numbers<[1], [0], [0], [1], [0, 0, 1, 1], [], []>} : vector<16x32xbf16>, vector<32x32xbf16>, vector<16x32xf32> -> vector<16x32xf32>
    %177 = vector.broadcast %168 : vector<1x32xf32> to vector<16x32xf32>
    %178 = arith.addf %176, %177 : vector<16x32xf32>
    %179 = arith.truncf %178 : vector<16x32xf32> to vector<16x32xbf16>
    %180 = arith.truncf %165 : vector<64x32xf32> to vector<64x32xbf16>
    %cst_87 = arith.constant dense<0.000000e+00> : vector<64x32xf32>
    %181 = tpu.matmul %180, %169, %cst_87 {dimension_numbers = #tpu.dot_dimension_numbers<[1], [0], [0], [1], [0, 0, 1, 1], [], []>} : vector<64x32xbf16>, vector<32x32xbf16>, vector<64x32xf32> -> vector<64x32xf32>
    %182 = vector.broadcast %170 : vector<1x32xf32> to vector<64x32xf32>
    %183 = arith.addf %181, %182 : vector<64x32xf32>
    %184 = arith.truncf %183 : vector<64x32xf32> to vector<64x32xbf16>
    %185 = arith.truncf %166 : vector<64x32xf32> to vector<64x32xbf16>
    %cst_88 = arith.constant dense<0.000000e+00> : vector<64x32xf32>
    %186 = tpu.matmul %185, %171, %cst_88 {dimension_numbers = #tpu.dot_dimension_numbers<[1], [0], [0], [1], [0, 0, 1, 1], [], []>} : vector<64x32xbf16>, vector<32x32xbf16>, vector<64x32xf32> -> vector<64x32xf32>
    %187 = vector.broadcast %172 : vector<1x32xf32> to vector<64x32xf32>
    %188 = arith.addf %186, %187 : vector<64x32xf32>
    %189 = arith.truncf %188 : vector<64x32xf32> to vector<64x32xbf16>
    %190 = vector.shape_cast %179 : vector<16x32xbf16> to vector<2x8x32xbf16>
    %191 = vector.shape_cast %184 : vector<64x32xbf16> to vector<2x32x32xbf16>
    %192 = vector.shape_cast %189 : vector<64x32xbf16> to vector<2x32x32xbf16>
    %193 = vector.extract_strided_slice %190 {offsets = [0, 0, 0], sizes = [2, 8, 8], strides = [1, 1, 1]} : vector<2x8x32xbf16> to vector<2x8x8xbf16>
    %194 = vector.extract_strided_slice %190 {offsets = [0, 0, 8], sizes = [2, 8, 8], strides = [1, 1, 1]} : vector<2x8x32xbf16> to vector<2x8x8xbf16>
    %195 = vector.extract_strided_slice %190 {offsets = [0, 0, 16], sizes = [2, 8, 8], strides = [1, 1, 1]} : vector<2x8x32xbf16> to vector<2x8x8xbf16>
    %196 = vector.extract_strided_slice %190 {offsets = [0, 0, 24], sizes = [2, 8, 8], strides = [1, 1, 1]} : vector<2x8x32xbf16> to vector<2x8x8xbf16>
    %197 = tpu.concatenate %193, %194, %195, %196 in 0 : vector<2x8x8xbf16>, vector<2x8x8xbf16>, vector<2x8x8xbf16>, vector<2x8x8xbf16> -> vector<8x8x8xbf16>
    %198 = vector.extract_strided_slice %191 {offsets = [0, 0, 0], sizes = [2, 32, 8], strides = [1, 1, 1]} : vector<2x32x32xbf16> to vector<2x32x8xbf16>
    %199 = vector.extract_strided_slice %191 {offsets = [0, 0, 8], sizes = [2, 32, 8], strides = [1, 1, 1]} : vector<2x32x32xbf16> to vector<2x32x8xbf16>
    %200 = vector.extract_strided_slice %191 {offsets = [0, 0, 16], sizes = [2, 32, 8], strides = [1, 1, 1]} : vector<2x32x32xbf16> to vector<2x32x8xbf16>
    %201 = vector.extract_strided_slice %191 {offsets = [0, 0, 24], sizes = [2, 32, 8], strides = [1, 1, 1]} : vector<2x32x32xbf16> to vector<2x32x8xbf16>
    %202 = tpu.concatenate %198, %199, %200, %201 in 0 : vector<2x32x8xbf16>, vector<2x32x8xbf16>, vector<2x32x8xbf16>, vector<2x32x8xbf16> -> vector<8x32x8xbf16>
    %203 = vector.extract_strided_slice %192 {offsets = [0, 0, 0], sizes = [2, 32, 8], strides = [1, 1, 1]} : vector<2x32x32xbf16> to vector<2x32x8xbf16>
    %204 = vector.extract_strided_slice %192 {offsets = [0, 0, 8], sizes = [2, 32, 8], strides = [1, 1, 1]} : vector<2x32x32xbf16> to vector<2x32x8xbf16>
    %205 = vector.extract_strided_slice %192 {offsets = [0, 0, 16], sizes = [2, 32, 8], strides = [1, 1, 1]} : vector<2x32x32xbf16> to vector<2x32x8xbf16>
    %206 = vector.extract_strided_slice %192 {offsets = [0, 0, 24], sizes = [2, 32, 8], strides = [1, 1, 1]} : vector<2x32x32xbf16> to vector<2x32x8xbf16>
    %207 = tpu.concatenate %203, %204, %205, %206 in 0 : vector<2x32x8xbf16>, vector<2x32x8xbf16>, vector<2x32x8xbf16>, vector<2x32x8xbf16> -> vector<8x32x8xbf16>
    "tpu.trace_start"() <{level = 10 : i32, message = "bqd,bkd->bqk"}> : () -> ()
    %cst_89 = arith.constant dense<0.000000e+00> : vector<8x8x32xf32>
    %208 = tpu.matmul %197, %202, %cst_89 {dimension_numbers = #tpu.dot_dimension_numbers<[2], [2], [1], [1], [0, 0, 0, 1, 1, 1], [0], [0]>} : vector<8x8x8xbf16>, vector<8x32x8xbf16>, vector<8x8x32xf32> -> vector<8x8x32xf32>
    "tpu.trace_stop"() : () -> ()
    %cst_90 = arith.constant dense<0xFF800000> : vector<8x8xf32>
    %209 = vector.multi_reduction <maximumf>, %208, %cst_90 [2] : vector<8x8x32xf32> to vector<8x8xf32>
    %210 = vector.shape_cast %209 : vector<8x8xf32> to vector<8x8x1xf32>
    %211 = vector.broadcast %210 : vector<8x8x1xf32> to vector<8x8x32xf32>
    %212 = arith.subf %208, %211 : vector<8x8x32xf32>
    %213 = math.exp %212 : vector<8x8x32xf32>
    %cst_91 = arith.constant dense<0.000000e+00> : vector<8x8xf32>
    %214 = vector.multi_reduction <add>, %213, %cst_91 [2] : vector<8x8x32xf32> to vector<8x8xf32>
    %215 = vector.shape_cast %214 : vector<8x8xf32> to vector<8x8x1xf32>
    %216 = tpu.reciprocal %215 {approx = true} : vector<8x8x1xf32> -> vector<8x8x1xf32>
    %217 = vector.broadcast %216 : vector<8x8x1xf32> to vector<8x8x32xf32>
    %218 = arith.mulf %213, %217 : vector<8x8x32xf32>
    %219 = arith.truncf %218 : vector<8x8x32xf32> to vector<8x8x32xbf16>
    "tpu.trace_start"() <{level = 10 : i32, message = "bqk,bkd->bqd"}> : () -> ()
    %cst_92 = arith.constant dense<0.000000e+00> : vector<8x8x8xf32>
    %220 = tpu.matmul %219, %207, %cst_92 {dimension_numbers = #tpu.dot_dimension_numbers<[2], [1], [1], [2], [0, 0, 0, 1, 1, 2], [0], [0]>} : vector<8x8x32xbf16>, vector<8x32x8xbf16>, vector<8x8x8xf32> -> vector<8x8x8xf32>
    "tpu.trace_stop"() : () -> ()
    %221 = vector.extract_strided_slice %220 {offsets = [0, 0, 0], sizes = [2, 8, 8], strides = [1, 1, 1]} : vector<8x8x8xf32> to vector<2x8x8xf32>
    %222 = vector.extract_strided_slice %220 {offsets = [2, 0, 0], sizes = [2, 8, 8], strides = [1, 1, 1]} : vector<8x8x8xf32> to vector<2x8x8xf32>
    %223 = vector.extract_strided_slice %220 {offsets = [4, 0, 0], sizes = [2, 8, 8], strides = [1, 1, 1]} : vector<8x8x8xf32> to vector<2x8x8xf32>
    %224 = vector.extract_strided_slice %220 {offsets = [6, 0, 0], sizes = [2, 8, 8], strides = [1, 1, 1]} : vector<8x8x8xf32> to vector<2x8x8xf32>
    %225 = tpu.concatenate %221, %222, %223, %224 in 2 : vector<2x8x8xf32>, vector<2x8x8xf32>, vector<2x8x8xf32>, vector<2x8x8xf32> -> vector<2x8x32xf32>
    %226 = vector.shape_cast %225 : vector<2x8x32xf32> to vector<16x32xf32>
    %227 = arith.truncf %226 : vector<16x32xf32> to vector<16x32xbf16>
    %cst_93 = arith.constant dense<0.000000e+00> : vector<16x32xf32>
    %228 = tpu.matmul %227, %173, %cst_93 {dimension_numbers = #tpu.dot_dimension_numbers<[1], [0], [0], [1], [0, 0, 1, 1], [], []>} : vector<16x32xbf16>, vector<32x32xbf16>, vector<16x32xf32> -> vector<16x32xf32>
    %229 = vector.broadcast %174 : vector<1x32xf32> to vector<16x32xf32>
    %230 = arith.addf %228, %229 : vector<16x32xf32>
    %231 = vector.shape_cast %230 : vector<16x32xf32> to vector<2x8x32xf32>
    %232 = arith.addf %96, %231 : vector<2x8x32xf32>
    %c0_94 = arith.constant 0 : index
    %c0_95 = arith.constant 0 : index
    %233 = vector.load %arg30[%c0_94, %c0_95] : memref<1x32xf32, #tpu.memory_space<vmem>>, vector<1x32xf32>
    %c0_96 = arith.constant 0 : index
    %c0_97 = arith.constant 0 : index
    %234 = vector.load %arg31[%c0_96, %c0_97] : memref<1x32xf32, #tpu.memory_space<vmem>>, vector<1x32xf32>
    %cst_98 = arith.constant dense<0.000000e+00> : vector<2x8xf32>
    %235 = vector.multi_reduction <add>, %232, %cst_98 [2] : vector<2x8x32xf32> to vector<2x8xf32>
    %236 = vector.shape_cast %235 : vector<2x8xf32> to vector<2x8x1xf32>
    %cst_99 = arith.constant 3.200000e+01 : f32
    %237 = vector.broadcast %cst_99 : f32 to vector<2x8x1xf32>
    %238 = arith.divf %236, %237 : vector<2x8x1xf32>
    %239 = vector.broadcast %238 : vector<2x8x1xf32> to vector<2x8x32xf32>
    %240 = arith.subf %232, %239 : vector<2x8x32xf32>
    %241 = arith.mulf %240, %240 : vector<2x8x32xf32>
    %cst_100 = arith.constant dense<0.000000e+00> : vector<2x8xf32>
    %242 = vector.multi_reduction <add>, %241, %cst_100 [2] : vector<2x8x32xf32> to vector<2x8xf32>
    %243 = vector.shape_cast %242 : vector<2x8xf32> to vector<2x8x1xf32>
    %cst_101 = arith.constant 3.200000e+01 : f32
    %244 = vector.broadcast %cst_101 : f32 to vector<2x8x1xf32>
    %245 = arith.divf %243, %244 : vector<2x8x1xf32>
    %cst_102 = arith.constant 9.99999974E-6 : f32
    %246 = vector.broadcast %cst_102 : f32 to vector<2x8x1xf32>
    %247 = arith.addf %245, %246 : vector<2x8x1xf32>
    %248 = math.rsqrt %247 : vector<2x8x1xf32>
    %249 = vector.broadcast %248 : vector<2x8x1xf32> to vector<2x8x32xf32>
    %250 = arith.mulf %240, %249 : vector<2x8x32xf32>
    %251 = vector.shape_cast %233 : vector<1x32xf32> to vector<1x1x32xf32>
    %252 = vector.broadcast %251 : vector<1x1x32xf32> to vector<2x8x32xf32>
    %253 = arith.mulf %250, %252 : vector<2x8x32xf32>
    %254 = vector.shape_cast %234 : vector<1x32xf32> to vector<1x1x32xf32>
    %255 = vector.broadcast %254 : vector<1x1x32xf32> to vector<2x8x32xf32>
    %256 = arith.addf %253, %255 : vector<2x8x32xf32>
    %257 = vector.shape_cast %256 : vector<2x8x32xf32> to vector<16x32xf32>
    %258 = arith.truncf %257 : vector<16x32xf32> to vector<16x32xbf16>
    %c0_103 = arith.constant 0 : index
    %c0_104 = arith.constant 0 : index
    %259 = vector.load %arg32[%c0_103, %c0_104] : memref<32x128xbf16, #tpu.memory_space<vmem>>, vector<32x128xbf16>
    %cst_105 = arith.constant dense<0.000000e+00> : vector<16x128xf32>
    %260 = tpu.matmul %258, %259, %cst_105 {dimension_numbers = #tpu.dot_dimension_numbers<[1], [0], [0], [1], [0, 0, 1, 1], [], []>} : vector<16x32xbf16>, vector<32x128xbf16>, vector<16x128xf32> -> vector<16x128xf32>
    %c0_106 = arith.constant 0 : index
    %c0_107 = arith.constant 0 : index
    %261 = vector.load %arg33[%c0_106, %c0_107] : memref<1x128xf32, #tpu.memory_space<vmem>>, vector<1x128xf32>
    %262 = vector.broadcast %261 : vector<1x128xf32> to vector<16x128xf32>
    %263 = arith.addf %260, %262 : vector<16x128xf32>
    %cst_108 = arith.constant 5.000000e-01 : f32
    %264 = vector.broadcast %cst_108 : f32 to vector<16x128xf32>
    %265 = arith.mulf %264, %263 : vector<16x128xf32>
    %cst_109 = arith.constant 4.471500e-02 : f32
    %266 = vector.broadcast %cst_109 : f32 to vector<16x128xf32>
    %267 = arith.mulf %266, %263 : vector<16x128xf32>
    %268 = arith.mulf %267, %263 : vector<16x128xf32>
    %269 = arith.mulf %268, %263 : vector<16x128xf32>
    %270 = arith.addf %263, %269 : vector<16x128xf32>
    %cst_110 = arith.constant 0.797884583 : f32
    %271 = vector.broadcast %cst_110 : f32 to vector<16x128xf32>
    %272 = arith.mulf %271, %270 : vector<16x128xf32>
    %273 = math.tanh %272 : vector<16x128xf32>
    %cst_111 = arith.constant 1.000000e+00 : f32
    %274 = vector.broadcast %cst_111 : f32 to vector<16x128xf32>
    %275 = arith.addf %274, %273 : vector<16x128xf32>
    %276 = arith.mulf %265, %275 : vector<16x128xf32>
    %277 = arith.truncf %276 : vector<16x128xf32> to vector<16x128xbf16>
    %c0_112 = arith.constant 0 : index
    %c0_113 = arith.constant 0 : index
    %278 = vector.load %arg34[%c0_112, %c0_113] : memref<128x32xbf16, #tpu.memory_space<vmem>>, vector<128x32xbf16>
    %cst_114 = arith.constant dense<0.000000e+00> : vector<16x32xf32>
    %279 = tpu.matmul %277, %278, %cst_114 {dimension_numbers = #tpu.dot_dimension_numbers<[1], [0], [0], [1], [0, 0, 1, 1], [], []>} : vector<16x128xbf16>, vector<128x32xbf16>, vector<16x32xf32> -> vector<16x32xf32>
    %c0_115 = arith.constant 0 : index
    %c0_116 = arith.constant 0 : index
    %280 = vector.load %arg35[%c0_115, %c0_116] : memref<1x32xf32, #tpu.memory_space<vmem>>, vector<1x32xf32>
    %281 = vector.broadcast %280 : vector<1x32xf32> to vector<16x32xf32>
    %282 = arith.addf %279, %281 : vector<16x32xf32>
    %283 = vector.shape_cast %282 : vector<16x32xf32> to vector<2x8x32xf32>
    %284 = arith.addf %232, %283 : vector<2x8x32xf32>
    %c0_117 = arith.constant 0 : index
    %c0_118 = arith.constant 0 : index
    %c0_119 = arith.constant 0 : index
    %285 = vector.load %arg36[%c0_117, %c0_118, %c0_119] : memref<2x8x32xf32, #tpu.memory_space<vmem>>, vector<2x8x32xf32>
    tpu.vector_store %arg36[%c0_117, %c0_118, %c0_119], %284 {strides = array<i32>} : memref<2x8x32xf32, #tpu.memory_space<vmem>>, vector<2x8x32xf32>,
    return
  }
  func.func @transform_0(%arg0: i32) -> (i32, i32, i32) {
    %c0_i32 = arith.constant 0 : i32
    %c0_i32_0 = arith.constant 0 : i32
    %c0_i32_1 = arith.constant 0 : i32
    return %arg0, %c0_i32, %c0_i32_0 : i32, i32, i32
  }
  func.func @transform_1(%arg0: i32) -> (i32, i32, i32) {
    %c0_i32 = arith.constant 0 : i32
    %c0_i32_0 = arith.constant 0 : i32
    %c0_i32_1 = arith.constant 0 : i32
    return %arg0, %c0_i32, %c0_i32_0 : i32, i32, i32
  }
  func.func @transform_2(%arg0: i32) -> (i32, i32, i32) {
    %c0_i32 = arith.constant 0 : i32
    %c0_i32_0 = arith.constant 0 : i32
    %c0_i32_1 = arith.constant 0 : i32
    return %arg0, %c0_i32, %c0_i32_0 : i32, i32, i32
  }
  func.func @transform_3(%arg0: i32) -> (i32, i32, i32) {
    %c0_i32 = arith.constant 0 : i32
    %c0_i32_0 = arith.constant 0 : i32
    %c0_i32_1 = arith.constant 0 : i32
    return %arg0, %c0_i32, %c0_i32_0 : i32, i32, i32
  }
  func.func @transform_4(%arg0: i32) -> (i32, i32, i32) {
    %c0_i32 = arith.constant 0 : i32
    %c0_i32_0 = arith.constant 0 : i32
    %c0_i32_1 = arith.constant 0 : i32
    return %arg0, %c0_i32, %c0_i32_0 : i32, i32, i32
  }
  func.func @transform_5(%arg0: i32) -> (i32, i32, i32) {
    %c0_i32 = arith.constant 0 : i32
    %c0_i32_0 = arith.constant 0 : i32
    %c0_i32_1 = arith.constant 0 : i32
    %c0_i32_2 = arith.constant 0 : i32
    return %c0_i32, %c0_i32_0, %c0_i32_1 : i32, i32, i32
  }
  func.func @transform_6(%arg0: i32) -> (i32, i32, i32) {
    %c0_i32 = arith.constant 0 : i32
    %c0_i32_0 = arith.constant 0 : i32
    %c0_i32_1 = arith.constant 0 : i32
    %c0_i32_2 = arith.constant 0 : i32
    return %c0_i32, %c0_i32_0, %c0_i32_1 : i32, i32, i32
  }
  func.func @transform_7(%arg0: i32) -> (i32, i32) {
    %c0_i32 = arith.constant 0 : i32
    %c0_i32_0 = arith.constant 0 : i32
    %c0_i32_1 = arith.constant 0 : i32
    return %c0_i32, %c0_i32_0 : i32, i32
  }
  func.func @transform_8(%arg0: i32) -> (i32, i32) {
    %c0_i32 = arith.constant 0 : i32
    %c0_i32_0 = arith.constant 0 : i32
    %c0_i32_1 = arith.constant 0 : i32
    return %c0_i32, %c0_i32_0 : i32, i32
  }
  func.func @transform_9(%arg0: i32) -> (i32, i32) {
    %c0_i32 = arith.constant 0 : i32
    %c0_i32_0 = arith.constant 0 : i32
    %c0_i32_1 = arith.constant 0 : i32
    return %c0_i32, %c0_i32_0 : i32, i32
  }
  func.func @transform_10(%arg0: i32) -> (i32, i32) {
    %c0_i32 = arith.constant 0 : i32
    %c0_i32_0 = arith.constant 0 : i32
    %c0_i32_1 = arith.constant 0 : i32
    return %c0_i32, %c0_i32_0 : i32, i32
  }
  func.func @transform_11(%arg0: i32) -> (i32, i32) {
    %c0_i32 = arith.constant 0 : i32
    %c0_i32_0 = arith.constant 0 : i32
    %c0_i32_1 = arith.constant 0 : i32
    return %c0_i32, %c0_i32_0 : i32, i32
  }
  func.func @transform_12(%arg0: i32) -> (i32, i32) {
    %c0_i32 = arith.constant 0 : i32
    %c0_i32_0 = arith.constant 0 : i32
    %c0_i32_1 = arith.constant 0 : i32
    return %c0_i32, %c0_i32_0 : i32, i32
  }
  func.func @transform_13(%arg0: i32) -> (i32, i32) {
    %c0_i32 = arith.constant 0 : i32
    %c0_i32_0 = arith.constant 0 : i32
    %c0_i32_1 = arith.constant 0 : i32
    return %c0_i32, %c0_i32_0 : i32, i32
  }
  func.func @transform_14(%arg0: i32) -> (i32, i32) {
    %c0_i32 = arith.constant 0 : i32
    %c0_i32_0 = arith.constant 0 : i32
    %c0_i32_1 = arith.constant 0 : i32
    return %c0_i32, %c0_i32_0 : i32, i32
  }
  func.func @transform_15(%arg0: i32) -> (i32, i32) {
    %c0_i32 = arith.constant 0 : i32
    %c0_i32_0 = arith.constant 0 : i32
    %c0_i32_1 = arith.constant 0 : i32
    return %c0_i32, %c0_i32_0 : i32, i32
  }
  func.func @transform_16(%arg0: i32) -> (i32, i32) {
    %c0_i32 = arith.constant 0 : i32
    %c0_i32_0 = arith.constant 0 : i32
    %c0_i32_1 = arith.constant 0 : i32
    return %c0_i32, %c0_i32_0 : i32, i32
  }
  func.func @transform_17(%arg0: i32) -> (i32, i32) {
    %c0_i32 = arith.constant 0 : i32
    %c0_i32_0 = arith.constant 0 : i32
    %c0_i32_1 = arith.constant 0 : i32
    return %c0_i32, %c0_i32_0 : i32, i32
  }
  func.func @transform_18(%arg0: i32) -> (i32, i32) {
    %c0_i32 = arith.constant 0 : i32
    %c0_i32_0 = arith.constant 0 : i32
    %c0_i32_1 = arith.constant 0 : i32
    return %c0_i32, %c0_i32_0 : i32, i32
  }
  func.func @transform_19(%arg0: i32) -> (i32, i32) {
    %c0_i32 = arith.constant 0 : i32
    %c0_i32_0 = arith.constant 0 : i32
    %c0_i32_1 = arith.constant 0 : i32
    return %c0_i32, %c0_i32_0 : i32, i32
  }
  func.func @transform_20(%arg0: i32) -> (i32, i32) {
    %c0_i32 = arith.constant 0 : i32
    %c0_i32_0 = arith.constant 0 : i32
    %c0_i32_1 = arith.constant 0 : i32
    return %c0_i32, %c0_i32_0 : i32, i32
  }
  func.func @transform_21(%arg0: i32) -> (i32, i32) {
    %c0_i32 = arith.constant 0 : i32
    %c0_i32_0 = arith.constant 0 : i32
    %c0_i32_1 = arith.constant 0 : i32
    return %c0_i32, %c0_i32_0 : i32, i32
  }
  func.func @transform_22(%arg0: i32) -> (i32, i32) {
    %c0_i32 = arith.constant 0 : i32
    %c0_i32_0 = arith.constant 0 : i32
    %c0_i32_1 = arith.constant 0 : i32
    return %c0_i32, %c0_i32_0 : i32, i32
  }
  func.func @transform_23(%arg0: i32) -> (i32, i32) {
    %c0_i32 = arith.constant 0 : i32
    %c0_i32_0 = arith.constant 0 : i32
    %c0_i32_1 = arith.constant 0 : i32
    return %c0_i32, %c0_i32_0 : i32, i32
  }
  func.func @transform_24(%arg0: i32) -> (i32, i32) {
    %c0_i32 = arith.constant 0 : i32
    %c0_i32_0 = arith.constant 0 : i32
    %c0_i32_1 = arith.constant 0 : i32
    return %c0_i32, %c0_i32_0 : i32, i32
  }
  func.func @transform_25(%arg0: i32) -> (i32, i32) {
    %c0_i32 = arith.constant 0 : i32
    %c0_i32_0 = arith.constant 0 : i32
    %c0_i32_1 = arith.constant 0 : i32
    return %c0_i32, %c0_i32_0 : i32, i32
  }
  func.func @transform_26(%arg0: i32) -> (i32, i32) {
    %c0_i32 = arith.constant 0 : i32
    %c0_i32_0 = arith.constant 0 : i32
    %c0_i32_1 = arith.constant 0 : i32
    return %c0_i32, %c0_i32_0 : i32, i32
  }
  func.func @transform_27(%arg0: i32) -> (i32, i32) {
    %c0_i32 = arith.constant 0 : i32
    %c0_i32_0 = arith.constant 0 : i32
    %c0_i32_1 = arith.constant 0 : i32
    return %c0_i32, %c0_i32_0 : i32, i32
  }
  func.func @transform_28(%arg0: i32) -> (i32, i32) {
    %c0_i32 = arith.constant 0 : i32
    %c0_i32_0 = arith.constant 0 : i32
    %c0_i32_1 = arith.constant 0 : i32
    return %c0_i32, %c0_i32_0 : i32, i32
  }
  func.func @transform_29(%arg0: i32) -> (i32, i32) {
    %c0_i32 = arith.constant 0 : i32
    %c0_i32_0 = arith.constant 0 : i32
    %c0_i32_1 = arith.constant 0 : i32
    return %c0_i32, %c0_i32_0 : i32, i32
  }
  func.func @transform_30(%arg0: i32) -> (i32, i32) {
    %c0_i32 = arith.constant 0 : i32
    %c0_i32_0 = arith.constant 0 : i32
    %c0_i32_1 = arith.constant 0 : i32
    return %c0_i32, %c0_i32_0 : i32, i32
  }
  func.func @transform_31(%arg0: i32) -> (i32, i32) {
    %c0_i32 = arith.constant 0 : i32
    %c0_i32_0 = arith.constant 0 : i32
    %c0_i32_1 = arith.constant 0 : i32
    return %c0_i32, %c0_i32_0 : i32, i32
  }
  func.func @transform_32(%arg0: i32) -> (i32, i32) {
    %c0_i32 = arith.constant 0 : i32
    %c0_i32_0 = arith.constant 0 : i32
    %c0_i32_1 = arith.constant 0 : i32
    return %c0_i32, %c0_i32_0 : i32, i32
  }
  func.func @transform_33(%arg0: i32) -> (i32, i32) {
    %c0_i32 = arith.constant 0 : i32
    %c0_i32_0 = arith.constant 0 : i32
    %c0_i32_1 = arith.constant 0 : i32
    return %c0_i32, %c0_i32_0 : i32, i32
  }
  func.func @transform_34(%arg0: i32) -> (i32, i32) {
    %c0_i32 = arith.constant 0 : i32
    %c0_i32_0 = arith.constant 0 : i32
    %c0_i32_1 = arith.constant 0 : i32
    return %c0_i32, %c0_i32_0 : i32, i32
  }
  func.func @transform_35(%arg0: i32) -> (i32, i32, i32) {
    %c0_i32 = arith.constant 0 : i32
    %c0_i32_0 = arith.constant 0 : i32
    %c0_i32_1 = arith.constant 0 : i32
    return %arg0, %c0_i32, %c0_i32_0 : i32, i32, i32
  }
}

module attributes {stable_mosaic.version = 11 : i64} {
  func.func @_decoder_layer_kernel(%arg0: i32, %arg1: memref<2x8x32xf32, #tpu.memory_space<vmem>>, %arg2: memref<2x16x32xbf16, #tpu.memory_space<vmem>>, %arg3: memref<2x16x32xbf16, #tpu.memory_space<vmem>>, %arg4: memref<2x16x32xbf16, #tpu.memory_space<vmem>>, %arg5: memref<2x16x32xbf16, #tpu.memory_space<vmem>>, %arg6: memref<1x8x32xf32, #tpu.memory_space<vmem>>, %arg7: memref<1x2x32xf32, #tpu.memory_space<vmem>>, %arg8: memref<1x32xf32, #tpu.memory_space<vmem>>, %arg9: memref<1x32xf32, #tpu.memory_space<vmem>>, %arg10: memref<32x32xbf16, #tpu.memory_space<vmem>>, %arg11: memref<1x32xf32, #tpu.memory_space<vmem>>, %arg12: memref<32x32xbf16, #tpu.memory_space<vmem>>, %arg13: memref<1x32xf32, #tpu.memory_space<vmem>>, %arg14: memref<32x32xbf16, #tpu.memory_space<vmem>>, %arg15: memref<1x32xf32, #tpu.memory_space<vmem>>, %arg16: memref<32x32xbf16, #tpu.memory_space<vmem>>, %arg17: memref<1x32xf32, #tpu.memory_space<vmem>>, %arg18: memref<1x32xf32, #tpu.memory_space<vmem>>, %arg19: memref<1x32xf32, #tpu.memory_space<vmem>>, %arg20: memref<1x32xf32, #tpu.memory_space<vmem>>, %arg21: memref<1x32xf32, #tpu.memory_space<vmem>>, %arg22: memref<32x32xbf16, #tpu.memory_space<vmem>>, %arg23: memref<1x32xf32, #tpu.memory_space<vmem>>, %arg24: memref<32x32xbf16, #tpu.memory_space<vmem>>, %arg25: memref<1x32xf32, #tpu.memory_space<vmem>>, %arg26: memref<32x32xbf16, #tpu.memory_space<vmem>>, %arg27: memref<1x32xf32, #tpu.memory_space<vmem>>, %arg28: memref<32x32xbf16, #tpu.memory_space<vmem>>, %arg29: memref<1x32xf32, #tpu.memory_space<vmem>>, %arg30: memref<1x32xf32, #tpu.memory_space<vmem>>, %arg31: memref<1x32xf32, #tpu.memory_space<vmem>>, %arg32: memref<32x128xbf16, #tpu.memory_space<vmem>>, %arg33: memref<1x128xf32, #tpu.memory_space<vmem>>, %arg34: memref<128x32xbf16, #tpu.memory_space<vmem>>, %arg35: memref<1x32xf32, #tpu.memory_space<vmem>>, %arg36: memref<2x8x32xf32, #tpu.memory_space<vmem>>) attributes {dimension_semantics = [#tpu.dimension_semantics<parallel>], iteration_bounds = array<i64: 1>, scalar_prefetch = 0 : i64, scratch_operands = 0 : i64, tpu.core_type = #tpu.core_type<tc>, window_params = [{transform_indices = @transform_0, window_bounds = array<i64: 2, 8, 32>}, {transform_indices = @transform_1, window_bounds = array<i64: 2, 16, 32>}, {transform_indices = @transform_2, window_bounds = array<i64: 2, 16, 32>}, {transform_indices = @transform_3, window_bounds = array<i64: 2, 16, 32>}, {transform_indices = @transform_4, window_bounds = array<i64: 2, 16, 32>}, {pipeline_mode = #tpu.pipeline_mode<synchronous>, transform_indices = @transform_5, window_bounds = array<i64: 1, 8, 32>}, {pipeline_mode = #tpu.pipeline_mode<synchronous>, transform_indices = @transform_6, window_bounds = array<i64: 1, 2, 32>}, {pipeline_mode = #tpu.pipeline_mode<synchronous>, transform_indices = @transform_7, window_bounds = array<i64: 1, 32>}, {pipeline_mode = #tpu.pipeline_mode<synchronous>, transform_indices = @transform_8, window_bounds = array<i64: 1, 32>}, {pipeline_mode = #tpu.pipeline_mode<synchronous>, transform_indices = @transform_9, window_bounds = array<i64: 32, 32>}, {pipeline_mode = #tpu.pipeline_mode<synchronous>, transform_indices = @transform_10, window_bounds = array<i64: 1, 32>}, {pipeline_mode = #tpu.pipeline_mode<synchronous>, transform_indices = @transform_11, window_bounds = array<i64: 32, 32>}, {pipeline_mode = #tpu.pipeline_mode<synchronous>, transform_indices = @transform_12, window_bounds = array<i64: 1, 32>}, {pipeline_mode = #tpu.pipeline_mode<synchronous>, transform_indices = @transform_13, window_bounds = array<i64: 32, 32>}, {pipeline_mode = #tpu.pipeline_mode<synchronous>, transform_indices = @transform_14, window_bounds = array<i64: 1, 32>}, {pipeline_mode = #tpu.pipeline_mode<synchronous>, transform_indices = @transform_15, window_bounds = array<i64: 32, 32>}, {pipeline_mode = #tpu.pipeline_mode<synchronous>, transform_indices = @transform_16, window_bounds = array<i64: 1, 32>}, {pipeline_mode = #tpu.pipeline_mode<synchronous>, transform_indices = @transform_17, window_bounds = array<i64: 1, 32>}, {pipeline_mode = #tpu.pipeline_mode<synchronous>, transform_indices = @transform_18, window_bounds = array<i64: 1, 32>}, {pipeline_mode = #tpu.pipeline_mode<synchronous>, transform_indices = @transform_19, window_bounds = array<i64: 1, 32>}, {pipeline_mode = #tpu.pipeline_mode<synchronous>, transform_indices = @transform_20, window_bounds = array<i64: 1, 32>}, {pipeline_mode = #tpu.pipeline_mode<synchronous>, transform_indices = @transform_21, window_bounds = array<i64: 32, 32>}, {pipeline_mode = #tpu.pipeline_mode<synchronous>, transform_indices = @transform_22, window_bounds = array<i64: 1, 32>}, {pipeline_mode = #tpu.pipeline_mode<synchronous>, transform_indices = @transform_23, window_bounds = array<i64: 32, 32>}, {pipeline_mode = #tpu.pipeline_mode<synchronous>, transform_indices = @transform_24, window_bounds = array<i64: 1, 32>}, {pipeline_mode = #tpu.pipeline_mode<synchronous>, transform_indices = @transform_25, window_bounds = array<i64: 32, 32>}, {pipeline_mode = #tpu.pipeline_mode<synchronous>, transform_indices = @transform_26, window_bounds = array<i64: 1, 32>}, {pipeline_mode = #tpu.pipeline_mode<synchronous>, transform_indices = @transform_27, window_bounds = array<i64: 32, 32>}, {pipeline_mode = #tpu.pipeline_mode<synchronous>, transform_indices = @transform_28, window_bounds = array<i64: 1, 32>}, {pipeline_mode = #tpu.pipeline_mode<synchronous>, transform_indices = @transform_29, window_bounds = array<i64: 1, 32>}, {pipeline_mode = #tpu.pipeline_mode<synchronous>, transform_indices = @transform_30, window_bounds = array<i64: 1, 32>}, {pipeline_mode = #tpu.pipeline_mode<synchronous>, transform_indices = @transform_31, window_bounds = array<i64: 32, 128>}, {pipeline_mode = #tpu.pipeline_mode<synchronous>, transform_indices = @transform_32, window_bounds = array<i64: 1, 128>}, {pipeline_mode = #tpu.pipeline_mode<synchronous>, transform_indices = @transform_33, window_bounds = array<i64: 128, 32>}, {pipeline_mode = #tpu.pipeline_mode<synchronous>, transform_indices = @transform_34, window_bounds = array<i64: 1, 32>}, {transform_indices = @transform_35, window_bounds = array<i64: 2, 8, 32>}]} {
    %c0 = arith.constant 0 : index
    %c0_0 = arith.constant 0 : index
    %c0_1 = arith.constant 0 : index
    %0 = vector.load %arg1[%c0, %c0_0, %c0_1] : memref<2x8x32xf32, #tpu.memory_space<vmem>>, vector<2x8x32xf32>
    %c0_2 = arith.constant 0 : index
    %c0_3 = arith.constant 0 : index
    %c0_4 = arith.constant 0 : index
    %1 = vector.load %arg6[%c0_2, %c0_3, %c0_4] : memref<1x8x32xf32, #tpu.memory_space<vmem>>, vector<1x8x32xf32>
    %c0_5 = arith.constant 0 : index
    %c0_6 = arith.constant 0 : index
    %2 = vector.load %arg8[%c0_5, %c0_6] : memref<1x32xf32, #tpu.memory_space<vmem>>, vector<1x32xf32>
    %c0_7 = arith.constant 0 : index
    %c0_8 = arith.constant 0 : index
    %3 = vector.load %arg9[%c0_7, %c0_8] : memref<1x32xf32, #tpu.memory_space<vmem>>, vector<1x32xf32>
    %cst = arith.constant dense<0.000000e+00> : vector<2x8xf32>
    %4 = vector.multi_reduction <add>, %0, %cst [2] : vector<2x8x32xf32> to vector<2x8xf32>
    %5 = vector.shape_cast %4 : vector<2x8xf32> to vector<2x8x1xf32>
    %cst_9 = arith.constant 3.200000e+01 : f32
    %6 = vector.broadcast %cst_9 : f32 to vector<2x8x1xf32>
    %7 = arith.divf %5, %6 : vector<2x8x1xf32>
    %8 = vector.broadcast %7 : vector<2x8x1xf32> to vector<2x8x32xf32>
    %9 = arith.subf %0, %8 : vector<2x8x32xf32>
    %10 = arith.mulf %9, %9 : vector<2x8x32xf32>
    %cst_10 = arith.constant dense<0.000000e+00> : vector<2x8xf32>
    %11 = vector.multi_reduction <add>, %10, %cst_10 [2] : vector<2x8x32xf32> to vector<2x8xf32>
    %12 = vector.shape_cast %11 : vector<2x8xf32> to vector<2x8x1xf32>
    %cst_11 = arith.constant 3.200000e+01 : f32
    %13 = vector.broadcast %cst_11 : f32 to vector<2x8x1xf32>
    %14 = arith.divf %12, %13 : vector<2x8x1xf32>
    %cst_12 = arith.constant 9.99999974E-6 : f32
    %15 = vector.broadcast %cst_12 : f32 to vector<2x8x1xf32>
    %16 = arith.addf %14, %15 : vector<2x8x1xf32>
    %17 = math.rsqrt %16 : vector<2x8x1xf32>
    %18 = vector.broadcast %17 : vector<2x8x1xf32> to vector<2x8x32xf32>
    %19 = arith.mulf %9, %18 : vector<2x8x32xf32>
    %20 = vector.shape_cast %2 : vector<1x32xf32> to vector<1x1x32xf32>
    %21 = vector.broadcast %20 : vector<1x1x32xf32> to vector<2x8x32xf32>
    %22 = arith.mulf %19, %21 : vector<2x8x32xf32>
    %23 = vector.shape_cast %3 : vector<1x32xf32> to vector<1x1x32xf32>
    %24 = vector.broadcast %23 : vector<1x1x32xf32> to vector<2x8x32xf32>
    %25 = arith.addf %22, %24 : vector<2x8x32xf32>
    %26 = vector.broadcast %1 : vector<1x8x32xf32> to vector<2x8x32xf32>
    %27 = arith.addf %25, %26 : vector<2x8x32xf32>
    %28 = vector.shape_cast %27 : vector<2x8x32xf32> to vector<16x32xf32>
    %29 = vector.shape_cast %27 : vector<2x8x32xf32> to vector<16x32xf32>
    %30 = vector.shape_cast %0 : vector<2x8x32xf32> to vector<16x32xf32>
    %c0_13 = arith.constant 0 : index
    %c0_14 = arith.constant 0 : index
    %31 = vector.load %arg10[%c0_13, %c0_14] : memref<32x32xbf16, #tpu.memory_space<vmem>>, vector<32x32xbf16>
    %c0_15 = arith.constant 0 : index
    %c0_16 = arith.constant 0 : index
    %32 = vector.load %arg11[%c0_15, %c0_16] : memref<1x32xf32, #tpu.memory_space<vmem>>, vector<1x32xf32>
    %c0_17 = arith.constant 0 : index
    %c0_18 = arith.constant 0 : index
    %33 = vector.load %arg12[%c0_17, %c0_18] : memref<32x32xbf16, #tpu.memory_space<vmem>>, vector<32x32xbf16>
    %c0_19 = arith.constant 0 : index
    %c0_20 = arith.constant 0 : index
    %34 = vector.load %arg13[%c0_19, %c0_20] : memref<1x32xf32, #tpu.memory_space<vmem>>, vector<1x32xf32>
    %c0_21 = arith.constant 0 : index
    %c0_22 = arith.constant 0 : index
    %35 = vector.load %arg14[%c0_21, %c0_22] : memref<32x32xbf16, #tpu.memory_space<vmem>>, vector<32x32xbf16>
    %c0_23 = arith.constant 0 : index
    %c0_24 = arith.constant 0 : index
    %36 = vector.load %arg15[%c0_23, %c0_24] : memref<1x32xf32, #tpu.memory_space<vmem>>, vector<1x32xf32>
    %c0_25 = arith.constant 0 : index
    %c0_26 = arith.constant 0 : index
    %37 = vector.load %arg16[%c0_25, %c0_26] : memref<32x32xbf16, #tpu.memory_space<vmem>>, vector<32x32xbf16>
    %c0_27 = arith.constant 0 : index
    %c0_28 = arith.constant 0 : index
    %38 = vector.load %arg17[%c0_27, %c0_28] : memref<1x32xf32, #tpu.memory_space<vmem>>, vector<1x32xf32>
    %39 = arith.truncf %28 : vector<16x32xf32> to vector<16x32xbf16>
    %cst_29 = arith.constant dense<0.000000e+00> : vector<16x32xf32>
    %40 = tpu.matmul %39, %31, %cst_29 {dimension_numbers = #tpu.dot_dimension_numbers<[1], [0], [0], [1], [0, 0, 1, 1], [], []>} : vector<16x32xbf16>, vector<32x32xbf16>, vector<16x32xf32> -> vector<16x32xf32>
    %41 = vector.broadcast %32 : vector<1x32xf32> to vector<16x32xf32>
    %42 = arith.addf %40, %41 : vector<16x32xf32>
    %43 = arith.truncf %42 : vector<16x32xf32> to vector<16x32xbf16>
    %44 = arith.truncf %29 : vector<16x32xf32> to vector<16x32xbf16>
    %cst_30 = arith.constant dense<0.000000e+00> : vector<16x32xf32>
    %45 = tpu.matmul %44, %33, %cst_30 {dimension_numbers = #tpu.dot_dimension_numbers<[1], [0], [0], [1], [0, 0, 1, 1], [], []>} : vector<16x32xbf16>, vector<32x32xbf16>, vector<16x32xf32> -> vector<16x32xf32>
    %46 = vector.broadcast %34 : vector<1x32xf32> to vector<16x32xf32>
    %47 = arith.addf %45, %46 : vector<16x32xf32>
    %48 = arith.truncf %47 : vector<16x32xf32> to vector<16x32xbf16>
    %49 = arith.truncf %30 : vector<16x32xf32> to vector<16x32xbf16>
    %cst_31 = arith.constant dense<0.000000e+00> : vector<16x32xf32>
    %50 = tpu.matmul %49, %35, %cst_31 {dimension_numbers = #tpu.dot_dimension_numbers<[1], [0], [0], [1], [0, 0, 1, 1], [], []>} : vector<16x32xbf16>, vector<32x32xbf16>, vector<16x32xf32> -> vector<16x32xf32>
    %51 = vector.broadcast %36 : vector<1x32xf32> to vector<16x32xf32>
    %52 = arith.addf %50, %51 : vector<16x32xf32>
    %53 = arith.truncf %52 : vector<16x32xf32> to vector<16x32xbf16>
    %54 = vector.shape_cast %43 : vector<16x32xbf16> to vector<2x8x32xbf16>
    %55 = vector.shape_cast %48 : vector<16x32xbf16> to vector<2x8x32xbf16>
    %56 = vector.shape_cast %53 : vector<16x32xbf16> to vector<2x8x32xbf16>
    %57 = vector.extract_strided_slice %54 {offsets = [0, 0, 0], sizes = [2, 8, 8], strides = [1, 1, 1]} : vector<2x8x32xbf16> to vector<2x8x8xbf16>
    %58 = vector.extract_strided_slice %54 {offsets = [0, 0, 8], sizes = [2, 8, 8], strides = [1, 1, 1]} : vector<2x8x32xbf16> to vector<2x8x8xbf16>
    %59 = vector.extract_strided_slice %54 {offsets = [0, 0, 16], sizes = [2, 8, 8], strides = [1, 1, 1]} : vector<2x8x32xbf16> to vector<2x8x8xbf16>
    %60 = vector.extract_strided_slice %54 {offsets = [0, 0, 24], sizes = [2, 8, 8], strides = [1, 1, 1]} : vector<2x8x32xbf16> to vector<2x8x8xbf16>
    %61 = tpu.concatenate %57, %58, %59, %60 in 0 : vector<2x8x8xbf16>, vector<2x8x8xbf16>, vector<2x8x8xbf16>, vector<2x8x8xbf16> -> vector<8x8x8xbf16>
    %62 = vector.extract_strided_slice %55 {offsets = [0, 0, 0], sizes = [2, 8, 8], strides = [1, 1, 1]} : vector<2x8x32xbf16> to vector<2x8x8xbf16>
    %63 = vector.extract_strided_slice %55 {offsets = [0, 0, 8], sizes = [2, 8, 8], strides = [1, 1, 1]} : vector<2x8x32xbf16> to vector<2x8x8xbf16>
    %64 = vector.extract_strided_slice %55 {offsets = [0, 0, 16], sizes = [2, 8, 8], strides = [1, 1, 1]} : vector<2x8x32xbf16> to vector<2x8x8xbf16>
    %65 = vector.extract_strided_slice %55 {offsets = [0, 0, 24], sizes = [2, 8, 8], strides = [1, 1, 1]} : vector<2x8x32xbf16> to vector<2x8x8xbf16>
    %66 = tpu.concatenate %62, %63, %64, %65 in 0 : vector<2x8x8xbf16>, vector<2x8x8xbf16>, vector<2x8x8xbf16>, vector<2x8x8xbf16> -> vector<8x8x8xbf16>
    %67 = vector.extract_strided_slice %56 {offsets = [0, 0, 0], sizes = [2, 8, 8], strides = [1, 1, 1]} : vector<2x8x32xbf16> to vector<2x8x8xbf16>
    %68 = vector.extract_strided_slice %56 {offsets = [0, 0, 8], sizes = [2, 8, 8], strides = [1, 1, 1]} : vector<2x8x32xbf16> to vector<2x8x8xbf16>
    %69 = vector.extract_strided_slice %56 {offsets = [0, 0, 16], sizes = [2, 8, 8], strides = [1, 1, 1]} : vector<2x8x32xbf16> to vector<2x8x8xbf16>
    %70 = vector.extract_strided_slice %56 {offsets = [0, 0, 24], sizes = [2, 8, 8], strides = [1, 1, 1]} : vector<2x8x32xbf16> to vector<2x8x8xbf16>
    %71 = tpu.concatenate %67, %68, %69, %70 in 0 : vector<2x8x8xbf16>, vector<2x8x8xbf16>, vector<2x8x8xbf16>, vector<2x8x8xbf16> -> vector<8x8x8xbf16>
    "tpu.trace_start"() <{level = 10 : i32, message = "bqd,bkd->bqk"}> : () -> ()
    %cst_32 = arith.constant dense<0.000000e+00> : vector<8x8x8xf32>
    %72 = tpu.matmul %61, %66, %cst_32 {dimension_numbers = #tpu.dot_dimension_numbers<[2], [2], [1], [1], [0, 0, 0, 1, 1, 1], [0], [0]>} : vector<8x8x8xbf16>, vector<8x8x8xbf16>, vector<8x8x8xf32> -> vector<8x8x8xf32>
    "tpu.trace_stop"() : () -> ()
    %cst_33 = arith.constant dense<0xFF800000> : vector<8x8xf32>
    %73 = vector.multi_reduction <maximumf>, %72, %cst_33 [2] : vector<8x8x8xf32> to vector<8x8xf32>
    %74 = vector.shape_cast %73 : vector<8x8xf32> to vector<8x8x1xf32>
    %75 = vector.broadcast %74 : vector<8x8x1xf32> to vector<8x8x8xf32>
    %76 = arith.subf %72, %75 : vector<8x8x8xf32>
    %77 = math.exp %76 : vector<8x8x8xf32>
    %cst_34 = arith.constant dense<0.000000e+00> : vector<8x8xf32>
    %78 = vector.multi_reduction <add>, %77, %cst_34 [2] : vector<8x8x8xf32> to vector<8x8xf32>
    %79 = vector.shape_cast %78 : vector<8x8xf32> to vector<8x8x1xf32>
    %80 = tpu.reciprocal %79 {approx = true} : vector<8x8x1xf32> -> vector<8x8x1xf32>
    %81 = vector.broadcast %80 : vector<8x8x1xf32> to vector<8x8x8xf32>
    %82 = arith.mulf %77, %81 : vector<8x8x8xf32>
    %83 = arith.truncf %82 : vector<8x8x8xf32> to vector<8x8x8xbf16>
    "tpu.trace_start"() <{level = 10 : i32, message = "bqk,bkd->bqd"}> : () -> ()
    %cst_35 = arith.constant dense<0.000000e+00> : vector<8x8x8xf32>
    %84 = tpu.matmul %83, %71, %cst_35 {dimension_numbers = #tpu.dot_dimension_numbers<[2], [1], [1], [2], [0, 0, 0, 1, 1, 2], [0], [0]>} : vector<8x8x8xbf16>, vector<8x8x8xbf16>, vector<8x8x8xf32> -> vector<8x8x8xf32>
    "tpu.trace_stop"() : () -> ()
    %85 = vector.extract_strided_slice %84 {offsets = [0, 0, 0], sizes = [2, 8, 8], strides = [1, 1, 1]} : vector<8x8x8xf32> to vector<2x8x8xf32>
    %86 = vector.extract_strided_slice %84 {offsets = [2, 0, 0], sizes = [2, 8, 8], strides = [1, 1, 1]} : vector<8x8x8xf32> to vector<2x8x8xf32>
    %87 = vector.extract_strided_slice %84 {offsets = [4, 0, 0], sizes = [2, 8, 8], strides = [1, 1, 1]} : vector<8x8x8xf32> to vector<2x8x8xf32>
    %88 = vector.extract_strided_slice %84 {offsets = [6, 0, 0], sizes = [2, 8, 8], strides = [1, 1, 1]} : vector<8x8x8xf32> to vector<2x8x8xf32>
    %89 = tpu.concatenate %85, %86, %87, %88 in 2 : vector<2x8x8xf32>, vector<2x8x8xf32>, vector<2x8x8xf32>, vector<2x8x8xf32> -> vector<2x8x32xf32>
    %90 = vector.shape_cast %89 : vector<2x8x32xf32> to vector<16x32xf32>
    %91 = arith.truncf %90 : vector<16x32xf32> to vector<16x32xbf16>
    %cst_36 = arith.constant dense<0.000000e+00> : vector<16x32xf32>
    %92 = tpu.matmul %91, %37, %cst_36 {dimension_numbers = #tpu.dot_dimension_numbers<[1], [0], [0], [1], [0, 0, 1, 1], [], []>} : vector<16x32xbf16>, vector<32x32xbf16>, vector<16x32xf32> -> vector<16x32xf32>
    %93 = vector.broadcast %38 : vector<1x32xf32> to vector<16x32xf32>
    %94 = arith.addf %92, %93 : vector<16x32xf32>
    %95 = vector.shape_cast %94 : vector<16x32xf32> to vector<2x8x32xf32>
    %96 = arith.addf %0, %95 : vector<2x8x32xf32>
    %c0_37 = arith.constant 0 : index
    %c0_38 = arith.constant 0 : index
    %97 = vector.load %arg18[%c0_37, %c0_38] : memref<1x32xf32, #tpu.memory_space<vmem>>, vector<1x32xf32>
    %c0_39 = arith.constant 0 : index
    %c0_40 = arith.constant 0 : index
    %98 = vector.load %arg19[%c0_39, %c0_40] : memref<1x32xf32, #tpu.memory_space<vmem>>, vector<1x32xf32>
    %cst_41 = arith.constant dense<0.000000e+00> : vector<2x8xf32>
    %99 = vector.multi_reduction <add>, %96, %cst_41 [2] : vector<2x8x32xf32> to vector<2x8xf32>
    %100 = vector.shape_cast %99 : vector<2x8xf32> to vector<2x8x1xf32>
    %cst_42 = arith.constant 3.200000e+01 : f32
    %101 = vector.broadcast %cst_42 : f32 to vector<2x8x1xf32>
    %102 = arith.divf %100, %101 : vector<2x8x1xf32>
    %103 = vector.broadcast %102 : vector<2x8x1xf32> to vector<2x8x32xf32>
    %104 = arith.subf %96, %103 : vector<2x8x32xf32>
    %105 = arith.mulf %104, %104 : vector<2x8x32xf32>
    %cst_43 = arith.constant dense<0.000000e+00> : vector<2x8xf32>
    %106 = vector.multi_reduction <add>, %105, %cst_43 [2] : vector<2x8x32xf32> to vector<2x8xf32>
    %107 = vector.shape_cast %106 : vector<2x8xf32> to vector<2x8x1xf32>
    %cst_44 = arith.constant 3.200000e+01 : f32
    %108 = vector.broadcast %cst_44 : f32 to vector<2x8x1xf32>
    %109 = arith.divf %107, %108 : vector<2x8x1xf32>
    %cst_45 = arith.constant 9.99999974E-6 : f32
    %110 = vector.broadcast %cst_45 : f32 to vector<2x8x1xf32>
    %111 = arith.addf %109, %110 : vector<2x8x1xf32>
    %112 = math.rsqrt %111 : vector<2x8x1xf32>
    %113 = vector.broadcast %112 : vector<2x8x1xf32> to vector<2x8x32xf32>
    %114 = arith.mulf %104, %113 : vector<2x8x32xf32>
    %115 = vector.shape_cast %97 : vector<1x32xf32> to vector<1x1x32xf32>
    %116 = vector.broadcast %115 : vector<1x1x32xf32> to vector<2x8x32xf32>
    %117 = arith.mulf %114, %116 : vector<2x8x32xf32>
    %118 = vector.shape_cast %98 : vector<1x32xf32> to vector<1x1x32xf32>
    %119 = vector.broadcast %118 : vector<1x1x32xf32> to vector<2x8x32xf32>
    %120 = arith.addf %117, %119 : vector<2x8x32xf32>
    %121 = vector.broadcast %1 : vector<1x8x32xf32> to vector<2x8x32xf32>
    %122 = arith.addf %120, %121 : vector<2x8x32xf32>
    %123 = vector.shape_cast %122 : vector<2x8x32xf32> to vector<16x32xf32>
    %c0_46 = arith.constant 0 : index
    %c0_47 = arith.constant 0 : index
    %c0_48 = arith.constant 0 : index
    %124 = vector.load %arg2[%c0_46, %c0_47, %c0_48] : memref<2x16x32xbf16, #tpu.memory_space<vmem>>, vector<2x16x32xbf16>
    %c0_49 = arith.constant 0 : index
    %c0_50 = arith.constant 0 : index
    %c0_51 = arith.constant 0 : index
    %125 = vector.load %arg3[%c0_49, %c0_50, %c0_51] : memref<2x16x32xbf16, #tpu.memory_space<vmem>>, vector<2x16x32xbf16>
    %126 = tpu.concatenate %124, %125 in 1 : vector<2x16x32xbf16>, vector<2x16x32xbf16> -> vector<2x32x32xbf16>
    %127 = arith.extf %126 : vector<2x32x32xbf16> to vector<2x32x32xf32>
    %c0_52 = arith.constant 0 : index
    %c0_53 = arith.constant 0 : index
    %c0_54 = arith.constant 0 : index
    %128 = vector.load %arg7[%c0_52, %c0_53, %c0_54] : memref<1x2x32xf32, #tpu.memory_space<vmem>>, vector<1x2x32xf32>
    %c0_55 = arith.constant 0 : index
    %c0_56 = arith.constant 0 : index
    %c0_57 = arith.constant 0 : index
    %129 = vector.load %arg4[%c0_55, %c0_56, %c0_57] : memref<2x16x32xbf16, #tpu.memory_space<vmem>>, vector<2x16x32xbf16>
    %130 = arith.extf %129 : vector<2x16x32xbf16> to vector<2x16x32xf32>
    %131 = vector.extract_strided_slice %128 {offsets = [0, 0, 0], sizes = [1, 1, 32], strides = [1, 1, 1]} : vector<1x2x32xf32> to vector<1x1x32xf32>
    %132 = vector.broadcast %131 : vector<1x1x32xf32> to vector<2x16x32xf32>
    %133 = arith.addf %130, %132 : vector<2x16x32xf32>
    %c0_58 = arith.constant 0 : index
    %c0_59 = arith.constant 0 : index
    %c0_60 = arith.constant 0 : index
    %134 = vector.load %arg5[%c0_58, %c0_59, %c0_60] : memref<2x16x32xbf16, #tpu.memory_space<vmem>>, vector<2x16x32xbf16>
    %135 = arith.extf %134 : vector<2x16x32xbf16> to vector<2x16x32xf32>
    %136 = vector.extract_strided_slice %128 {offsets = [0, 1, 0], sizes = [1, 1, 32], strides = [1, 1, 1]} : vector<1x2x32xf32> to vector<1x1x32xf32>
    %137 = vector.broadcast %136 : vector<1x1x32xf32> to vector<2x16x32xf32>
    %138 = arith.addf %135, %137 : vector<2x16x32xf32>
    %139 = tpu.concatenate %133, %138 in 1 : vector<2x16x32xf32>, vector<2x16x32xf32> -> vector<2x32x32xf32>
    %c0_61 = arith.constant 0 : index
    %c0_62 = arith.constant 0 : index
    %140 = vector.load %arg20[%c0_61, %c0_62] : memref<1x32xf32, #tpu.memory_space<vmem>>, vector<1x32xf32>
    %c0_63 = arith.constant 0 : index
    %c0_64 = arith.constant 0 : index
    %141 = vector.load %arg21[%c0_63, %c0_64] : memref<1x32xf32, #tpu.memory_space<vmem>>, vector<1x32xf32>
    %cst_65 = arith.constant dense<0.000000e+00> : vector<2x32xf32>
    %142 = vector.multi_reduction <add>, %127, %cst_65 [2] : vector<2x32x32xf32> to vector<2x32xf32>
    %143 = vector.shape_cast %142 : vector<2x32xf32> to vector<2x32x1xf32>
    %cst_66 = arith.constant 3.200000e+01 : f32
    %144 = vector.broadcast %cst_66 : f32 to vector<2x32x1xf32>
    %145 = arith.divf %143, %144 : vector<2x32x1xf32>
    %146 = vector.broadcast %145 : vector<2x32x1xf32> to vector<2x32x32xf32>
    %147 = arith.subf %127, %146 : vector<2x32x32xf32>
    %148 = arith.mulf %147, %147 : vector<2x32x32xf32>
    %cst_67 = arith.constant dense<0.000000e+00> : vector<2x32xf32>
    %149 = vector.multi_reduction <add>, %148, %cst_67 [2] : vector<2x32x32xf32> to vector<2x32xf32>
    %150 = vector.shape_cast %149 : vector<2x32xf32> to vector<2x32x1xf32>
    %cst_68 = arith.constant 3.200000e+01 : f32
    %151 = vector.broadcast %cst_68 : f32 to vector<2x32x1xf32>
    %152 = arith.divf %150, %151 : vector<2x32x1xf32>
    %cst_69 = arith.constant 9.99999974E-6 : f32
    %153 = vector.broadcast %cst_69 : f32 to vector<2x32x1xf32>
    %154 = arith.addf %152, %153 : vector<2x32x1xf32>
    %155 = math.rsqrt %154 : vector<2x32x1xf32>
    %156 = vector.broadcast %155 : vector<2x32x1xf32> to vector<2x32x32xf32>
    %157 = arith.mulf %147, %156 : vector<2x32x32xf32>
    %158 = vector.shape_cast %140 : vector<1x32xf32> to vector<1x1x32xf32>
    %159 = vector.broadcast %158 : vector<1x1x32xf32> to vector<2x32x32xf32>
    %160 = arith.mulf %157, %159 : vector<2x32x32xf32>
    %161 = vector.shape_cast %141 : vector<1x32xf32> to vector<1x1x32xf32>
    %162 = vector.broadcast %161 : vector<1x1x32xf32> to vector<2x32x32xf32>
    %163 = arith.addf %160, %162 : vector<2x32x32xf32>
    %164 = arith.addf %163, %139 : vector<2x32x32xf32>
    %165 = vector.shape_cast %164 : vector<2x32x32xf32> to vector<64x32xf32>
    %166 = vector.shape_cast %127 : vector<2x32x32xf32> to vector<64x32xf32>
    %c0_70 = arith.constant 0 : index
    %c0_71 = arith.constant 0 : index
    %167 = vector.load %arg22[%c0_70, %c0_71] : memref<32x32xbf16, #tpu.memory_space<vmem>>, vector<32x32xbf16>
    %c0_72 = arith.constant 0 : index
    %c0_73 = arith.constant 0 : index
    %168 = vector.load %arg23[%c0_72, %c0_73] : memref<1x32xf32, #tpu.memory_space<vmem>>, vector<1x32xf32>
    %c0_74 = arith.constant 0 : index
    %c0_75 = arith.constant 0 : index
    %169 = vector.load %arg24[%c0_74, %c0_75] : memref<32x32xbf16, #tpu.memory_space<vmem>>, vector<32x32xbf16>
    %c0_76 = arith.constant 0 : index
    %c0_77 = arith.constant 0 : index
    %170 = vector.load %arg25[%c0_76, %c0_77] : memref<1x32xf32, #tpu.memory_space<vmem>>, vector<1x32xf32>
    %c0_78 = arith.constant 0 : index
    %c0_79 = arith.constant 0 : index
    %171 = vector.load %arg26[%c0_78, %c0_79] : memref<32x32xbf16, #tpu.memory_space<vmem>>, vector<32x32xbf16>
    %c0_80 = arith.constant 0 : index
    %c0_81 = arith.constant 0 : index
    %172 = vector.load %arg27[%c0_80, %c0_81] : memref<1x32xf32, #tpu.memory_space<vmem>>, vector<1x32xf32>
    %c0_82 = arith.constant 0 : index
    %c0_83 = arith.constant 0 : index
    %173 = vector.load %arg28[%c0_82, %c0_83] : memref<32x32xbf16, #tpu.memory_space<vmem>>, vector<32x32xbf16>
    %c0_84 = arith.constant 0 : index
    %c0_85 = arith.constant 0 : index
    %174 = vector.load %arg29[%c0_84, %c0_85] : memref<1x32xf32, #tpu.memory_space<vmem>>, vector<1x32xf32>
    %175 = arith.truncf %123 : vector<16x32xf32> to vector<16x32xbf16>
    %cst_86 = arith.constant dense<0.000000e+00> : vector<16x32xf32>
    %176 = tpu.matmul %175, %167, %cst_86 {dimension_numbers = #tpu.dot_dimension_numbers<[1], [0], [0], [1], [0, 0, 1, 1], [], []>} : vector<16x32xbf16>, vector<32x32xbf16>, vector<16x32xf32> -> vector<16x32xf32>
    %177 = vector.broadcast %168 : vector<1x32xf32> to vector<16x32xf32>
    %178 = arith.addf %176, %177 : vector<16x32xf32>
    %179 = arith.truncf %178 : vector<16x32xf32> to vector<16x32xbf16>
    %180 = arith.truncf %165 : vector<64x32xf32> to vector<64x32xbf16>
    %cst_87 = arith.constant dense<0.000000e+00> : vector<64x32xf32>
    %181 = tpu.matmul %180, %169, %cst_87 {dimension_numbers = #tpu.dot_dimension_numbers<[1], [0], [0], [1], [0, 0, 1, 1], [], []>} : vector<64x32xbf16>, vector<32x32xbf16>, vector<64x32xf32> -> vector<64x32xf32>
    %182 = vector.broadcast %170 : vector<1x32xf32> to vector<64x32xf32>
    %183 = arith.addf %181, %182 : vector<64x32xf32>
    %184 = arith.truncf %183 : vector<64x32xf32> to vector<64x32xbf16>
    %185 = arith.truncf %166 : vector<64x32xf32> to vector<64x32xbf16>
    %cst_88 = arith.constant dense<0.000000e+00> : vector<64x32xf32>
    %186 = tpu.matmul %185, %171, %cst_88 {dimension_numbers = #tpu.dot_dimension_numbers<[1], [0], [0], [1], [0, 0, 1, 1], [], []>} : vector<64x32xbf16>, vector<32x32xbf16>, vector<64x32xf32> -> vector<64x32xf32>
    %187 = vector.broadcast %172 : vector<1x32xf32> to vector<64x32xf32>
    %188 = arith.addf %186, %187 : vector<64x32xf32>
    %189 = arith.truncf %188 : vector<64x32xf32> to vector<64x32xbf16>
    %190 = vector.shape_cast %179 : vector<16x32xbf16> to vector<2x8x32xbf16>
    %191 = vector.shape_cast %184 : vector<64x32xbf16> to vector<2x32x32xbf16>
    %192 = vector.shape_cast %189 : vector<64x32xbf16> to vector<2x32x32xbf16>
    %193 = vector.extract_strided_slice %190 {offsets = [0, 0, 0], sizes = [2, 8, 8], strides = [1, 1, 1]} : vector<2x8x32xbf16> to vector<2x8x8xbf16>
    %194 = vector.extract_strided_slice %190 {offsets = [0, 0, 8], sizes = [2, 8, 8], strides = [1, 1, 1]} : vector<2x8x32xbf16> to vector<2x8x8xbf16>
    %195 = vector.extract_strided_slice %190 {offsets = [0, 0, 16], sizes = [2, 8, 8], strides = [1, 1, 1]} : vector<2x8x32xbf16> to vector<2x8x8xbf16>
    %196 = vector.extract_strided_slice %190 {offsets = [0, 0, 24], sizes = [2, 8, 8], strides = [1, 1, 1]} : vector<2x8x32xbf16> to vector<2x8x8xbf16>
    %197 = tpu.concatenate %193, %194, %195, %196 in 0 : vector<2x8x8xbf16>, vector<2x8x8xbf16>, vector<2x8x8xbf16>, vector<2x8x8xbf16> -> vector<8x8x8xbf16>
    %198 = vector.extract_strided_slice %191 {offsets = [0, 0, 0], sizes = [2, 32, 8], strides = [1, 1, 1]} : vector<2x32x32xbf16> to vector<2x32x8xbf16>
    %199 = vector.extract_strided_slice %191 {offsets = [0, 0, 8], sizes = [2, 32, 8], strides = [1, 1, 1]} : vector<2x32x32xbf16> to vector<2x32x8xbf16>
    %200 = vector.extract_strided_slice %191 {offsets = [0, 0, 16], sizes = [2, 32, 8], strides = [1, 1, 1]} : vector<2x32x32xbf16> to vector<2x32x8xbf16>
    %201 = vector.extract_strided_slice %191 {offsets = [0, 0, 24], sizes = [2, 32, 8], strides = [1, 1, 1]} : vector<2x32x32xbf16> to vector<2x32x8xbf16>
    %202 = tpu.concatenate %198, %199, %200, %201 in 0 : vector<2x32x8xbf16>, vector<2x32x8xbf16>, vector<2x32x8xbf16>, vector<2x32x8xbf16> -> vector<8x32x8xbf16>
    %203 = vector.extract_strided_slice %192 {offsets = [0, 0, 0], sizes = [2, 32, 8], strides = [1, 1, 1]} : vector<2x32x32xbf16> to vector<2x32x8xbf16>
    %204 = vector.extract_strided_slice %192 {offsets = [0, 0, 8], sizes = [2, 32, 8], strides = [1, 1, 1]} : vector<2x32x32xbf16> to vector<2x32x8xbf16>
    %205 = vector.extract_strided_slice %192 {offsets = [0, 0, 16], sizes = [2, 32, 8], strides = [1, 1, 1]} : vector<2x32x32xbf16> to vector<2x32x8xbf16>
    %206 = vector.extract_strided_slice %192 {offsets = [0, 0, 24], sizes = [2, 32, 8], strides = [1, 1, 1]} : vector<2x32x32xbf16> to vector<2x32x8xbf16>
    %207 = tpu.concatenate %203, %204, %205, %206 in 0 : vector<2x32x8xbf16>, vector<2x32x8xbf16>, vector<2x32x8xbf16>, vector<2x32x8xbf16> -> vector<8x32x8xbf16>
    "tpu.trace_start"() <{level = 10 : i32, message = "bqd,bkd->bqk"}> : () -> ()
    %cst_89 = arith.constant dense<0.000000e+00> : vector<8x8x32xf32>
    %208 = tpu.matmul %197, %202, %cst_89 {dimension_numbers = #tpu.dot_dimension_numbers<[2], [2], [1], [1], [0, 0, 0, 1, 1, 1], [0], [0]>} : vector<8x8x8xbf16>, vector<8x32x8xbf16>, vector<8x8x32xf32> -> vector<8x8x32xf32>
    "tpu.trace_stop"() : () -> ()
    %cst_90 = arith.constant dense<0xFF800000> : vector<8x8xf32>
    %209 = vector.multi_reduction <maximumf>, %208, %cst_90 [2] : vector<8x8x32xf32> to vector<8x8xf32>
    %210 = vector.shape_cast %209 : vector<8x8xf32> to vector<8x8x1xf32>
    %211 = vector.broadcast %210 : vector<8x8x1xf32> to vector<8x8x32xf32>
    %212 = arith.subf %208, %211 : vector<8x8x32xf32>
    %213 = math.exp %212 : vector<8x8x32xf32>
    %cst_91 = arith.constant dense<0.000000e+00> : vector<8x8xf32>
    %214 = vector.multi_reduction <add>, %213, %cst_91 [2] : vector<8x8x32xf32> to vector<8x8xf32>
    %215 = vector.shape_cast %214 : vector<8x8xf32> to vector<8x8x1xf32>
    %216 = tpu.reciprocal %215 {approx = true} : vector<8x8x1xf32> -> vector<8x8x1xf32>
    %217 = vector.broadcast %216 : vector<8x8x1xf32> to vector<8x8x32xf32>
    %218 = arith.mulf %213, %217 : vector<8x8x32xf32>
    %219 = arith.truncf %218 : vector<8x8x32xf32> to vector<8x8x32xbf16>
    "tpu.trace_start"() <{level = 10 : i32, message = "bqk,bkd->bqd"}> : () -> ()
    %cst_92 = arith.constant dense<0.000000e+00> : vector<8x8x8xf32>
    %220 = tpu.matmul %219, %207, %cst_92 {dimension_numbers = #tpu.dot_dimension_numbers<[2], [1], [1], [2], [0, 0, 0, 1, 1, 2], [0], [0]>} : vector<8x8x32xbf16>, vector<8x32x8xbf16>, vector<8x8x8xf32> -> vector<8x8x8xf32>
    "tpu.trace_stop"() : () -> ()
    %221 = vector.extract_strided_slice %220 {offsets = [0, 0, 0], sizes = [2, 8, 8], strides = [1, 1, 1]} : vector<8x8x8xf32> to vector<2x8x8xf32>
    %222 = vector.extract_strided_slice %220 {offsets = [2, 0, 0], sizes = [2, 8, 8], strides = [1, 1, 1]} : vector<8x8x8xf32> to vector<2x8x8xf32>
    %223 = vector.extract_strided_slice %220 {offsets = [4, 0, 0], sizes = [2, 8, 8], strides = [1, 1, 1]} : vector<8x8x8xf32> to vector<2x8x8xf32>
    %224 = vector.extract_strided_slice %220 {offsets = [6, 0, 0], sizes = [2, 8, 8], strides = [1, 1, 1]} : vector<8x8x8xf32> to vector<2x8x8xf32>
    %225 = tpu.concatenate %221, %222, %223, %224 in 2 : vector<2x8x8xf32>, vector<2x8x8xf32>, vector<2x8x8xf32>, vector<2x8x8xf32> -> vector<2x8x32xf32>
    %226 = vector.shape_cast %225 : vector<2x8x32xf32> to vector<16x32xf32>
    %227 = arith.truncf %226 : vector<16x32xf32> to vector<16x32xbf16>
    %cst_93 = arith.constant dense<0.000000e+00> : vector<16x32xf32>
    %228 = tpu.matmul %227, %173, %cst_93 {dimension_numbers = #tpu.dot_dimension_numbers<[1], [0], [0], [1], [0, 0, 1, 1], [], []>} : vector<16x32xbf16>, vector<32x32xbf16>, vector<16x32xf32> -> vector<16x32xf32>
    %229 = vector.broadcast %174 : vector<1x32xf32> to vector<16x32xf32>
    %230 = arith.addf %228, %229 : vector<16x32xf32>
    %231 = vector.shape_cast %230 : vector<16x32xf32> to vector<2x8x32xf32>
    %232 = arith.addf %96, %231 : vector<2x8x32xf32>
    %c0_94 = arith.constant 0 : index
    %c0_95 = arith.constant 0 : index
    %233 = vector.load %arg30[%c0_94, %c0_95] : memref<1x32xf32, #tpu.memory_space<vmem>>, vector<1x32xf32>
    %c0_96 = arith.constant 0 : index
    %c0_97 = arith.constant 0 : index
    %234 = vector.load %arg31[%c0_96, %c0_97] : memref<1x32xf32, #tpu.memory_space<vmem>>, vector<1x32xf32>
    %cst_98 = arith.constant dense<0.000000e+00> : vector<2x8xf32>
    %235 = vector.multi_reduction <add>, %232, %cst_98 [2] : vector<2x8x32xf32> to vector<2x8xf32>
    %236 = vector.shape_cast %235 : vector<2x8xf32> to vector<2x8x1xf32>
    %cst_99 = arith.constant 3.200000e+01 : f32
    %237 = vector.broadcast %cst_99 : f32 to vector<2x8x1xf32>
    %238 = arith.divf %236, %237 : vector<2x8x1xf32>
    %239 = vector.broadcast %238 : vector<2x8x1xf32> to vector<2x8x32xf32>
    %240 = arith.subf %232, %239 : vector<2x8x32xf32>
    %241 = arith.mulf %240, %240 : vector<2x8x32xf32>
    %cst_100 = arith.constant dense<0.000000e+00> : vector<2x8xf32>
    %242 = vector.multi_reduction <add>, %241, %cst_100 [2] : vector<2x8x32xf32> to vector<2x8xf32>
    %243 = vector.shape_cast %242 : vector<2x8xf32> to vector<2x8x1xf32>
    %cst_101 = arith.constant 3.200000e+01 : f32
    %244 = vector.broadcast %cst_101 : f32 to vector<2x8x1xf32>
    %245 = arith.divf %243, %244 : vector<2x8x1xf32>
    %cst_102 = arith.constant 9.99999974E-6 : f32
    %246 = vector.broadcast %cst_102 : f32 to vector<2x8x1xf32>
    %247 = arith.addf %245, %246 : vector<2x8x1xf32>
    %248 = math.rsqrt %247 : vector<2x8x1xf32>
    %249 = vector.broadcast %248 : vector<2x8x1xf32> to vector<2x8x32xf32>
    %250 = arith.mulf %240, %249 : vector<2x8x32xf32>
    %251 = vector.shape_cast %233 : vector<1x32xf32> to vector<1x1x32xf32>
    %252 = vector.broadcast %251 : vector<1x1x32xf32> to vector<2x8x32xf32>
    %253 = arith.mulf %250, %252 : vector<2x8x32xf32>
    %254 = vector.shape_cast %234 : vector<1x32xf32> to vector<1x1x32xf32>
    %255 = vector.broadcast %254 : vector<1x1x32xf32> to vector<2x8x32xf32>
    %256 = arith.addf %253, %255 : vector<2x8x32xf32>
    %257 = vector.shape_cast %256 : vector<2x8x32xf32> to vector<16x32xf32>
    %258 = arith.truncf %257 : vector<16x32xf32> to vector<16x32xbf16>
    %c0_103 = arith.constant 0 : index
    %c0_104 = arith.constant 0 : index
    %259 = vector.load %arg32[%c0_103, %c0_104] : memref<32x128xbf16, #tpu.memory_space<vmem>>, vector<32x128xbf16>
    %cst_105 = arith.constant dense<0.000000e+00> : vector<16x128xf32>
    %260 = tpu.matmul %258, %259, %cst_105 {dimension_numbers = #tpu.dot_dimension_numbers<[1], [0], [0], [1], [0, 0, 1, 1], [], []>} : vector<16x32xbf16>, vector<32x128xbf16>, vector<16x128xf32> -> vector<16x128xf32>
    %c0_106 = arith.constant 0 : index
    %c0_107 = arith.constant 0 : index
    %261 = vector.load %arg33[%c0_106, %c0_107] : memref<1x128xf32, #tpu.memory_space<vmem>>, vector<1x128xf32>
    %262 = vector.broadcast %261 : vector<1x128xf32> to vector<16x128xf32>
    %263 = arith.addf %260, %262 : vector<16x128xf32>
    %cst_108 = arith.constant 5.000000e-01 : f32
    %264 = vector.broadcast %cst_108 : f32 to vector<16x128xf32>
    %265 = arith.mulf %264, %263 : vector<16x128xf32>
    %cst_109 = arith.constant 4.471500e-02 : f32
    %266 = vector.broadcast %cst_109 : f32 to vector<16x128xf32>
    %267 = arith.mulf %266, %263 : vector<16x128xf32>
    %268 = arith.mulf %267, %263 : vector<16x128xf32>
    %269 = arith.mulf %268, %263 : vector<16x128xf32>
    %270 = arith.addf %263, %269 : vector<16x128xf32>
    %cst_110 = arith.constant 0.797884583 : f32
    %271 = vector.broadcast %cst_110 : f32 to vector<16x128xf32>
    %272 = arith.mulf %271, %270 : vector<16x128xf32>
    %273 = math.tanh %272 : vector<16x128xf32>
    %cst_111 = arith.constant 1.000000e+00 : f32
    %274 = vector.broadcast %cst_111 : f32 to vector<16x128xf32>
    %275 = arith.addf %274, %273 : vector<16x128xf32>
    %276 = arith.mulf %265, %275 : vector<16x128xf32>
    %277 = arith.truncf %276 : vector<16x128xf32> to vector<16x128xbf16>
    %c0_112 = arith.constant 0 : index
    %c0_113 = arith.constant 0 : index
    %278 = vector.load %arg34[%c0_112, %c0_113] : memref<128x32xbf16, #tpu.memory_space<vmem>>, vector<128x32xbf16>
    %cst_114 = arith.constant dense<0.000000e+00> : vector<16x32xf32>
    %279 = tpu.matmul %277, %278, %cst_114 {dimension_numbers = #tpu.dot_dimension_numbers<[1], [0], [0], [1], [0, 0, 1, 1], [], []>} : vector<16x128xbf16>, vector<128x32xbf16>, vector<16x32xf32> -> vector<16x32xf32>
    %c0_115 = arith.constant 0 : index
    %c0_116 = arith.constant 0 : index
    %280 = vector.load %arg35[%c0_115, %c0_116] : memref<1x32xf32, #tpu.memory_space<vmem>>, vector<1x32xf32>
    %281 = vector.broadcast %280 : vector<1x32xf32> to vector<16x32xf32>
    %282 = arith.addf %279, %281 : vector<16x32xf32>
    %283 = vector.shape_cast %282 : vector<16x32xf32> to vector<2x8x32xf32>
    %284 = arith.addf %232, %283 : vector<2x8x32xf32>
    %c0_117 = arith.constant 0 : index
    %c0_118 = arith.constant 0 : index
    %c0_119 = arith.constant 0 : index
    %285 = vector.load %arg36[%c0_117, %c0_118, %c0_119] : memref<2x8x32xf32, #tpu.memory_space<vmem>>, vector<2x8x32xf32>
    tpu.vector_store %arg36[%c0_117, %c0_118, %c0_119], %284 {strides = array<i32>} : memref<2x8x32xf32, #tpu.memory_space<vmem>>, vector<2x8x32xf32>,
    return
  }
  func.func @transform_0(%arg0: i32) -> (i32, i32, i32) {
    %c0_i32 = arith.constant 0 : i32
    %c0_i32_0 = arith.constant 0 : i32
    %c0_i32_1 = arith.constant 0 : i32
    return %arg0, %c0_i32, %c0_i32_0 : i32, i32, i32
  }
  func.func @transform_1(%arg0: i32) -> (i32, i32, i32) {
    %c0_i32 = arith.constant 0 : i32
    %c0_i32_0 = arith.constant 0 : i32
    %c0_i32_1 = arith.constant 0 : i32
    return %arg0, %c0_i32, %c0_i32_0 : i32, i32, i32
  }
  func.func @transform_2(%arg0: i32) -> (i32, i32, i32) {
    %c0_i32 = arith.constant 0 : i32
    %c0_i32_0 = arith.constant 0 : i32
    %c0_i32_1 = arith.constant 0 : i32
    return %arg0, %c0_i32, %c0_i32_0 : i32, i32, i32
  }
  func.func @transform_3(%arg0: i32) -> (i32, i32, i32) {
    %c0_i32 = arith.constant 0 : i32
    %c0_i32_0 = arith.constant 0 : i32
    %c0_i32_1 = arith.constant 0 : i32
    return %arg0, %c0_i32, %c0_i32_0 : i32, i32, i32
  }
  func.func @transform_4(%arg0: i32) -> (i32, i32, i32) {
    %c0_i32 = arith.constant 0 : i32
    %c0_i32_0 = arith.constant 0 : i32
    %c0_i32_1 = arith.constant 0 : i32
    return %arg0, %c0_i32, %c0_i32_0 : i32, i32, i32
  }
  func.func @transform_5(%arg0: i32) -> (i32, i32, i32) {
    %c0_i32 = arith.constant 0 : i32
    %c0_i32_0 = arith.constant 0 : i32
    %c0_i32_1 = arith.constant 0 : i32
    %c0_i32_2 = arith.constant 0 : i32
    return %c0_i32, %c0_i32_0, %c0_i32_1 : i32, i32, i32
  }
  func.func @transform_6(%arg0: i32) -> (i32, i32, i32) {
    %c0_i32 = arith.constant 0 : i32
    %c0_i32_0 = arith.constant 0 : i32
    %c0_i32_1 = arith.constant 0 : i32
    %c0_i32_2 = arith.constant 0 : i32
    return %c0_i32, %c0_i32_0, %c0_i32_1 : i32, i32, i32
  }
  func.func @transform_7(%arg0: i32) -> (i32, i32) {
    %c0_i32 = arith.constant 0 : i32
    %c0_i32_0 = arith.constant 0 : i32
    %c0_i32_1 = arith.constant 0 : i32
    return %c0_i32, %c0_i32_0 : i32, i32
  }
  func.func @transform_8(%arg0: i32) -> (i32, i32) {
    %c0_i32 = arith.constant 0 : i32
    %c0_i32_0 = arith.constant 0 : i32
    %c0_i32_1 = arith.constant 0 : i32
    return %c0_i32, %c0_i32_0 : i32, i32
  }
  func.func @transform_9(%arg0: i32) -> (i32, i32) {
    %c0_i32 = arith.constant 0 : i32
    %c0_i32_0 = arith.constant 0 : i32
    %c0_i32_1 = arith.constant 0 : i32
    return %c0_i32, %c0_i32_0 : i32, i32
  }
  func.func @transform_10(%arg0: i32) -> (i32, i32) {
    %c0_i32 = arith.constant 0 : i32
    %c0_i32_0 = arith.constant 0 : i32
    %c0_i32_1 = arith.constant 0 : i32
    return %c0_i32, %c0_i32_0 : i32, i32
  }
  func.func @transform_11(%arg0: i32) -> (i32, i32) {
    %c0_i32 = arith.constant 0 : i32
    %c0_i32_0 = arith.constant 0 : i32
    %c0_i32_1 = arith.constant 0 : i32
    return %c0_i32, %c0_i32_0 : i32, i32
  }
  func.func @transform_12(%arg0: i32) -> (i32, i32) {
    %c0_i32 = arith.constant 0 : i32
    %c0_i32_0 = arith.constant 0 : i32
    %c0_i32_1 = arith.constant 0 : i32
    return %c0_i32, %c0_i32_0 : i32, i32
  }
  func.func @transform_13(%arg0: i32) -> (i32, i32) {
    %c0_i32 = arith.constant 0 : i32
    %c0_i32_0 = arith.constant 0 : i32
    %c0_i32_1 = arith.constant 0 : i32
    return %c0_i32, %c0_i32_0 : i32, i32
  }
  func.func @transform_14(%arg0: i32) -> (i32, i32) {
    %c0_i32 = arith.constant 0 : i32
    %c0_i32_0 = arith.constant 0 : i32
    %c0_i32_1 = arith.constant 0 : i32
    return %c0_i32, %c0_i32_0 : i32, i32
  }
  func.func @transform_15(%arg0: i32) -> (i32, i32) {
    %c0_i32 = arith.constant 0 : i32
    %c0_i32_0 = arith.constant 0 : i32
    %c0_i32_1 = arith.constant 0 : i32
    return %c0_i32, %c0_i32_0 : i32, i32
  }
  func.func @transform_16(%arg0: i32) -> (i32, i32) {
    %c0_i32 = arith.constant 0 : i32
    %c0_i32_0 = arith.constant 0 : i32
    %c0_i32_1 = arith.constant 0 : i32
    return %c0_i32, %c0_i32_0 : i32, i32
  }
  func.func @transform_17(%arg0: i32) -> (i32, i32) {
    %c0_i32 = arith.constant 0 : i32
    %c0_i32_0 = arith.constant 0 : i32
    %c0_i32_1 = arith.constant 0 : i32
    return %c0_i32, %c0_i32_0 : i32, i32
  }
  func.func @transform_18(%arg0: i32) -> (i32, i32) {
    %c0_i32 = arith.constant 0 : i32
    %c0_i32_0 = arith.constant 0 : i32
    %c0_i32_1 = arith.constant 0 : i32
    return %c0_i32, %c0_i32_0 : i32, i32
  }
  func.func @transform_19(%arg0: i32) -> (i32, i32) {
    %c0_i32 = arith.constant 0 : i32
    %c0_i32_0 = arith.constant 0 : i32
    %c0_i32_1 = arith.constant 0 : i32
    return %c0_i32, %c0_i32_0 : i32, i32
  }
  func.func @transform_20(%arg0: i32) -> (i32, i32) {
    %c0_i32 = arith.constant 0 : i32
    %c0_i32_0 = arith.constant 0 : i32
    %c0_i32_1 = arith.constant 0 : i32
    return %c0_i32, %c0_i32_0 : i32, i32
  }
  func.func @transform_21(%arg0: i32) -> (i32, i32) {
    %c0_i32 = arith.constant 0 : i32
    %c0_i32_0 = arith.constant 0 : i32
    %c0_i32_1 = arith.constant 0 : i32
    return %c0_i32, %c0_i32_0 : i32, i32
  }
  func.func @transform_22(%arg0: i32) -> (i32, i32) {
    %c0_i32 = arith.constant 0 : i32
    %c0_i32_0 = arith.constant 0 : i32
    %c0_i32_1 = arith.constant 0 : i32
    return %c0_i32, %c0_i32_0 : i32, i32
  }
  func.func @transform_23(%arg0: i32) -> (i32, i32) {
    %c0_i32 = arith.constant 0 : i32
    %c0_i32_0 = arith.constant 0 : i32
    %c0_i32_1 = arith.constant 0 : i32
    return %c0_i32, %c0_i32_0 : i32, i32
  }
  func.func @transform_24(%arg0: i32) -> (i32, i32) {
    %c0_i32 = arith.constant 0 : i32
    %c0_i32_0 = arith.constant 0 : i32
    %c0_i32_1 = arith.constant 0 : i32
    return %c0_i32, %c0_i32_0 : i32, i32
  }
  func.func @transform_25(%arg0: i32) -> (i32, i32) {
    %c0_i32 = arith.constant 0 : i32
    %c0_i32_0 = arith.constant 0 : i32
    %c0_i32_1 = arith.constant 0 : i32
    return %c0_i32, %c0_i32_0 : i32, i32
  }
  func.func @transform_26(%arg0: i32) -> (i32, i32) {
    %c0_i32 = arith.constant 0 : i32
    %c0_i32_0 = arith.constant 0 : i32
    %c0_i32_1 = arith.constant 0 : i32
    return %c0_i32, %c0_i32_0 : i32, i32
  }
  func.func @transform_27(%arg0: i32) -> (i32, i32) {
    %c0_i32 = arith.constant 0 : i32
    %c0_i32_0 = arith.constant 0 : i32
    %c0_i32_1 = arith.constant 0 : i32
    return %c0_i32, %c0_i32_0 : i32, i32
  }
  func.func @transform_28(%arg0: i32) -> (i32, i32) {
    %c0_i32 = arith.constant 0 : i32
    %c0_i32_0 = arith.constant 0 : i32
    %c0_i32_1 = arith.constant 0 : i32
    return %c0_i32, %c0_i32_0 : i32, i32
  }
  func.func @transform_29(%arg0: i32) -> (i32, i32) {
    %c0_i32 = arith.constant 0 : i32
    %c0_i32_0 = arith.constant 0 : i32
    %c0_i32_1 = arith.constant 0 : i32
    return %c0_i32, %c0_i32_0 : i32, i32
  }
  func.func @transform_30(%arg0: i32) -> (i32, i32) {
    %c0_i32 = arith.constant 0 : i32
    %c0_i32_0 = arith.constant 0 : i32
    %c0_i32_1 = arith.constant 0 : i32
    return %c0_i32, %c0_i32_0 : i32, i32
  }
  func.func @transform_31(%arg0: i32) -> (i32, i32) {
    %c0_i32 = arith.constant 0 : i32
    %c0_i32_0 = arith.constant 0 : i32
    %c0_i32_1 = arith.constant 0 : i32
    return %c0_i32, %c0_i32_0 : i32, i32
  }
  func.func @transform_32(%arg0: i32) -> (i32, i32) {
    %c0_i32 = arith.constant 0 : i32
    %c0_i32_0 = arith.constant 0 : i32
    %c0_i32_1 = arith.constant 0 : i32
    return %c0_i32, %c0_i32_0 : i32, i32
  }
  func.func @transform_33(%arg0: i32) -> (i32, i32) {
    %c0_i32 = arith.constant 0 : i32
    %c0_i32_0 = arith.constant 0 : i32
    %c0_i32_1 = arith.constant 0 : i32
    return %c0_i32, %c0_i32_0 : i32, i32
  }
  func.func @transform_34(%arg0: i32) -> (i32, i32) {
    %c0_i32 = arith.constant 0 : i32
    %c0_i32_0 = arith.constant 0 : i32
    %c0_i32_1 = arith.constant 0 : i32
    return %c0_i32, %c0_i32_0 : i32, i32
  }
  func.func @transform_35(%arg0: i32) -> (i32, i32, i32) {
    %c0_i32 = arith.constant 0 : i32
    %c0_i32_0 = arith.constant 0 : i32
    %c0_i32_1 = arith.constant 0 : i32
    return %arg0, %c0_i32, %c0_i32_0 : i32, i32, i32
  }
}

</mosaic_0001>

<llo_original>
// kernel: tpu_custom_call.1
$region0: #{tpu_custom_call.1}
  #allocation0 [shape = 'u32[]', space=smem, size = 0x4, offset = 0x4, fixed_abs, tag = 'smem constant byte address 0x4 - core index']
  #allocation1 [shape = 'u32[144,128]{1,0:T(1,128)}', space=vmem, size = 0x12000, scoped, tag = 'internal scratch']
  %s0 = inlined_call_operand.smem [shape: u32[36], index: -1, kind: input, shape index: {}]
  %s1 = sld [smem:[%s0]]
  %s2 = scalar_lea.smem %s0, 1
  %s3 = sld [smem:[%s2]]
  %s4 = scalar_lea.smem %s0, 2
  %s5 = sld [smem:[%s4]]
  %s6 = scalar_lea.smem %s0, 3
  %s7 = sld [smem:[%s6]]
  %s8 = scalar_lea.smem %s0, 4
  %s9 = sld [smem:[%s8]]
  %s10 = scalar_lea.smem %s0, 5
  %s11 = sld [smem:[%s10]]
  %s12 = scalar_lea.smem %s0, 6
  %s13 = sld [smem:[%s12]]
  %s14 = scalar_lea.smem %s0, 7
  %s15 = sld [smem:[%s14]]
  %s16 = scalar_lea.smem %s0, 8
  %s17 = sld [smem:[%s16]]
  %s18 = scalar_lea.smem %s0, 9
  %s19 = sld [smem:[%s18]]
  %s20 = scalar_lea.smem %s0, 10
  %s21 = sld [smem:[%s20]]
  %s22 = scalar_lea.smem %s0, 11
  %s23 = sld [smem:[%s22]]
  %s24 = scalar_lea.smem %s0, 12
  %s25 = sld [smem:[%s24]]
  %s26 = scalar_lea.smem %s0, 13
  %s27 = sld [smem:[%s26]]
  %s28 = scalar_lea.smem %s0, 14
  %s29 = sld [smem:[%s28]]
  %s30 = scalar_lea.smem %s0, 15
  %s31 = sld [smem:[%s30]]
  %s32 = scalar_lea.smem %s0, 16
  %s33 = sld [smem:[%s32]]
  %s34 = scalar_lea.smem %s0, 17
  %s35 = sld [smem:[%s34]]
  %s36 = scalar_lea.smem %s0, 18
  %s37 = sld [smem:[%s36]]
  %s38 = scalar_lea.smem %s0, 19
  %s39 = sld [smem:[%s38]]
  %s40 = scalar_lea.smem %s0, 20
  %s41 = sld [smem:[%s40]]
  %s42 = scalar_lea.smem %s0, 21
  %s43 = sld [smem:[%s42]]
  %s44 = scalar_lea.smem %s0, 22
  %s45 = sld [smem:[%s44]]
  %s46 = scalar_lea.smem %s0, 23
  %s47 = sld [smem:[%s46]]
  %s48 = scalar_lea.smem %s0, 24
  %s49 = sld [smem:[%s48]]
  %s50 = scalar_lea.smem %s0, 25
  %s51 = sld [smem:[%s50]]
  %s52 = scalar_lea.smem %s0, 26
  %s53 = sld [smem:[%s52]]
  %s54 = scalar_lea.smem %s0, 27
  %s55 = sld [smem:[%s54]]
  %s56 = scalar_lea.smem %s0, 28
  %s57 = sld [smem:[%s56]]
  %s58 = scalar_lea.smem %s0, 29
  %s59 = sld [smem:[%s58]]
  %s60 = scalar_lea.smem %s0, 30
  %s61 = sld [smem:[%s60]]
  %s62 = scalar_lea.smem %s0, 31
  %s63 = sld [smem:[%s62]]
  %s64 = scalar_lea.smem %s0, 32
  %s65 = sld [smem:[%s64]]
  %s66 = scalar_lea.smem %s0, 33
  %s67 = sld [smem:[%s66]]
  %s68 = scalar_lea.smem %s0, 34
  %s69 = sld [smem:[%s68]]
  %s70 = scalar_lea.smem %s0, 35
  %s71 = sld [smem:[%s70]]
  %s72 = sld [smem:[#allocation0]]
  $region230: #{tpu_custom_call.1} parent=0
    _
  %s74 = ssub.s32 1, %s72
  %s75 = scalar_select 0, %s74, %s72
  $region1: #{tpu_custom_call.1} parent=0
    #allocation2 [shape = 'u8[4096]{0}', space=vmem, size = 0x1000, scoped, tag = 'input window, operand 5, single buffered']
    #allocation3 [shape = 's32[1]{0}', space=sflag, size = 0x4, scoped, tag = 'scoped memory for tpu_custom_call.1']
    #allocation4 [shape = 's32[1]{0}', space=sflag, size = 0x4, scoped, tag = 'scoped memory for tpu_custom_call.1']
    #allocation5 [shape = 'u8[1024]{0}', space=vmem, size = 0x400, scoped, tag = 'input window, operand 6, single buffered']
    #allocation6 [shape = 's32[1]{0}', space=sflag, size = 0x4, scoped, tag = 'scoped memory for tpu_custom_call.1']
    #allocation7 [shape = 'u8[512]{0}', space=vmem, size = 0x400, scoped, tag = 'input window, operand 7, single buffered']
    #allocation8 [shape = 'u8[512]{0}', space=vmem, size = 0x400, scoped, tag = 'input window, operand 8, single buffered']
    #allocation9 [shape = 's32[1]{0}', space=sflag, size = 0x4, scoped, tag = 'scoped memory for tpu_custom_call.1']
    #allocation10 [shape = 'u8[512]{0}', space=vmem, size = 0x400, scoped, tag = 'input window, operand 10, single buffered']
    #allocation11 [shape = 'u8[8192]{0}', space=vmem, size = 0x2000, scoped, tag = 'input window, operand 11, single buffered']
    #allocation12 [shape = 's32[1]{0}', space=sflag, size = 0x4, scoped, tag = 'scoped memory for tpu_custom_call.1']
    #allocation13 [shape = 'u8[512]{0}', space=vmem, size = 0x400, scoped, tag = 'input window, operand 12, single buffered']
    #allocation14 [shape = 'u8[512]{0}', space=vmem, size = 0x400, scoped, tag = 'input window, operand 14, single buffered']
    #allocation15 [shape = 's32[1]{0}', space=sflag, size = 0x4, scoped, tag = 'scoped memory for tpu_custom_call.1']
    #allocation16 [shape = 'u8[8192]{0}', space=vmem, size = 0x2000, scoped, tag = 'input window, operand 15, single buffered']
    #allocation17 [shape = 'u8[512]{0}', space=vmem, size = 0x400, scoped, tag = 'input window, operand 16, single buffered']
    #allocation18 [shape = 's32[1]{0}', space=sflag, size = 0x4, scoped, tag = 'scoped memory for tpu_custom_call.1']
    #allocation19 [shape = 'u8[512]{0}', space=vmem, size = 0x400, scoped, tag = 'input window, operand 17, single buffered']
    #allocation20 [shape = 'u8[512]{0}', space=vmem, size = 0x400, scoped, tag = 'input window, operand 19, single buffered']
    #allocation21 [shape = 's32[1]{0}', space=sflag, size = 0x4, scoped, tag = 'scoped memory for tpu_custom_call.1']
    #allocation22 [shape = 'u8[512]{0}', space=vmem, size = 0x400, scoped, tag = 'input window, operand 20, single buffered']
    #allocation23 [shape = 'u8[512]{0}', space=vmem, size = 0x400, scoped, tag = 'input window, operand 22, single buffered']
    #allocation24 [shape = 's32[1]{0}', space=sflag, size = 0x4, scoped, tag = 'scoped memory for tpu_custom_call.1']
    #allocation25 [shape = 'u8[512]{0}', space=vmem, size = 0x400, scoped, tag = 'input window, operand 24, single buffered']
    #allocation26 [shape = 'u8[8192]{0}', space=vmem, size = 0x2000, scoped, tag = 'input window, operand 25, single buffered']
    #allocation27 [shape = 's32[1]{0}', space=sflag, size = 0x4, scoped, tag = 'scoped memory for tpu_custom_call.1']
    #allocation28 [shape = 'u8[512]{0}', space=vmem, size = 0x400, scoped, tag = 'input window, operand 26, single buffered']
    #allocation29 [shape = 'u8[512]{0}', space=vmem, size = 0x400, scoped, tag = 'input window, operand 28, single buffered']
    #allocation30 [shape = 's32[1]{0}', space=sflag, size = 0x4, scoped, tag = 'scoped memory for tpu_custom_call.1']
    #allocation31 [shape = 'u8[512]{0}', space=vmem, size = 0x400, scoped, tag = 'input window, operand 29, single buffered']
    #allocation32 [shape = 'u8[512]{0}', space=vmem, size = 0x400, scoped, tag = 'input window, operand 30, single buffered']
    #allocation33 [shape = 's32[1]{0}', space=sflag, size = 0x4, scoped, tag = 'scoped memory for tpu_custom_call.1']
    #allocation34 [shape = 'u8[8192]{0}', space=vmem, size = 0x2000, scoped, tag = 'output window, operand 0, single buffered']
    %76 = vsyncpa [#allocation3], 0
    %77 = vsyncpa [#allocation6], 0
    %78 = vsyncpa [#allocation9], 0
    %79 = vsyncpa [#allocation12], 0
    %80 = vsyncpa [#allocation15], 0
    %81 = vsyncpa [#allocation18], 0
    %82 = vsyncpa [#allocation21], 0
    %83 = vsyncpa [#allocation24], 0
    %84 = vsyncpa [#allocation27], 0
    %85 = vsyncpa [#allocation30], 0
    %86 = vsyncpa [#allocation33], 0
    %87 = vsyncpa [#allocation4], 0
    // Predicated region
    $region2: #{tpu_custom_call.1} parent=1 // pred_check
      _
    $region3: #{tpu_custom_call.1} parent=1 // pred_check_branch
      %89 = sbr.rel (0) target = $region5
    $region4: #{tpu_custom_call.1} parent=1 // pred_region
      _
    $region5: #{tpu_custom_call.1} parent=1 // pred_fallthru
      _
    // Predicated region
    $region6: #{tpu_custom_call.1} parent=1 // pred_check
      _
    $region7: #{tpu_custom_call.1} parent=1 // pred_check_branch
      %91 = sbr.rel (0) target = $region9
    $region8: #{tpu_custom_call.1} parent=1 // pred_region
      _
    $region9: #{tpu_custom_call.1} parent=1 // pred_fallthru
      _
    // Predicated region
    $region10: #{tpu_custom_call.1} parent=1 // pred_check
      _
    $region11: #{tpu_custom_call.1} parent=1 // pred_check_branch
      %93 = sbr.rel (0) target = $region13
    $region12: #{tpu_custom_call.1} parent=1 // pred_region
      _
    $region13: #{tpu_custom_call.1} parent=1 // pred_fallthru
      _
    // Predicated region
    $region14: #{tpu_custom_call.1} parent=1 // pred_check
      _
    $region15: #{tpu_custom_call.1} parent=1 // pred_check_branch
      %95 = sbr.rel (0) target = $region17
    $region16: #{tpu_custom_call.1} parent=1 // pred_region
      _
    $region17: #{tpu_custom_call.1} parent=1 // pred_fallthru
      _
    // Predicated region
    $region18: #{tpu_custom_call.1} parent=1 // pred_check
      _
    $region19: #{tpu_custom_call.1} parent=1 // pred_check_branch
      %97 = sbr.rel (0) target = $region21
    $region20: #{tpu_custom_call.1} parent=1 // pred_region
      _
    $region21: #{tpu_custom_call.1} parent=1 // pred_fallthru
      _
    // Predicated region
    $region22: #{tpu_custom_call.1} parent=1 // pred_check
      _
    $region23: #{tpu_custom_call.1} parent=1 // pred_check_branch
      %99 = sbr.rel (0) target = $region25
    $region24: #{tpu_custom_call.1} parent=1 // pred_region
      %s101 = ssub.s32 128, 128
      %102 = vsyncadd [#allocation3], %s101
      %s104 = sshll.u32 [#allocation2], 4
      %s105 = int_to_ptr.vmem [resolvable:$true] %s104
      %107 = dma.hbm_to_vmem [thread:$0]  %s11, 128, %s105, [#allocation3]
    $region25: #{tpu_custom_call.1} parent=1 // pred_fallthru
      _
    // Predicated region
    $region26: #{tpu_custom_call.1} parent=1 // pred_check
      _
    $region27: #{tpu_custom_call.1} parent=1 // pred_check_branch
      %109 = sbr.rel (0) target = $region29
    $region28: #{tpu_custom_call.1} parent=1 // pred_region
      %s111 = ssub.s32 32, 32
      %112 = vsyncadd [#allocation6], %s111
      %s114 = sshll.u32 [#allocation5], 4
      %s115 = int_to_ptr.vmem [resolvable:$true] %s114
      %117 = dma.hbm_to_vmem [thread:$0]  %s13, 32, %s115, [#allocation6]
    $region29: #{tpu_custom_call.1} parent=1 // pred_fallthru
      _
    // Predicated region
    $region30: #{tpu_custom_call.1} parent=1 // pred_check
      _
    $region31: #{tpu_custom_call.1} parent=1 // pred_check_branch
      %119 = sbr.rel (0) target = $region33
    $region32: #{tpu_custom_call.1} parent=1 // pred_region
      %s121 = ssub.s32 16, 16
      %122 = vsyncadd [#allocation6], %s121
      %s124 = sshll.u32 [#allocation7], 4
      %s125 = int_to_ptr.vmem [resolvable:$true] %s124
      %127 = dma.hbm_to_vmem [thread:$0]  %s15, 16, %s125, [#allocation6]
    $region33: #{tpu_custom_call.1} parent=1 // pred_fallthru
      _
    // Predicated region
    $region34: #{tpu_custom_call.1} parent=1 // pred_check
      _
    $region35: #{tpu_custom_call.1} parent=1 // pred_check_branch
      %129 = sbr.rel (0) target = $region37
    $region36: #{tpu_custom_call.1} parent=1 // pred_region
      %s131 = ssub.s32 16, 16
      %132 = vsyncadd [#allocation9], %s131
      %s134 = sshll.u32 [#allocation8], 4
      %s135 = int_to_ptr.vmem [resolvable:$true] %s134
      %137 = dma.hbm_to_vmem [thread:$0]  %s17, 16, %s135, [#allocation9]
    $region37: #{tpu_custom_call.1} parent=1 // pred_fallthru
      _
    // Predicated region
    $region38: #{tpu_custom_call.1} parent=1 // pred_check
      _
    $region39: #{tpu_custom_call.1} parent=1 // pred_check_branch
      %139 = sbr.rel (0) target = $region41
    $region40: #{tpu_custom_call.1} parent=1 // pred_region
      _
    $region41: #{tpu_custom_call.1} parent=1 // pred_fallthru
      _
    // Predicated region
    $region42: #{tpu_custom_call.1} parent=1 // pred_check
      _
    $region43: #{tpu_custom_call.1} parent=1 // pred_check_branch
      %141 = sbr.rel (0) target = $region45
    $region44: #{tpu_custom_call.1} parent=1 // pred_region
      %s143 = ssub.s32 16, 16
      %144 = vsyncadd [#allocation9], %s143
      %s146 = sshll.u32 [#allocation10], 4
      %s147 = int_to_ptr.vmem [resolvable:$true] %s146
      %149 = dma.hbm_to_vmem [thread:$0]  %s21, 16, %s147, [#allocation9]
    $region45: #{tpu_custom_call.1} parent=1 // pred_fallthru
      _
    // Predicated region
    $region46: #{tpu_custom_call.1} parent=1 // pred_check
      _
    $region47: #{tpu_custom_call.1} parent=1 // pred_check_branch
      %151 = sbr.rel (0) target = $region49
    $region48: #{tpu_custom_call.1} parent=1 // pred_region
      %s153 = ssub.s32 256, 256
      %154 = vsyncadd [#allocation12], %s153
      %s155 = sshll.u32 [#allocation11], 4
      %s156 = int_to_ptr.vmem [resolvable:$true] %s155
      %161 = dma.hbm_to_vmem [thread:$0]  %s23, 256, %s156, [#allocation12], 64, 64, 4
    $region49: #{tpu_custom_call.1} parent=1 // pred_fallthru
      _
    // Predicated region
    $region50: #{tpu_custom_call.1} parent=1 // pred_check
      _
    $region51: #{tpu_custom_call.1} parent=1 // pred_check_branch
      %163 = sbr.rel (0) target = $region53
    $region52: #{tpu_custom_call.1} parent=1 // pred_region
      %s165 = ssub.s32 16, 16
      %166 = vsyncadd [#allocation12], %s165
      %s168 = sshll.u32 [#allocation13], 4
      %s169 = int_to_ptr.vmem [resolvable:$true] %s168
      %171 = dma.hbm_to_vmem [thread:$0]  %s25, 16, %s169, [#allocation12]
    $region53: #{tpu_custom_call.1} parent=1 // pred_fallthru
      _
    // Predicated region
    $region54: #{tpu_custom_call.1} parent=1 // pred_check
      _
    $region55: #{tpu_custom_call.1} parent=1 // pred_check_branch
      %173 = sbr.rel (0) target = $region57
    $region56: #{tpu_custom_call.1} parent=1 // pred_region
      _
    $region57: #{tpu_custom_call.1} parent=1 // pred_fallthru
      _
    // Predicated region
    $region58: #{tpu_custom_call.1} parent=1 // pred_check
      _
    $region59: #{tpu_custom_call.1} parent=1 // pred_check_branch
      %175 = sbr.rel (0) target = $region61
    $region60: #{tpu_custom_call.1} parent=1 // pred_region
      %s177 = ssub.s32 16, 16
      %178 = vsyncadd [#allocation15], %s177
      %s180 = sshll.u32 [#allocation14], 4
      %s181 = int_to_ptr.vmem [resolvable:$true] %s180
      %183 = dma.hbm_to_vmem [thread:$0]  %s29, 16, %s181, [#allocation15]
    $region61: #{tpu_custom_call.1} parent=1 // pred_fallthru
      _
    // Predicated region
    $region62: #{tpu_custom_call.1} parent=1 // pred_check
      _
    $region63: #{tpu_custom_call.1} parent=1 // pred_check_branch
      %185 = sbr.rel (0) target = $region65
    $region64: #{tpu_custom_call.1} parent=1 // pred_region
      %s187 = ssub.s32 256, 256
      %188 = vsyncadd [#allocation15], %s187
      %s189 = sshll.u32 [#allocation16], 4
      %s190 = int_to_ptr.vmem [resolvable:$true] %s189
      %195 = dma.hbm_to_vmem [thread:$0]  %s31, 256, %s190, [#allocation15], 64, 64, 4
    $region65: #{tpu_custom_call.1} parent=1 // pred_fallthru
      _
    // Predicated region
    $region66: #{tpu_custom_call.1} parent=1 // pred_check
      _
    $region67: #{tpu_custom_call.1} parent=1 // pred_check_branch
      %197 = sbr.rel (0) target = $region69
    $region68: #{tpu_custom_call.1} parent=1 // pred_region
      %s199 = ssub.s32 16, 16
      %200 = vsyncadd [#allocation18], %s199
      %s202 = sshll.u32 [#allocation17], 4
      %s203 = int_to_ptr.vmem [resolvable:$true] %s202
      %205 = dma.hbm_to_vmem [thread:$0]  %s33, 16, %s203, [#allocation18]
    $region69: #{tpu_custom_call.1} parent=1 // pred_fallthru
      _
    // Predicated region
    $region70: #{tpu_custom_call.1} parent=1 // pred_check
      _
    $region71: #{tpu_custom_call.1} parent=1 // pred_check_branch
      %207 = sbr.rel (0) target = $region73
    $region72: #{tpu_custom_call.1} parent=1 // pred_region
      %s209 = ssub.s32 16, 16
      %210 = vsyncadd [#allocation18], %s209
      %s212 = sshll.u32 [#allocation19], 4
      %s213 = int_to_ptr.vmem [resolvable:$true] %s212
      %215 = dma.hbm_to_vmem [thread:$0]  %s35, 16, %s213, [#allocation18]
    $region73: #{tpu_custom_call.1} parent=1 // pred_fallthru
      _
    // Predicated region
    $region74: #{tpu_custom_call.1} parent=1 // pred_check
      _
    $region75: #{tpu_custom_call.1} parent=1 // pred_check_branch
      %217 = sbr.rel (0) target = $region77
    $region76: #{tpu_custom_call.1} parent=1 // pred_region
      _
    $region77: #{tpu_custom_call.1} parent=1 // pred_fallthru
      _
    // Predicated region
    $region78: #{tpu_custom_call.1} parent=1 // pred_check
      _
    $region79: #{tpu_custom_call.1} parent=1 // pred_check_branch
      %219 = sbr.rel (0) target = $region81
    $region80: #{tpu_custom_call.1} parent=1 // pred_region
      %s221 = ssub.s32 16, 16
      %222 = vsyncadd [#allocation21], %s221
      %s224 = sshll.u32 [#allocation20], 4
      %s225 = int_to_ptr.vmem [resolvable:$true] %s224
      %227 = dma.hbm_to_vmem [thread:$0]  %s39, 16, %s225, [#allocation21]
    $region81: #{tpu_custom_call.1} parent=1 // pred_fallthru
      _
    // Predicated region
    $region82: #{tpu_custom_call.1} parent=1 // pred_check
      _
    $region83: #{tpu_custom_call.1} parent=1 // pred_check_branch
      %229 = sbr.rel (0) target = $region85
    $region84: #{tpu_custom_call.1} parent=1 // pred_region
      %s231 = ssub.s32 16, 16
      %232 = vsyncadd [#allocation21], %s231
      %s234 = sshll.u32 [#allocation22], 4
      %s235 = int_to_ptr.vmem [resolvable:$true] %s234
      %237 = dma.hbm_to_vmem [thread:$0]  %s41, 16, %s235, [#allocation21]
    $region85: #{tpu_custom_call.1} parent=1 // pred_fallthru
      _
    // Predicated region
    $region86: #{tpu_custom_call.1} parent=1 // pred_check
      _
    $region87: #{tpu_custom_call.1} parent=1 // pred_check_branch
      %239 = sbr.rel (0) target = $region89
    $region88: #{tpu_custom_call.1} parent=1 // pred_region
      _
    $region89: #{tpu_custom_call.1} parent=1 // pred_fallthru
      _
    // Predicated region
    $region90: #{tpu_custom_call.1} parent=1 // pred_check
      _
    $region91: #{tpu_custom_call.1} parent=1 // pred_check_branch
      %241 = sbr.rel (0) target = $region93
    $region92: #{tpu_custom_call.1} parent=1 // pred_region
      %s243 = ssub.s32 16, 16
      %244 = vsyncadd [#allocation24], %s243
      %s246 = sshll.u32 [#allocation23], 4
      %s247 = int_to_ptr.vmem [resolvable:$true] %s246
      %249 = dma.hbm_to_vmem [thread:$0]  %s45, 16, %s247, [#allocation24]
    $region93: #{tpu_custom_call.1} parent=1 // pred_fallthru
      _
    // Predicated region
    $region94: #{tpu_custom_call.1} parent=1 // pred_check
      _
    $region95: #{tpu_custom_call.1} parent=1 // pred_check_branch
      %251 = sbr.rel (0) target = $region97
    $region96: #{tpu_custom_call.1} parent=1 // pred_region
      _
    $region97: #{tpu_custom_call.1} parent=1 // pred_fallthru
      _
    // Predicated region
    $region98: #{tpu_custom_call.1} parent=1 // pred_check
      _
    $region99: #{tpu_custom_call.1} parent=1 // pred_check_branch
      %253 = sbr.rel (0) target = $region101
    $region100: #{tpu_custom_call.1} parent=1 // pred_region
      %s255 = ssub.s32 16, 16
      %256 = vsyncadd [#allocation24], %s255
      %s258 = sshll.u32 [#allocation25], 4
      %s259 = int_to_ptr.vmem [resolvable:$true] %s258
      %261 = dma.hbm_to_vmem [thread:$0]  %s49, 16, %s259, [#allocation24]
    $region101: #{tpu_custom_call.1} parent=1 // pred_fallthru
      _
    // Predicated region
    $region102: #{tpu_custom_call.1} parent=1 // pred_check
      _
    $region103: #{tpu_custom_call.1} parent=1 // pred_check_branch
      %263 = sbr.rel (0) target = $region105
    $region104: #{tpu_custom_call.1} parent=1 // pred_region
      %s265 = ssub.s32 256, 256
      %266 = vsyncadd [#allocation27], %s265
      %s267 = sshll.u32 [#allocation26], 4
      %s268 = int_to_ptr.vmem [resolvable:$true] %s267
      %273 = dma.hbm_to_vmem [thread:$0]  %s51, 256, %s268, [#allocation27], 64, 64, 4
    $region105: #{tpu_custom_call.1} parent=1 // pred_fallthru
      _
    // Predicated region
    $region106: #{tpu_custom_call.1} parent=1 // pred_check
      _
    $region107: #{tpu_custom_call.1} parent=1 // pred_check_branch
      %275 = sbr.rel (0) target = $region109
    $region108: #{tpu_custom_call.1} parent=1 // pred_region
      %s277 = ssub.s32 16, 16
      %278 = vsyncadd [#allocation27], %s277
      %s280 = sshll.u32 [#allocation28], 4
      %s281 = int_to_ptr.vmem [resolvable:$true] %s280
      %283 = dma.hbm_to_vmem [thread:$0]  %s53, 16, %s281, [#allocation27]
    $region109: #{tpu_custom_call.1} parent=1 // pred_fallthru
      _
    // Predicated region
    $region110: #{tpu_custom_call.1} parent=1 // pred_check
      _
    $region111: #{tpu_custom_call.1} parent=1 // pred_check_branch
      %285 = sbr.rel (0) target = $region113
    $region112: #{tpu_custom_call.1} parent=1 // pred_region
      _
    $region113: #{tpu_custom_call.1} parent=1 // pred_fallthru
      _
    // Predicated region
    $region114: #{tpu_custom_call.1} parent=1 // pred_check
      _
    $region115: #{tpu_custom_call.1} parent=1 // pred_check_branch
      %287 = sbr.rel (0) target = $region117
    $region116: #{tpu_custom_call.1} parent=1 // pred_region
      %s289 = ssub.s32 16, 16
      %290 = vsyncadd [#allocation30], %s289
      %s292 = sshll.u32 [#allocation29], 4
      %s293 = int_to_ptr.vmem [resolvable:$true] %s292
      %295 = dma.hbm_to_vmem [thread:$0]  %s57, 16, %s293, [#allocation30]
    $region117: #{tpu_custom_call.1} parent=1 // pred_fallthru
      _
    // Predicated region
    $region118: #{tpu_custom_call.1} parent=1 // pred_check
      _
    $region119: #{tpu_custom_call.1} parent=1 // pred_check_branch
      %297 = sbr.rel (0) target = $region121
    $region120: #{tpu_custom_call.1} parent=1 // pred_region
      %s299 = ssub.s32 16, 16
      %300 = vsyncadd [#allocation30], %s299
      %s302 = sshll.u32 [#allocation31], 4
      %s303 = int_to_ptr.vmem [resolvable:$true] %s302
      %305 = dma.hbm_to_vmem [thread:$0]  %s59, 16, %s303, [#allocation30]
    $region121: #{tpu_custom_call.1} parent=1 // pred_fallthru
      _
    // Predicated region
    $region122: #{tpu_custom_call.1} parent=1 // pred_check
      _
    $region123: #{tpu_custom_call.1} parent=1 // pred_check_branch
      %307 = sbr.rel (0) target = $region125
    $region124: #{tpu_custom_call.1} parent=1 // pred_region
      %s309 = ssub.s32 16, 16
      %310 = vsyncadd [#allocation33], %s309
      %s312 = sshll.u32 [#allocation32], 4
      %s313 = int_to_ptr.vmem [resolvable:$true] %s312
      %315 = dma.hbm_to_vmem [thread:$0]  %s61, 16, %s313, [#allocation33]
    $region125: #{tpu_custom_call.1} parent=1 // pred_fallthru
      _
    // Predicated region
    $region126: #{tpu_custom_call.1} parent=1 // pred_check
      _
    $region127: #{tpu_custom_call.1} parent=1 // pred_check_branch
      %317 = sbr.rel (0) target = $region129
    $region128: #{tpu_custom_call.1} parent=1 // pred_region
      _
    $region129: #{tpu_custom_call.1} parent=1 // pred_fallthru
      _
    // Predicated region
    $region130: #{tpu_custom_call.1} parent=1 // pred_check
      _
    $region131: #{tpu_custom_call.1} parent=1 // pred_check_branch
      %319 = sbr.rel (0) target = $region133
    $region132: #{tpu_custom_call.1} parent=1 // pred_region
      _
    $region133: #{tpu_custom_call.1} parent=1 // pred_fallthru
      _
    // Predicated region
    $region134: #{tpu_custom_call.1} parent=1 // pred_check
      _
    $region135: #{tpu_custom_call.1} parent=1 // pred_check_branch
      %321 = sbr.rel (0) target = $region137
    $region136: #{tpu_custom_call.1} parent=1 // pred_region
      _
    $region137: #{tpu_custom_call.1} parent=1 // pred_fallthru
      _
    // Predicated region
    $region138: #{tpu_custom_call.1} parent=1 // pred_check
      _
    $region139: #{tpu_custom_call.1} parent=1 // pred_check_branch
      %323 = sbr.rel (0) target = $region141
    $region140: #{tpu_custom_call.1} parent=1 // pred_region
      _
    $region141: #{tpu_custom_call.1} parent=1 // pred_fallthru
      _
    // Predicated region
    $region142: #{tpu_custom_call.1} parent=1 // pred_check
      _
    $region143: #{tpu_custom_call.1} parent=1 // pred_check_branch
      %325 = sbr.rel (0) target = $region145
    $region144: #{tpu_custom_call.1} parent=1 // pred_region
      %326 = dma.done [#allocation3], 128
    $region145: #{tpu_custom_call.1} parent=1 // pred_fallthru
      _
    // Predicated region
    $region146: #{tpu_custom_call.1} parent=1 // pred_check
      _
    $region147: #{tpu_custom_call.1} parent=1 // pred_check_branch
      %328 = sbr.rel (0) target = $region149
    $region148: #{tpu_custom_call.1} parent=1 // pred_region
      %329 = dma.done [#allocation6], 32
    $region149: #{tpu_custom_call.1} parent=1 // pred_fallthru
      _
    // Predicated region
    $region150: #{tpu_custom_call.1} parent=1 // pred_check
      _
    $region151: #{tpu_custom_call.1} parent=1 // pred_check_branch
      %331 = sbr.rel (0) target = $region153
    $region152: #{tpu_custom_call.1} parent=1 // pred_region
      %332 = dma.done [#allocation6], 16
    $region153: #{tpu_custom_call.1} parent=1 // pred_fallthru
      _
    // Predicated region
    $region154: #{tpu_custom_call.1} parent=1 // pred_check
      _
    $region155: #{tpu_custom_call.1} parent=1 // pred_check_branch
      %334 = sbr.rel (0) target = $region157
    $region156: #{tpu_custom_call.1} parent=1 // pred_region
      %335 = dma.done [#allocation9], 16
    $region157: #{tpu_custom_call.1} parent=1 // pred_fallthru
      _
    // Predicated region
    $region158: #{tpu_custom_call.1} parent=1 // pred_check
      _
    $region159: #{tpu_custom_call.1} parent=1 // pred_check_branch
      %337 = sbr.rel (0) target = $region161
    $region160: #{tpu_custom_call.1} parent=1 // pred_region
      %338 = dma.done [#allocation9], 16
    $region161: #{tpu_custom_call.1} parent=1 // pred_fallthru
      _
    // Predicated region
    $region162: #{tpu_custom_call.1} parent=1 // pred_check
      _
    $region163: #{tpu_custom_call.1} parent=1 // pred_check_branch
      %340 = sbr.rel (0) target = $region165
    $region164: #{tpu_custom_call.1} parent=1 // pred_region
      %341 = dma.done [#allocation12], 256
    $region165: #{tpu_custom_call.1} parent=1 // pred_fallthru
      _
    // Predicated region
    $region166: #{tpu_custom_call.1} parent=1 // pred_check
      _
    $region167: #{tpu_custom_call.1} parent=1 // pred_check_branch
      %343 = sbr.rel (0) target = $region169
    $region168: #{tpu_custom_call.1} parent=1 // pred_region
      %344 = dma.done [#allocation12], 16
    $region169: #{tpu_custom_call.1} parent=1 // pred_fallthru
      _
    // Predicated region
    $region170: #{tpu_custom_call.1} parent=1 // pred_check
      _
    $region171: #{tpu_custom_call.1} parent=1 // pred_check_branch
      %346 = sbr.rel (0) target = $region173
    $region172: #{tpu_custom_call.1} parent=1 // pred_region
      %347 = dma.done [#allocation15], 16
    $region173: #{tpu_custom_call.1} parent=1 // pred_fallthru
      _
    // Predicated region
    $region174: #{tpu_custom_call.1} parent=1 // pred_check
      _
    $region175: #{tpu_custom_call.1} parent=1 // pred_check_branch
      %349 = sbr.rel (0) target = $region177
    $region176: #{tpu_custom_call.1} parent=1 // pred_region
      %350 = dma.done [#allocation15], 256
    $region177: #{tpu_custom_call.1} parent=1 // pred_fallthru
      _
    // Predicated region
    $region178: #{tpu_custom_call.1} parent=1 // pred_check
      _
    $region179: #{tpu_custom_call.1} parent=1 // pred_check_branch
      %352 = sbr.rel (0) target = $region181
    $region180: #{tpu_custom_call.1} parent=1 // pred_region
      %353 = dma.done [#allocation18], 16
    $region181: #{tpu_custom_call.1} parent=1 // pred_fallthru
      _
    // Predicated region
    $region182: #{tpu_custom_call.1} parent=1 // pred_check
      _
    $region183: #{tpu_custom_call.1} parent=1 // pred_check_branch
      %355 = sbr.rel (0) target = $region185
    $region184: #{tpu_custom_call.1} parent=1 // pred_region
      %356 = dma.done [#allocation18], 16
    $region185: #{tpu_custom_call.1} parent=1 // pred_fallthru
      _
    // Predicated region
    $region186: #{tpu_custom_call.1} parent=1 // pred_check
      _
    $region187: #{tpu_custom_call.1} parent=1 // pred_check_branch
      %358 = sbr.rel (0) target = $region189
    $region188: #{tpu_custom_call.1} parent=1 // pred_region
      %359 = dma.done [#allocation21], 16
    $region189: #{tpu_custom_call.1} parent=1 // pred_fallthru
      _
    // Predicated region
    $region190: #{tpu_custom_call.1} parent=1 // pred_check
      _
    $region191: #{tpu_custom_call.1} parent=1 // pred_check_branch
      %361 = sbr.rel (0) target = $region193
    $region192: #{tpu_custom_call.1} parent=1 // pred_region
      %362 = dma.done [#allocation21], 16
    $region193: #{tpu_custom_call.1} parent=1 // pred_fallthru
      _
    // Predicated region
    $region194: #{tpu_custom_call.1} parent=1 // pred_check
      _
    $region195: #{tpu_custom_call.1} parent=1 // pred_check_branch
      %364 = sbr.rel (0) target = $region197
    $region196: #{tpu_custom_call.1} parent=1 // pred_region
      %365 = dma.done [#allocation24], 16
    $region197: #{tpu_custom_call.1} parent=1 // pred_fallthru
      _
    // Predicated region
    $region198: #{tpu_custom_call.1} parent=1 // pred_check
      _
    $region199: #{tpu_custom_call.1} parent=1 // pred_check_branch
      %367 = sbr.rel (0) target = $region201
    $region200: #{tpu_custom_call.1} parent=1 // pred_region
      %368 = dma.done [#allocation24], 16
    $region201: #{tpu_custom_call.1} parent=1 // pred_fallthru
      _
    // Predicated region
    $region202: #{tpu_custom_call.1} parent=1 // pred_check
      _
    $region203: #{tpu_custom_call.1} parent=1 // pred_check_branch
      %370 = sbr.rel (0) target = $region205
    $region204: #{tpu_custom_call.1} parent=1 // pred_region
      %371 = dma.done [#allocation27], 256
    $region205: #{tpu_custom_call.1} parent=1 // pred_fallthru
      _
    // Predicated region
    $region206: #{tpu_custom_call.1} parent=1 // pred_check
      _
    $region207: #{tpu_custom_call.1} parent=1 // pred_check_branch
      %373 = sbr.rel (0) target = $region209
    $region208: #{tpu_custom_call.1} parent=1 // pred_region
      %374 = dma.done [#allocation27], 16
    $region209: #{tpu_custom_call.1} parent=1 // pred_fallthru
      _
    // Predicated region
    $region210: #{tpu_custom_call.1} parent=1 // pred_check
      _
    $region211: #{tpu_custom_call.1} parent=1 // pred_check_branch
      %376 = sbr.rel (0) target = $region213
    $region212: #{tpu_custom_call.1} parent=1 // pred_region
      %377 = dma.done [#allocation30], 16
    $region213: #{tpu_custom_call.1} parent=1 // pred_fallthru
      _
    // Predicated region
    $region214: #{tpu_custom_call.1} parent=1 // pred_check
      _
    $region215: #{tpu_custom_call.1} parent=1 // pred_check_branch
      %379 = sbr.rel (0) target = $region217
    $region216: #{tpu_custom_call.1} parent=1 // pred_region
      %380 = dma.done [#allocation30], 16
    $region217: #{tpu_custom_call.1} parent=1 // pred_fallthru
      _
    // Predicated region
    $region218: #{tpu_custom_call.1} parent=1 // pred_check
      _
    $region219: #{tpu_custom_call.1} parent=1 // pred_check_branch
      %382 = sbr.rel (0) target = $region221
    $region220: #{tpu_custom_call.1} parent=1 // pred_region
      %383 = dma.done [#allocation33], 16
    $region221: #{tpu_custom_call.1} parent=1 // pred_fallthru
      _
    %v385 = vld [vmem:[%s1] sm:$0xff]
    %v386 = vld [vmem:[%s1 + $0x8] sm:$0xff]
    %v387 = vld [vmem:[#allocation2] sm:$0xff]
    %v388 = vld [vmem:[#allocation7] sm:$0x1]
    %v389 = vld [vmem:[#allocation8] sm:$0x1]
    %vm390 = vcmask 261120
    %v391 = vsel %vm390, %v385, 0.0
    %392 = vadd.xlane.f32.xlu0 %v391
    %v393 = vpop.xlane.xlu0 %392
    %v394 = vsel %vm390, %v386, 0.0
    %395 = vadd.xlane.f32.xlu0 %v394
    %v396 = vpop.xlane.xlu0 %395
    %v397 = vrcp.pop 32.0
    %v398 = vmul.f32 %v393, %v397
    %v399 = vmul.f32 %v396, %v397
    %v400 = vsub.f32 %v385, %v398
    %v401 = vsub.f32 %v386, %v399
    %v402 = vmul.f32 %v400, %v400
    %v403 = vmul.f32 %v401, %v401
    %v404 = vsel %vm390, %v402, 0.0
    %405 = vadd.xlane.f32.xlu0 %v404
    %v406 = vpop.xlane.xlu0 %405
    %v407 = vsel %vm390, %v403, 0.0
    %408 = vadd.xlane.f32.xlu0 %v407
    %v409 = vpop.xlane.xlu0 %408
    %v410 = vmul.f32 %v406, %v397
    %v411 = vmul.f32 %v409, %v397
    %v412 = vadd.f32 %v410, 1e-05
    %v413 = vadd.f32 %v411, 1e-05
    %v414 = vrsqrt.pop %v412
    %v415 = vrsqrt.pop %v413
    %v416 = vmul.f32 %v400, %v414
    %v417 = vmul.f32 %v401, %v415
    %v419 = vlaneseq
    %v420 = vshrl.u32 %v419, 7
    %v421 = vsub.s32 0, %v420
    %v422 = vrot.slane %v388, %v421
    %v424 = vmul.f32 %v416, %v422
    %v425 = vmul.f32 %v417, %v422
    %v427 = vlaneseq
    %v428 = vshrl.u32 %v427, 7
    %v429 = vsub.s32 0, %v428
    %v430 = vrot.slane %v389, %v429
    %v432 = vadd.f32 %v424, %v430
    %v433 = vadd.f32 %v425, %v430
    %v434 = vadd.f32 %v432, %v387
    %v435 = vadd.f32 %v433, %v387
    %v436 = vld [vmem:[%s19] sm:$0xf]
    %v437 = vld [vmem:[%s19 + $0x4] sm:$0xf]
    %v438 = vld [vmem:[%s19 + $0x8] sm:$0xf]
    %v439 = vld [vmem:[%s19 + $0xc] sm:$0xf]
    %v440 = vld [vmem:[#allocation10] sm:$0x1]
    %v441 = vld [vmem:[#allocation11] sm:$0xf]
    %v442 = vld [vmem:[#allocation11 + $0x4] sm:$0xf]
    %v443 = vld [vmem:[#allocation11 + $0x8] sm:$0xf]
    %v444 = vld [vmem:[#allocation11 + $0xc] sm:$0xf]
    %v445 = vld [vmem:[#allocation13] sm:$0x1]
    %v446 = vld [vmem:[%s27] sm:$0xf]
    %v447 = vld [vmem:[%s27 + $0x4] sm:$0xf]
    %v448 = vld [vmem:[%s27 + $0x8] sm:$0xf]
    %v449 = vld [vmem:[%s27 + $0xc] sm:$0xf]
    %v450 = vld [vmem:[#allocation14] sm:$0x1]
    %v451 = vld [vmem:[#allocation16] sm:$0xf]
    %v452 = vld [vmem:[#allocation16 + $0x4] sm:$0xf]
    %v453 = vld [vmem:[#allocation16 + $0x8] sm:$0xf]
    %v454 = vld [vmem:[#allocation16 + $0xc] sm:$0xf]
    %v455 = vld [vmem:[#allocation17] sm:$0x1]
    %v456 = vpack.c.bf16 %v435, %v434
    %v458 = vlaneseq
    %v459 = vshrl.u32 %v458, 7
    %v460 = vsub.s32 0, %v459
    %v461 = vrot.slane %v440, %v460
    %v467 = vunpack.c.l.b16 %v436
    %v468 = vunpack.c.l.b16 %v437
    %v469 = vunpack.c.l.b16 %v438
    %v470 = vunpack.c.l.b16 %v439
    %v471 = vpack.c.b16 %v468, %v467
    %v472 = vpack.c.b16 %v470, %v469
    %v476 = vsel %vm390, %v456, 0
    %478 = vmatprep.subr.bf16.mxu0 0
    %479 = vmatpush1.bf16.msra.mxu0 %v471
    %480 = vmatprep.subr.bf16.mxu0 0
    %481 = vmatpush1.bf16.msra.mxu0 %v472
    %482 = vmatprep.subr.bf16.mxu0 0
    %483 = vmatpush1.bf16.msra.mxu0 0
    %484 = vmatprep.subr.bf16.mxu0 0
    %485 = vmatpush1.bf16.msra.mxu0 0
    %486 = vmatprep.subr.bf16.mxu0 0
    %487 = vmatpush1.bf16.msra.mxu0 0
    %488 = vmatprep.subr.bf16.mxu0 0
    %489 = vmatpush1.bf16.msra.mxu0 0
    %490 = vmatprep.subr.bf16.mxu0 0
    %491 = vmatpush1.bf16.msra.mxu0 0
    %492 = vmatprep.subr.bf16.mxu0 0
    %493 = vmatpush1.bf16.msra.mxu0 0
    %494 = vmatprep.subr.bf16.mxu0 0
    %495 = vmatpush1.bf16.msra.mxu0 0
    %496 = vmatprep.subr.bf16.mxu0 0
    %497 = vmatpush1.bf16.msra.mxu0 0
    %498 = vmatprep.subr.bf16.mxu0 0
    %499 = vmatpush1.bf16.msra.mxu0 0
    %500 = vmatprep.subr.bf16.mxu0 0
    %501 = vmatpush1.bf16.msra.mxu0 0
    %502 = vmatprep.subr.bf16.mxu0 0
    %503 = vmatpush1.bf16.msra.mxu0 0
    %504 = vmatprep.subr.bf16.mxu0 0
    %505 = vmatpush1.bf16.msra.mxu0 0
    %506 = vmatprep.subr.bf16.mxu0 0
    %507 = vmatpush1.bf16.msra.mxu0 0
    %508 = vmatprep.subr.bf16.mxu0 0
    %509 = vmatpush1.bf16.msra.mxu0 0
    %510 = vmatprep.mubr.bf16.mxu0 0
    %511 = vmatmul.mubr.bf16.gmra.mrb[0].mxu0 %v476
    %v512 = vpop.f32.mrb[0].mxu0
    %v513 = vadd.f32 %v461, %v512
    %v514 = vpop.f32.mrb[0].mxu0
    %v515 = vpop.f32.mrb[0].mxu0
    %v516 = vadd.f32 %v461, %v515
    %v517 = vpop.f32.mrb[0].mxu0
    %518 = vdwg.mxu0
    %v519 = vpack.c.bf16 %v516, %v513
    %v521 = vlaneseq
    %v522 = vshrl.u32 %v521, 7
    %v523 = vsub.s32 0, %v522
    %v524 = vrot.slane %v445, %v523
    %v530 = vunpack.c.l.b16 %v441
    %v531 = vunpack.c.l.b16 %v442
    %v532 = vunpack.c.l.b16 %v443
    %v533 = vunpack.c.l.b16 %v444
    %v534 = vpack.c.b16 %v531, %v530
    %v535 = vpack.c.b16 %v533, %v532
    %538 = vmatprep.subr.bf16.mxu0 0
    %539 = vmatpush1.bf16.msra.mxu0 %v534
    %540 = vmatprep.subr.bf16.mxu0 0
    %541 = vmatpush1.bf16.msra.mxu0 %v535
    %542 = vmatprep.subr.bf16.mxu0 0
    %543 = vmatpush1.bf16.msra.mxu0 0
    %544 = vmatprep.subr.bf16.mxu0 0
    %545 = vmatpush1.bf16.msra.mxu0 0
    %546 = vmatprep.subr.bf16.mxu0 0
    %547 = vmatpush1.bf16.msra.mxu0 0
    %548 = vmatprep.subr.bf16.mxu0 0
    %549 = vmatpush1.bf16.msra.mxu0 0
    %550 = vmatprep.subr.bf16.mxu0 0
    %551 = vmatpush1.bf16.msra.mxu0 0
    %552 = vmatprep.subr.bf16.mxu0 0
    %553 = vmatpush1.bf16.msra.mxu0 0
    %554 = vmatprep.subr.bf16.mxu0 0
    %555 = vmatpush1.bf16.msra.mxu0 0
    %556 = vmatprep.subr.bf16.mxu0 0
    %557 = vmatpush1.bf16.msra.mxu0 0
    %558 = vmatprep.subr.bf16.mxu0 0
    %559 = vmatpush1.bf16.msra.mxu0 0
    %560 = vmatprep.subr.bf16.mxu0 0
    %561 = vmatpush1.bf16.msra.mxu0 0
    %562 = vmatprep.subr.bf16.mxu0 0
    %563 = vmatpush1.bf16.msra.mxu0 0
    %564 = vmatprep.subr.bf16.mxu0 0
    %565 = vmatpush1.bf16.msra.mxu0 0
    %566 = vmatprep.subr.bf16.mxu0 0
    %567 = vmatpush1.bf16.msra.mxu0 0
    %568 = vmatprep.subr.bf16.mxu0 0
    %569 = vmatpush1.bf16.msra.mxu0 0
    %570 = vmatprep.mubr.bf16.mxu0 0
    %571 = vmatmul.mubr.bf16.gmra.mrb[0].mxu0 %v476
    %v572 = vpop.f32.mrb[0].mxu0
    %v573 = vadd.f32 %v524, %v572
    %v574 = vpop.f32.mrb[0].mxu0
    %v575 = vpop.f32.mrb[0].mxu0
    %v576 = vadd.f32 %v524, %v575
    %v577 = vpop.f32.mrb[0].mxu0
    %578 = vdwg.mxu0
    %v579 = vpack.c.bf16 %v576, %v573
    %v580 = vpack.c.bf16 %v386, %v385
    %v582 = vlaneseq
    %v583 = vshrl.u32 %v582, 7
    %v584 = vsub.s32 0, %v583
    %v585 = vrot.slane %v450, %v584
    %v591 = vunpack.c.l.b16 %v446
    %v592 = vunpack.c.l.b16 %v447
    %v593 = vunpack.c.l.b16 %v448
    %v594 = vunpack.c.l.b16 %v449
    %v595 = vpack.c.b16 %v592, %v591
    %v596 = vpack.c.b16 %v594, %v593
    %v600 = vsel %vm390, %v580, 0
    %602 = vmatprep.subr.bf16.mxu0 0
    %603 = vmatpush1.bf16.msra.mxu0 %v595
    %604 = vmatprep.subr.bf16.mxu0 0
    %605 = vmatpush1.bf16.msra.mxu0 %v596
    %606 = vmatprep.subr.bf16.mxu0 0
    %607 = vmatpush1.bf16.msra.mxu0 0
    %608 = vmatprep.subr.bf16.mxu0 0
    %609 = vmatpush1.bf16.msra.mxu0 0
    %610 = vmatprep.subr.bf16.mxu0 0
    %611 = vmatpush1.bf16.msra.mxu0 0
    %612 = vmatprep.subr.bf16.mxu0 0
    %613 = vmatpush1.bf16.msra.mxu0 0
    %614 = vmatprep.subr.bf16.mxu0 0
    %615 = vmatpush1.bf16.msra.mxu0 0
    %616 = vmatprep.subr.bf16.mxu0 0
    %617 = vmatpush1.bf16.msra.mxu0 0
    %618 = vmatprep.subr.bf16.mxu0 0
    %619 = vmatpush1.bf16.msra.mxu0 0
    %620 = vmatprep.subr.bf16.mxu0 0
    %621 = vmatpush1.bf16.msra.mxu0 0
    %622 = vmatprep.subr.bf16.mxu0 0
    %623 = vmatpush1.bf16.msra.mxu0 0
    %624 = vmatprep.subr.bf16.mxu0 0
    %625 = vmatpush1.bf16.msra.mxu0 0
    %626 = vmatprep.subr.bf16.mxu0 0
    %627 = vmatpush1.bf16.msra.mxu0 0
    %628 = vmatprep.subr.bf16.mxu0 0
    %629 = vmatpush1.bf16.msra.mxu0 0
    %630 = vmatprep.subr.bf16.mxu0 0
    %631 = vmatpush1.bf16.msra.mxu0 0
    %632 = vmatprep.subr.bf16.mxu0 0
    %633 = vmatpush1.bf16.msra.mxu0 0
    %634 = vmatprep.mubr.bf16.mxu0 0
    %635 = vmatmul.mubr.bf16.gmra.mrb[0].mxu0 %v600
    %v636 = vpop.f32.mrb[0].mxu0
    %v637 = vadd.f32 %v585, %v636
    %v638 = vpop.f32.mrb[0].mxu0
    %v639 = vpop.f32.mrb[0].mxu0
    %v640 = vadd.f32 %v585, %v639
    %v641 = vpop.f32.mrb[0].mxu0
    %642 = vdwg.mxu0
    %v643 = vpack.c.bf16 %v640, %v637
    %v645 = vunpack.c.l.b16 %v519
    %v646 = vunpack.c.h.b16 %v519
    %v647 = vpack.c.b16 %v645, %v645
    %v648 = vpack.c.b16 %v646, %v646
    %v650 = vunpack.c.l.b16 %v579
    %v651 = vunpack.c.h.b16 %v579
    %v652 = vpack.c.b16 %v650, %v650
    %v653 = vpack.c.b16 %v651, %v651
    %v655 = vunpack.c.l.b16 %v643
    %v656 = vunpack.c.h.b16 %v643
    %v657 = vpack.c.b16 %v655, %v655
    %v658 = vpack.c.b16 %v656, %v656
    %659 = vrot.lane.b32.xlu0 %v647, 120
    %v660 = vpop.permute.xlu0 %659
    %661 = vrot.lane.b32.xlu0 %v648, 120
    %v662 = vpop.permute.xlu0 %661
    %663 = vrot.lane.b32.xlu0 %v647, 112
    %v664 = vpop.permute.xlu0 %663
    %665 = vrot.lane.b32.xlu0 %v648, 112
    %v666 = vpop.permute.xlu0 %665
    %667 = vrot.lane.b32.xlu0 %v647, 104
    %v668 = vpop.permute.xlu0 %667
    %669 = vrot.lane.b32.xlu0 %v648, 104
    %v670 = vpop.permute.xlu0 %669
    %671 = vrot.lane.b32.xlu0 %v652, 120
    %v672 = vpop.permute.xlu0 %671
    %673 = vrot.lane.b32.xlu0 %v653, 120
    %v674 = vpop.permute.xlu0 %673
    %675 = vrot.lane.b32.xlu0 %v652, 112
    %v676 = vpop.permute.xlu0 %675
    %677 = vrot.lane.b32.xlu0 %v653, 112
    %v678 = vpop.permute.xlu0 %677
    %679 = vrot.lane.b32.xlu0 %v652, 104
    %v680 = vpop.permute.xlu0 %679
    %681 = vrot.lane.b32.xlu0 %v653, 104
    %v682 = vpop.permute.xlu0 %681
    %683 = vrot.lane.b32.xlu0 %v657, 120
    %v684 = vpop.permute.xlu0 %683
    %685 = vrot.lane.b32.xlu0 %v658, 120
    %v686 = vpop.permute.xlu0 %685
    %687 = vrot.lane.b32.xlu0 %v657, 112
    %v688 = vpop.permute.xlu0 %687
    %689 = vrot.lane.b32.xlu0 %v658, 112
    %v690 = vpop.permute.xlu0 %689
    %691 = vrot.lane.b32.xlu0 %v657, 104
    %v692 = vpop.permute.xlu0 %691
    %693 = vrot.lane.b32.xlu0 %v658, 104
    %v694 = vpop.permute.xlu0 %693
    %vm695 = vcmask 64512
    %v697 = vsel %vm695, %v647, 0
    %v700 = vsel %vm695, %v652, 0
    %702 = vmatprep.subr.bf16.mxu0 0
    %703 = vmatpush1.bf16.xpose.msra.mxu0 %v700
    %704 = vmatprep.subr.bf16.mxu0 0
    %705 = vmatpush1.bf16.xpose.msra.mxu0 0
    %706 = vmatprep.subr.bf16.mxu0 0
    %707 = vmatpush1.bf16.xpose.msra.mxu0 0
    %708 = vmatprep.subr.bf16.mxu0 0
    %709 = vmatpush1.bf16.xpose.msra.mxu0 0
    %710 = vmatprep.subr.bf16.mxu0 0
    %711 = vmatpush1.bf16.xpose.msra.mxu0 0
    %712 = vmatprep.subr.bf16.mxu0 0
    %713 = vmatpush1.bf16.xpose.msra.mxu0 0
    %714 = vmatprep.subr.bf16.mxu0 0
    %715 = vmatpush1.bf16.xpose.msra.mxu0 0
    %716 = vmatprep.subr.bf16.mxu0 0
    %717 = vmatpush1.bf16.xpose.msra.mxu0 0
    %718 = vmatprep.subr.bf16.mxu0 0
    %719 = vmatpush1.bf16.xpose.msra.mxu0 0
    %720 = vmatprep.subr.bf16.mxu0 0
    %721 = vmatpush1.bf16.xpose.msra.mxu0 0
    %722 = vmatprep.subr.bf16.mxu0 0
    %723 = vmatpush1.bf16.xpose.msra.mxu0 0
    %724 = vmatprep.subr.bf16.mxu0 0
    %725 = vmatpush1.bf16.xpose.msra.mxu0 0
    %726 = vmatprep.subr.bf16.mxu0 0
    %727 = vmatpush1.bf16.xpose.msra.mxu0 0
    %728 = vmatprep.subr.bf16.mxu0 0
    %729 = vmatpush1.bf16.xpose.msra.mxu0 0
    %730 = vmatprep.subr.bf16.mxu0 0
    %731 = vmatpush1.bf16.xpose.msra.mxu0 0
    %732 = vmatprep.subr.bf16.mxu0 0
    %733 = vmatpush1.bf16.xpose.msra.mxu0 0
    %734 = vmatprep.mubr.bf16.mxu0 0
    %735 = vmatmul.mubr.bf16.gmra.mrb[0].mxu0 %v697
    %v736 = vpop.f32.mrb[0].mxu0
    %v737 = vadd.f32 0.0, %v736
    %v738 = vpop.f32.mrb[0].mxu0
    %v739 = vpop.f32.mrb[0].mxu0
    %v740 = vpop.f32.mrb[0].mxu0
    %741 = vdwg.mxu0
    %v743 = vsel %vm695, %v648, 0
    %v746 = vsel %vm695, %v653, 0
    %748 = vmatprep.subr.bf16.mxu0 0
    %749 = vmatpush1.bf16.xpose.msra.mxu0 %v746
    %750 = vmatprep.subr.bf16.mxu0 0
    %751 = vmatpush1.bf16.xpose.msra.mxu0 0
    %752 = vmatprep.subr.bf16.mxu0 0
    %753 = vmatpush1.bf16.xpose.msra.mxu0 0
    %754 = vmatprep.subr.bf16.mxu0 0
    %755 = vmatpush1.bf16.xpose.msra.mxu0 0
    %756 = vmatprep.subr.bf16.mxu0 0
    %757 = vmatpush1.bf16.xpose.msra.mxu0 0
    %758 = vmatprep.subr.bf16.mxu0 0
    %759 = vmatpush1.bf16.xpose.msra.mxu0 0
    %760 = vmatprep.subr.bf16.mxu0 0
    %761 = vmatpush1.bf16.xpose.msra.mxu0 0
    %762 = vmatprep.subr.bf16.mxu0 0
    %763 = vmatpush1.bf16.xpose.msra.mxu0 0
    %764 = vmatprep.subr.bf16.mxu0 0
    %765 = vmatpush1.bf16.xpose.msra.mxu0 0
    %766 = vmatprep.subr.bf16.mxu0 0
    %767 = vmatpush1.bf16.xpose.msra.mxu0 0
    %768 = vmatprep.subr.bf16.mxu0 0
    %769 = vmatpush1.bf16.xpose.msra.mxu0 0
    %770 = vmatprep.subr.bf16.mxu0 0
    %771 = vmatpush1.bf16.xpose.msra.mxu0 0
    %772 = vmatprep.subr.bf16.mxu0 0
    %773 = vmatpush1.bf16.xpose.msra.mxu0 0
    %774 = vmatprep.subr.bf16.mxu0 0
    %775 = vmatpush1.bf16.xpose.msra.mxu0 0
    %776 = vmatprep.subr.bf16.mxu0 0
    %777 = vmatpush1.bf16.xpose.msra.mxu0 0
    %778 = vmatprep.subr.bf16.mxu0 0
    %779 = vmatpush1.bf16.xpose.msra.mxu0 0
    %780 = vmatprep.mubr.bf16.mxu0 0
    %781 = vmatmul.mubr.bf16.gmra.mrb[0].mxu0 %v743
    %v782 = vpop.f32.mrb[0].mxu0
    %v783 = vadd.f32 0.0, %v782
    %v784 = vpop.f32.mrb[0].mxu0
    %v785 = vpop.f32.mrb[0].mxu0
    %v786 = vpop.f32.mrb[0].mxu0
    %787 = vdwg.mxu0
    %v789 = vsel %vm695, %v660, 0
    %v792 = vsel %vm695, %v672, 0
    %794 = vmatprep.subr.bf16.mxu0 0
    %795 = vmatpush1.bf16.xpose.msra.mxu0 %v792
    %796 = vmatprep.subr.bf16.mxu0 0
    %797 = vmatpush1.bf16.xpose.msra.mxu0 0
    %798 = vmatprep.subr.bf16.mxu0 0
    %799 = vmatpush1.bf16.xpose.msra.mxu0 0
    %800 = vmatprep.subr.bf16.mxu0 0
    %801 = vmatpush1.bf16.xpose.msra.mxu0 0
    %802 = vmatprep.subr.bf16.mxu0 0
    %803 = vmatpush1.bf16.xpose.msra.mxu0 0
    %804 = vmatprep.subr.bf16.mxu0 0
    %805 = vmatpush1.bf16.xpose.msra.mxu0 0
    %806 = vmatprep.subr.bf16.mxu0 0
    %807 = vmatpush1.bf16.xpose.msra.mxu0 0
    %808 = vmatprep.subr.bf16.mxu0 0
    %809 = vmatpush1.bf16.xpose.msra.mxu0 0
    %810 = vmatprep.subr.bf16.mxu0 0
    %811 = vmatpush1.bf16.xpose.msra.mxu0 0
    %812 = vmatprep.subr.bf16.mxu0 0
    %813 = vmatpush1.bf16.xpose.msra.mxu0 0
    %814 = vmatprep.subr.bf16.mxu0 0
    %815 = vmatpush1.bf16.xpose.msra.mxu0 0
    %816 = vmatprep.subr.bf16.mxu0 0
    %817 = vmatpush1.bf16.xpose.msra.mxu0 0
    %818 = vmatprep.subr.bf16.mxu0 0
    %819 = vmatpush1.bf16.xpose.msra.mxu0 0
    %820 = vmatprep.subr.bf16.mxu0 0
    %821 = vmatpush1.bf16.xpose.msra.mxu0 0
    %822 = vmatprep.subr.bf16.mxu0 0
    %823 = vmatpush1.bf16.xpose.msra.mxu0 0
    %824 = vmatprep.subr.bf16.mxu0 0
    %825 = vmatpush1.bf16.xpose.msra.mxu0 0
    %826 = vmatprep.mubr.bf16.mxu0 0
    %827 = vmatmul.mubr.bf16.gmra.mrb[0].mxu0 %v789
    %v828 = vpop.f32.mrb[0].mxu0
    %v829 = vadd.f32 0.0, %v828
    %v830 = vpop.f32.mrb[0].mxu0
    %v831 = vpop.f32.mrb[0].mxu0
    %v832 = vpop.f32.mrb[0].mxu0
    %833 = vdwg.mxu0
    %v835 = vsel %vm695, %v662, 0
    %v838 = vsel %vm695, %v674, 0
    %840 = vmatprep.subr.bf16.mxu0 0
    %841 = vmatpush1.bf16.xpose.msra.mxu0 %v838
    %842 = vmatprep.subr.bf16.mxu0 0
    %843 = vmatpush1.bf16.xpose.msra.mxu0 0
    %844 = vmatprep.subr.bf16.mxu0 0
    %845 = vmatpush1.bf16.xpose.msra.mxu0 0
    %846 = vmatprep.subr.bf16.mxu0 0
    %847 = vmatpush1.bf16.xpose.msra.mxu0 0
    %848 = vmatprep.subr.bf16.mxu0 0
    %849 = vmatpush1.bf16.xpose.msra.mxu0 0
    %850 = vmatprep.subr.bf16.mxu0 0
    %851 = vmatpush1.bf16.xpose.msra.mxu0 0
    %852 = vmatprep.subr.bf16.mxu0 0
    %853 = vmatpush1.bf16.xpose.msra.mxu0 0
    %854 = vmatprep.subr.bf16.mxu0 0
    %855 = vmatpush1.bf16.xpose.msra.mxu0 0
    %856 = vmatprep.subr.bf16.mxu0 0
    %857 = vmatpush1.bf16.xpose.msra.mxu0 0
    %858 = vmatprep.subr.bf16.mxu0 0
    %859 = vmatpush1.bf16.xpose.msra.mxu0 0
    %860 = vmatprep.subr.bf16.mxu0 0
    %861 = vmatpush1.bf16.xpose.msra.mxu0 0
    %862 = vmatprep.subr.bf16.mxu0 0
    %863 = vmatpush1.bf16.xpose.msra.mxu0 0
    %864 = vmatprep.subr.bf16.mxu0 0
    %865 = vmatpush1.bf16.xpose.msra.mxu0 0
    %866 = vmatprep.subr.bf16.mxu0 0
    %867 = vmatpush1.bf16.xpose.msra.mxu0 0
    %868 = vmatprep.subr.bf16.mxu0 0
    %869 = vmatpush1.bf16.xpose.msra.mxu0 0
    %870 = vmatprep.subr.bf16.mxu0 0
    %871 = vmatpush1.bf16.xpose.msra.mxu0 0
    %872 = vmatprep.mubr.bf16.mxu0 0
    %873 = vmatmul.mubr.bf16.gmra.mrb[0].mxu0 %v835
    %v874 = vpop.f32.mrb[0].mxu0
    %v875 = vadd.f32 0.0, %v874
    %v876 = vpop.f32.mrb[0].mxu0
    %v877 = vpop.f32.mrb[0].mxu0
    %v878 = vpop.f32.mrb[0].mxu0
    %879 = vdwg.mxu0
    %v881 = vsel %vm695, %v664, 0
    %v884 = vsel %vm695, %v676, 0
    %886 = vmatprep.subr.bf16.mxu0 0
    %887 = vmatpush1.bf16.xpose.msra.mxu0 %v884
    %888 = vmatprep.subr.bf16.mxu0 0
    %889 = vmatpush1.bf16.xpose.msra.mxu0 0
    %890 = vmatprep.subr.bf16.mxu0 0
    %891 = vmatpush1.bf16.xpose.msra.mxu0 0
    %892 = vmatprep.subr.bf16.mxu0 0
    %893 = vmatpush1.bf16.xpose.msra.mxu0 0
    %894 = vmatprep.subr.bf16.mxu0 0
    %895 = vmatpush1.bf16.xpose.msra.mxu0 0
    %896 = vmatprep.subr.bf16.mxu0 0
    %897 = vmatpush1.bf16.xpose.msra.mxu0 0
    %898 = vmatprep.subr.bf16.mxu0 0
    %899 = vmatpush1.bf16.xpose.msra.mxu0 0
    %900 = vmatprep.subr.bf16.mxu0 0
    %901 = vmatpush1.bf16.xpose.msra.mxu0 0
    %902 = vmatprep.subr.bf16.mxu0 0
    %903 = vmatpush1.bf16.xpose.msra.mxu0 0
    %904 = vmatprep.subr.bf16.mxu0 0
    %905 = vmatpush1.bf16.xpose.msra.mxu0 0
    %906 = vmatprep.subr.bf16.mxu0 0
    %907 = vmatpush1.bf16.xpose.msra.mxu0 0
    %908 = vmatprep.subr.bf16.mxu0 0
    %909 = vmatpush1.bf16.xpose.msra.mxu0 0
    %910 = vmatprep.subr.bf16.mxu0 0
    %911 = vmatpush1.bf16.xpose.msra.mxu0 0
    %912 = vmatprep.subr.bf16.mxu0 0
    %913 = vmatpush1.bf16.xpose.msra.mxu0 0
    %914 = vmatprep.subr.bf16.mxu0 0
    %915 = vmatpush1.bf16.xpose.msra.mxu0 0
    %916 = vmatprep.subr.bf16.mxu0 0
    %917 = vmatpush1.bf16.xpose.msra.mxu0 0
    %918 = vmatprep.mubr.bf16.mxu0 0
    %919 = vmatmul.mubr.bf16.gmra.mrb[0].mxu0 %v881
    %v920 = vpop.f32.mrb[0].mxu0
    %v921 = vadd.f32 0.0, %v920
    %v922 = vpop.f32.mrb[0].mxu0
    %v923 = vpop.f32.mrb[0].mxu0
    %v924 = vpop.f32.mrb[0].mxu0
    %925 = vdwg.mxu0
    %v927 = vsel %vm695, %v666, 0
    %v930 = vsel %vm695, %v678, 0
    %932 = vmatprep.subr.bf16.mxu0 0
    %933 = vmatpush1.bf16.xpose.msra.mxu0 %v930
    %934 = vmatprep.subr.bf16.mxu0 0
    %935 = vmatpush1.bf16.xpose.msra.mxu0 0
    %936 = vmatprep.subr.bf16.mxu0 0
    %937 = vmatpush1.bf16.xpose.msra.mxu0 0
    %938 = vmatprep.subr.bf16.mxu0 0
    %939 = vmatpush1.bf16.xpose.msra.mxu0 0
    %940 = vmatprep.subr.bf16.mxu0 0
    %941 = vmatpush1.bf16.xpose.msra.mxu0 0
    %942 = vmatprep.subr.bf16.mxu0 0
    %943 = vmatpush1.bf16.xpose.msra.mxu0 0
    %944 = vmatprep.subr.bf16.mxu0 0
    %945 = vmatpush1.bf16.xpose.msra.mxu0 0
    %946 = vmatprep.subr.bf16.mxu0 0
    %947 = vmatpush1.bf16.xpose.msra.mxu0 0
    %948 = vmatprep.subr.bf16.mxu0 0
    %949 = vmatpush1.bf16.xpose.msra.mxu0 0
    %950 = vmatprep.subr.bf16.mxu0 0
    %951 = vmatpush1.bf16.xpose.msra.mxu0 0
    %952 = vmatprep.subr.bf16.mxu0 0
    %953 = vmatpush1.bf16.xpose.msra.mxu0 0
    %954 = vmatprep.subr.bf16.mxu0 0
    %955 = vmatpush1.bf16.xpose.msra.mxu0 0
    %956 = vmatprep.subr.bf16.mxu0 0
    %957 = vmatpush1.bf16.xpose.msra.mxu0 0
    %958 = vmatprep.subr.bf16.mxu0 0
    %959 = vmatpush1.bf16.xpose.msra.mxu0 0
    %960 = vmatprep.subr.bf16.mxu0 0
    %961 = vmatpush1.bf16.xpose.msra.mxu0 0
    %962 = vmatprep.subr.bf16.mxu0 0
    %963 = vmatpush1.bf16.xpose.msra.mxu0 0
    %964 = vmatprep.mubr.bf16.mxu0 0
    %965 = vmatmul.mubr.bf16.gmra.mrb[0].mxu0 %v927
    %v966 = vpop.f32.mrb[0].mxu0
    %v967 = vadd.f32 0.0, %v966
    %v968 = vpop.f32.mrb[0].mxu0
    %v969 = vpop.f32.mrb[0].mxu0
    %v970 = vpop.f32.mrb[0].mxu0
    %971 = vdwg.mxu0
    %v973 = vsel %vm695, %v668, 0
    %v976 = vsel %vm695, %v680, 0
    %978 = vmatprep.subr.bf16.mxu0 0
    %979 = vmatpush1.bf16.xpose.msra.mxu0 %v976
    %980 = vmatprep.subr.bf16.mxu0 0
    %981 = vmatpush1.bf16.xpose.msra.mxu0 0
    %982 = vmatprep.subr.bf16.mxu0 0
    %983 = vmatpush1.bf16.xpose.msra.mxu0 0
    %984 = vmatprep.subr.bf16.mxu0 0
    %985 = vmatpush1.bf16.xpose.msra.mxu0 0
    %986 = vmatprep.subr.bf16.mxu0 0
    %987 = vmatpush1.bf16.xpose.msra.mxu0 0
    %988 = vmatprep.subr.bf16.mxu0 0
    %989 = vmatpush1.bf16.xpose.msra.mxu0 0
    %990 = vmatprep.subr.bf16.mxu0 0
    %991 = vmatpush1.bf16.xpose.msra.mxu0 0
    %992 = vmatprep.subr.bf16.mxu0 0
    %993 = vmatpush1.bf16.xpose.msra.mxu0 0
    %994 = vmatprep.subr.bf16.mxu0 0
    %995 = vmatpush1.bf16.xpose.msra.mxu0 0
    %996 = vmatprep.subr.bf16.mxu0 0
    %997 = vmatpush1.bf16.xpose.msra.mxu0 0
    %998 = vmatprep.subr.bf16.mxu0 0
    %999 = vmatpush1.bf16.xpose.msra.mxu0 0
    %1000 = vmatprep.subr.bf16.mxu0 0
    %1001 = vmatpush1.bf16.xpose.msra.mxu0 0
    %1002 = vmatprep.subr.bf16.mxu0 0
    %1003 = vmatpush1.bf16.xpose.msra.mxu0 0
    %1004 = vmatprep.subr.bf16.mxu0 0
    %1005 = vmatpush1.bf16.xpose.msra.mxu0 0
    %1006 = vmatprep.subr.bf16.mxu0 0
    %1007 = vmatpush1.bf16.xpose.msra.mxu0 0
    %1008 = vmatprep.subr.bf16.mxu0 0
    %1009 = vmatpush1.bf16.xpose.msra.mxu0 0
    %1010 = vmatprep.mubr.bf16.mxu0 0
    %1011 = vmatmul.mubr.bf16.gmra.mrb[0].mxu0 %v973
    %v1012 = vpop.f32.mrb[0].mxu0
    %v1013 = vadd.f32 0.0, %v1012
    %v1014 = vpop.f32.mrb[0].mxu0
    %v1015 = vpop.f32.mrb[0].mxu0
    %v1016 = vpop.f32.mrb[0].mxu0
    %1017 = vdwg.mxu0
    %v1019 = vsel %vm695, %v670, 0
    %v1022 = vsel %vm695, %v682, 0
    %1024 = vmatprep.subr.bf16.mxu0 0
    %1025 = vmatpush1.bf16.xpose.msra.mxu0 %v1022
    %1026 = vmatprep.subr.bf16.mxu0 0
    %1027 = vmatpush1.bf16.xpose.msra.mxu0 0
    %1028 = vmatprep.subr.bf16.mxu0 0
    %1029 = vmatpush1.bf16.xpose.msra.mxu0 0
    %1030 = vmatprep.subr.bf16.mxu0 0
    %1031 = vmatpush1.bf16.xpose.msra.mxu0 0
    %1032 = vmatprep.subr.bf16.mxu0 0
    %1033 = vmatpush1.bf16.xpose.msra.mxu0 0
    %1034 = vmatprep.subr.bf16.mxu0 0
    %1035 = vmatpush1.bf16.xpose.msra.mxu0 0
    %1036 = vmatprep.subr.bf16.mxu0 0
    %1037 = vmatpush1.bf16.xpose.msra.mxu0 0
    %1038 = vmatprep.subr.bf16.mxu0 0
    %1039 = vmatpush1.bf16.xpose.msra.mxu0 0
    %1040 = vmatprep.subr.bf16.mxu0 0
    %1041 = vmatpush1.bf16.xpose.msra.mxu0 0
    %1042 = vmatprep.subr.bf16.mxu0 0
    %1043 = vmatpush1.bf16.xpose.msra.mxu0 0
    %1044 = vmatprep.subr.bf16.mxu0 0
    %1045 = vmatpush1.bf16.xpose.msra.mxu0 0
    %1046 = vmatprep.subr.bf16.mxu0 0
    %1047 = vmatpush1.bf16.xpose.msra.mxu0 0
    %1048 = vmatprep.subr.bf16.mxu0 0
    %1049 = vmatpush1.bf16.xpose.msra.mxu0 0
    %1050 = vmatprep.subr.bf16.mxu0 0
    %1051 = vmatpush1.bf16.xpose.msra.mxu0 0
    %1052 = vmatprep.subr.bf16.mxu0 0
    %1053 = vmatpush1.bf16.xpose.msra.mxu0 0
    %1054 = vmatprep.subr.bf16.mxu0 0
    %1055 = vmatpush1.bf16.xpose.msra.mxu0 0
    %1056 = vmatprep.mubr.bf16.mxu0 0
    %1057 = vmatmul.mubr.bf16.gmra.mrb[0].mxu0 %v1019
    %v1058 = vpop.f32.mrb[0].mxu0
    %v1059 = vadd.f32 0.0, %v1058
    %v1060 = vpop.f32.mrb[0].mxu0
    %v1061 = vpop.f32.mrb[0].mxu0
    %v1062 = vpop.f32.mrb[0].mxu0
    %1063 = vdwg.mxu0
    %v1064 = vsel %vm695, %v737, -inf
    %1065 = vmax.xlane.f32.xlu0 %v1064
    %v1066 = vpop.xlane.xlu0 %1065
    %v1067 = vsel %vm695, %v783, -inf
    %1068 = vmax.xlane.f32.xlu0 %v1067
    %v1069 = vpop.xlane.xlu0 %1068
    %v1070 = vsel %vm695, %v829, -inf
    %1071 = vmax.xlane.f32.xlu0 %v1070
    %v1072 = vpop.xlane.xlu0 %1071
    %v1073 = vsel %vm695, %v875, -inf
    %1074 = vmax.xlane.f32.xlu0 %v1073
    %v1075 = vpop.xlane.xlu0 %1074
    %v1076 = vsel %vm695, %v921, -inf
    %1077 = vmax.xlane.f32.xlu0 %v1076
    %v1078 = vpop.xlane.xlu0 %1077
    %v1079 = vsel %vm695, %v967, -inf
    %1080 = vmax.xlane.f32.xlu0 %v1079
    %v1081 = vpop.xlane.xlu0 %1080
    %v1082 = vsel %vm695, %v1013, -inf
    %1083 = vmax.xlane.f32.xlu0 %v1082
    %v1084 = vpop.xlane.xlu0 %1083
    %v1085 = vsel %vm695, %v1059, -inf
    %1086 = vmax.xlane.f32.xlu0 %v1085
    %v1087 = vpop.xlane.xlu0 %1086
    %v1088 = vsub.f32 %v737, %v1066
    %v1089 = vsub.f32 %v783, %v1069
    %v1090 = vsub.f32 %v829, %v1072
    %v1091 = vsub.f32 %v875, %v1075
    %v1092 = vsub.f32 %v921, %v1078
    %v1093 = vsub.f32 %v967, %v1081
    %v1094 = vsub.f32 %v1013, %v1084
    %v1095 = vsub.f32 %v1059, %v1087
    %v1096 = vmul.f32 %v1088, 1.442695
    %v1097 = vpow.pop %v1096
    %v1098 = vmul.f32 %v1089, 1.442695
    %v1099 = vpow.pop %v1098
    %v1100 = vmul.f32 %v1090, 1.442695
    %v1101 = vpow.pop %v1100
    %v1102 = vmul.f32 %v1091, 1.442695
    %v1103 = vpow.pop %v1102
    %v1104 = vmul.f32 %v1092, 1.442695
    %v1105 = vpow.pop %v1104
    %v1106 = vmul.f32 %v1093, 1.442695
    %v1107 = vpow.pop %v1106
    %v1108 = vmul.f32 %v1094, 1.442695
    %v1109 = vpow.pop %v1108
    %v1110 = vmul.f32 %v1095, 1.442695
    %v1111 = vpow.pop %v1110
    %v1112 = vsel %vm695, %v1097, 0.0
    %1113 = vadd.xlane.f32.xlu0 %v1112
    %v1114 = vpop.xlane.xlu0 %1113
    %v1115 = vsel %vm695, %v1099, 0.0
    %1116 = vadd.xlane.f32.xlu0 %v1115
    %v1117 = vpop.xlane.xlu0 %1116
    %v1118 = vsel %vm695, %v1101, 0.0
    %1119 = vadd.xlane.f32.xlu0 %v1118
    %v1120 = vpop.xlane.xlu0 %1119
    %v1121 = vsel %vm695, %v1103, 0.0
    %1122 = vadd.xlane.f32.xlu0 %v1121
    %v1123 = vpop.xlane.xlu0 %1122
    %v1124 = vsel %vm695, %v1105, 0.0
    %1125 = vadd.xlane.f32.xlu0 %v1124
    %v1126 = vpop.xlane.xlu0 %1125
    %v1127 = vsel %vm695, %v1107, 0.0
    %1128 = vadd.xlane.f32.xlu0 %v1127
    %v1129 = vpop.xlane.xlu0 %1128
    %v1130 = vsel %vm695, %v1109, 0.0
    %1131 = vadd.xlane.f32.xlu0 %v1130
    %v1132 = vpop.xlane.xlu0 %1131
    %v1133 = vsel %vm695, %v1111, 0.0
    %1134 = vadd.xlane.f32.xlu0 %v1133
    %v1135 = vpop.xlane.xlu0 %1134
    %v1136 = vrcp.pop %v1114
    %v1137 = vrcp.pop %v1117
    %v1138 = vrcp.pop %v1120
    %v1139 = vrcp.pop %v1123
    %v1140 = vrcp.pop %v1126
    %v1141 = vrcp.pop %v1129
    %v1142 = vrcp.pop %v1132
    %v1143 = vrcp.pop %v1135
    %v1144 = vmul.f32 %v1097, %v1136
    %v1145 = vmul.f32 %v1099, %v1137
    %v1146 = vmul.f32 %v1101, %v1138
    %v1147 = vmul.f32 %v1103, %v1139
    %v1148 = vmul.f32 %v1105, %v1140
    %v1149 = vmul.f32 %v1107, %v1141
    %v1150 = vmul.f32 %v1109, %v1142
    %v1151 = vmul.f32 %v1111, %v1143
    %v1152 = vpack.c.bf16 %v1144, %v1144
    %v1153 = vpack.c.bf16 %v1145, %v1145
    %v1154 = vpack.c.bf16 %v1146, %v1146
    %v1155 = vpack.c.bf16 %v1147, %v1147
    %v1156 = vpack.c.bf16 %v1148, %v1148
    %v1157 = vpack.c.bf16 %v1149, %v1149
    %v1158 = vpack.c.bf16 %v1150, %v1150
    %v1159 = vpack.c.bf16 %v1151, %v1151
    %v1161 = vsel %vm695, %v1152, 0
    %vm1163 = vcmask 1043456
    %v1165 = vsel %vm1163, %v657, 0
    %1167 = vmatprep.subr.bf16.mxu0 0
    %1168 = vmatpush1.bf16.msra.mxu0 %v1165
    %1169 = vmatprep.subr.bf16.mxu0 0
    %1170 = vmatpush1.bf16.msra.mxu0 0
    %1171 = vmatprep.subr.bf16.mxu0 0
    %1172 = vmatpush1.bf16.msra.mxu0 0
    %1173 = vmatprep.subr.bf16.mxu0 0
    %1174 = vmatpush1.bf16.msra.mxu0 0
    %1175 = vmatprep.subr.bf16.mxu0 0
    %1176 = vmatpush1.bf16.msra.mxu0 0
    %1177 = vmatprep.subr.bf16.mxu0 0
    %1178 = vmatpush1.bf16.msra.mxu0 0
    %1179 = vmatprep.subr.bf16.mxu0 0
    %1180 = vmatpush1.bf16.msra.mxu0 0
    %1181 = vmatprep.subr.bf16.mxu0 0
    %1182 = vmatpush1.bf16.msra.mxu0 0
    %1183 = vmatprep.subr.bf16.mxu0 0
    %1184 = vmatpush1.bf16.msra.mxu0 0
    %1185 = vmatprep.subr.bf16.mxu0 0
    %1186 = vmatpush1.bf16.msra.mxu0 0
    %1187 = vmatprep.subr.bf16.mxu0 0
    %1188 = vmatpush1.bf16.msra.mxu0 0
    %1189 = vmatprep.subr.bf16.mxu0 0
    %1190 = vmatpush1.bf16.msra.mxu0 0
    %1191 = vmatprep.subr.bf16.mxu0 0
    %1192 = vmatpush1.bf16.msra.mxu0 0
    %1193 = vmatprep.subr.bf16.mxu0 0
    %1194 = vmatpush1.bf16.msra.mxu0 0
    %1195 = vmatprep.subr.bf16.mxu0 0
    %1196 = vmatpush1.bf16.msra.mxu0 0
    %1197 = vmatprep.subr.bf16.mxu0 0
    %1198 = vmatpush1.bf16.msra.mxu0 0
    %1199 = vmatprep.mubr.bf16.mxu0 0
    %1200 = vmatmul.mubr.bf16.gmra.mrb[0].mxu0 %v1161
    %v1201 = vpop.f32.mrb[0].mxu0
    %v1202 = vadd.f32 0.0, %v1201
    %v1203 = vpop.f32.mrb[0].mxu0
    %v1204 = vpop.f32.mrb[0].mxu0
    %v1205 = vpop.f32.mrb[0].mxu0
    %1206 = vdwg.mxu0
    %v1208 = vsel %vm695, %v1153, 0
    %v1211 = vsel %vm1163, %v658, 0
    %1213 = vmatprep.subr.bf16.mxu0 0
    %1214 = vmatpush1.bf16.msra.mxu0 %v1211
    %1215 = vmatprep.subr.bf16.mxu0 0
    %1216 = vmatpush1.bf16.msra.mxu0 0
    %1217 = vmatprep.subr.bf16.mxu0 0
    %1218 = vmatpush1.bf16.msra.mxu0 0
    %1219 = vmatprep.subr.bf16.mxu0 0
    %1220 = vmatpush1.bf16.msra.mxu0 0
    %1221 = vmatprep.subr.bf16.mxu0 0
    %1222 = vmatpush1.bf16.msra.mxu0 0
    %1223 = vmatprep.subr.bf16.mxu0 0
    %1224 = vmatpush1.bf16.msra.mxu0 0
    %1225 = vmatprep.subr.bf16.mxu0 0
    %1226 = vmatpush1.bf16.msra.mxu0 0
    %1227 = vmatprep.subr.bf16.mxu0 0
    %1228 = vmatpush1.bf16.msra.mxu0 0
    %1229 = vmatprep.subr.bf16.mxu0 0
    %1230 = vmatpush1.bf16.msra.mxu0 0
    %1231 = vmatprep.subr.bf16.mxu0 0
    %1232 = vmatpush1.bf16.msra.mxu0 0
    %1233 = vmatprep.subr.bf16.mxu0 0
    %1234 = vmatpush1.bf16.msra.mxu0 0
    %1235 = vmatprep.subr.bf16.mxu0 0
    %1236 = vmatpush1.bf16.msra.mxu0 0
    %1237 = vmatprep.subr.bf16.mxu0 0
    %1238 = vmatpush1.bf16.msra.mxu0 0
    %1239 = vmatprep.subr.bf16.mxu0 0
    %1240 = vmatpush1.bf16.msra.mxu0 0
    %1241 = vmatprep.subr.bf16.mxu0 0
    %1242 = vmatpush1.bf16.msra.mxu0 0
    %1243 = vmatprep.subr.bf16.mxu0 0
    %1244 = vmatpush1.bf16.msra.mxu0 0
    %1245 = vmatprep.mubr.bf16.mxu0 0
    %1246 = vmatmul.mubr.bf16.gmra.mrb[0].mxu0 %v1208
    %v1247 = vpop.f32.mrb[0].mxu0
    %v1248 = vadd.f32 0.0, %v1247
    %v1249 = vpop.f32.mrb[0].mxu0
    %v1250 = vpop.f32.mrb[0].mxu0
    %v1251 = vpop.f32.mrb[0].mxu0
    %1252 = vdwg.mxu0
    %v1254 = vsel %vm695, %v1154, 0
    %v1257 = vsel %vm1163, %v684, 0
    %1259 = vmatprep.subr.bf16.mxu0 0
    %1260 = vmatpush1.bf16.msra.mxu0 %v1257
    %1261 = vmatprep.subr.bf16.mxu0 0
    %1262 = vmatpush1.bf16.msra.mxu0 0
    %1263 = vmatprep.subr.bf16.mxu0 0
    %1264 = vmatpush1.bf16.msra.mxu0 0
    %1265 = vmatprep.subr.bf16.mxu0 0
    %1266 = vmatpush1.bf16.msra.mxu0 0
    %1267 = vmatprep.subr.bf16.mxu0 0
    %1268 = vmatpush1.bf16.msra.mxu0 0
    %1269 = vmatprep.subr.bf16.mxu0 0
    %1270 = vmatpush1.bf16.msra.mxu0 0
    %1271 = vmatprep.subr.bf16.mxu0 0
    %1272 = vmatpush1.bf16.msra.mxu0 0
    %1273 = vmatprep.subr.bf16.mxu0 0
    %1274 = vmatpush1.bf16.msra.mxu0 0
    %1275 = vmatprep.subr.bf16.mxu0 0
    %1276 = vmatpush1.bf16.msra.mxu0 0
    %1277 = vmatprep.subr.bf16.mxu0 0
    %1278 = vmatpush1.bf16.msra.mxu0 0
    %1279 = vmatprep.subr.bf16.mxu0 0
    %1280 = vmatpush1.bf16.msra.mxu0 0
    %1281 = vmatprep.subr.bf16.mxu0 0
    %1282 = vmatpush1.bf16.msra.mxu0 0
    %1283 = vmatprep.subr.bf16.mxu0 0
    %1284 = vmatpush1.bf16.msra.mxu0 0
    %1285 = vmatprep.subr.bf16.mxu0 0
    %1286 = vmatpush1.bf16.msra.mxu0 0
    %1287 = vmatprep.subr.bf16.mxu0 0
    %1288 = vmatpush1.bf16.msra.mxu0 0
    %1289 = vmatprep.subr.bf16.mxu0 0
    %1290 = vmatpush1.bf16.msra.mxu0 0
    %1291 = vmatprep.mubr.bf16.mxu0 0
    %1292 = vmatmul.mubr.bf16.gmra.mrb[0].mxu0 %v1254
    %v1293 = vpop.f32.mrb[0].mxu0
    %v1294 = vadd.f32 0.0, %v1293
    %v1295 = vpop.f32.mrb[0].mxu0
    %v1296 = vpop.f32.mrb[0].mxu0
    %v1297 = vpop.f32.mrb[0].mxu0
    %1298 = vdwg.mxu0
    %v1300 = vsel %vm695, %v1155, 0
    %v1303 = vsel %vm1163, %v686, 0
    %1305 = vmatprep.subr.bf16.mxu0 0
    %1306 = vmatpush1.bf16.msra.mxu0 %v1303
    %1307 = vmatprep.subr.bf16.mxu0 0
    %1308 = vmatpush1.bf16.msra.mxu0 0
    %1309 = vmatprep.subr.bf16.mxu0 0
    %1310 = vmatpush1.bf16.msra.mxu0 0
    %1311 = vmatprep.subr.bf16.mxu0 0
    %1312 = vmatpush1.bf16.msra.mxu0 0
    %1313 = vmatprep.subr.bf16.mxu0 0
    %1314 = vmatpush1.bf16.msra.mxu0 0
    %1315 = vmatprep.subr.bf16.mxu0 0
    %1316 = vmatpush1.bf16.msra.mxu0 0
    %1317 = vmatprep.subr.bf16.mxu0 0
    %1318 = vmatpush1.bf16.msra.mxu0 0
    %1319 = vmatprep.subr.bf16.mxu0 0
    %1320 = vmatpush1.bf16.msra.mxu0 0
    %1321 = vmatprep.subr.bf16.mxu0 0
    %1322 = vmatpush1.bf16.msra.mxu0 0
    %1323 = vmatprep.subr.bf16.mxu0 0
    %1324 = vmatpush1.bf16.msra.mxu0 0
    %1325 = vmatprep.subr.bf16.mxu0 0
    %1326 = vmatpush1.bf16.msra.mxu0 0
    %1327 = vmatprep.subr.bf16.mxu0 0
    %1328 = vmatpush1.bf16.msra.mxu0 0
    %1329 = vmatprep.subr.bf16.mxu0 0
    %1330 = vmatpush1.bf16.msra.mxu0 0
    %1331 = vmatprep.subr.bf16.mxu0 0
    %1332 = vmatpush1.bf16.msra.mxu0 0
    %1333 = vmatprep.subr.bf16.mxu0 0
    %1334 = vmatpush1.bf16.msra.mxu0 0
    %1335 = vmatprep.subr.bf16.mxu0 0
    %1336 = vmatpush1.bf16.msra.mxu0 0
    %1337 = vmatprep.mubr.bf16.mxu0 0
    %1338 = vmatmul.mubr.bf16.gmra.mrb[0].mxu0 %v1300
    %v1339 = vpop.f32.mrb[0].mxu0
    %v1340 = vadd.f32 0.0, %v1339
    %v1341 = vpop.f32.mrb[0].mxu0
    %v1342 = vpop.f32.mrb[0].mxu0
    %v1343 = vpop.f32.mrb[0].mxu0
    %1344 = vdwg.mxu0
    %v1346 = vsel %vm695, %v1156, 0
    %v1349 = vsel %vm1163, %v688, 0
    %1351 = vmatprep.subr.bf16.mxu0 0
    %1352 = vmatpush1.bf16.msra.mxu0 %v1349
    %1353 = vmatprep.subr.bf16.mxu0 0
    %1354 = vmatpush1.bf16.msra.mxu0 0
    %1355 = vmatprep.subr.bf16.mxu0 0
    %1356 = vmatpush1.bf16.msra.mxu0 0
    %1357 = vmatprep.subr.bf16.mxu0 0
    %1358 = vmatpush1.bf16.msra.mxu0 0
    %1359 = vmatprep.subr.bf16.mxu0 0
    %1360 = vmatpush1.bf16.msra.mxu0 0
    %1361 = vmatprep.subr.bf16.mxu0 0
    %1362 = vmatpush1.bf16.msra.mxu0 0
    %1363 = vmatprep.subr.bf16.mxu0 0
    %1364 = vmatpush1.bf16.msra.mxu0 0
    %1365 = vmatprep.subr.bf16.mxu0 0
    %1366 = vmatpush1.bf16.msra.mxu0 0
    %1367 = vmatprep.subr.bf16.mxu0 0
    %1368 = vmatpush1.bf16.msra.mxu0 0
    %1369 = vmatprep.subr.bf16.mxu0 0
    %1370 = vmatpush1.bf16.msra.mxu0 0
    %1371 = vmatprep.subr.bf16.mxu0 0
    %1372 = vmatpush1.bf16.msra.mxu0 0
    %1373 = vmatprep.subr.bf16.mxu0 0
    %1374 = vmatpush1.bf16.msra.mxu0 0
    %1375 = vmatprep.subr.bf16.mxu0 0
    %1376 = vmatpush1.bf16.msra.mxu0 0
    %1377 = vmatprep.subr.bf16.mxu0 0
    %1378 = vmatpush1.bf16.msra.mxu0 0
    %1379 = vmatprep.subr.bf16.mxu0 0
    %1380 = vmatpush1.bf16.msra.mxu0 0
    %1381 = vmatprep.subr.bf16.mxu0 0
    %1382 = vmatpush1.bf16.msra.mxu0 0
    %1383 = vmatprep.mubr.bf16.mxu0 0
    %1384 = vmatmul.mubr.bf16.gmra.mrb[0].mxu0 %v1346
    %v1385 = vpop.f32.mrb[0].mxu0
    %v1386 = vadd.f32 0.0, %v1385
    %v1387 = vpop.f32.mrb[0].mxu0
    %v1388 = vpop.f32.mrb[0].mxu0
    %v1389 = vpop.f32.mrb[0].mxu0
    %1390 = vdwg.mxu0
    %v1392 = vsel %vm695, %v1157, 0
    %v1395 = vsel %vm1163, %v690, 0
    %1397 = vmatprep.subr.bf16.mxu0 0
    %1398 = vmatpush1.bf16.msra.mxu0 %v1395
    %1399 = vmatprep.subr.bf16.mxu0 0
    %1400 = vmatpush1.bf16.msra.mxu0 0
    %1401 = vmatprep.subr.bf16.mxu0 0
    %1402 = vmatpush1.bf16.msra.mxu0 0
    %1403 = vmatprep.subr.bf16.mxu0 0
    %1404 = vmatpush1.bf16.msra.mxu0 0
    %1405 = vmatprep.subr.bf16.mxu0 0
    %1406 = vmatpush1.bf16.msra.mxu0 0
    %1407 = vmatprep.subr.bf16.mxu0 0
    %1408 = vmatpush1.bf16.msra.mxu0 0
    %1409 = vmatprep.subr.bf16.mxu0 0
    %1410 = vmatpush1.bf16.msra.mxu0 0
    %1411 = vmatprep.subr.bf16.mxu0 0
    %1412 = vmatpush1.bf16.msra.mxu0 0
    %1413 = vmatprep.subr.bf16.mxu0 0
    %1414 = vmatpush1.bf16.msra.mxu0 0
    %1415 = vmatprep.subr.bf16.mxu0 0
    %1416 = vmatpush1.bf16.msra.mxu0 0
    %1417 = vmatprep.subr.bf16.mxu0 0
    %1418 = vmatpush1.bf16.msra.mxu0 0
    %1419 = vmatprep.subr.bf16.mxu0 0
    %1420 = vmatpush1.bf16.msra.mxu0 0
    %1421 = vmatprep.subr.bf16.mxu0 0
    %1422 = vmatpush1.bf16.msra.mxu0 0
    %1423 = vmatprep.subr.bf16.mxu0 0
    %1424 = vmatpush1.bf16.msra.mxu0 0
    %1425 = vmatprep.subr.bf16.mxu0 0
    %1426 = vmatpush1.bf16.msra.mxu0 0
    %1427 = vmatprep.subr.bf16.mxu0 0
    %1428 = vmatpush1.bf16.msra.mxu0 0
    %1429 = vmatprep.mubr.bf16.mxu0 0
    %1430 = vmatmul.mubr.bf16.gmra.mrb[0].mxu0 %v1392
    %v1431 = vpop.f32.mrb[0].mxu0
    %v1432 = vadd.f32 0.0, %v1431
    %v1433 = vpop.f32.mrb[0].mxu0
    %v1434 = vpop.f32.mrb[0].mxu0
    %v1435 = vpop.f32.mrb[0].mxu0
    %1436 = vdwg.mxu0
    %v1438 = vsel %vm695, %v1158, 0
    %v1441 = vsel %vm1163, %v692, 0
    %1443 = vmatprep.subr.bf16.mxu0 0
    %1444 = vmatpush1.bf16.msra.mxu0 %v1441
    %1445 = vmatprep.subr.bf16.mxu0 0
    %1446 = vmatpush1.bf16.msra.mxu0 0
    %1447 = vmatprep.subr.bf16.mxu0 0
    %1448 = vmatpush1.bf16.msra.mxu0 0
    %1449 = vmatprep.subr.bf16.mxu0 0
    %1450 = vmatpush1.bf16.msra.mxu0 0
    %1451 = vmatprep.subr.bf16.mxu0 0
    %1452 = vmatpush1.bf16.msra.mxu0 0
    %1453 = vmatprep.subr.bf16.mxu0 0
    %1454 = vmatpush1.bf16.msra.mxu0 0
    %1455 = vmatprep.subr.bf16.mxu0 0
    %1456 = vmatpush1.bf16.msra.mxu0 0
    %1457 = vmatprep.subr.bf16.mxu0 0
    %1458 = vmatpush1.bf16.msra.mxu0 0
    %1459 = vmatprep.subr.bf16.mxu0 0
    %1460 = vmatpush1.bf16.msra.mxu0 0
    %1461 = vmatprep.subr.bf16.mxu0 0
    %1462 = vmatpush1.bf16.msra.mxu0 0
    %1463 = vmatprep.subr.bf16.mxu0 0
    %1464 = vmatpush1.bf16.msra.mxu0 0
    %1465 = vmatprep.subr.bf16.mxu0 0
    %1466 = vmatpush1.bf16.msra.mxu0 0
    %1467 = vmatprep.subr.bf16.mxu0 0
    %1468 = vmatpush1.bf16.msra.mxu0 0
    %1469 = vmatprep.subr.bf16.mxu0 0
    %1470 = vmatpush1.bf16.msra.mxu0 0
    %1471 = vmatprep.subr.bf16.mxu0 0
    %1472 = vmatpush1.bf16.msra.mxu0 0
    %1473 = vmatprep.subr.bf16.mxu0 0
    %1474 = vmatpush1.bf16.msra.mxu0 0
    %1475 = vmatprep.mubr.bf16.mxu0 0
    %1476 = vmatmul.mubr.bf16.gmra.mrb[0].mxu0 %v1438
    %v1477 = vpop.f32.mrb[0].mxu0
    %v1478 = vadd.f32 0.0, %v1477
    %v1479 = vpop.f32.mrb[0].mxu0
    %v1480 = vpop.f32.mrb[0].mxu0
    %v1481 = vpop.f32.mrb[0].mxu0
    %1482 = vdwg.mxu0
    %v1484 = vsel %vm695, %v1159, 0
    %v1487 = vsel %vm1163, %v694, 0
    %1489 = vmatprep.subr.bf16.mxu0 0
    %1490 = vmatpush1.bf16.msra.mxu0 %v1487
    %1491 = vmatprep.subr.bf16.mxu0 0
    %1492 = vmatpush1.bf16.msra.mxu0 0
    %1493 = vmatprep.subr.bf16.mxu0 0
    %1494 = vmatpush1.bf16.msra.mxu0 0
    %1495 = vmatprep.subr.bf16.mxu0 0
    %1496 = vmatpush1.bf16.msra.mxu0 0
    %1497 = vmatprep.subr.bf16.mxu0 0
    %1498 = vmatpush1.bf16.msra.mxu0 0
    %1499 = vmatprep.subr.bf16.mxu0 0
    %1500 = vmatpush1.bf16.msra.mxu0 0
    %1501 = vmatprep.subr.bf16.mxu0 0
    %1502 = vmatpush1.bf16.msra.mxu0 0
    %1503 = vmatprep.subr.bf16.mxu0 0
    %1504 = vmatpush1.bf16.msra.mxu0 0
    %1505 = vmatprep.subr.bf16.mxu0 0
    %1506 = vmatpush1.bf16.msra.mxu0 0
    %1507 = vmatprep.subr.bf16.mxu0 0
    %1508 = vmatpush1.bf16.msra.mxu0 0
    %1509 = vmatprep.subr.bf16.mxu0 0
    %1510 = vmatpush1.bf16.msra.mxu0 0
    %1511 = vmatprep.subr.bf16.mxu0 0
    %1512 = vmatpush1.bf16.msra.mxu0 0
    %1513 = vmatprep.subr.bf16.mxu0 0
    %1514 = vmatpush1.bf16.msra.mxu0 0
    %1515 = vmatprep.subr.bf16.mxu0 0
    %1516 = vmatpush1.bf16.msra.mxu0 0
    %1517 = vmatprep.subr.bf16.mxu0 0
    %1518 = vmatpush1.bf16.msra.mxu0 0
    %1519 = vmatprep.subr.bf16.mxu0 0
    %1520 = vmatpush1.bf16.msra.mxu0 0
    %1521 = vmatprep.mubr.bf16.mxu0 0
    %1522 = vmatmul.mubr.bf16.gmra.mrb[0].mxu0 %v1484
    %v1523 = vpop.f32.mrb[0].mxu0
    %v1524 = vadd.f32 0.0, %v1523
    %v1525 = vpop.f32.mrb[0].mxu0
    %v1526 = vpop.f32.mrb[0].mxu0
    %v1527 = vpop.f32.mrb[0].mxu0
    %1528 = vdwg.mxu0
    %1531 = vrot.lane.b32.xlu0 %v1294, 8
    %v1532 = vpop.permute.xlu0 %1531
    %1533 = vrot.lane.b32.xlu0 %v1340, 8
    %v1534 = vpop.permute.xlu0 %1533
    %1539 = vrot.lane.b32.xlu0 %v1386, 16
    %v1540 = vpop.permute.xlu0 %1539
    %1541 = vrot.lane.b32.xlu0 %v1432, 16
    %v1542 = vpop.permute.xlu0 %1541
    %1547 = vrot.lane.b32.xlu0 %v1478, 24
    %v1548 = vpop.permute.xlu0 %1547
    %1549 = vrot.lane.b32.xlu0 %v1524, 24
    %v1550 = vpop.permute.xlu0 %1549
    %v1553 = vsel %vm695, %v1202, %v1532
    %v1554 = vsel %vm695, %v1248, %v1534
    %vm1555 = vcmask 130048
    %v1556 = vsel %vm1555, %v1553, %v1540
    %v1557 = vsel %vm1555, %v1554, %v1542
    %vm1558 = vcmask 195584
    %v1559 = vsel %vm1558, %v1556, %v1548
    %v1560 = vsel %vm1558, %v1557, %v1550
    %v1561 = vpack.c.bf16 %v1560, %v1559
    %v1563 = vlaneseq
    %v1564 = vshrl.u32 %v1563, 7
    %v1565 = vsub.s32 0, %v1564
    %v1566 = vrot.slane %v455, %v1565
    %v1572 = vunpack.c.l.b16 %v451
    %v1573 = vunpack.c.l.b16 %v452
    %v1574 = vunpack.c.l.b16 %v453
    %v1575 = vunpack.c.l.b16 %v454
    %v1576 = vpack.c.b16 %v1573, %v1572
    %v1577 = vpack.c.b16 %v1575, %v1574
    %v1581 = vsel %vm390, %v1561, 0
    %1583 = vmatprep.subr.bf16.mxu0 0
    %1584 = vmatpush1.bf16.msra.mxu0 %v1576
    %1585 = vmatprep.subr.bf16.mxu0 0
    %1586 = vmatpush1.bf16.msra.mxu0 %v1577
    %1587 = vmatprep.subr.bf16.mxu0 0
    %1588 = vmatpush1.bf16.msra.mxu0 0
    %1589 = vmatprep.subr.bf16.mxu0 0
    %1590 = vmatpush1.bf16.msra.mxu0 0
    %1591 = vmatprep.subr.bf16.mxu0 0
    %1592 = vmatpush1.bf16.msra.mxu0 0
    %1593 = vmatprep.subr.bf16.mxu0 0
    %1594 = vmatpush1.bf16.msra.mxu0 0
    %1595 = vmatprep.subr.bf16.mxu0 0
    %1596 = vmatpush1.bf16.msra.mxu0 0
    %1597 = vmatprep.subr.bf16.mxu0 0
    %1598 = vmatpush1.bf16.msra.mxu0 0
    %1599 = vmatprep.subr.bf16.mxu0 0
    %1600 = vmatpush1.bf16.msra.mxu0 0
    %1601 = vmatprep.subr.bf16.mxu0 0
    %1602 = vmatpush1.bf16.msra.mxu0 0
    %1603 = vmatprep.subr.bf16.mxu0 0
    %1604 = vmatpush1.bf16.msra.mxu0 0
    %1605 = vmatprep.subr.bf16.mxu0 0
    %1606 = vmatpush1.bf16.msra.mxu0 0
    %1607 = vmatprep.subr.bf16.mxu0 0
    %1608 = vmatpush1.bf16.msra.mxu0 0
    %1609 = vmatprep.subr.bf16.mxu0 0
    %1610 = vmatpush1.bf16.msra.mxu0 0
    %1611 = vmatprep.subr.bf16.mxu0 0
    %1612 = vmatpush1.bf16.msra.mxu0 0
    %1613 = vmatprep.subr.bf16.mxu0 0
    %1614 = vmatpush1.bf16.msra.mxu0 0
    %1615 = vmatprep.mubr.bf16.mxu0 0
    %1616 = vmatmul.mubr.bf16.gmra.mrb[0].mxu0 %v1581
    %v1617 = vpop.f32.mrb[0].mxu0
    %v1618 = vadd.f32 %v1566, %v1617
    %v1619 = vpop.f32.mrb[0].mxu0
    %v1620 = vpop.f32.mrb[0].mxu0
    %v1621 = vadd.f32 %v1566, %v1620
    %v1622 = vpop.f32.mrb[0].mxu0
    %1623 = vdwg.mxu0
    %v1624 = vadd.f32 %v385, %v1618
    %v1625 = vadd.f32 %v386, %v1621
    %v1626 = vld [vmem:[#allocation19] sm:$0x1]
    %v1627 = vld [vmem:[%s37] sm:$0x1]
    %v1628 = vsel %vm390, %v1624, 0.0
    %1629 = vadd.xlane.f32.xlu0 %v1628
    %v1630 = vpop.xlane.xlu0 %1629
    %v1631 = vsel %vm390, %v1625, 0.0
    %1632 = vadd.xlane.f32.xlu0 %v1631
    %v1633 = vpop.xlane.xlu0 %1632
    %v1634 = vmul.f32 %v1630, %v397
    %v1635 = vmul.f32 %v1633, %v397
    %v1636 = vsub.f32 %v1624, %v1634
    %v1637 = vsub.f32 %v1625, %v1635
    %v1638 = vmul.f32 %v1636, %v1636
    %v1639 = vmul.f32 %v1637, %v1637
    %v1640 = vsel %vm390, %v1638, 0.0
    %1641 = vadd.xlane.f32.xlu0 %v1640
    %v1642 = vpop.xlane.xlu0 %1641
    %v1643 = vsel %vm390, %v1639, 0.0
    %1644 = vadd.xlane.f32.xlu0 %v1643
    %v1645 = vpop.xlane.xlu0 %1644
    %v1646 = vmul.f32 %v1642, %v397
    %v1647 = vmul.f32 %v1645, %v397
    %v1648 = vadd.f32 %v1646, 1e-05
    %v1649 = vadd.f32 %v1647, 1e-05
    %v1650 = vrsqrt.pop %v1648
    %v1651 = vrsqrt.pop %v1649
    %v1652 = vmul.f32 %v1636, %v1650
    %v1653 = vmul.f32 %v1637, %v1651
    %v1655 = vlaneseq
    %v1656 = vshrl.u32 %v1655, 7
    %v1657 = vsub.s32 0, %v1656
    %v1658 = vrot.slane %v1626, %v1657
    %v1660 = vmul.f32 %v1652, %v1658
    %v1661 = vmul.f32 %v1653, %v1658
    %v1663 = vlaneseq
    %v1664 = vshrl.u32 %v1663, 7
    %v1665 = vsub.s32 0, %v1664
    %v1666 = vrot.slane %v1627, %v1665
    %v1668 = vadd.f32 %v1660, %v1666
    %v1669 = vadd.f32 %v1661, %v1666
    %v1670 = vadd.f32 %v1668, %v387
    %v1671 = vadd.f32 %v1669, %v387
    %v1672 = vld [vmem:[%s3] sm:$0xf]
    %v1673 = vld [vmem:[%s3 + $0x4] sm:$0xf]
    %v1674 = vld [vmem:[%s3 + $0x8] sm:$0xf]
    %v1675 = vld [vmem:[%s3 + $0xc] sm:$0xf]
    %v1676 = vld [vmem:[%s5] sm:$0xf]
    %v1677 = vld [vmem:[%s5 + $0x4] sm:$0xf]
    %v1678 = vld [vmem:[%s5 + $0x8] sm:$0xf]
    %v1679 = vld [vmem:[%s5 + $0xc] sm:$0xf]
    %v1684 = vunpack.c.l.b16 %v1672
    %v1685 = vunpack.c.l.b16 %v1673
    %v1686 = vunpack.c.l.b16 %v1674
    %v1687 = vunpack.c.l.b16 %v1675
    %v1688 = vpack.c.b16 %v1685, %v1684
    %v1689 = vpack.c.b16 %v1687, %v1686
    %v1696 = vunpack.c.l.b16 %v1676
    %v1697 = vunpack.c.l.b16 %v1677
    %v1698 = vunpack.c.l.b16 %v1678
    %v1699 = vunpack.c.l.b16 %v1679
    %v1700 = vpack.c.b16 %v1697, %v1696
    %v1701 = vpack.c.b16 %v1699, %v1698
    %v1704 = vunpack.c.l.bf16 %v1688
    %v1705 = vunpack.c.h.bf16 %v1688
    %v1706 = vunpack.c.l.bf16 %v1700
    %v1707 = vunpack.c.h.bf16 %v1700
    %v1708 = vunpack.c.l.bf16 %v1689
    %v1709 = vunpack.c.h.bf16 %v1689
    %v1710 = vunpack.c.l.bf16 %v1701
    %v1711 = vunpack.c.h.bf16 %v1701
    %v1712 = vld [vmem:[#allocation5] sm:$0x3]
    %v1713 = vld [vmem:[%s7] sm:$0xf]
    %v1714 = vld [vmem:[%s7 + $0x4] sm:$0xf]
    %v1715 = vld [vmem:[%s7 + $0x8] sm:$0xf]
    %v1716 = vld [vmem:[%s7 + $0xc] sm:$0xf]
    %v1717 = vunpack.c.l.bf16 %v1713
    %v1718 = vunpack.c.l.bf16 %v1714
    %v1719 = vunpack.c.l.bf16 %v1715
    %v1720 = vunpack.c.l.bf16 %v1716
    %v1721 = vlaneseq
    %v1722 = vshrl.u32 %v1721, 7
    %v1723 = vsub.s32 0, %v1722
    %v1724 = vrot.slane %v1712, %v1723
    %v1725 = vadd.f32 %v1717, %v1724
    %v1726 = vadd.f32 %v1718, %v1724
    %v1727 = vadd.f32 %v1719, %v1724
    %v1728 = vadd.f32 %v1720, %v1724
    %v1729 = vld [vmem:[%s9] sm:$0xf]
    %v1730 = vld [vmem:[%s9 + $0x4] sm:$0xf]
    %v1731 = vld [vmem:[%s9 + $0x8] sm:$0xf]
    %v1732 = vld [vmem:[%s9 + $0xc] sm:$0xf]
    %v1733 = vunpack.c.l.bf16 %v1729
    %v1734 = vunpack.c.l.bf16 %v1730
    %v1735 = vunpack.c.l.bf16 %v1731
    %v1736 = vunpack.c.l.bf16 %v1732
    %v1737 = vlaneseq
    %v1738 = vshrl.u32 %v1737, 7
    %v1739 = vsub.s32 1, %v1738
    %v1740 = vrot.slane %v1712, %v1739
    %v1741 = vadd.f32 %v1733, %v1740
    %v1742 = vadd.f32 %v1734, %v1740
    %v1743 = vadd.f32 %v1735, %v1740
    %v1744 = vadd.f32 %v1736, %v1740
    %v1745 = vld [vmem:[#allocation20] sm:$0x1]
    %v1746 = vld [vmem:[#allocation22] sm:$0x1]
    %v1747 = vsel %vm390, %v1704, 0.0
    %1748 = vadd.xlane.f32.xlu0 %v1747
    %v1749 = vpop.xlane.xlu0 %1748
    %v1750 = vsel %vm390, %v1705, 0.0
    %1751 = vadd.xlane.f32.xlu0 %v1750
    %v1752 = vpop.xlane.xlu0 %1751
    %v1753 = vsel %vm390, %v1706, 0.0
    %1754 = vadd.xlane.f32.xlu0 %v1753
    %v1755 = vpop.xlane.xlu0 %1754
    %v1756 = vsel %vm390, %v1707, 0.0
    %1757 = vadd.xlane.f32.xlu0 %v1756
    %v1758 = vpop.xlane.xlu0 %1757
    %v1759 = vsel %vm390, %v1708, 0.0
    %1760 = vadd.xlane.f32.xlu0 %v1759
    %v1761 = vpop.xlane.xlu0 %1760
    %v1762 = vsel %vm390, %v1709, 0.0
    %1763 = vadd.xlane.f32.xlu0 %v1762
    %v1764 = vpop.xlane.xlu0 %1763
    %v1765 = vsel %vm390, %v1710, 0.0
    %1766 = vadd.xlane.f32.xlu0 %v1765
    %v1767 = vpop.xlane.xlu0 %1766
    %v1768 = vsel %vm390, %v1711, 0.0
    %1769 = vadd.xlane.f32.xlu0 %v1768
    %v1770 = vpop.xlane.xlu0 %1769
    %v1771 = vmul.f32 %v1749, %v397
    %v1772 = vmul.f32 %v1752, %v397
    %v1773 = vmul.f32 %v1755, %v397
    %v1774 = vmul.f32 %v1758, %v397
    %v1775 = vmul.f32 %v1761, %v397
    %v1776 = vmul.f32 %v1764, %v397
    %v1777 = vmul.f32 %v1767, %v397
    %v1778 = vmul.f32 %v1770, %v397
    %v1779 = vsub.f32 %v1704, %v1771
    %v1780 = vsub.f32 %v1705, %v1772
    %v1781 = vsub.f32 %v1706, %v1773
    %v1782 = vsub.f32 %v1707, %v1774
    %v1783 = vsub.f32 %v1708, %v1775
    %v1784 = vsub.f32 %v1709, %v1776
    %v1785 = vsub.f32 %v1710, %v1777
    %v1786 = vsub.f32 %v1711, %v1778
    %v1787 = vmul.f32 %v1779, %v1779
    %v1788 = vmul.f32 %v1780, %v1780
    %v1789 = vmul.f32 %v1781, %v1781
    %v1790 = vmul.f32 %v1782, %v1782
    %v1791 = vmul.f32 %v1783, %v1783
    %v1792 = vmul.f32 %v1784, %v1784
    %v1793 = vmul.f32 %v1785, %v1785
    %v1794 = vmul.f32 %v1786, %v1786
    %v1795 = vsel %vm390, %v1787, 0.0
    %1796 = vadd.xlane.f32.xlu0 %v1795
    %v1797 = vpop.xlane.xlu0 %1796
    %v1798 = vsel %vm390, %v1788, 0.0
    %1799 = vadd.xlane.f32.xlu0 %v1798
    %v1800 = vpop.xlane.xlu0 %1799
    %v1801 = vsel %vm390, %v1789, 0.0
    %1802 = vadd.xlane.f32.xlu0 %v1801
    %v1803 = vpop.xlane.xlu0 %1802
    %v1804 = vsel %vm390, %v1790, 0.0
    %1805 = vadd.xlane.f32.xlu0 %v1804
    %v1806 = vpop.xlane.xlu0 %1805
    %v1807 = vsel %vm390, %v1791, 0.0
    %1808 = vadd.xlane.f32.xlu0 %v1807
    %v1809 = vpop.xlane.xlu0 %1808
    %v1810 = vsel %vm390, %v1792, 0.0
    %1811 = vadd.xlane.f32.xlu0 %v1810
    %v1812 = vpop.xlane.xlu0 %1811
    %v1813 = vsel %vm390, %v1793, 0.0
    %1814 = vadd.xlane.f32.xlu0 %v1813
    %v1815 = vpop.xlane.xlu0 %1814
    %v1816 = vsel %vm390, %v1794, 0.0
    %1817 = vadd.xlane.f32.xlu0 %v1816
    %v1818 = vpop.xlane.xlu0 %1817
    %v1819 = vmul.f32 %v1797, %v397
    %v1820 = vmul.f32 %v1800, %v397
    %v1821 = vmul.f32 %v1803, %v397
    %v1822 = vmul.f32 %v1806, %v397
    %v1823 = vmul.f32 %v1809, %v397
    %v1824 = vmul.f32 %v1812, %v397
    %v1825 = vmul.f32 %v1815, %v397
    %v1826 = vmul.f32 %v1818, %v397
    %v1827 = vadd.f32 %v1819, 1e-05
    %v1828 = vadd.f32 %v1820, 1e-05
    %v1829 = vadd.f32 %v1821, 1e-05
    %v1830 = vadd.f32 %v1822, 1e-05
    %v1831 = vadd.f32 %v1823, 1e-05
    %v1832 = vadd.f32 %v1824, 1e-05
    %v1833 = vadd.f32 %v1825, 1e-05
    %v1834 = vadd.f32 %v1826, 1e-05
    %v1835 = vrsqrt.pop %v1827
    %v1836 = vrsqrt.pop %v1828
    %v1837 = vrsqrt.pop %v1829
    %v1838 = vrsqrt.pop %v1830
    %v1839 = vrsqrt.pop %v1831
    %v1840 = vrsqrt.pop %v1832
    %v1841 = vrsqrt.pop %v1833
    %v1842 = vrsqrt.pop %v1834
    %v1843 = vmul.f32 %v1779, %v1835
    %v1844 = vmul.f32 %v1780, %v1836
    %v1845 = vmul.f32 %v1781, %v1837
    %v1846 = vmul.f32 %v1782, %v1838
    %v1847 = vmul.f32 %v1783, %v1839
    %v1848 = vmul.f32 %v1784, %v1840
    %v1849 = vmul.f32 %v1785, %v1841
    %v1850 = vmul.f32 %v1786, %v1842
    %v1852 = vlaneseq
    %v1853 = vshrl.u32 %v1852, 7
    %v1854 = vsub.s32 0, %v1853
    %v1855 = vrot.slane %v1745, %v1854
    %v1857 = vmul.f32 %v1843, %v1855
    %v1858 = vmul.f32 %v1844, %v1855
    %v1859 = vmul.f32 %v1845, %v1855
    %v1860 = vmul.f32 %v1846, %v1855
    %v1861 = vmul.f32 %v1847, %v1855
    %v1862 = vmul.f32 %v1848, %v1855
    %v1863 = vmul.f32 %v1849, %v1855
    %v1864 = vmul.f32 %v1850, %v1855
    %v1866 = vlaneseq
    %v1867 = vshrl.u32 %v1866, 7
    %v1868 = vsub.s32 0, %v1867
    %v1869 = vrot.slane %v1746, %v1868
    %v1871 = vadd.f32 %v1857, %v1869
    %v1872 = vadd.f32 %v1858, %v1869
    %v1873 = vadd.f32 %v1859, %v1869
    %v1874 = vadd.f32 %v1860, %v1869
    %v1875 = vadd.f32 %v1861, %v1869
    %v1876 = vadd.f32 %v1862, %v1869
    %v1877 = vadd.f32 %v1863, %v1869
    %v1878 = vadd.f32 %v1864, %v1869
    %v1879 = vadd.f32 %v1871, %v1725
    %v1880 = vadd.f32 %v1872, %v1726
    %v1881 = vadd.f32 %v1873, %v1741
    %v1882 = vadd.f32 %v1874, %v1742
    %v1883 = vadd.f32 %v1875, %v1727
    %v1884 = vadd.f32 %v1876, %v1728
    %v1885 = vadd.f32 %v1877, %v1743
    %v1886 = vadd.f32 %v1878, %v1744
    %v1887 = vld [vmem:[%s43] sm:$0xf]
    %v1888 = vld [vmem:[%s43 + $0x4] sm:$0xf]
    %v1889 = vld [vmem:[%s43 + $0x8] sm:$0xf]
    %v1890 = vld [vmem:[%s43 + $0xc] sm:$0xf]
    %v1891 = vld [vmem:[#allocation23] sm:$0x1]
    %v1892 = vld [vmem:[%s47] sm:$0xf]
    %v1893 = vld [vmem:[%s47 + $0x4] sm:$0xf]
    %v1894 = vld [vmem:[%s47 + $0x8] sm:$0xf]
    %v1895 = vld [vmem:[%s47 + $0xc] sm:$0xf]
    %v1896 = vld [vmem:[#allocation25] sm:$0x1]
    %v1897 = vld [vmem:[#allocation26] sm:$0xf]
    %v1898 = vld [vmem:[#allocation26 + $0x4] sm:$0xf]
    %v1899 = vld [vmem:[#allocation26 + $0x8] sm:$0xf]
    %v1900 = vld [vmem:[#allocation26 + $0xc] sm:$0xf]
    %v1901 = vld [vmem:[#allocation28] sm:$0x1]
    %v1902 = vld [vmem:[%s55] sm:$0xf]
    %v1903 = vld [vmem:[%s55 + $0x4] sm:$0xf]
    %v1904 = vld [vmem:[%s55 + $0x8] sm:$0xf]
    %v1905 = vld [vmem:[%s55 + $0xc] sm:$0xf]
    %v1906 = vld [vmem:[#allocation29] sm:$0x1]
    %v1907 = vpack.c.bf16 %v1671, %v1670
    %v1909 = vlaneseq
    %v1910 = vshrl.u32 %v1909, 7
    %v1911 = vsub.s32 0, %v1910
    %v1912 = vrot.slane %v1891, %v1911
    %v1918 = vunpack.c.l.b16 %v1887
    %v1919 = vunpack.c.l.b16 %v1888
    %v1920 = vunpack.c.l.b16 %v1889
    %v1921 = vunpack.c.l.b16 %v1890
    %v1922 = vpack.c.b16 %v1919, %v1918
    %v1923 = vpack.c.b16 %v1921, %v1920
    %v1927 = vsel %vm390, %v1907, 0
    %1929 = vmatprep.subr.bf16.mxu0 0
    %1930 = vmatpush1.bf16.msra.mxu0 %v1922
    %1931 = vmatprep.subr.bf16.mxu0 0
    %1932 = vmatpush1.bf16.msra.mxu0 %v1923
    %1933 = vmatprep.subr.bf16.mxu0 0
    %1934 = vmatpush1.bf16.msra.mxu0 0
    %1935 = vmatprep.subr.bf16.mxu0 0
    %1936 = vmatpush1.bf16.msra.mxu0 0
    %1937 = vmatprep.subr.bf16.mxu0 0
    %1938 = vmatpush1.bf16.msra.mxu0 0
    %1939 = vmatprep.subr.bf16.mxu0 0
    %1940 = vmatpush1.bf16.msra.mxu0 0
    %1941 = vmatprep.subr.bf16.mxu0 0
    %1942 = vmatpush1.bf16.msra.mxu0 0
    %1943 = vmatprep.subr.bf16.mxu0 0
    %1944 = vmatpush1.bf16.msra.mxu0 0
    %1945 = vmatprep.subr.bf16.mxu0 0
    %1946 = vmatpush1.bf16.msra.mxu0 0
    %1947 = vmatprep.subr.bf16.mxu0 0
    %1948 = vmatpush1.bf16.msra.mxu0 0
    %1949 = vmatprep.subr.bf16.mxu0 0
    %1950 = vmatpush1.bf16.msra.mxu0 0
    %1951 = vmatprep.subr.bf16.mxu0 0
    %1952 = vmatpush1.bf16.msra.mxu0 0
    %1953 = vmatprep.subr.bf16.mxu0 0
    %1954 = vmatpush1.bf16.msra.mxu0 0
    %1955 = vmatprep.subr.bf16.mxu0 0
    %1956 = vmatpush1.bf16.msra.mxu0 0
    %1957 = vmatprep.subr.bf16.mxu0 0
    %1958 = vmatpush1.bf16.msra.mxu0 0
    %1959 = vmatprep.subr.bf16.mxu0 0
    %1960 = vmatpush1.bf16.msra.mxu0 0
    %1961 = vmatprep.mubr.bf16.mxu0 0
    %1962 = vmatmul.mubr.bf16.gmra.mrb[0].mxu0 %v1927
    %v1963 = vpop.f32.mrb[0].mxu0
    %v1964 = vadd.f32 %v1912, %v1963
    %v1965 = vpop.f32.mrb[0].mxu0
    %v1966 = vpop.f32.mrb[0].mxu0
    %v1967 = vadd.f32 %v1912, %v1966
    %v1968 = vpop.f32.mrb[0].mxu0
    %1969 = vdwg.mxu0
    %v1970 = vpack.c.bf16 %v1967, %v1964
    %v1971 = vpack.c.bf16 %v1880, %v1879
    %v1972 = vpack.c.bf16 %v1882, %v1881
    %v1973 = vpack.c.bf16 %v1884, %v1883
    %v1974 = vpack.c.bf16 %v1886, %v1885
    %v1976 = vlaneseq
    %v1977 = vshrl.u32 %v1976, 7
    %v1978 = vsub.s32 0, %v1977
    %v1979 = vrot.slane %v1896, %v1978
    %v1985 = vunpack.c.l.b16 %v1892
    %v1986 = vunpack.c.l.b16 %v1893
    %v1987 = vunpack.c.l.b16 %v1894
    %v1988 = vunpack.c.l.b16 %v1895
    %v1989 = vpack.c.b16 %v1986, %v1985
    %v1990 = vpack.c.b16 %v1988, %v1987
    %v1994 = vsel %vm390, %v1971, 0
    %v1997 = vsel %vm390, %v1972, 0
    %v2000 = vsel %vm390, %v1973, 0
    %v2003 = vsel %vm390, %v1974, 0
    %2005 = vmatprep.subr.bf16.mxu0 0
    %2006 = vmatpush1.bf16.msra.mxu0 %v1989
    %2007 = vmatprep.subr.bf16.mxu0 0
    %2008 = vmatpush1.bf16.msra.mxu0 %v1990
    %2009 = vmatprep.subr.bf16.mxu0 0
    %2010 = vmatpush1.bf16.msra.mxu0 0
    %2011 = vmatprep.subr.bf16.mxu0 0
    %2012 = vmatpush1.bf16.msra.mxu0 0
    %2013 = vmatprep.subr.bf16.mxu0 0
    %2014 = vmatpush1.bf16.msra.mxu0 0
    %2015 = vmatprep.subr.bf16.mxu0 0
    %2016 = vmatpush1.bf16.msra.mxu0 0
    %2017 = vmatprep.subr.bf16.mxu0 0
    %2018 = vmatpush1.bf16.msra.mxu0 0
    %2019 = vmatprep.subr.bf16.mxu0 0
    %2020 = vmatpush1.bf16.msra.mxu0 0
    %2021 = vmatprep.subr.bf16.mxu0 0
    %2022 = vmatpush1.bf16.msra.mxu0 0
    %2023 = vmatprep.subr.bf16.mxu0 0
    %2024 = vmatpush1.bf16.msra.mxu0 0
    %2025 = vmatprep.subr.bf16.mxu0 0
    %2026 = vmatpush1.bf16.msra.mxu0 0
    %2027 = vmatprep.subr.bf16.mxu0 0
    %2028 = vmatpush1.bf16.msra.mxu0 0
    %2029 = vmatprep.subr.bf16.mxu0 0
    %2030 = vmatpush1.bf16.msra.mxu0 0
    %2031 = vmatprep.subr.bf16.mxu0 0
    %2032 = vmatpush1.bf16.msra.mxu0 0
    %2033 = vmatprep.subr.bf16.mxu0 0
    %2034 = vmatpush1.bf16.msra.mxu0 0
    %2035 = vmatprep.subr.bf16.mxu0 0
    %2036 = vmatpush1.bf16.msra.mxu0 0
    %2037 = vmatprep.mubr.bf16.mxu0 0
    %2038 = vmatmul.mubr.bf16.gmra.mrb[0].mxu0 %v1994
    %v2039 = vpop.f32.mrb[0].mxu0
    %v2040 = vadd.f32 %v1979, %v2039
    %v2041 = vpop.f32.mrb[0].mxu0
    %v2042 = vpop.f32.mrb[0].mxu0
    %v2043 = vadd.f32 %v1979, %v2042
    %v2044 = vpop.f32.mrb[0].mxu0
    %2045 = vmatprep.mubr.bf16.mxu0 0
    %2046 = vmatmul.mubr.bf16.gmra.mrb[0].mxu0 %v1997
    %v2047 = vpop.f32.mrb[0].mxu0
    %v2048 = vadd.f32 %v1979, %v2047
    %v2049 = vpop.f32.mrb[0].mxu0
    %v2050 = vpop.f32.mrb[0].mxu0
    %v2051 = vadd.f32 %v1979, %v2050
    %v2052 = vpop.f32.mrb[0].mxu0
    %2053 = vmatprep.mubr.bf16.mxu0 0
    %2054 = vmatmul.mubr.bf16.gmra.mrb[0].mxu0 %v2000
    %v2055 = vpop.f32.mrb[0].mxu0
    %v2056 = vadd.f32 %v1979, %v2055
    %v2057 = vpop.f32.mrb[0].mxu0
    %v2058 = vpop.f32.mrb[0].mxu0
    %v2059 = vadd.f32 %v1979, %v2058
    %v2060 = vpop.f32.mrb[0].mxu0
    %2061 = vmatprep.mubr.bf16.mxu0 0
    %2062 = vmatmul.mubr.bf16.gmra.mrb[0].mxu0 %v2003
    %v2063 = vpop.f32.mrb[0].mxu0
    %v2064 = vadd.f32 %v1979, %v2063
    %v2065 = vpop.f32.mrb[0].mxu0
    %v2066 = vpop.f32.mrb[0].mxu0
    %v2067 = vadd.f32 %v1979, %v2066
    %v2068 = vpop.f32.mrb[0].mxu0
    %2069 = vdwg.mxu0
    %v2070 = vpack.c.bf16 %v2043, %v2040
    %v2071 = vpack.c.bf16 %v2051, %v2048
    %v2072 = vpack.c.bf16 %v2059, %v2056
    %v2073 = vpack.c.bf16 %v2067, %v2064
    %v2074 = vpack.c.bf16 %v1705, %v1704
    %v2075 = vpack.c.bf16 %v1707, %v1706
    %v2076 = vpack.c.bf16 %v1709, %v1708
    %v2077 = vpack.c.bf16 %v1711, %v1710
    %v2079 = vlaneseq
    %v2080 = vshrl.u32 %v2079, 7
    %v2081 = vsub.s32 0, %v2080
    %v2082 = vrot.slane %v1901, %v2081
    %v2088 = vunpack.c.l.b16 %v1897
    %v2089 = vunpack.c.l.b16 %v1898
    %v2090 = vunpack.c.l.b16 %v1899
    %v2091 = vunpack.c.l.b16 %v1900
    %v2092 = vpack.c.b16 %v2089, %v2088
    %v2093 = vpack.c.b16 %v2091, %v2090
    %v2097 = vsel %vm390, %v2074, 0
    %v2100 = vsel %vm390, %v2075, 0
    %v2103 = vsel %vm390, %v2076, 0
    %v2106 = vsel %vm390, %v2077, 0
    %2108 = vmatprep.subr.bf16.mxu0 0
    %2109 = vmatpush1.bf16.msra.mxu0 %v2092
    %2110 = vmatprep.subr.bf16.mxu0 0
    %2111 = vmatpush1.bf16.msra.mxu0 %v2093
    %2112 = vmatprep.subr.bf16.mxu0 0
    %2113 = vmatpush1.bf16.msra.mxu0 0
    %2114 = vmatprep.subr.bf16.mxu0 0
    %2115 = vmatpush1.bf16.msra.mxu0 0
    %2116 = vmatprep.subr.bf16.mxu0 0
    %2117 = vmatpush1.bf16.msra.mxu0 0
    %2118 = vmatprep.subr.bf16.mxu0 0
    %2119 = vmatpush1.bf16.msra.mxu0 0
    %2120 = vmatprep.subr.bf16.mxu0 0
    %2121 = vmatpush1.bf16.msra.mxu0 0
    %2122 = vmatprep.subr.bf16.mxu0 0
    %2123 = vmatpush1.bf16.msra.mxu0 0
    %2124 = vmatprep.subr.bf16.mxu0 0
    %2125 = vmatpush1.bf16.msra.mxu0 0
    %2126 = vmatprep.subr.bf16.mxu0 0
    %2127 = vmatpush1.bf16.msra.mxu0 0
    %2128 = vmatprep.subr.bf16.mxu0 0
    %2129 = vmatpush1.bf16.msra.mxu0 0
    %2130 = vmatprep.subr.bf16.mxu0 0
    %2131 = vmatpush1.bf16.msra.mxu0 0
    %2132 = vmatprep.subr.bf16.mxu0 0
    %2133 = vmatpush1.bf16.msra.mxu0 0
    %2134 = vmatprep.subr.bf16.mxu0 0
    %2135 = vmatpush1.bf16.msra.mxu0 0
    %2136 = vmatprep.subr.bf16.mxu0 0
    %2137 = vmatpush1.bf16.msra.mxu0 0
    %2138 = vmatprep.subr.bf16.mxu0 0
    %2139 = vmatpush1.bf16.msra.mxu0 0
    %2140 = vmatprep.mubr.bf16.mxu0 0
    %2141 = vmatmul.mubr.bf16.gmra.mrb[0].mxu0 %v2097
    %v2142 = vpop.f32.mrb[0].mxu0
    %v2143 = vadd.f32 %v2082, %v2142
    %v2144 = vpop.f32.mrb[0].mxu0
    %v2145 = vpop.f32.mrb[0].mxu0
    %v2146 = vadd.f32 %v2082, %v2145
    %v2147 = vpop.f32.mrb[0].mxu0
    %2148 = vmatprep.mubr.bf16.mxu0 0
    %2149 = vmatmul.mubr.bf16.gmra.mrb[0].mxu0 %v2100
    %v2150 = vpop.f32.mrb[0].mxu0
    %v2151 = vadd.f32 %v2082, %v2150
    %v2152 = vpop.f32.mrb[0].mxu0
    %v2153 = vpop.f32.mrb[0].mxu0
    %v2154 = vadd.f32 %v2082, %v2153
    %v2155 = vpop.f32.mrb[0].mxu0
    %2156 = vmatprep.mubr.bf16.mxu0 0
    %2157 = vmatmul.mubr.bf16.gmra.mrb[0].mxu0 %v2103
    %v2158 = vpop.f32.mrb[0].mxu0
    %v2159 = vadd.f32 %v2082, %v2158
    %v2160 = vpop.f32.mrb[0].mxu0
    %v2161 = vpop.f32.mrb[0].mxu0
    %v2162 = vadd.f32 %v2082, %v2161
    %v2163 = vpop.f32.mrb[0].mxu0
    %2164 = vmatprep.mubr.bf16.mxu0 0
    %2165 = vmatmul.mubr.bf16.gmra.mrb[0].mxu0 %v2106
    %v2166 = vpop.f32.mrb[0].mxu0
    %v2167 = vadd.f32 %v2082, %v2166
    %v2168 = vpop.f32.mrb[0].mxu0
    %v2169 = vpop.f32.mrb[0].mxu0
    %v2170 = vadd.f32 %v2082, %v2169
    %v2171 = vpop.f32.mrb[0].mxu0
    %2172 = vdwg.mxu0
    %v2173 = vpack.c.bf16 %v2146, %v2143
    %v2174 = vpack.c.bf16 %v2154, %v2151
    %v2175 = vpack.c.bf16 %v2162, %v2159
    %v2176 = vpack.c.bf16 %v2170, %v2167
    %v2178 = vunpack.c.l.b16 %v1970
    %v2179 = vunpack.c.h.b16 %v1970
    %v2180 = vpack.c.b16 %v2178, %v2178
    %v2181 = vpack.c.b16 %v2179, %v2179
    %2182 = vrot.lane.b32.xlu0 %v2180, 120
    %v2183 = vpop.permute.xlu0 %2182
    %2184 = vrot.lane.b32.xlu0 %v2181, 120
    %v2185 = vpop.permute.xlu0 %2184
    %2186 = vrot.lane.b32.xlu0 %v2180, 112
    %v2187 = vpop.permute.xlu0 %2186
    %2188 = vrot.lane.b32.xlu0 %v2181, 112
    %v2189 = vpop.permute.xlu0 %2188
    %2190 = vrot.lane.b32.xlu0 %v2180, 104
    %v2191 = vpop.permute.xlu0 %2190
    %2192 = vrot.lane.b32.xlu0 %v2181, 104
    %v2193 = vpop.permute.xlu0 %2192
    %2198 = vrot.lane.b32.xlu0 %v2070, 120
    %v2199 = vpop.permute.xlu0 %2198
    %2200 = vrot.lane.b32.xlu0 %v2071, 120
    %v2201 = vpop.permute.xlu0 %2200
    %2202 = vrot.lane.b32.xlu0 %v2072, 120
    %v2203 = vpop.permute.xlu0 %2202
    %2204 = vrot.lane.b32.xlu0 %v2073, 120
    %v2205 = vpop.permute.xlu0 %2204
    %2206 = vrot.lane.b32.xlu0 %v2070, 112
    %v2207 = vpop.permute.xlu0 %2206
    %2208 = vrot.lane.b32.xlu0 %v2071, 112
    %v2209 = vpop.permute.xlu0 %2208
    %2210 = vrot.lane.b32.xlu0 %v2072, 112
    %v2211 = vpop.permute.xlu0 %2210
    %2212 = vrot.lane.b32.xlu0 %v2073, 112
    %v2213 = vpop.permute.xlu0 %2212
    %2214 = vrot.lane.b32.xlu0 %v2070, 104
    %v2215 = vpop.permute.xlu0 %2214
    %2216 = vrot.lane.b32.xlu0 %v2071, 104
    %v2217 = vpop.permute.xlu0 %2216
    %2218 = vrot.lane.b32.xlu0 %v2072, 104
    %v2219 = vpop.permute.xlu0 %2218
    %2220 = vrot.lane.b32.xlu0 %v2073, 104
    %v2221 = vpop.permute.xlu0 %2220
    %2226 = vrot.lane.b32.xlu0 %v2173, 120
    %v2227 = vpop.permute.xlu0 %2226
    %2228 = vrot.lane.b32.xlu0 %v2174, 120
    %v2229 = vpop.permute.xlu0 %2228
    %2230 = vrot.lane.b32.xlu0 %v2175, 120
    %v2231 = vpop.permute.xlu0 %2230
    %2232 = vrot.lane.b32.xlu0 %v2176, 120
    %v2233 = vpop.permute.xlu0 %2232
    %2238 = vrot.lane.b32.xlu0 %v2173, 112
    %v2239 = vpop.permute.xlu0 %2238
    %2240 = vrot.lane.b32.xlu0 %v2174, 112
    %v2241 = vpop.permute.xlu0 %2240
    %2242 = vrot.lane.b32.xlu0 %v2175, 112
    %v2243 = vpop.permute.xlu0 %2242
    %2244 = vrot.lane.b32.xlu0 %v2176, 112
    %v2245 = vpop.permute.xlu0 %2244
    %2250 = vrot.lane.b32.xlu0 %v2173, 104
    %v2251 = vpop.permute.xlu0 %2250
    %2252 = vrot.lane.b32.xlu0 %v2174, 104
    %v2253 = vpop.permute.xlu0 %2252
    %2254 = vrot.lane.b32.xlu0 %v2175, 104
    %v2255 = vpop.permute.xlu0 %2254
    %2256 = vrot.lane.b32.xlu0 %v2176, 104
    %v2257 = vpop.permute.xlu0 %2256
    %v2263 = vsel %vm695, %v2180, 0
    %v2266 = vsel %vm695, %v2070, 0
    %v2269 = vsel %vm695, %v2071, 0
    %2271 = vmatprep.subr.bf16.mxu0 0
    %2272 = vmatpush1.bf16.xpose.msra.mxu0 %v2266
    %2273 = vmatprep.subr.bf16.mxu0 0
    %2274 = vmatpush1.bf16.xpose.msra.mxu0 %v2269
    %2275 = vmatprep.subr.bf16.mxu0 0
    %2276 = vmatpush1.bf16.xpose.msra.mxu0 0
    %2277 = vmatprep.subr.bf16.mxu0 0
    %2278 = vmatpush1.bf16.xpose.msra.mxu0 0
    %2279 = vmatprep.subr.bf16.mxu0 0
    %2280 = vmatpush1.bf16.xpose.msra.mxu0 0
    %2281 = vmatprep.subr.bf16.mxu0 0
    %2282 = vmatpush1.bf16.xpose.msra.mxu0 0
    %2283 = vmatprep.subr.bf16.mxu0 0
    %2284 = vmatpush1.bf16.xpose.msra.mxu0 0
    %2285 = vmatprep.subr.bf16.mxu0 0
    %2286 = vmatpush1.bf16.xpose.msra.mxu0 0
    %2287 = vmatprep.subr.bf16.mxu0 0
    %2288 = vmatpush1.bf16.xpose.msra.mxu0 0
    %2289 = vmatprep.subr.bf16.mxu0 0
    %2290 = vmatpush1.bf16.xpose.msra.mxu0 0
    %2291 = vmatprep.subr.bf16.mxu0 0
    %2292 = vmatpush1.bf16.xpose.msra.mxu0 0
    %2293 = vmatprep.subr.bf16.mxu0 0
    %2294 = vmatpush1.bf16.xpose.msra.mxu0 0
    %2295 = vmatprep.subr.bf16.mxu0 0
    %2296 = vmatpush1.bf16.xpose.msra.mxu0 0
    %2297 = vmatprep.subr.bf16.mxu0 0
    %2298 = vmatpush1.bf16.xpose.msra.mxu0 0
    %2299 = vmatprep.subr.bf16.mxu0 0
    %2300 = vmatpush1.bf16.xpose.msra.mxu0 0
    %2301 = vmatprep.subr.bf16.mxu0 0
    %2302 = vmatpush1.bf16.xpose.msra.mxu0 0
    %2303 = vmatprep.mubr.bf16.mxu0 0
    %2304 = vmatmul.mubr.bf16.gmra.mrb[0].mxu0 %v2263
    %v2305 = vpop.f32.mrb[0].mxu0
    %v2306 = vadd.f32 0.0, %v2305
    %v2307 = vpop.f32.mrb[0].mxu0
    %v2308 = vpop.f32.mrb[0].mxu0
    %v2309 = vpop.f32.mrb[0].mxu0
    %2310 = vdwg.mxu0
    %v2312 = vsel %vm695, %v2181, 0
    %v2315 = vsel %vm695, %v2072, 0
    %v2318 = vsel %vm695, %v2073, 0
    %2320 = vmatprep.subr.bf16.mxu0 0
    %2321 = vmatpush1.bf16.xpose.msra.mxu0 %v2315
    %2322 = vmatprep.subr.bf16.mxu0 0
    %2323 = vmatpush1.bf16.xpose.msra.mxu0 %v2318
    %2324 = vmatprep.subr.bf16.mxu0 0
    %2325 = vmatpush1.bf16.xpose.msra.mxu0 0
    %2326 = vmatprep.subr.bf16.mxu0 0
    %2327 = vmatpush1.bf16.xpose.msra.mxu0 0
    %2328 = vmatprep.subr.bf16.mxu0 0
    %2329 = vmatpush1.bf16.xpose.msra.mxu0 0
    %2330 = vmatprep.subr.bf16.mxu0 0
    %2331 = vmatpush1.bf16.xpose.msra.mxu0 0
    %2332 = vmatprep.subr.bf16.mxu0 0
    %2333 = vmatpush1.bf16.xpose.msra.mxu0 0
    %2334 = vmatprep.subr.bf16.mxu0 0
    %2335 = vmatpush1.bf16.xpose.msra.mxu0 0
    %2336 = vmatprep.subr.bf16.mxu0 0
    %2337 = vmatpush1.bf16.xpose.msra.mxu0 0
    %2338 = vmatprep.subr.bf16.mxu0 0
    %2339 = vmatpush1.bf16.xpose.msra.mxu0 0
    %2340 = vmatprep.subr.bf16.mxu0 0
    %2341 = vmatpush1.bf16.xpose.msra.mxu0 0
    %2342 = vmatprep.subr.bf16.mxu0 0
    %2343 = vmatpush1.bf16.xpose.msra.mxu0 0
    %2344 = vmatprep.subr.bf16.mxu0 0
    %2345 = vmatpush1.bf16.xpose.msra.mxu0 0
    %2346 = vmatprep.subr.bf16.mxu0 0
    %2347 = vmatpush1.bf16.xpose.msra.mxu0 0
    %2348 = vmatprep.subr.bf16.mxu0 0
    %2349 = vmatpush1.bf16.xpose.msra.mxu0 0
    %2350 = vmatprep.subr.bf16.mxu0 0
    %2351 = vmatpush1.bf16.xpose.msra.mxu0 0
    %2352 = vmatprep.mubr.bf16.mxu0 0
    %2353 = vmatmul.mubr.bf16.gmra.mrb[0].mxu0 %v2312
    %v2354 = vpop.f32.mrb[0].mxu0
    %v2355 = vadd.f32 0.0, %v2354
    %v2356 = vpop.f32.mrb[0].mxu0
    %v2357 = vpop.f32.mrb[0].mxu0
    %v2358 = vpop.f32.mrb[0].mxu0
    %2359 = vdwg.mxu0
    %v2361 = vsel %vm695, %v2183, 0
    %v2364 = vsel %vm695, %v2199, 0
    %v2367 = vsel %vm695, %v2201, 0
    %2369 = vmatprep.subr.bf16.mxu0 0
    %2370 = vmatpush1.bf16.xpose.msra.mxu0 %v2364
    %2371 = vmatprep.subr.bf16.mxu0 0
    %2372 = vmatpush1.bf16.xpose.msra.mxu0 %v2367
    %2373 = vmatprep.subr.bf16.mxu0 0
    %2374 = vmatpush1.bf16.xpose.msra.mxu0 0
    %2375 = vmatprep.subr.bf16.mxu0 0
    %2376 = vmatpush1.bf16.xpose.msra.mxu0 0
    %2377 = vmatprep.subr.bf16.mxu0 0
    %2378 = vmatpush1.bf16.xpose.msra.mxu0 0
    %2379 = vmatprep.subr.bf16.mxu0 0
    %2380 = vmatpush1.bf16.xpose.msra.mxu0 0
    %2381 = vmatprep.subr.bf16.mxu0 0
    %2382 = vmatpush1.bf16.xpose.msra.mxu0 0
    %2383 = vmatprep.subr.bf16.mxu0 0
    %2384 = vmatpush1.bf16.xpose.msra.mxu0 0
    %2385 = vmatprep.subr.bf16.mxu0 0
    %2386 = vmatpush1.bf16.xpose.msra.mxu0 0
    %2387 = vmatprep.subr.bf16.mxu0 0
    %2388 = vmatpush1.bf16.xpose.msra.mxu0 0
    %2389 = vmatprep.subr.bf16.mxu0 0
    %2390 = vmatpush1.bf16.xpose.msra.mxu0 0
    %2391 = vmatprep.subr.bf16.mxu0 0
    %2392 = vmatpush1.bf16.xpose.msra.mxu0 0
    %2393 = vmatprep.subr.bf16.mxu0 0
    %2394 = vmatpush1.bf16.xpose.msra.mxu0 0
    %2395 = vmatprep.subr.bf16.mxu0 0
    %2396 = vmatpush1.bf16.xpose.msra.mxu0 0
    %2397 = vmatprep.subr.bf16.mxu0 0
    %2398 = vmatpush1.bf16.xpose.msra.mxu0 0
    %2399 = vmatprep.subr.bf16.mxu0 0
    %2400 = vmatpush1.bf16.xpose.msra.mxu0 0
    %2401 = vmatprep.mubr.bf16.mxu0 0
    %2402 = vmatmul.mubr.bf16.gmra.mrb[0].mxu0 %v2361
    %v2403 = vpop.f32.mrb[0].mxu0
    %v2404 = vadd.f32 0.0, %v2403
    %v2405 = vpop.f32.mrb[0].mxu0
    %v2406 = vpop.f32.mrb[0].mxu0
    %v2407 = vpop.f32.mrb[0].mxu0
    %2408 = vdwg.mxu0
    %v2410 = vsel %vm695, %v2185, 0
    %v2413 = vsel %vm695, %v2203, 0
    %v2416 = vsel %vm695, %v2205, 0
    %2418 = vmatprep.subr.bf16.mxu0 0
    %2419 = vmatpush1.bf16.xpose.msra.mxu0 %v2413
    %2420 = vmatprep.subr.bf16.mxu0 0
    %2421 = vmatpush1.bf16.xpose.msra.mxu0 %v2416
    %2422 = vmatprep.subr.bf16.mxu0 0
    %2423 = vmatpush1.bf16.xpose.msra.mxu0 0
    %2424 = vmatprep.subr.bf16.mxu0 0
    %2425 = vmatpush1.bf16.xpose.msra.mxu0 0
    %2426 = vmatprep.subr.bf16.mxu0 0
    %2427 = vmatpush1.bf16.xpose.msra.mxu0 0
    %2428 = vmatprep.subr.bf16.mxu0 0
    %2429 = vmatpush1.bf16.xpose.msra.mxu0 0
    %2430 = vmatprep.subr.bf16.mxu0 0
    %2431 = vmatpush1.bf16.xpose.msra.mxu0 0
    %2432 = vmatprep.subr.bf16.mxu0 0
    %2433 = vmatpush1.bf16.xpose.msra.mxu0 0
    %2434 = vmatprep.subr.bf16.mxu0 0
    %2435 = vmatpush1.bf16.xpose.msra.mxu0 0
    %2436 = vmatprep.subr.bf16.mxu0 0
    %2437 = vmatpush1.bf16.xpose.msra.mxu0 0
    %2438 = vmatprep.subr.bf16.mxu0 0
    %2439 = vmatpush1.bf16.xpose.msra.mxu0 0
    %2440 = vmatprep.subr.bf16.mxu0 0
    %2441 = vmatpush1.bf16.xpose.msra.mxu0 0
    %2442 = vmatprep.subr.bf16.mxu0 0
    %2443 = vmatpush1.bf16.xpose.msra.mxu0 0
    %2444 = vmatprep.subr.bf16.mxu0 0
    %2445 = vmatpush1.bf16.xpose.msra.mxu0 0
    %2446 = vmatprep.subr.bf16.mxu0 0
    %2447 = vmatpush1.bf16.xpose.msra.mxu0 0
    %2448 = vmatprep.subr.bf16.mxu0 0
    %2449 = vmatpush1.bf16.xpose.msra.mxu0 0
    %2450 = vmatprep.mubr.bf16.mxu0 0
    %2451 = vmatmul.mubr.bf16.gmra.mrb[0].mxu0 %v2410
    %v2452 = vpop.f32.mrb[0].mxu0
    %v2453 = vadd.f32 0.0, %v2452
    %v2454 = vpop.f32.mrb[0].mxu0
    %v2455 = vpop.f32.mrb[0].mxu0
    %v2456 = vpop.f32.mrb[0].mxu0
    %2457 = vdwg.mxu0
    %v2459 = vsel %vm695, %v2187, 0
    %v2462 = vsel %vm695, %v2207, 0
    %v2465 = vsel %vm695, %v2209, 0
    %2467 = vmatprep.subr.bf16.mxu0 0
    %2468 = vmatpush1.bf16.xpose.msra.mxu0 %v2462
    %2469 = vmatprep.subr.bf16.mxu0 0
    %2470 = vmatpush1.bf16.xpose.msra.mxu0 %v2465
    %2471 = vmatprep.subr.bf16.mxu0 0
    %2472 = vmatpush1.bf16.xpose.msra.mxu0 0
    %2473 = vmatprep.subr.bf16.mxu0 0
    %2474 = vmatpush1.bf16.xpose.msra.mxu0 0
    %2475 = vmatprep.subr.bf16.mxu0 0
    %2476 = vmatpush1.bf16.xpose.msra.mxu0 0
    %2477 = vmatprep.subr.bf16.mxu0 0
    %2478 = vmatpush1.bf16.xpose.msra.mxu0 0
    %2479 = vmatprep.subr.bf16.mxu0 0
    %2480 = vmatpush1.bf16.xpose.msra.mxu0 0
    %2481 = vmatprep.subr.bf16.mxu0 0
    %2482 = vmatpush1.bf16.xpose.msra.mxu0 0
    %2483 = vmatprep.subr.bf16.mxu0 0
    %2484 = vmatpush1.bf16.xpose.msra.mxu0 0
    %2485 = vmatprep.subr.bf16.mxu0 0
    %2486 = vmatpush1.bf16.xpose.msra.mxu0 0
    %2487 = vmatprep.subr.bf16.mxu0 0
    %2488 = vmatpush1.bf16.xpose.msra.mxu0 0
    %2489 = vmatprep.subr.bf16.mxu0 0
    %2490 = vmatpush1.bf16.xpose.msra.mxu0 0
    %2491 = vmatprep.subr.bf16.mxu0 0
    %2492 = vmatpush1.bf16.xpose.msra.mxu0 0
    %2493 = vmatprep.subr.bf16.mxu0 0
    %2494 = vmatpush1.bf16.xpose.msra.mxu0 0
    %2495 = vmatprep.subr.bf16.mxu0 0
    %2496 = vmatpush1.bf16.xpose.msra.mxu0 0
    %2497 = vmatprep.subr.bf16.mxu0 0
    %2498 = vmatpush1.bf16.xpose.msra.mxu0 0
    %2499 = vmatprep.mubr.bf16.mxu0 0
    %2500 = vmatmul.mubr.bf16.gmra.mrb[0].mxu0 %v2459
    %v2501 = vpop.f32.mrb[0].mxu0
    %v2502 = vadd.f32 0.0, %v2501
    %v2503 = vpop.f32.mrb[0].mxu0
    %v2504 = vpop.f32.mrb[0].mxu0
    %v2505 = vpop.f32.mrb[0].mxu0
    %2506 = vdwg.mxu0
    %v2508 = vsel %vm695, %v2189, 0
    %v2511 = vsel %vm695, %v2211, 0
    %v2514 = vsel %vm695, %v2213, 0
    %2516 = vmatprep.subr.bf16.mxu0 0
    %2517 = vmatpush1.bf16.xpose.msra.mxu0 %v2511
    %2518 = vmatprep.subr.bf16.mxu0 0
    %2519 = vmatpush1.bf16.xpose.msra.mxu0 %v2514
    %2520 = vmatprep.subr.bf16.mxu0 0
    %2521 = vmatpush1.bf16.xpose.msra.mxu0 0
    %2522 = vmatprep.subr.bf16.mxu0 0
    %2523 = vmatpush1.bf16.xpose.msra.mxu0 0
    %2524 = vmatprep.subr.bf16.mxu0 0
    %2525 = vmatpush1.bf16.xpose.msra.mxu0 0
    %2526 = vmatprep.subr.bf16.mxu0 0
    %2527 = vmatpush1.bf16.xpose.msra.mxu0 0
    %2528 = vmatprep.subr.bf16.mxu0 0
    %2529 = vmatpush1.bf16.xpose.msra.mxu0 0
    %2530 = vmatprep.subr.bf16.mxu0 0
    %2531 = vmatpush1.bf16.xpose.msra.mxu0 0
    %2532 = vmatprep.subr.bf16.mxu0 0
    %2533 = vmatpush1.bf16.xpose.msra.mxu0 0
    %2534 = vmatprep.subr.bf16.mxu0 0
    %2535 = vmatpush1.bf16.xpose.msra.mxu0 0
    %2536 = vmatprep.subr.bf16.mxu0 0
    %2537 = vmatpush1.bf16.xpose.msra.mxu0 0
    %2538 = vmatprep.subr.bf16.mxu0 0
    %2539 = vmatpush1.bf16.xpose.msra.mxu0 0
    %2540 = vmatprep.subr.bf16.mxu0 0
    %2541 = vmatpush1.bf16.xpose.msra.mxu0 0
    %2542 = vmatprep.subr.bf16.mxu0 0
    %2543 = vmatpush1.bf16.xpose.msra.mxu0 0
    %2544 = vmatprep.subr.bf16.mxu0 0
    %2545 = vmatpush1.bf16.xpose.msra.mxu0 0
    %2546 = vmatprep.subr.bf16.mxu0 0
    %2547 = vmatpush1.bf16.xpose.msra.mxu0 0
    %2548 = vmatprep.mubr.bf16.mxu0 0
    %2549 = vmatmul.mubr.bf16.gmra.mrb[0].mxu0 %v2508
    %v2550 = vpop.f32.mrb[0].mxu0
    %v2551 = vadd.f32 0.0, %v2550
    %v2552 = vpop.f32.mrb[0].mxu0
    %v2553 = vpop.f32.mrb[0].mxu0
    %v2554 = vpop.f32.mrb[0].mxu0
    %2555 = vdwg.mxu0
    %v2557 = vsel %vm695, %v2191, 0
    %v2560 = vsel %vm695, %v2215, 0
    %v2563 = vsel %vm695, %v2217, 0
    %2565 = vmatprep.subr.bf16.mxu0 0
    %2566 = vmatpush1.bf16.xpose.msra.mxu0 %v2560
    %2567 = vmatprep.subr.bf16.mxu0 0
    %2568 = vmatpush1.bf16.xpose.msra.mxu0 %v2563
    %2569 = vmatprep.subr.bf16.mxu0 0
    %2570 = vmatpush1.bf16.xpose.msra.mxu0 0
    %2571 = vmatprep.subr.bf16.mxu0 0
    %2572 = vmatpush1.bf16.xpose.msra.mxu0 0
    %2573 = vmatprep.subr.bf16.mxu0 0
    %2574 = vmatpush1.bf16.xpose.msra.mxu0 0
    %2575 = vmatprep.subr.bf16.mxu0 0
    %2576 = vmatpush1.bf16.xpose.msra.mxu0 0
    %2577 = vmatprep.subr.bf16.mxu0 0
    %2578 = vmatpush1.bf16.xpose.msra.mxu0 0
    %2579 = vmatprep.subr.bf16.mxu0 0
    %2580 = vmatpush1.bf16.xpose.msra.mxu0 0
    %2581 = vmatprep.subr.bf16.mxu0 0
    %2582 = vmatpush1.bf16.xpose.msra.mxu0 0
    %2583 = vmatprep.subr.bf16.mxu0 0
    %2584 = vmatpush1.bf16.xpose.msra.mxu0 0
    %2585 = vmatprep.subr.bf16.mxu0 0
    %2586 = vmatpush1.bf16.xpose.msra.mxu0 0
    %2587 = vmatprep.subr.bf16.mxu0 0
    %2588 = vmatpush1.bf16.xpose.msra.mxu0 0
    %2589 = vmatprep.subr.bf16.mxu0 0
    %2590 = vmatpush1.bf16.xpose.msra.mxu0 0
    %2591 = vmatprep.subr.bf16.mxu0 0
    %2592 = vmatpush1.bf16.xpose.msra.mxu0 0
    %2593 = vmatprep.subr.bf16.mxu0 0
    %2594 = vmatpush1.bf16.xpose.msra.mxu0 0
    %2595 = vmatprep.subr.bf16.mxu0 0
    %2596 = vmatpush1.bf16.xpose.msra.mxu0 0
    %2597 = vmatprep.mubr.bf16.mxu0 0
    %2598 = vmatmul.mubr.bf16.gmra.mrb[0].mxu0 %v2557
    %v2599 = vpop.f32.mrb[0].mxu0
    %v2600 = vadd.f32 0.0, %v2599
    %v2601 = vpop.f32.mrb[0].mxu0
    %v2602 = vpop.f32.mrb[0].mxu0
    %v2603 = vpop.f32.mrb[0].mxu0
    %2604 = vdwg.mxu0
    %v2606 = vsel %vm695, %v2193, 0
    %v2609 = vsel %vm695, %v2219, 0
    %v2612 = vsel %vm695, %v2221, 0
    %2614 = vmatprep.subr.bf16.mxu0 0
    %2615 = vmatpush1.bf16.xpose.msra.mxu0 %v2609
    %2616 = vmatprep.subr.bf16.mxu0 0
    %2617 = vmatpush1.bf16.xpose.msra.mxu0 %v2612
    %2618 = vmatprep.subr.bf16.mxu0 0
    %2619 = vmatpush1.bf16.xpose.msra.mxu0 0
    %2620 = vmatprep.subr.bf16.mxu0 0
    %2621 = vmatpush1.bf16.xpose.msra.mxu0 0
    %2622 = vmatprep.subr.bf16.mxu0 0
    %2623 = vmatpush1.bf16.xpose.msra.mxu0 0
    %2624 = vmatprep.subr.bf16.mxu0 0
    %2625 = vmatpush1.bf16.xpose.msra.mxu0 0
    %2626 = vmatprep.subr.bf16.mxu0 0
    %2627 = vmatpush1.bf16.xpose.msra.mxu0 0
    %2628 = vmatprep.subr.bf16.mxu0 0
    %2629 = vmatpush1.bf16.xpose.msra.mxu0 0
    %2630 = vmatprep.subr.bf16.mxu0 0
    %2631 = vmatpush1.bf16.xpose.msra.mxu0 0
    %2632 = vmatprep.subr.bf16.mxu0 0
    %2633 = vmatpush1.bf16.xpose.msra.mxu0 0
    %2634 = vmatprep.subr.bf16.mxu0 0
    %2635 = vmatpush1.bf16.xpose.msra.mxu0 0
    %2636 = vmatprep.subr.bf16.mxu0 0
    %2637 = vmatpush1.bf16.xpose.msra.mxu0 0
    %2638 = vmatprep.subr.bf16.mxu0 0
    %2639 = vmatpush1.bf16.xpose.msra.mxu0 0
    %2640 = vmatprep.subr.bf16.mxu0 0
    %2641 = vmatpush1.bf16.xpose.msra.mxu0 0
    %2642 = vmatprep.subr.bf16.mxu0 0
    %2643 = vmatpush1.bf16.xpose.msra.mxu0 0
    %2644 = vmatprep.subr.bf16.mxu0 0
    %2645 = vmatpush1.bf16.xpose.msra.mxu0 0
    %2646 = vmatprep.mubr.bf16.mxu0 0
    %2647 = vmatmul.mubr.bf16.gmra.mrb[0].mxu0 %v2606
    %v2648 = vpop.f32.mrb[0].mxu0
    %v2649 = vadd.f32 0.0, %v2648
    %v2650 = vpop.f32.mrb[0].mxu0
    %v2651 = vpop.f32.mrb[0].mxu0
    %v2652 = vpop.f32.mrb[0].mxu0
    %2653 = vdwg.mxu0
    %v2654 = vsel %vm390, %v2306, -inf
    %2655 = vmax.xlane.f32.xlu0 %v2654
    %v2656 = vpop.xlane.xlu0 %2655
    %v2657 = vsel %vm390, %v2355, -inf
    %2658 = vmax.xlane.f32.xlu0 %v2657
    %v2659 = vpop.xlane.xlu0 %2658
    %v2660 = vsel %vm390, %v2404, -inf
    %2661 = vmax.xlane.f32.xlu0 %v2660
    %v2662 = vpop.xlane.xlu0 %2661
    %v2663 = vsel %vm390, %v2453, -inf
    %2664 = vmax.xlane.f32.xlu0 %v2663
    %v2665 = vpop.xlane.xlu0 %2664
    %v2666 = vsel %vm390, %v2502, -inf
    %2667 = vmax.xlane.f32.xlu0 %v2666
    %v2668 = vpop.xlane.xlu0 %2667
    %v2669 = vsel %vm390, %v2551, -inf
    %2670 = vmax.xlane.f32.xlu0 %v2669
    %v2671 = vpop.xlane.xlu0 %2670
    %v2672 = vsel %vm390, %v2600, -inf
    %2673 = vmax.xlane.f32.xlu0 %v2672
    %v2674 = vpop.xlane.xlu0 %2673
    %v2675 = vsel %vm390, %v2649, -inf
    %2676 = vmax.xlane.f32.xlu0 %v2675
    %v2677 = vpop.xlane.xlu0 %2676
    %v2678 = vsub.f32 %v2306, %v2656
    %v2679 = vsub.f32 %v2355, %v2659
    %v2680 = vsub.f32 %v2404, %v2662
    %v2681 = vsub.f32 %v2453, %v2665
    %v2682 = vsub.f32 %v2502, %v2668
    %v2683 = vsub.f32 %v2551, %v2671
    %v2684 = vsub.f32 %v2600, %v2674
    %v2685 = vsub.f32 %v2649, %v2677
    %v2686 = vmul.f32 %v2678, 1.442695
    %v2687 = vpow.pop %v2686
    %v2688 = vmul.f32 %v2679, 1.442695
    %v2689 = vpow.pop %v2688
    %v2690 = vmul.f32 %v2680, 1.442695
    %v2691 = vpow.pop %v2690
    %v2692 = vmul.f32 %v2681, 1.442695
    %v2693 = vpow.pop %v2692
    %v2694 = vmul.f32 %v2682, 1.442695
    %v2695 = vpow.pop %v2694
    %v2696 = vmul.f32 %v2683, 1.442695
    %v2697 = vpow.pop %v2696
    %v2698 = vmul.f32 %v2684, 1.442695
    %v2699 = vpow.pop %v2698
    %v2700 = vmul.f32 %v2685, 1.442695
    %v2701 = vpow.pop %v2700
    %v2702 = vsel %vm390, %v2687, 0.0
    %2703 = vadd.xlane.f32.xlu0 %v2702
    %v2704 = vpop.xlane.xlu0 %2703
    %v2705 = vsel %vm390, %v2689, 0.0
    %2706 = vadd.xlane.f32.xlu0 %v2705
    %v2707 = vpop.xlane.xlu0 %2706
    %v2708 = vsel %vm390, %v2691, 0.0
    %2709 = vadd.xlane.f32.xlu0 %v2708
    %v2710 = vpop.xlane.xlu0 %2709
    %v2711 = vsel %vm390, %v2693, 0.0
    %2712 = vadd.xlane.f32.xlu0 %v2711
    %v2713 = vpop.xlane.xlu0 %2712
    %v2714 = vsel %vm390, %v2695, 0.0
    %2715 = vadd.xlane.f32.xlu0 %v2714
    %v2716 = vpop.xlane.xlu0 %2715
    %v2717 = vsel %vm390, %v2697, 0.0
    %2718 = vadd.xlane.f32.xlu0 %v2717
    %v2719 = vpop.xlane.xlu0 %2718
    %v2720 = vsel %vm390, %v2699, 0.0
    %2721 = vadd.xlane.f32.xlu0 %v2720
    %v2722 = vpop.xlane.xlu0 %2721
    %v2723 = vsel %vm390, %v2701, 0.0
    %2724 = vadd.xlane.f32.xlu0 %v2723
    %v2725 = vpop.xlane.xlu0 %2724
    %v2726 = vrcp.pop %v2704
    %v2727 = vrcp.pop %v2707
    %v2728 = vrcp.pop %v2710
    %v2729 = vrcp.pop %v2713
    %v2730 = vrcp.pop %v2716
    %v2731 = vrcp.pop %v2719
    %v2732 = vrcp.pop %v2722
    %v2733 = vrcp.pop %v2725
    %v2734 = vmul.f32 %v2687, %v2726
    %v2735 = vmul.f32 %v2689, %v2727
    %v2736 = vmul.f32 %v2691, %v2728
    %v2737 = vmul.f32 %v2693, %v2729
    %v2738 = vmul.f32 %v2695, %v2730
    %v2739 = vmul.f32 %v2697, %v2731
    %v2740 = vmul.f32 %v2699, %v2732
    %v2741 = vmul.f32 %v2701, %v2733
    %v2742 = vpack.c.bf16 %v2734, %v2734
    %v2743 = vpack.c.bf16 %v2735, %v2735
    %v2744 = vpack.c.bf16 %v2736, %v2736
    %v2745 = vpack.c.bf16 %v2737, %v2737
    %v2746 = vpack.c.bf16 %v2738, %v2738
    %v2747 = vpack.c.bf16 %v2739, %v2739
    %v2748 = vpack.c.bf16 %v2740, %v2740
    %v2749 = vpack.c.bf16 %v2741, %v2741
    %v2751 = vsel %vm390, %v2742, 0
    %2753 = vmatprep.subr.bf16.mxu0 0
    %2754 = vmatpush1.bf16.msra.mxu0 %v2173
    %2755 = vmatprep.subr.bf16.mxu0 0
    %2756 = vmatpush1.bf16.msra.mxu0 %v2174
    %2757 = vmatprep.subr.bf16.mxu0 0
    %2758 = vmatpush1.bf16.msra.mxu0 0
    %2759 = vmatprep.subr.bf16.mxu0 0
    %2760 = vmatpush1.bf16.msra.mxu0 0
    %2761 = vmatprep.subr.bf16.mxu0 0
    %2762 = vmatpush1.bf16.msra.mxu0 0
    %2763 = vmatprep.subr.bf16.mxu0 0
    %2764 = vmatpush1.bf16.msra.mxu0 0
    %2765 = vmatprep.subr.bf16.mxu0 0
    %2766 = vmatpush1.bf16.msra.mxu0 0
    %2767 = vmatprep.subr.bf16.mxu0 0
    %2768 = vmatpush1.bf16.msra.mxu0 0
    %2769 = vmatprep.subr.bf16.mxu0 0
    %2770 = vmatpush1.bf16.msra.mxu0 0
    %2771 = vmatprep.subr.bf16.mxu0 0
    %2772 = vmatpush1.bf16.msra.mxu0 0
    %2773 = vmatprep.subr.bf16.mxu0 0
    %2774 = vmatpush1.bf16.msra.mxu0 0
    %2775 = vmatprep.subr.bf16.mxu0 0
    %2776 = vmatpush1.bf16.msra.mxu0 0
    %2777 = vmatprep.subr.bf16.mxu0 0
    %2778 = vmatpush1.bf16.msra.mxu0 0
    %2779 = vmatprep.subr.bf16.mxu0 0
    %2780 = vmatpush1.bf16.msra.mxu0 0
    %2781 = vmatprep.subr.bf16.mxu0 0
    %2782 = vmatpush1.bf16.msra.mxu0 0
    %2783 = vmatprep.subr.bf16.mxu0 0
    %2784 = vmatpush1.bf16.msra.mxu0 0
    %2785 = vmatprep.mubr.bf16.mxu0 0
    %2786 = vmatmul.mubr.bf16.gmra.mrb[0].mxu0 %v2751
    %v2787 = vpop.f32.mrb[0].mxu0
    %v2788 = vadd.f32 0.0, %v2787
    %v2789 = vpop.f32.mrb[0].mxu0
    %v2790 = vpop.f32.mrb[0].mxu0
    %v2791 = vpop.f32.mrb[0].mxu0
    %2792 = vdwg.mxu0
    %v2794 = vsel %vm390, %v2743, 0
    %2796 = vmatprep.subr.bf16.mxu0 0
    %2797 = vmatpush1.bf16.msra.mxu0 %v2175
    %2798 = vmatprep.subr.bf16.mxu0 0
    %2799 = vmatpush1.bf16.msra.mxu0 %v2176
    %2800 = vmatprep.subr.bf16.mxu0 0
    %2801 = vmatpush1.bf16.msra.mxu0 0
    %2802 = vmatprep.subr.bf16.mxu0 0
    %2803 = vmatpush1.bf16.msra.mxu0 0
    %2804 = vmatprep.subr.bf16.mxu0 0
    %2805 = vmatpush1.bf16.msra.mxu0 0
    %2806 = vmatprep.subr.bf16.mxu0 0
    %2807 = vmatpush1.bf16.msra.mxu0 0
    %2808 = vmatprep.subr.bf16.mxu0 0
    %2809 = vmatpush1.bf16.msra.mxu0 0
    %2810 = vmatprep.subr.bf16.mxu0 0
    %2811 = vmatpush1.bf16.msra.mxu0 0
    %2812 = vmatprep.subr.bf16.mxu0 0
    %2813 = vmatpush1.bf16.msra.mxu0 0
    %2814 = vmatprep.subr.bf16.mxu0 0
    %2815 = vmatpush1.bf16.msra.mxu0 0
    %2816 = vmatprep.subr.bf16.mxu0 0
    %2817 = vmatpush1.bf16.msra.mxu0 0
    %2818 = vmatprep.subr.bf16.mxu0 0
    %2819 = vmatpush1.bf16.msra.mxu0 0
    %2820 = vmatprep.subr.bf16.mxu0 0
    %2821 = vmatpush1.bf16.msra.mxu0 0
    %2822 = vmatprep.subr.bf16.mxu0 0
    %2823 = vmatpush1.bf16.msra.mxu0 0
    %2824 = vmatprep.subr.bf16.mxu0 0
    %2825 = vmatpush1.bf16.msra.mxu0 0
    %2826 = vmatprep.subr.bf16.mxu0 0
    %2827 = vmatpush1.bf16.msra.mxu0 0
    %2828 = vmatprep.mubr.bf16.mxu0 0
    %2829 = vmatmul.mubr.bf16.gmra.mrb[0].mxu0 %v2794
    %v2830 = vpop.f32.mrb[0].mxu0
    %v2831 = vadd.f32 0.0, %v2830
    %v2832 = vpop.f32.mrb[0].mxu0
    %v2833 = vpop.f32.mrb[0].mxu0
    %v2834 = vpop.f32.mrb[0].mxu0
    %2835 = vdwg.mxu0
    %v2837 = vsel %vm390, %v2744, 0
    %2839 = vmatprep.subr.bf16.mxu0 0
    %2840 = vmatpush1.bf16.msra.mxu0 %v2227
    %2841 = vmatprep.subr.bf16.mxu0 0
    %2842 = vmatpush1.bf16.msra.mxu0 %v2229
    %2843 = vmatprep.subr.bf16.mxu0 0
    %2844 = vmatpush1.bf16.msra.mxu0 0
    %2845 = vmatprep.subr.bf16.mxu0 0
    %2846 = vmatpush1.bf16.msra.mxu0 0
    %2847 = vmatprep.subr.bf16.mxu0 0
    %2848 = vmatpush1.bf16.msra.mxu0 0
    %2849 = vmatprep.subr.bf16.mxu0 0
    %2850 = vmatpush1.bf16.msra.mxu0 0
    %2851 = vmatprep.subr.bf16.mxu0 0
    %2852 = vmatpush1.bf16.msra.mxu0 0
    %2853 = vmatprep.subr.bf16.mxu0 0
    %2854 = vmatpush1.bf16.msra.mxu0 0
    %2855 = vmatprep.subr.bf16.mxu0 0
    %2856 = vmatpush1.bf16.msra.mxu0 0
    %2857 = vmatprep.subr.bf16.mxu0 0
    %2858 = vmatpush1.bf16.msra.mxu0 0
    %2859 = vmatprep.subr.bf16.mxu0 0
    %2860 = vmatpush1.bf16.msra.mxu0 0
    %2861 = vmatprep.subr.bf16.mxu0 0
    %2862 = vmatpush1.bf16.msra.mxu0 0
    %2863 = vmatprep.subr.bf16.mxu0 0
    %2864 = vmatpush1.bf16.msra.mxu0 0
    %2865 = vmatprep.subr.bf16.mxu0 0
    %2866 = vmatpush1.bf16.msra.mxu0 0
    %2867 = vmatprep.subr.bf16.mxu0 0
    %2868 = vmatpush1.bf16.msra.mxu0 0
    %2869 = vmatprep.subr.bf16.mxu0 0
    %2870 = vmatpush1.bf16.msra.mxu0 0
    %2871 = vmatprep.mubr.bf16.mxu0 0
    %2872 = vmatmul.mubr.bf16.gmra.mrb[0].mxu0 %v2837
    %v2873 = vpop.f32.mrb[0].mxu0
    %v2874 = vadd.f32 0.0, %v2873
    %v2875 = vpop.f32.mrb[0].mxu0
    %v2876 = vpop.f32.mrb[0].mxu0
    %v2877 = vpop.f32.mrb[0].mxu0
    %2878 = vdwg.mxu0
    %v2880 = vsel %vm390, %v2745, 0
    %2882 = vmatprep.subr.bf16.mxu0 0
    %2883 = vmatpush1.bf16.msra.mxu0 %v2231
    %2884 = vmatprep.subr.bf16.mxu0 0
    %2885 = vmatpush1.bf16.msra.mxu0 %v2233
    %2886 = vmatprep.subr.bf16.mxu0 0
    %2887 = vmatpush1.bf16.msra.mxu0 0
    %2888 = vmatprep.subr.bf16.mxu0 0
    %2889 = vmatpush1.bf16.msra.mxu0 0
    %2890 = vmatprep.subr.bf16.mxu0 0
    %2891 = vmatpush1.bf16.msra.mxu0 0
    %2892 = vmatprep.subr.bf16.mxu0 0
    %2893 = vmatpush1.bf16.msra.mxu0 0
    %2894 = vmatprep.subr.bf16.mxu0 0
    %2895 = vmatpush1.bf16.msra.mxu0 0
    %2896 = vmatprep.subr.bf16.mxu0 0
    %2897 = vmatpush1.bf16.msra.mxu0 0
    %2898 = vmatprep.subr.bf16.mxu0 0
    %2899 = vmatpush1.bf16.msra.mxu0 0
    %2900 = vmatprep.subr.bf16.mxu0 0
    %2901 = vmatpush1.bf16.msra.mxu0 0
    %2902 = vmatprep.subr.bf16.mxu0 0
    %2903 = vmatpush1.bf16.msra.mxu0 0
    %2904 = vmatprep.subr.bf16.mxu0 0
    %2905 = vmatpush1.bf16.msra.mxu0 0
    %2906 = vmatprep.subr.bf16.mxu0 0
    %2907 = vmatpush1.bf16.msra.mxu0 0
    %2908 = vmatprep.subr.bf16.mxu0 0
    %2909 = vmatpush1.bf16.msra.mxu0 0
    %2910 = vmatprep.subr.bf16.mxu0 0
    %2911 = vmatpush1.bf16.msra.mxu0 0
    %2912 = vmatprep.subr.bf16.mxu0 0
    %2913 = vmatpush1.bf16.msra.mxu0 0
    %2914 = vmatprep.mubr.bf16.mxu0 0
    %2915 = vmatmul.mubr.bf16.gmra.mrb[0].mxu0 %v2880
    %v2916 = vpop.f32.mrb[0].mxu0
    %v2917 = vadd.f32 0.0, %v2916
    %v2918 = vpop.f32.mrb[0].mxu0
    %v2919 = vpop.f32.mrb[0].mxu0
    %v2920 = vpop.f32.mrb[0].mxu0
    %2921 = vdwg.mxu0
    %v2923 = vsel %vm390, %v2746, 0
    %2925 = vmatprep.subr.bf16.mxu0 0
    %2926 = vmatpush1.bf16.msra.mxu0 %v2239
    %2927 = vmatprep.subr.bf16.mxu0 0
    %2928 = vmatpush1.bf16.msra.mxu0 %v2241
    %2929 = vmatprep.subr.bf16.mxu0 0
    %2930 = vmatpush1.bf16.msra.mxu0 0
    %2931 = vmatprep.subr.bf16.mxu0 0
    %2932 = vmatpush1.bf16.msra.mxu0 0
    %2933 = vmatprep.subr.bf16.mxu0 0
    %2934 = vmatpush1.bf16.msra.mxu0 0
    %2935 = vmatprep.subr.bf16.mxu0 0
    %2936 = vmatpush1.bf16.msra.mxu0 0
    %2937 = vmatprep.subr.bf16.mxu0 0
    %2938 = vmatpush1.bf16.msra.mxu0 0
    %2939 = vmatprep.subr.bf16.mxu0 0
    %2940 = vmatpush1.bf16.msra.mxu0 0
    %2941 = vmatprep.subr.bf16.mxu0 0
    %2942 = vmatpush1.bf16.msra.mxu0 0
    %2943 = vmatprep.subr.bf16.mxu0 0
    %2944 = vmatpush1.bf16.msra.mxu0 0
    %2945 = vmatprep.subr.bf16.mxu0 0
    %2946 = vmatpush1.bf16.msra.mxu0 0
    %2947 = vmatprep.subr.bf16.mxu0 0
    %2948 = vmatpush1.bf16.msra.mxu0 0
    %2949 = vmatprep.subr.bf16.mxu0 0
    %2950 = vmatpush1.bf16.msra.mxu0 0
    %2951 = vmatprep.subr.bf16.mxu0 0
    %2952 = vmatpush1.bf16.msra.mxu0 0
    %2953 = vmatprep.subr.bf16.mxu0 0
    %2954 = vmatpush1.bf16.msra.mxu0 0
    %2955 = vmatprep.subr.bf16.mxu0 0
    %2956 = vmatpush1.bf16.msra.mxu0 0
    %2957 = vmatprep.mubr.bf16.mxu0 0
    %2958 = vmatmul.mubr.bf16.gmra.mrb[0].mxu0 %v2923
    %v2959 = vpop.f32.mrb[0].mxu0
    %v2960 = vadd.f32 0.0, %v2959
    %v2961 = vpop.f32.mrb[0].mxu0
    %v2962 = vpop.f32.mrb[0].mxu0
    %v2963 = vpop.f32.mrb[0].mxu0
    %2964 = vdwg.mxu0
    %v2966 = vsel %vm390, %v2747, 0
    %2968 = vmatprep.subr.bf16.mxu0 0
    %2969 = vmatpush1.bf16.msra.mxu0 %v2243
    %2970 = vmatprep.subr.bf16.mxu0 0
    %2971 = vmatpush1.bf16.msra.mxu0 %v2245
    %2972 = vmatprep.subr.bf16.mxu0 0
    %2973 = vmatpush1.bf16.msra.mxu0 0
    %2974 = vmatprep.subr.bf16.mxu0 0
    %2975 = vmatpush1.bf16.msra.mxu0 0
    %2976 = vmatprep.subr.bf16.mxu0 0
    %2977 = vmatpush1.bf16.msra.mxu0 0
    %2978 = vmatprep.subr.bf16.mxu0 0
    %2979 = vmatpush1.bf16.msra.mxu0 0
    %2980 = vmatprep.subr.bf16.mxu0 0
    %2981 = vmatpush1.bf16.msra.mxu0 0
    %2982 = vmatprep.subr.bf16.mxu0 0
    %2983 = vmatpush1.bf16.msra.mxu0 0
    %2984 = vmatprep.subr.bf16.mxu0 0
    %2985 = vmatpush1.bf16.msra.mxu0 0
    %2986 = vmatprep.subr.bf16.mxu0 0
    %2987 = vmatpush1.bf16.msra.mxu0 0
    %2988 = vmatprep.subr.bf16.mxu0 0
    %2989 = vmatpush1.bf16.msra.mxu0 0
    %2990 = vmatprep.subr.bf16.mxu0 0
    %2991 = vmatpush1.bf16.msra.mxu0 0
    %2992 = vmatprep.subr.bf16.mxu0 0
    %2993 = vmatpush1.bf16.msra.mxu0 0
    %2994 = vmatprep.subr.bf16.mxu0 0
    %2995 = vmatpush1.bf16.msra.mxu0 0
    %2996 = vmatprep.subr.bf16.mxu0 0
    %2997 = vmatpush1.bf16.msra.mxu0 0
    %2998 = vmatprep.subr.bf16.mxu0 0
    %2999 = vmatpush1.bf16.msra.mxu0 0
    %3000 = vmatprep.mubr.bf16.mxu0 0
    %3001 = vmatmul.mubr.bf16.gmra.mrb[0].mxu0 %v2966
    %v3002 = vpop.f32.mrb[0].mxu0
    %v3003 = vadd.f32 0.0, %v3002
    %v3004 = vpop.f32.mrb[0].mxu0
    %v3005 = vpop.f32.mrb[0].mxu0
    %v3006 = vpop.f32.mrb[0].mxu0
    %3007 = vdwg.mxu0
    %v3009 = vsel %vm390, %v2748, 0
    %3011 = vmatprep.subr.bf16.mxu0 0
    %3012 = vmatpush1.bf16.msra.mxu0 %v2251
    %3013 = vmatprep.subr.bf16.mxu0 0
    %3014 = vmatpush1.bf16.msra.mxu0 %v2253
    %3015 = vmatprep.subr.bf16.mxu0 0
    %3016 = vmatpush1.bf16.msra.mxu0 0
    %3017 = vmatprep.subr.bf16.mxu0 0
    %3018 = vmatpush1.bf16.msra.mxu0 0
    %3019 = vmatprep.subr.bf16.mxu0 0
    %3020 = vmatpush1.bf16.msra.mxu0 0
    %3021 = vmatprep.subr.bf16.mxu0 0
    %3022 = vmatpush1.bf16.msra.mxu0 0
    %3023 = vmatprep.subr.bf16.mxu0 0
    %3024 = vmatpush1.bf16.msra.mxu0 0
    %3025 = vmatprep.subr.bf16.mxu0 0
    %3026 = vmatpush1.bf16.msra.mxu0 0
    %3027 = vmatprep.subr.bf16.mxu0 0
    %3028 = vmatpush1.bf16.msra.mxu0 0
    %3029 = vmatprep.subr.bf16.mxu0 0
    %3030 = vmatpush1.bf16.msra.mxu0 0
    %3031 = vmatprep.subr.bf16.mxu0 0
    %3032 = vmatpush1.bf16.msra.mxu0 0
    %3033 = vmatprep.subr.bf16.mxu0 0
    %3034 = vmatpush1.bf16.msra.mxu0 0
    %3035 = vmatprep.subr.bf16.mxu0 0
    %3036 = vmatpush1.bf16.msra.mxu0 0
    %3037 = vmatprep.subr.bf16.mxu0 0
    %3038 = vmatpush1.bf16.msra.mxu0 0
    %3039 = vmatprep.subr.bf16.mxu0 0
    %3040 = vmatpush1.bf16.msra.mxu0 0
    %3041 = vmatprep.subr.bf16.mxu0 0
    %3042 = vmatpush1.bf16.msra.mxu0 0
    %3043 = vmatprep.mubr.bf16.mxu0 0
    %3044 = vmatmul.mubr.bf16.gmra.mrb[0].mxu0 %v3009
    %v3045 = vpop.f32.mrb[0].mxu0
    %v3046 = vadd.f32 0.0, %v3045
    %v3047 = vpop.f32.mrb[0].mxu0
    %v3048 = vpop.f32.mrb[0].mxu0
    %v3049 = vpop.f32.mrb[0].mxu0
    %3050 = vdwg.mxu0
    %v3052 = vsel %vm390, %v2749, 0
    %3054 = vmatprep.subr.bf16.mxu0 0
    %3055 = vmatpush1.bf16.msra.mxu0 %v2255
    %3056 = vmatprep.subr.bf16.mxu0 0
    %3057 = vmatpush1.bf16.msra.mxu0 %v2257
    %3058 = vmatprep.subr.bf16.mxu0 0
    %3059 = vmatpush1.bf16.msra.mxu0 0
    %3060 = vmatprep.subr.bf16.mxu0 0
    %3061 = vmatpush1.bf16.msra.mxu0 0
    %3062 = vmatprep.subr.bf16.mxu0 0
    %3063 = vmatpush1.bf16.msra.mxu0 0
    %3064 = vmatprep.subr.bf16.mxu0 0
    %3065 = vmatpush1.bf16.msra.mxu0 0
    %3066 = vmatprep.subr.bf16.mxu0 0
    %3067 = vmatpush1.bf16.msra.mxu0 0
    %3068 = vmatprep.subr.bf16.mxu0 0
    %3069 = vmatpush1.bf16.msra.mxu0 0
    %3070 = vmatprep.subr.bf16.mxu0 0
    %3071 = vmatpush1.bf16.msra.mxu0 0
    %3072 = vmatprep.subr.bf16.mxu0 0
    %3073 = vmatpush1.bf16.msra.mxu0 0
    %3074 = vmatprep.subr.bf16.mxu0 0
    %3075 = vmatpush1.bf16.msra.mxu0 0
    %3076 = vmatprep.subr.bf16.mxu0 0
    %3077 = vmatpush1.bf16.msra.mxu0 0
    %3078 = vmatprep.subr.bf16.mxu0 0
    %3079 = vmatpush1.bf16.msra.mxu0 0
    %3080 = vmatprep.subr.bf16.mxu0 0
    %3081 = vmatpush1.bf16.msra.mxu0 0
    %3082 = vmatprep.subr.bf16.mxu0 0
    %3083 = vmatpush1.bf16.msra.mxu0 0
    %3084 = vmatprep.subr.bf16.mxu0 0
    %3085 = vmatpush1.bf16.msra.mxu0 0
    %3086 = vmatprep.mubr.bf16.mxu0 0
    %3087 = vmatmul.mubr.bf16.gmra.mrb[0].mxu0 %v3052
    %v3088 = vpop.f32.mrb[0].mxu0
    %v3089 = vadd.f32 0.0, %v3088
    %v3090 = vpop.f32.mrb[0].mxu0
    %v3091 = vpop.f32.mrb[0].mxu0
    %v3092 = vpop.f32.mrb[0].mxu0
    %3093 = vdwg.mxu0
    %3096 = vrot.lane.b32.xlu0 %v2874, 8
    %v3097 = vpop.permute.xlu0 %3096
    %3098 = vrot.lane.b32.xlu0 %v2917, 8
    %v3099 = vpop.permute.xlu0 %3098
    %3104 = vrot.lane.b32.xlu0 %v2960, 16
    %v3105 = vpop.permute.xlu0 %3104
    %3106 = vrot.lane.b32.xlu0 %v3003, 16
    %v3107 = vpop.permute.xlu0 %3106
    %3112 = vrot.lane.b32.xlu0 %v3046, 24
    %v3113 = vpop.permute.xlu0 %3112
    %3114 = vrot.lane.b32.xlu0 %v3089, 24
    %v3115 = vpop.permute.xlu0 %3114
    %v3118 = vsel %vm695, %v2788, %v3097
    %v3119 = vsel %vm695, %v2831, %v3099
    %v3120 = vsel %vm1555, %v3118, %v3105
    %v3121 = vsel %vm1555, %v3119, %v3107
    %v3122 = vsel %vm1558, %v3120, %v3113
    %v3123 = vsel %vm1558, %v3121, %v3115
    %v3124 = vpack.c.bf16 %v3123, %v3122
    %v3126 = vlaneseq
    %v3127 = vshrl.u32 %v3126, 7
    %v3128 = vsub.s32 0, %v3127
    %v3129 = vrot.slane %v1906, %v3128
    %v3135 = vunpack.c.l.b16 %v1902
    %v3136 = vunpack.c.l.b16 %v1903
    %v3137 = vunpack.c.l.b16 %v1904
    %v3138 = vunpack.c.l.b16 %v1905
    %v3139 = vpack.c.b16 %v3136, %v3135
    %v3140 = vpack.c.b16 %v3138, %v3137
    %v3144 = vsel %vm390, %v3124, 0
    %3146 = vmatprep.subr.bf16.mxu0 0
    %3147 = vmatpush1.bf16.msra.mxu0 %v3139
    %3148 = vmatprep.subr.bf16.mxu0 0
    %3149 = vmatpush1.bf16.msra.mxu0 %v3140
    %3150 = vmatprep.subr.bf16.mxu0 0
    %3151 = vmatpush1.bf16.msra.mxu0 0
    %3152 = vmatprep.subr.bf16.mxu0 0
    %3153 = vmatpush1.bf16.msra.mxu0 0
    %3154 = vmatprep.subr.bf16.mxu0 0
    %3155 = vmatpush1.bf16.msra.mxu0 0
    %3156 = vmatprep.subr.bf16.mxu0 0
    %3157 = vmatpush1.bf16.msra.mxu0 0
    %3158 = vmatprep.subr.bf16.mxu0 0
    %3159 = vmatpush1.bf16.msra.mxu0 0
    %3160 = vmatprep.subr.bf16.mxu0 0
    %3161 = vmatpush1.bf16.msra.mxu0 0
    %3162 = vmatprep.subr.bf16.mxu0 0
    %3163 = vmatpush1.bf16.msra.mxu0 0
    %3164 = vmatprep.subr.bf16.mxu0 0
    %3165 = vmatpush1.bf16.msra.mxu0 0
    %3166 = vmatprep.subr.bf16.mxu0 0
    %3167 = vmatpush1.bf16.msra.mxu0 0
    %3168 = vmatprep.subr.bf16.mxu0 0
    %3169 = vmatpush1.bf16.msra.mxu0 0
    %3170 = vmatprep.subr.bf16.mxu0 0
    %3171 = vmatpush1.bf16.msra.mxu0 0
    %3172 = vmatprep.subr.bf16.mxu0 0
    %3173 = vmatpush1.bf16.msra.mxu0 0
    %3174 = vmatprep.subr.bf16.mxu0 0
    %3175 = vmatpush1.bf16.msra.mxu0 0
    %3176 = vmatprep.subr.bf16.mxu0 0
    %3177 = vmatpush1.bf16.msra.mxu0 0
    %3178 = vmatprep.mubr.bf16.mxu0 0
    %3179 = vmatmul.mubr.bf16.gmra.mrb[0].mxu0 %v3144
    %v3180 = vpop.f32.mrb[0].mxu0
    %v3181 = vadd.f32 %v3129, %v3180
    %v3182 = vpop.f32.mrb[0].mxu0
    %v3183 = vpop.f32.mrb[0].mxu0
    %v3184 = vadd.f32 %v3129, %v3183
    %v3185 = vpop.f32.mrb[0].mxu0
    %3186 = vdwg.mxu0
    %v3187 = vadd.f32 %v1624, %v3181
    %v3188 = vadd.f32 %v1625, %v3184
    %v3189 = vld [vmem:[#allocation31] sm:$0x1]
    %v3190 = vld [vmem:[#allocation32] sm:$0x1]
    %v3191 = vsel %vm390, %v3187, 0.0
    %3192 = vadd.xlane.f32.xlu0 %v3191
    %v3193 = vpop.xlane.xlu0 %3192
    %v3194 = vsel %vm390, %v3188, 0.0
    %3195 = vadd.xlane.f32.xlu0 %v3194
    %v3196 = vpop.xlane.xlu0 %3195
    %v3197 = vmul.f32 %v3193, %v397
    %v3198 = vmul.f32 %v3196, %v397
    %v3199 = vsub.f32 %v3187, %v3197
    %v3200 = vsub.f32 %v3188, %v3198
    %v3201 = vmul.f32 %v3199, %v3199
    %v3202 = vmul.f32 %v3200, %v3200
    %v3203 = vsel %vm390, %v3201, 0.0
    %3204 = vadd.xlane.f32.xlu0 %v3203
    %v3205 = vpop.xlane.xlu0 %3204
    %v3206 = vsel %vm390, %v3202, 0.0
    %3207 = vadd.xlane.f32.xlu0 %v3206
    %v3208 = vpop.xlane.xlu0 %3207
    %v3209 = vmul.f32 %v3205, %v397
    %v3210 = vmul.f32 %v3208, %v397
    %v3211 = vadd.f32 %v3209, 1e-05
    %v3212 = vadd.f32 %v3210, 1e-05
    %v3213 = vrsqrt.pop %v3211
    %v3214 = vrsqrt.pop %v3212
    %v3215 = vmul.f32 %v3199, %v3213
    %v3216 = vmul.f32 %v3200, %v3214
    %v3218 = vlaneseq
    %v3219 = vshrl.u32 %v3218, 7
    %v3220 = vsub.s32 0, %v3219
    %v3221 = vrot.slane %v3189, %v3220
    %v3223 = vmul.f32 %v3215, %v3221
    %v3224 = vmul.f32 %v3216, %v3221
    %v3226 = vlaneseq
    %v3227 = vshrl.u32 %v3226, 7
    %v3228 = vsub.s32 0, %v3227
    %v3229 = vrot.slane %v3190, %v3228
    %v3231 = vadd.f32 %v3223, %v3229
    %v3232 = vadd.f32 %v3224, %v3229
    %v3233 = vpack.c.bf16 %v3232, %v3231
    %v3234 = vld [vmem:[%s63] sm:$0xf]
    %v3235 = vld [vmem:[%s63 + $0x4] sm:$0xf]
    %v3236 = vld [vmem:[%s63 + $0x8] sm:$0xf]
    %v3237 = vld [vmem:[%s63 + $0xc] sm:$0xf]
    %v3238 = vld [vmem:[%s65] sm:$0x1]
    %v3240 = vlaneseq
    %v3241 = vshrl.u32 %v3240, 7
    %v3242 = vsub.s32 0, %v3241
    %v3243 = vrot.slane %v3238, %v3242
    %v3249 = vunpack.c.l.b16 %v3234
    %v3250 = vunpack.c.l.b16 %v3235
    %v3251 = vunpack.c.l.b16 %v3236
    %v3252 = vunpack.c.l.b16 %v3237
    %v3253 = vpack.c.b16 %v3250, %v3249
    %v3254 = vpack.c.b16 %v3252, %v3251
    %v3258 = vsel %vm390, %v3233, 0
    %3260 = vmatprep.subr.bf16.mxu0 0
    %3261 = vmatpush1.bf16.msra.mxu0 %v3253
    %3262 = vmatprep.subr.bf16.mxu0 0
    %3263 = vmatpush1.bf16.msra.mxu0 %v3254
    %3264 = vmatprep.subr.bf16.mxu0 0
    %3265 = vmatpush1.bf16.msra.mxu0 0
    %3266 = vmatprep.subr.bf16.mxu0 0
    %3267 = vmatpush1.bf16.msra.mxu0 0
    %3268 = vmatprep.subr.bf16.mxu0 0
    %3269 = vmatpush1.bf16.msra.mxu0 0
    %3270 = vmatprep.subr.bf16.mxu0 0
    %3271 = vmatpush1.bf16.msra.mxu0 0
    %3272 = vmatprep.subr.bf16.mxu0 0
    %3273 = vmatpush1.bf16.msra.mxu0 0
    %3274 = vmatprep.subr.bf16.mxu0 0
    %3275 = vmatpush1.bf16.msra.mxu0 0
    %3276 = vmatprep.subr.bf16.mxu0 0
    %3277 = vmatpush1.bf16.msra.mxu0 0
    %3278 = vmatprep.subr.bf16.mxu0 0
    %3279 = vmatpush1.bf16.msra.mxu0 0
    %3280 = vmatprep.subr.bf16.mxu0 0
    %3281 = vmatpush1.bf16.msra.mxu0 0
    %3282 = vmatprep.subr.bf16.mxu0 0
    %3283 = vmatpush1.bf16.msra.mxu0 0
    %3284 = vmatprep.subr.bf16.mxu0 0
    %3285 = vmatpush1.bf16.msra.mxu0 0
    %3286 = vmatprep.subr.bf16.mxu0 0
    %3287 = vmatpush1.bf16.msra.mxu0 0
    %3288 = vmatprep.subr.bf16.mxu0 0
    %3289 = vmatpush1.bf16.msra.mxu0 0
    %3290 = vmatprep.subr.bf16.mxu0 0
    %3291 = vmatpush1.bf16.msra.mxu0 0
    %3292 = vmatprep.mubr.bf16.mxu0 0
    %3293 = vmatmul.mubr.bf16.gmra.mrb[0].mxu0 %v3258
    %v3294 = vpop.f32.mrb[0].mxu0
    %v3295 = vadd.f32 %v3243, %v3294
    %v3296 = vpop.f32.mrb[0].mxu0
    %v3297 = vpop.f32.mrb[0].mxu0
    %v3298 = vadd.f32 %v3243, %v3297
    %v3299 = vpop.f32.mrb[0].mxu0
    %3300 = vdwg.mxu0
    %v3301 = vmul.f32 %v3295, 0.5
    %v3302 = vmul.f32 %v3298, 0.5
    %v3303 = vmul.f32 %v3295, 0.044715
    %v3304 = vmul.f32 %v3298, 0.044715
    %v3305 = vmul.f32 %v3303, %v3295
    %v3306 = vmul.f32 %v3304, %v3298
    %v3307 = vmul.f32 %v3305, %v3295
    %v3308 = vmul.f32 %v3306, %v3298
    %v3309 = vadd.f32 %v3295, %v3307
    %v3310 = vadd.f32 %v3298, %v3308
    %v3311 = vmul.f32 %v3309, 0.7978846
    %v3312 = vmul.f32 %v3310, 0.7978846
    %v3313 = vtanh.pop %v3311
    %v3314 = vtanh.pop %v3312
    %v3315 = vadd.f32 %v3313, 1.0
    %v3316 = vadd.f32 %v3314, 1.0
    %v3317 = vmul.f32 %v3301, %v3315
    %v3318 = vmul.f32 %v3302, %v3316
    %v3319 = vpack.c.bf16 %v3318, %v3317
    %v3320 = vld [vmem:[%s67] sm:$0xf]
    %v3321 = vld [vmem:[%s67 + $0x4] sm:$0xf]
    %v3322 = vld [vmem:[%s67 + $0x8] sm:$0xf]
    %v3323 = vld [vmem:[%s67 + $0xc] sm:$0xf]
    %v3324 = vld [vmem:[%s67 + $0x10] sm:$0xf]
    %v3325 = vld [vmem:[%s67 + $0x14] sm:$0xf]
    %v3326 = vld [vmem:[%s67 + $0x18] sm:$0xf]
    %v3327 = vld [vmem:[%s67 + $0x1c] sm:$0xf]
    %v3328 = vld [vmem:[%s67 + $0x20] sm:$0xf]
    %v3329 = vld [vmem:[%s67 + $0x24] sm:$0xf]
    %v3330 = vld [vmem:[%s67 + $0x28] sm:$0xf]
    %v3331 = vld [vmem:[%s67 + $0x2c] sm:$0xf]
    %v3332 = vld [vmem:[%s67 + $0x30] sm:$0xf]
    %v3333 = vld [vmem:[%s67 + $0x34] sm:$0xf]
    %v3334 = vld [vmem:[%s67 + $0x38] sm:$0xf]
    %v3335 = vld [vmem:[%s67 + $0x3c] sm:$0xf]
    %v3336 = vld [vmem:[%s69] sm:$0x1]
    %v3338 = vlaneseq
    %v3339 = vshrl.u32 %v3338, 7
    %v3340 = vsub.s32 0, %v3339
    %v3341 = vrot.slane %v3336, %v3340
    %v3359 = vunpack.c.l.b16 %v3320
    %v3360 = vunpack.c.l.b16 %v3321
    %v3361 = vunpack.c.l.b16 %v3322
    %v3362 = vunpack.c.l.b16 %v3323
    %v3363 = vunpack.c.l.b16 %v3324
    %v3364 = vunpack.c.l.b16 %v3325
    %v3365 = vunpack.c.l.b16 %v3326
    %v3366 = vunpack.c.l.b16 %v3327
    %v3367 = vunpack.c.l.b16 %v3328
    %v3368 = vunpack.c.l.b16 %v3329
    %v3369 = vunpack.c.l.b16 %v3330
    %v3370 = vunpack.c.l.b16 %v3331
    %v3371 = vunpack.c.l.b16 %v3332
    %v3372 = vunpack.c.l.b16 %v3333
    %v3373 = vunpack.c.l.b16 %v3334
    %v3374 = vunpack.c.l.b16 %v3335
    %v3375 = vpack.c.b16 %v3360, %v3359
    %v3376 = vpack.c.b16 %v3362, %v3361
    %v3377 = vpack.c.b16 %v3364, %v3363
    %v3378 = vpack.c.b16 %v3366, %v3365
    %v3379 = vpack.c.b16 %v3368, %v3367
    %v3380 = vpack.c.b16 %v3370, %v3369
    %v3381 = vpack.c.b16 %v3372, %v3371
    %v3382 = vpack.c.b16 %v3374, %v3373
    %3391 = vmatprep.subr.bf16.mxu0 0
    %3392 = vmatpush1.bf16.msra.mxu0 %v3375
    %3393 = vmatprep.subr.bf16.mxu0 0
    %3394 = vmatpush1.bf16.msra.mxu0 %v3376
    %3395 = vmatprep.subr.bf16.mxu0 0
    %3396 = vmatpush1.bf16.msra.mxu0 %v3377
    %3397 = vmatprep.subr.bf16.mxu0 0
    %3398 = vmatpush1.bf16.msra.mxu0 %v3378
    %3399 = vmatprep.subr.bf16.mxu0 0
    %3400 = vmatpush1.bf16.msra.mxu0 %v3379
    %3401 = vmatprep.subr.bf16.mxu0 0
    %3402 = vmatpush1.bf16.msra.mxu0 %v3380
    %3403 = vmatprep.subr.bf16.mxu0 0
    %3404 = vmatpush1.bf16.msra.mxu0 %v3381
    %3405 = vmatprep.subr.bf16.mxu0 0
    %3406 = vmatpush1.bf16.msra.mxu0 %v3382
    %3407 = vmatprep.subr.bf16.mxu0 0
    %3408 = vmatpush1.bf16.msra.mxu0 0
    %3409 = vmatprep.subr.bf16.mxu0 0
    %3410 = vmatpush1.bf16.msra.mxu0 0
    %3411 = vmatprep.subr.bf16.mxu0 0
    %3412 = vmatpush1.bf16.msra.mxu0 0
    %3413 = vmatprep.subr.bf16.mxu0 0
    %3414 = vmatpush1.bf16.msra.mxu0 0
    %3415 = vmatprep.subr.bf16.mxu0 0
    %3416 = vmatpush1.bf16.msra.mxu0 0
    %3417 = vmatprep.subr.bf16.mxu0 0
    %3418 = vmatpush1.bf16.msra.mxu0 0
    %3419 = vmatprep.subr.bf16.mxu0 0
    %3420 = vmatpush1.bf16.msra.mxu0 0
    %3421 = vmatprep.subr.bf16.mxu0 0
    %3422 = vmatpush1.bf16.msra.mxu0 0
    %3423 = vmatprep.mubr.bf16.mxu0 0
    %3424 = vmatmul.mubr.bf16.gmra.mrb[0].mxu0 %v3319
    %v3425 = vpop.f32.mrb[0].mxu0
    %v3426 = vadd.f32 %v3341, %v3425
    %v3427 = vpop.f32.mrb[0].mxu0
    %v3428 = vpop.f32.mrb[0].mxu0
    %v3429 = vadd.f32 %v3341, %v3428
    %v3430 = vpop.f32.mrb[0].mxu0
    %3431 = vdwg.mxu0
    %v3432 = vadd.f32 %v3187, %v3426
    %v3433 = vadd.f32 %v3188, %v3429
    %3434 = vst.msk [vmem:[#allocation34] sm:$0xff] %vm390, %v3432
    %3435 = vst.msk [vmem:[#allocation34 + $0x8] sm:$0xff] %vm390, %v3433
    // Predicated region
    $region222: #{tpu_custom_call.1} parent=1 // pred_check
      _
    $region223: #{tpu_custom_call.1} parent=1 // pred_check_branch
      %3437 = sbr.rel (0) target = $region225
    $region224: #{tpu_custom_call.1} parent=1 // pred_region
      %s3439 = ssub.s32 256, 256
      %3440 = vsyncadd [#allocation4], %s3439
      %s3441 = sshll.u32 [#allocation34], 4
      %s3442 = int_to_ptr.vmem [resolvable:$true] %s3441
      %3447 = dma.vmem_to_hbm [thread:$0]  %s3442, 256, %s71, [#allocation4], 128, 128, 8
    $region225: #{tpu_custom_call.1} parent=1 // pred_fallthru
      _
    // Predicated region
    $region226: #{tpu_custom_call.1} parent=1 // pred_check
      _
    $region227: #{tpu_custom_call.1} parent=1 // pred_check_branch
      %3449 = sbr.rel (0) target = $region229
    $region228: #{tpu_custom_call.1} parent=1 // pred_region
      %3450 = dma.done [#allocation4], 256
    $region229: #{tpu_custom_call.1} parent=1 // pred_fallthru
      _
    %3451 = vsyncpa [#allocation3], 1
    %3452 = vsyncpa [#allocation6], 1
    %3453 = vsyncpa [#allocation9], 1
    %3454 = vsyncpa [#allocation12], 1
    %3455 = vsyncpa [#allocation15], 1
    %3456 = vsyncpa [#allocation18], 1
    %3457 = vsyncpa [#allocation21], 1
    %3458 = vsyncpa [#allocation24], 1
    %3459 = vsyncpa [#allocation27], 1
    %3460 = vsyncpa [#allocation30], 1
    %3461 = vsyncpa [#allocation33], 1
    %3462 = vsyncpa [#allocation4], 1

// kernel: tpu_custom_call.1
$region0: #{tpu_custom_call.1}
  #allocation0 [shape = 'u32[]', space=smem, size = 0x4, offset = 0x4, fixed_abs, tag = 'smem constant byte address 0x4 - core index']
  #allocation1 [shape = 'u32[144,128]{1,0:T(1,128)}', space=vmem, size = 0x12000, scoped, tag = 'internal scratch']
  %s0 = inlined_call_operand.smem [shape: u32[36], index: -1, kind: input, shape index: {}]
  %s1 = sld [smem:[%s0]]
  %s2 = scalar_lea.smem %s0, 1
  %s3 = sld [smem:[%s2]]
  %s4 = scalar_lea.smem %s0, 2
  %s5 = sld [smem:[%s4]]
  %s6 = scalar_lea.smem %s0, 3
  %s7 = sld [smem:[%s6]]
  %s8 = scalar_lea.smem %s0, 4
  %s9 = sld [smem:[%s8]]
  %s10 = scalar_lea.smem %s0, 5
  %s11 = sld [smem:[%s10]]
  %s12 = scalar_lea.smem %s0, 6
  %s13 = sld [smem:[%s12]]
  %s14 = scalar_lea.smem %s0, 7
  %s15 = sld [smem:[%s14]]
  %s16 = scalar_lea.smem %s0, 8
  %s17 = sld [smem:[%s16]]
  %s18 = scalar_lea.smem %s0, 9
  %s19 = sld [smem:[%s18]]
  %s20 = scalar_lea.smem %s0, 10
  %s21 = sld [smem:[%s20]]
  %s22 = scalar_lea.smem %s0, 11
  %s23 = sld [smem:[%s22]]
  %s24 = scalar_lea.smem %s0, 12
  %s25 = sld [smem:[%s24]]
  %s26 = scalar_lea.smem %s0, 13
  %s27 = sld [smem:[%s26]]
  %s28 = scalar_lea.smem %s0, 14
  %s29 = sld [smem:[%s28]]
  %s30 = scalar_lea.smem %s0, 15
  %s31 = sld [smem:[%s30]]
  %s32 = scalar_lea.smem %s0, 16
  %s33 = sld [smem:[%s32]]
  %s34 = scalar_lea.smem %s0, 17
  %s35 = sld [smem:[%s34]]
  %s36 = scalar_lea.smem %s0, 18
  %s37 = sld [smem:[%s36]]
  %s38 = scalar_lea.smem %s0, 19
  %s39 = sld [smem:[%s38]]
  %s40 = scalar_lea.smem %s0, 20
  %s41 = sld [smem:[%s40]]
  %s42 = scalar_lea.smem %s0, 21
  %s43 = sld [smem:[%s42]]
  %s44 = scalar_lea.smem %s0, 22
  %s45 = sld [smem:[%s44]]
  %s46 = scalar_lea.smem %s0, 23
  %s47 = sld [smem:[%s46]]
  %s48 = scalar_lea.smem %s0, 24
  %s49 = sld [smem:[%s48]]
  %s50 = scalar_lea.smem %s0, 25
  %s51 = sld [smem:[%s50]]
  %s52 = scalar_lea.smem %s0, 26
  %s53 = sld [smem:[%s52]]
  %s54 = scalar_lea.smem %s0, 27
  %s55 = sld [smem:[%s54]]
  %s56 = scalar_lea.smem %s0, 28
  %s57 = sld [smem:[%s56]]
  %s58 = scalar_lea.smem %s0, 29
  %s59 = sld [smem:[%s58]]
  %s60 = scalar_lea.smem %s0, 30
  %s61 = sld [smem:[%s60]]
  %s62 = scalar_lea.smem %s0, 31
  %s63 = sld [smem:[%s62]]
  %s64 = scalar_lea.smem %s0, 32
  %s65 = sld [smem:[%s64]]
  %s66 = scalar_lea.smem %s0, 33
  %s67 = sld [smem:[%s66]]
  %s68 = scalar_lea.smem %s0, 34
  %s69 = sld [smem:[%s68]]
  %s70 = scalar_lea.smem %s0, 35
  %s71 = sld [smem:[%s70]]
  %s72 = sld [smem:[#allocation0]]
  $region230: #{tpu_custom_call.1} parent=0
    _
  %s74 = ssub.s32 1, %s72
  %s75 = scalar_select 0, %s74, %s72
  $region1: #{tpu_custom_call.1} parent=0
    #allocation2 [shape = 'u8[4096]{0}', space=vmem, size = 0x1000, scoped, tag = 'input window, operand 5, single buffered']
    #allocation3 [shape = 's32[1]{0}', space=sflag, size = 0x4, scoped, tag = 'scoped memory for tpu_custom_call.1']
    #allocation4 [shape = 's32[1]{0}', space=sflag, size = 0x4, scoped, tag = 'scoped memory for tpu_custom_call.1']
    #allocation5 [shape = 'u8[1024]{0}', space=vmem, size = 0x400, scoped, tag = 'input window, operand 6, single buffered']
    #allocation6 [shape = 's32[1]{0}', space=sflag, size = 0x4, scoped, tag = 'scoped memory for tpu_custom_call.1']
    #allocation7 [shape = 'u8[512]{0}', space=vmem, size = 0x400, scoped, tag = 'input window, operand 7, single buffered']
    #allocation8 [shape = 'u8[512]{0}', space=vmem, size = 0x400, scoped, tag = 'input window, operand 8, single buffered']
    #allocation9 [shape = 's32[1]{0}', space=sflag, size = 0x4, scoped, tag = 'scoped memory for tpu_custom_call.1']
    #allocation10 [shape = 'u8[512]{0}', space=vmem, size = 0x400, scoped, tag = 'input window, operand 10, single buffered']
    #allocation11 [shape = 'u8[8192]{0}', space=vmem, size = 0x2000, scoped, tag = 'input window, operand 11, single buffered']
    #allocation12 [shape = 's32[1]{0}', space=sflag, size = 0x4, scoped, tag = 'scoped memory for tpu_custom_call.1']
    #allocation13 [shape = 'u8[512]{0}', space=vmem, size = 0x400, scoped, tag = 'input window, operand 12, single buffered']
    #allocation14 [shape = 'u8[512]{0}', space=vmem, size = 0x400, scoped, tag = 'input window, operand 14, single buffered']
    #allocation15 [shape = 's32[1]{0}', space=sflag, size = 0x4, scoped, tag = 'scoped memory for tpu_custom_call.1']
    #allocation16 [shape = 'u8[8192]{0}', space=vmem, size = 0x2000, scoped, tag = 'input window, operand 15, single buffered']
    #allocation17 [shape = 'u8[512]{0}', space=vmem, size = 0x400, scoped, tag = 'input window, operand 16, single buffered']
    #allocation18 [shape = 's32[1]{0}', space=sflag, size = 0x4, scoped, tag = 'scoped memory for tpu_custom_call.1']
    #allocation19 [shape = 'u8[512]{0}', space=vmem, size = 0x400, scoped, tag = 'input window, operand 17, single buffered']
    #allocation20 [shape = 'u8[512]{0}', space=vmem, size = 0x400, scoped, tag = 'input window, operand 19, single buffered']
    #allocation21 [shape = 's32[1]{0}', space=sflag, size = 0x4, scoped, tag = 'scoped memory for tpu_custom_call.1']
    #allocation22 [shape = 'u8[512]{0}', space=vmem, size = 0x400, scoped, tag = 'input window, operand 20, single buffered']
    #allocation23 [shape = 'u8[512]{0}', space=vmem, size = 0x400, scoped, tag = 'input window, operand 22, single buffered']
    #allocation24 [shape = 's32[1]{0}', space=sflag, size = 0x4, scoped, tag = 'scoped memory for tpu_custom_call.1']
    #allocation25 [shape = 'u8[512]{0}', space=vmem, size = 0x400, scoped, tag = 'input window, operand 24, single buffered']
    #allocation26 [shape = 'u8[8192]{0}', space=vmem, size = 0x2000, scoped, tag = 'input window, operand 25, single buffered']
    #allocation27 [shape = 's32[1]{0}', space=sflag, size = 0x4, scoped, tag = 'scoped memory for tpu_custom_call.1']
    #allocation28 [shape = 'u8[512]{0}', space=vmem, size = 0x400, scoped, tag = 'input window, operand 26, single buffered']
    #allocation29 [shape = 'u8[512]{0}', space=vmem, size = 0x400, scoped, tag = 'input window, operand 28, single buffered']
    #allocation30 [shape = 's32[1]{0}', space=sflag, size = 0x4, scoped, tag = 'scoped memory for tpu_custom_call.1']
    #allocation31 [shape = 'u8[512]{0}', space=vmem, size = 0x400, scoped, tag = 'input window, operand 29, single buffered']
    #allocation32 [shape = 'u8[512]{0}', space=vmem, size = 0x400, scoped, tag = 'input window, operand 30, single buffered']
    #allocation33 [shape = 's32[1]{0}', space=sflag, size = 0x4, scoped, tag = 'scoped memory for tpu_custom_call.1']
    #allocation34 [shape = 'u8[8192]{0}', space=vmem, size = 0x2000, scoped, tag = 'output window, operand 0, single buffered']
    %76 = vsyncpa [#allocation3], 0
    %77 = vsyncpa [#allocation6], 0
    %78 = vsyncpa [#allocation9], 0
    %79 = vsyncpa [#allocation12], 0
    %80 = vsyncpa [#allocation15], 0
    %81 = vsyncpa [#allocation18], 0
    %82 = vsyncpa [#allocation21], 0
    %83 = vsyncpa [#allocation24], 0
    %84 = vsyncpa [#allocation27], 0
    %85 = vsyncpa [#allocation30], 0
    %86 = vsyncpa [#allocation33], 0
    %87 = vsyncpa [#allocation4], 0
    // Predicated region
    $region2: #{tpu_custom_call.1} parent=1 // pred_check
      _
    $region3: #{tpu_custom_call.1} parent=1 // pred_check_branch
      %89 = sbr.rel (0) target = $region5
    $region4: #{tpu_custom_call.1} parent=1 // pred_region
      _
    $region5: #{tpu_custom_call.1} parent=1 // pred_fallthru
      _
    // Predicated region
    $region6: #{tpu_custom_call.1} parent=1 // pred_check
      _
    $region7: #{tpu_custom_call.1} parent=1 // pred_check_branch
      %91 = sbr.rel (0) target = $region9
    $region8: #{tpu_custom_call.1} parent=1 // pred_region
      _
    $region9: #{tpu_custom_call.1} parent=1 // pred_fallthru
      _
    // Predicated region
    $region10: #{tpu_custom_call.1} parent=1 // pred_check
      _
    $region11: #{tpu_custom_call.1} parent=1 // pred_check_branch
      %93 = sbr.rel (0) target = $region13
    $region12: #{tpu_custom_call.1} parent=1 // pred_region
      _
    $region13: #{tpu_custom_call.1} parent=1 // pred_fallthru
      _
    // Predicated region
    $region14: #{tpu_custom_call.1} parent=1 // pred_check
      _
    $region15: #{tpu_custom_call.1} parent=1 // pred_check_branch
      %95 = sbr.rel (0) target = $region17
    $region16: #{tpu_custom_call.1} parent=1 // pred_region
      _
    $region17: #{tpu_custom_call.1} parent=1 // pred_fallthru
      _
    // Predicated region
    $region18: #{tpu_custom_call.1} parent=1 // pred_check
      _
    $region19: #{tpu_custom_call.1} parent=1 // pred_check_branch
      %97 = sbr.rel (0) target = $region21
    $region20: #{tpu_custom_call.1} parent=1 // pred_region
      _
    $region21: #{tpu_custom_call.1} parent=1 // pred_fallthru
      _
    // Predicated region
    $region22: #{tpu_custom_call.1} parent=1 // pred_check
      _
    $region23: #{tpu_custom_call.1} parent=1 // pred_check_branch
      %99 = sbr.rel (0) target = $region25
    $region24: #{tpu_custom_call.1} parent=1 // pred_region
      %s101 = ssub.s32 128, 128
      %102 = vsyncadd [#allocation3], %s101
      %s104 = sshll.u32 [#allocation2], 4
      %s105 = int_to_ptr.vmem [resolvable:$true] %s104
      %107 = dma.hbm_to_vmem [thread:$0]  %s11, 128, %s105, [#allocation3]
    $region25: #{tpu_custom_call.1} parent=1 // pred_fallthru
      _
    // Predicated region
    $region26: #{tpu_custom_call.1} parent=1 // pred_check
      _
    $region27: #{tpu_custom_call.1} parent=1 // pred_check_branch
      %109 = sbr.rel (0) target = $region29
    $region28: #{tpu_custom_call.1} parent=1 // pred_region
      %s111 = ssub.s32 32, 32
      %112 = vsyncadd [#allocation6], %s111
      %s114 = sshll.u32 [#allocation5], 4
      %s115 = int_to_ptr.vmem [resolvable:$true] %s114
      %117 = dma.hbm_to_vmem [thread:$0]  %s13, 32, %s115, [#allocation6]
    $region29: #{tpu_custom_call.1} parent=1 // pred_fallthru
      _
    // Predicated region
    $region30: #{tpu_custom_call.1} parent=1 // pred_check
      _
    $region31: #{tpu_custom_call.1} parent=1 // pred_check_branch
      %119 = sbr.rel (0) target = $region33
    $region32: #{tpu_custom_call.1} parent=1 // pred_region
      %s121 = ssub.s32 16, 16
      %122 = vsyncadd [#allocation6], %s121
      %s124 = sshll.u32 [#allocation7], 4
      %s125 = int_to_ptr.vmem [resolvable:$true] %s124
      %127 = dma.hbm_to_vmem [thread:$0]  %s15, 16, %s125, [#allocation6]
    $region33: #{tpu_custom_call.1} parent=1 // pred_fallthru
      _
    // Predicated region
    $region34: #{tpu_custom_call.1} parent=1 // pred_check
      _
    $region35: #{tpu_custom_call.1} parent=1 // pred_check_branch
      %129 = sbr.rel (0) target = $region37
    $region36: #{tpu_custom_call.1} parent=1 // pred_region
      %s131 = ssub.s32 16, 16
      %132 = vsyncadd [#allocation9], %s131
      %s134 = sshll.u32 [#allocation8], 4
      %s135 = int_to_ptr.vmem [resolvable:$true] %s134
      %137 = dma.hbm_to_vmem [thread:$0]  %s17, 16, %s135, [#allocation9]
    $region37: #{tpu_custom_call.1} parent=1 // pred_fallthru
      _
    // Predicated region
    $region38: #{tpu_custom_call.1} parent=1 // pred_check
      _
    $region39: #{tpu_custom_call.1} parent=1 // pred_check_branch
      %139 = sbr.rel (0) target = $region41
    $region40: #{tpu_custom_call.1} parent=1 // pred_region
      _
    $region41: #{tpu_custom_call.1} parent=1 // pred_fallthru
      _
    // Predicated region
    $region42: #{tpu_custom_call.1} parent=1 // pred_check
      _
    $region43: #{tpu_custom_call.1} parent=1 // pred_check_branch
      %141 = sbr.rel (0) target = $region45
    $region44: #{tpu_custom_call.1} parent=1 // pred_region
      %s143 = ssub.s32 16, 16
      %144 = vsyncadd [#allocation9], %s143
      %s146 = sshll.u32 [#allocation10], 4
      %s147 = int_to_ptr.vmem [resolvable:$true] %s146
      %149 = dma.hbm_to_vmem [thread:$0]  %s21, 16, %s147, [#allocation9]
    $region45: #{tpu_custom_call.1} parent=1 // pred_fallthru
      _
    // Predicated region
    $region46: #{tpu_custom_call.1} parent=1 // pred_check
      _
    $region47: #{tpu_custom_call.1} parent=1 // pred_check_branch
      %151 = sbr.rel (0) target = $region49
    $region48: #{tpu_custom_call.1} parent=1 // pred_region
      %s153 = ssub.s32 256, 256
      %154 = vsyncadd [#allocation12], %s153
      %s155 = sshll.u32 [#allocation11], 4
      %s156 = int_to_ptr.vmem [resolvable:$true] %s155
      %161 = dma.hbm_to_vmem [thread:$0]  %s23, 256, %s156, [#allocation12], 64, 64, 4
    $region49: #{tpu_custom_call.1} parent=1 // pred_fallthru
      _
    // Predicated region
    $region50: #{tpu_custom_call.1} parent=1 // pred_check
      _
    $region51: #{tpu_custom_call.1} parent=1 // pred_check_branch
      %163 = sbr.rel (0) target = $region53
    $region52: #{tpu_custom_call.1} parent=1 // pred_region
      %s165 = ssub.s32 16, 16
      %166 = vsyncadd [#allocation12], %s165
      %s168 = sshll.u32 [#allocation13], 4
      %s169 = int_to_ptr.vmem [resolvable:$true] %s168
      %171 = dma.hbm_to_vmem [thread:$0]  %s25, 16, %s169, [#allocation12]
    $region53: #{tpu_custom_call.1} parent=1 // pred_fallthru
      _
    // Predicated region
    $region54: #{tpu_custom_call.1} parent=1 // pred_check
      _
    $region55: #{tpu_custom_call.1} parent=1 // pred_check_branch
      %173 = sbr.rel (0) target = $region57
    $region56: #{tpu_custom_call.1} parent=1 // pred_region
      _
    $region57: #{tpu_custom_call.1} parent=1 // pred_fallthru
      _
    // Predicated region
    $region58: #{tpu_custom_call.1} parent=1 // pred_check
      _
    $region59: #{tpu_custom_call.1} parent=1 // pred_check_branch
      %175 = sbr.rel (0) target = $region61
    $region60: #{tpu_custom_call.1} parent=1 // pred_region
      %s177 = ssub.s32 16, 16
      %178 = vsyncadd [#allocation15], %s177
      %s180 = sshll.u32 [#allocation14], 4
      %s181 = int_to_ptr.vmem [resolvable:$true] %s180
      %183 = dma.hbm_to_vmem [thread:$0]  %s29, 16, %s181, [#allocation15]
    $region61: #{tpu_custom_call.1} parent=1 // pred_fallthru
      _
    // Predicated region
    $region62: #{tpu_custom_call.1} parent=1 // pred_check
      _
    $region63: #{tpu_custom_call.1} parent=1 // pred_check_branch
      %185 = sbr.rel (0) target = $region65
    $region64: #{tpu_custom_call.1} parent=1 // pred_region
      %s187 = ssub.s32 256, 256
      %188 = vsyncadd [#allocation15], %s187
      %s189 = sshll.u32 [#allocation16], 4
      %s190 = int_to_ptr.vmem [resolvable:$true] %s189
      %195 = dma.hbm_to_vmem [thread:$0]  %s31, 256, %s190, [#allocation15], 64, 64, 4
    $region65: #{tpu_custom_call.1} parent=1 // pred_fallthru
      _
    // Predicated region
    $region66: #{tpu_custom_call.1} parent=1 // pred_check
      _
    $region67: #{tpu_custom_call.1} parent=1 // pred_check_branch
      %197 = sbr.rel (0) target = $region69
    $region68: #{tpu_custom_call.1} parent=1 // pred_region
      %s199 = ssub.s32 16, 16
      %200 = vsyncadd [#allocation18], %s199
      %s202 = sshll.u32 [#allocation17], 4
      %s203 = int_to_ptr.vmem [resolvable:$true] %s202
      %205 = dma.hbm_to_vmem [thread:$0]  %s33, 16, %s203, [#allocation18]
    $region69: #{tpu_custom_call.1} parent=1 // pred_fallthru
      _
    // Predicated region
    $region70: #{tpu_custom_call.1} parent=1 // pred_check
      _
    $region71: #{tpu_custom_call.1} parent=1 // pred_check_branch
      %207 = sbr.rel (0) target = $region73
    $region72: #{tpu_custom_call.1} parent=1 // pred_region
      %s209 = ssub.s32 16, 16
      %210 = vsyncadd [#allocation18], %s209
      %s212 = sshll.u32 [#allocation19], 4
      %s213 = int_to_ptr.vmem [resolvable:$true] %s212
      %215 = dma.hbm_to_vmem [thread:$0]  %s35, 16, %s213, [#allocation18]
    $region73: #{tpu_custom_call.1} parent=1 // pred_fallthru
      _
    // Predicated region
    $region74: #{tpu_custom_call.1} parent=1 // pred_check
      _
    $region75: #{tpu_custom_call.1} parent=1 // pred_check_branch
      %217 = sbr.rel (0) target = $region77
    $region76: #{tpu_custom_call.1} parent=1 // pred_region
      _
    $region77: #{tpu_custom_call.1} parent=1 // pred_fallthru
      _
    // Predicated region
    $region78: #{tpu_custom_call.1} parent=1 // pred_check
      _
    $region79: #{tpu_custom_call.1} parent=1 // pred_check_branch
      %219 = sbr.rel (0) target = $region81
    $region80: #{tpu_custom_call.1} parent=1 // pred_region
      %s221 = ssub.s32 16, 16
      %222 = vsyncadd [#allocation21], %s221
      %s224 = sshll.u32 [#allocation20], 4
      %s225 = int_to_ptr.vmem [resolvable:$true] %s224
      %227 = dma.hbm_to_vmem [thread:$0]  %s39, 16, %s225, [#allocation21]
    $region81: #{tpu_custom_call.1} parent=1 // pred_fallthru
      _
    // Predicated region
    $region82: #{tpu_custom_call.1} parent=1 // pred_check
      _
    $region83: #{tpu_custom_call.1} parent=1 // pred_check_branch
      %229 = sbr.rel (0) target = $region85
    $region84: #{tpu_custom_call.1} parent=1 // pred_region
      %s231 = ssub.s32 16, 16
      %232 = vsyncadd [#allocation21], %s231
      %s234 = sshll.u32 [#allocation22], 4
      %s235 = int_to_ptr.vmem [resolvable:$true] %s234
      %237 = dma.hbm_to_vmem [thread:$0]  %s41, 16, %s235, [#allocation21]
    $region85: #{tpu_custom_call.1} parent=1 // pred_fallthru
      _
    // Predicated region
    $region86: #{tpu_custom_call.1} parent=1 // pred_check
      _
    $region87: #{tpu_custom_call.1} parent=1 // pred_check_branch
      %239 = sbr.rel (0) target = $region89
    $region88: #{tpu_custom_call.1} parent=1 // pred_region
      _
    $region89: #{tpu_custom_call.1} parent=1 // pred_fallthru
      _
    // Predicated region
    $region90: #{tpu_custom_call.1} parent=1 // pred_check
      _
    $region91: #{tpu_custom_call.1} parent=1 // pred_check_branch
      %241 = sbr.rel (0) target = $region93
    $region92: #{tpu_custom_call.1} parent=1 // pred_region
      %s243 = ssub.s32 16, 16
      %244 = vsyncadd [#allocation24], %s243
      %s246 = sshll.u32 [#allocation23], 4
      %s247 = int_to_ptr.vmem [resolvable:$true] %s246
      %249 = dma.hbm_to_vmem [thread:$0]  %s45, 16, %s247, [#allocation24]
    $region93: #{tpu_custom_call.1} parent=1 // pred_fallthru
      _
    // Predicated region
    $region94: #{tpu_custom_call.1} parent=1 // pred_check
      _
    $region95: #{tpu_custom_call.1} parent=1 // pred_check_branch
      %251 = sbr.rel (0) target = $region97
    $region96: #{tpu_custom_call.1} parent=1 // pred_region
      _
    $region97: #{tpu_custom_call.1} parent=1 // pred_fallthru
      _
    // Predicated region
    $region98: #{tpu_custom_call.1} parent=1 // pred_check
      _
    $region99: #{tpu_custom_call.1} parent=1 // pred_check_branch
      %253 = sbr.rel (0) target = $region101
    $region100: #{tpu_custom_call.1} parent=1 // pred_region
      %s255 = ssub.s32 16, 16
      %256 = vsyncadd [#allocation24], %s255
      %s258 = sshll.u32 [#allocation25], 4
      %s259 = int_to_ptr.vmem [resolvable:$true] %s258
      %261 = dma.hbm_to_vmem [thread:$0]  %s49, 16, %s259, [#allocation24]
    $region101: #{tpu_custom_call.1} parent=1 // pred_fallthru
      _
    // Predicated region
    $region102: #{tpu_custom_call.1} parent=1 // pred_check
      _
    $region103: #{tpu_custom_call.1} parent=1 // pred_check_branch
      %263 = sbr.rel (0) target = $region105
    $region104: #{tpu_custom_call.1} parent=1 // pred_region
      %s265 = ssub.s32 256, 256
      %266 = vsyncadd [#allocation27], %s265
      %s267 = sshll.u32 [#allocation26], 4
      %s268 = int_to_ptr.vmem [resolvable:$true] %s267
      %273 = dma.hbm_to_vmem [thread:$0]  %s51, 256, %s268, [#allocation27], 64, 64, 4
    $region105: #{tpu_custom_call.1} parent=1 // pred_fallthru
      _
    // Predicated region
    $region106: #{tpu_custom_call.1} parent=1 // pred_check
      _
    $region107: #{tpu_custom_call.1} parent=1 // pred_check_branch
      %275 = sbr.rel (0) target = $region109
    $region108: #{tpu_custom_call.1} parent=1 // pred_region
      %s277 = ssub.s32 16, 16
      %278 = vsyncadd [#allocation27], %s277
      %s280 = sshll.u32 [#allocation28], 4
      %s281 = int_to_ptr.vmem [resolvable:$true] %s280
      %283 = dma.hbm_to_vmem [thread:$0]  %s53, 16, %s281, [#allocation27]
    $region109: #{tpu_custom_call.1} parent=1 // pred_fallthru
      _
    // Predicated region
    $region110: #{tpu_custom_call.1} parent=1 // pred_check
      _
    $region111: #{tpu_custom_call.1} parent=1 // pred_check_branch
      %285 = sbr.rel (0) target = $region113
    $region112: #{tpu_custom_call.1} parent=1 // pred_region
      _
    $region113: #{tpu_custom_call.1} parent=1 // pred_fallthru
      _
    // Predicated region
    $region114: #{tpu_custom_call.1} parent=1 // pred_check
      _
    $region115: #{tpu_custom_call.1} parent=1 // pred_check_branch
      %287 = sbr.rel (0) target = $region117
    $region116: #{tpu_custom_call.1} parent=1 // pred_region
      %s289 = ssub.s32 16, 16
      %290 = vsyncadd [#allocation30], %s289
      %s292 = sshll.u32 [#allocation29], 4
      %s293 = int_to_ptr.vmem [resolvable:$true] %s292
      %295 = dma.hbm_to_vmem [thread:$0]  %s57, 16, %s293, [#allocation30]
    $region117: #{tpu_custom_call.1} parent=1 // pred_fallthru
      _
    // Predicated region
    $region118: #{tpu_custom_call.1} parent=1 // pred_check
      _
    $region119: #{tpu_custom_call.1} parent=1 // pred_check_branch
      %297 = sbr.rel (0) target = $region121
    $region120: #{tpu_custom_call.1} parent=1 // pred_region
      %s299 = ssub.s32 16, 16
      %300 = vsyncadd [#allocation30], %s299
      %s302 = sshll.u32 [#allocation31], 4
      %s303 = int_to_ptr.vmem [resolvable:$true] %s302
      %305 = dma.hbm_to_vmem [thread:$0]  %s59, 16, %s303, [#allocation30]
    $region121: #{tpu_custom_call.1} parent=1 // pred_fallthru
      _
    // Predicated region
    $region122: #{tpu_custom_call.1} parent=1 // pred_check
      _
    $region123: #{tpu_custom_call.1} parent=1 // pred_check_branch
      %307 = sbr.rel (0) target = $region125
    $region124: #{tpu_custom_call.1} parent=1 // pred_region
      %s309 = ssub.s32 16, 16
      %310 = vsyncadd [#allocation33], %s309
      %s312 = sshll.u32 [#allocation32], 4
      %s313 = int_to_ptr.vmem [resolvable:$true] %s312
      %315 = dma.hbm_to_vmem [thread:$0]  %s61, 16, %s313, [#allocation33]
    $region125: #{tpu_custom_call.1} parent=1 // pred_fallthru
      _
    // Predicated region
    $region126: #{tpu_custom_call.1} parent=1 // pred_check
      _
    $region127: #{tpu_custom_call.1} parent=1 // pred_check_branch
      %317 = sbr.rel (0) target = $region129
    $region128: #{tpu_custom_call.1} parent=1 // pred_region
      _
    $region129: #{tpu_custom_call.1} parent=1 // pred_fallthru
      _
    // Predicated region
    $region130: #{tpu_custom_call.1} parent=1 // pred_check
      _
    $region131: #{tpu_custom_call.1} parent=1 // pred_check_branch
      %319 = sbr.rel (0) target = $region133
    $region132: #{tpu_custom_call.1} parent=1 // pred_region
      _
    $region133: #{tpu_custom_call.1} parent=1 // pred_fallthru
      _
    // Predicated region
    $region134: #{tpu_custom_call.1} parent=1 // pred_check
      _
    $region135: #{tpu_custom_call.1} parent=1 // pred_check_branch
      %321 = sbr.rel (0) target = $region137
    $region136: #{tpu_custom_call.1} parent=1 // pred_region
      _
    $region137: #{tpu_custom_call.1} parent=1 // pred_fallthru
      _
    // Predicated region
    $region138: #{tpu_custom_call.1} parent=1 // pred_check
      _
    $region139: #{tpu_custom_call.1} parent=1 // pred_check_branch
      %323 = sbr.rel (0) target = $region141
    $region140: #{tpu_custom_call.1} parent=1 // pred_region
      _
    $region141: #{tpu_custom_call.1} parent=1 // pred_fallthru
      _
    // Predicated region
    $region142: #{tpu_custom_call.1} parent=1 // pred_check
      _
    $region143: #{tpu_custom_call.1} parent=1 // pred_check_branch
      %325 = sbr.rel (0) target = $region145
    $region144: #{tpu_custom_call.1} parent=1 // pred_region
      %326 = dma.done [#allocation3], 128
    $region145: #{tpu_custom_call.1} parent=1 // pred_fallthru
      _
    // Predicated region
    $region146: #{tpu_custom_call.1} parent=1 // pred_check
      _
    $region147: #{tpu_custom_call.1} parent=1 // pred_check_branch
      %328 = sbr.rel (0) target = $region149
    $region148: #{tpu_custom_call.1} parent=1 // pred_region
      %329 = dma.done [#allocation6], 32
    $region149: #{tpu_custom_call.1} parent=1 // pred_fallthru
      _
    // Predicated region
    $region150: #{tpu_custom_call.1} parent=1 // pred_check
      _
    $region151: #{tpu_custom_call.1} parent=1 // pred_check_branch
      %331 = sbr.rel (0) target = $region153
    $region152: #{tpu_custom_call.1} parent=1 // pred_region
      %332 = dma.done [#allocation6], 16
    $region153: #{tpu_custom_call.1} parent=1 // pred_fallthru
      _
    // Predicated region
    $region154: #{tpu_custom_call.1} parent=1 // pred_check
      _
    $region155: #{tpu_custom_call.1} parent=1 // pred_check_branch
      %334 = sbr.rel (0) target = $region157
    $region156: #{tpu_custom_call.1} parent=1 // pred_region
      %335 = dma.done [#allocation9], 16
    $region157: #{tpu_custom_call.1} parent=1 // pred_fallthru
      _
    // Predicated region
    $region158: #{tpu_custom_call.1} parent=1 // pred_check
      _
    $region159: #{tpu_custom_call.1} parent=1 // pred_check_branch
      %337 = sbr.rel (0) target = $region161
    $region160: #{tpu_custom_call.1} parent=1 // pred_region
      %338 = dma.done [#allocation9], 16
    $region161: #{tpu_custom_call.1} parent=1 // pred_fallthru
      _
    // Predicated region
    $region162: #{tpu_custom_call.1} parent=1 // pred_check
      _
    $region163: #{tpu_custom_call.1} parent=1 // pred_check_branch
      %340 = sbr.rel (0) target = $region165
    $region164: #{tpu_custom_call.1} parent=1 // pred_region
      %341 = dma.done [#allocation12], 256
    $region165: #{tpu_custom_call.1} parent=1 // pred_fallthru
      _
    // Predicated region
    $region166: #{tpu_custom_call.1} parent=1 // pred_check
      _
    $region167: #{tpu_custom_call.1} parent=1 // pred_check_branch
      %343 = sbr.rel (0) target = $region169
    $region168: #{tpu_custom_call.1} parent=1 // pred_region
      %344 = dma.done [#allocation12], 16
    $region169: #{tpu_custom_call.1} parent=1 // pred_fallthru
      _
    // Predicated region
    $region170: #{tpu_custom_call.1} parent=1 // pred_check
      _
    $region171: #{tpu_custom_call.1} parent=1 // pred_check_branch
      %346 = sbr.rel (0) target = $region173
    $region172: #{tpu_custom_call.1} parent=1 // pred_region
      %347 = dma.done [#allocation15], 16
    $region173: #{tpu_custom_call.1} parent=1 // pred_fallthru
      _
    // Predicated region
    $region174: #{tpu_custom_call.1} parent=1 // pred_check
      _
    $region175: #{tpu_custom_call.1} parent=1 // pred_check_branch
      %349 = sbr.rel (0) target = $region177
    $region176: #{tpu_custom_call.1} parent=1 // pred_region
      %350 = dma.done [#allocation15], 256
    $region177: #{tpu_custom_call.1} parent=1 // pred_fallthru
      _
    // Predicated region
    $region178: #{tpu_custom_call.1} parent=1 // pred_check
      _
    $region179: #{tpu_custom_call.1} parent=1 // pred_check_branch
      %352 = sbr.rel (0) target = $region181
    $region180: #{tpu_custom_call.1} parent=1 // pred_region
      %353 = dma.done [#allocation18], 16
    $region181: #{tpu_custom_call.1} parent=1 // pred_fallthru
      _
    // Predicated region
    $region182: #{tpu_custom_call.1} parent=1 // pred_check
      _
    $region183: #{tpu_custom_call.1} parent=1 // pred_check_branch
      %355 = sbr.rel (0) target = $region185
    $region184: #{tpu_custom_call.1} parent=1 // pred_region
      %356 = dma.done [#allocation18], 16
    $region185: #{tpu_custom_call.1} parent=1 // pred_fallthru
      _
    // Predicated region
    $region186: #{tpu_custom_call.1} parent=1 // pred_check
      _
    $region187: #{tpu_custom_call.1} parent=1 // pred_check_branch
      %358 = sbr.rel (0) target = $region189
    $region188: #{tpu_custom_call.1} parent=1 // pred_region
      %359 = dma.done [#allocation21], 16
    $region189: #{tpu_custom_call.1} parent=1 // pred_fallthru
      _
    // Predicated region
    $region190: #{tpu_custom_call.1} parent=1 // pred_check
      _
    $region191: #{tpu_custom_call.1} parent=1 // pred_check_branch
      %361 = sbr.rel (0) target = $region193
    $region192: #{tpu_custom_call.1} parent=1 // pred_region
      %362 = dma.done [#allocation21], 16
    $region193: #{tpu_custom_call.1} parent=1 // pred_fallthru
      _
    // Predicated region
    $region194: #{tpu_custom_call.1} parent=1 // pred_check
      _
    $region195: #{tpu_custom_call.1} parent=1 // pred_check_branch
      %364 = sbr.rel (0) target = $region197
    $region196: #{tpu_custom_call.1} parent=1 // pred_region
      %365 = dma.done [#allocation24], 16
    $region197: #{tpu_custom_call.1} parent=1 // pred_fallthru
      _
    // Predicated region
    $region198: #{tpu_custom_call.1} parent=1 // pred_check
      _
    $region199: #{tpu_custom_call.1} parent=1 // pred_check_branch
      %367 = sbr.rel (0) target = $region201
    $region200: #{tpu_custom_call.1} parent=1 // pred_region
      %368 = dma.done [#allocation24], 16
    $region201: #{tpu_custom_call.1} parent=1 // pred_fallthru
      _
    // Predicated region
    $region202: #{tpu_custom_call.1} parent=1 // pred_check
      _
    $region203: #{tpu_custom_call.1} parent=1 // pred_check_branch
      %370 = sbr.rel (0) target = $region205
    $region204: #{tpu_custom_call.1} parent=1 // pred_region
      %371 = dma.done [#allocation27], 256
    $region205: #{tpu_custom_call.1} parent=1 // pred_fallthru
      _
    // Predicated region
    $region206: #{tpu_custom_call.1} parent=1 // pred_check
      _
    $region207: #{tpu_custom_call.1} parent=1 // pred_check_branch
      %373 = sbr.rel (0) target = $region209
    $region208: #{tpu_custom_call.1} parent=1 // pred_region
      %374 = dma.done [#allocation27], 16
    $region209: #{tpu_custom_call.1} parent=1 // pred_fallthru
      _
    // Predicated region
    $region210: #{tpu_custom_call.1} parent=1 // pred_check
      _
    $region211: #{tpu_custom_call.1} parent=1 // pred_check_branch
      %376 = sbr.rel (0) target = $region213
    $region212: #{tpu_custom_call.1} parent=1 // pred_region
      %377 = dma.done [#allocation30], 16
    $region213: #{tpu_custom_call.1} parent=1 // pred_fallthru
      _
    // Predicated region
    $region214: #{tpu_custom_call.1} parent=1 // pred_check
      _
    $region215: #{tpu_custom_call.1} parent=1 // pred_check_branch
      %379 = sbr.rel (0) target = $region217
    $region216: #{tpu_custom_call.1} parent=1 // pred_region
      %380 = dma.done [#allocation30], 16
    $region217: #{tpu_custom_call.1} parent=1 // pred_fallthru
      _
    // Predicated region
    $region218: #{tpu_custom_call.1} parent=1 // pred_check
      _
    $region219: #{tpu_custom_call.1} parent=1 // pred_check_branch
      %382 = sbr.rel (0) target = $region221
    $region220: #{tpu_custom_call.1} parent=1 // pred_region
      %383 = dma.done [#allocation33], 16
    $region221: #{tpu_custom_call.1} parent=1 // pred_fallthru
      _
    %v385 = vld [vmem:[%s1] sm:$0xff]
    %v386 = vld [vmem:[%s1 + $0x8] sm:$0xff]
    %v387 = vld [vmem:[#allocation2] sm:$0xff]
    %v388 = vld [vmem:[#allocation7] sm:$0x1]
    %v389 = vld [vmem:[#allocation8] sm:$0x1]
    %vm390 = vcmask 261120
    %v391 = vsel %vm390, %v385, 0.0
    %392 = vadd.xlane.f32.xlu0 %v391
    %v393 = vpop.xlane.xlu0 %392
    %v394 = vsel %vm390, %v386, 0.0
    %395 = vadd.xlane.f32.xlu0 %v394
    %v396 = vpop.xlane.xlu0 %395
    %v397 = vrcp.pop 32.0
    %v398 = vmul.f32 %v393, %v397
    %v399 = vmul.f32 %v396, %v397
    %v400 = vsub.f32 %v385, %v398
    %v401 = vsub.f32 %v386, %v399
    %v402 = vmul.f32 %v400, %v400
    %v403 = vmul.f32 %v401, %v401
    %v404 = vsel %vm390, %v402, 0.0
    %405 = vadd.xlane.f32.xlu0 %v404
    %v406 = vpop.xlane.xlu0 %405
    %v407 = vsel %vm390, %v403, 0.0
    %408 = vadd.xlane.f32.xlu0 %v407
    %v409 = vpop.xlane.xlu0 %408
    %v410 = vmul.f32 %v406, %v397
    %v411 = vmul.f32 %v409, %v397
    %v412 = vadd.f32 %v410, 1e-05
    %v413 = vadd.f32 %v411, 1e-05
    %v414 = vrsqrt.pop %v412
    %v415 = vrsqrt.pop %v413
    %v416 = vmul.f32 %v400, %v414
    %v417 = vmul.f32 %v401, %v415
    %v419 = vlaneseq
    %v420 = vshrl.u32 %v419, 7
    %v421 = vsub.s32 0, %v420
    %v422 = vrot.slane %v388, %v421
    %v424 = vmul.f32 %v416, %v422
    %v425 = vmul.f32 %v417, %v422
    %v427 = vlaneseq
    %v428 = vshrl.u32 %v427, 7
    %v429 = vsub.s32 0, %v428
    %v430 = vrot.slane %v389, %v429
    %v432 = vadd.f32 %v424, %v430
    %v433 = vadd.f32 %v425, %v430
    %v434 = vadd.f32 %v432, %v387
    %v435 = vadd.f32 %v433, %v387
    %v436 = vld [vmem:[%s19] sm:$0xf]
    %v437 = vld [vmem:[%s19 + $0x4] sm:$0xf]
    %v438 = vld [vmem:[%s19 + $0x8] sm:$0xf]
    %v439 = vld [vmem:[%s19 + $0xc] sm:$0xf]
    %v440 = vld [vmem:[#allocation10] sm:$0x1]
    %v441 = vld [vmem:[#allocation11] sm:$0xf]
    %v442 = vld [vmem:[#allocation11 + $0x4] sm:$0xf]
    %v443 = vld [vmem:[#allocation11 + $0x8] sm:$0xf]
    %v444 = vld [vmem:[#allocation11 + $0xc] sm:$0xf]
    %v445 = vld [vmem:[#allocation13] sm:$0x1]
    %v446 = vld [vmem:[%s27] sm:$0xf]
    %v447 = vld [vmem:[%s27 + $0x4] sm:$0xf]
    %v448 = vld [vmem:[%s27 + $0x8] sm:$0xf]
    %v449 = vld [vmem:[%s27 + $0xc] sm:$0xf]
    %v450 = vld [vmem:[#allocation14] sm:$0x1]
    %v451 = vld [vmem:[#allocation16] sm:$0xf]
    %v452 = vld [vmem:[#allocation16 + $0x4] sm:$0xf]
    %v453 = vld [vmem:[#allocation16 + $0x8] sm:$0xf]
    %v454 = vld [vmem:[#allocation16 + $0xc] sm:$0xf]
    %v455 = vld [vmem:[#allocation17] sm:$0x1]
    %v456 = vpack.c.bf16 %v435, %v434
    %v458 = vlaneseq
    %v459 = vshrl.u32 %v458, 7
    %v460 = vsub.s32 0, %v459
    %v461 = vrot.slane %v440, %v460
    %v467 = vunpack.c.l.b16 %v436
    %v468 = vunpack.c.l.b16 %v437
    %v469 = vunpack.c.l.b16 %v438
    %v470 = vunpack.c.l.b16 %v439
    %v471 = vpack.c.b16 %v468, %v467
    %v472 = vpack.c.b16 %v470, %v469
    %v476 = vsel %vm390, %v456, 0
    %478 = vmatprep.subr.bf16.mxu0 0
    %479 = vmatpush1.bf16.msra.mxu0 %v471
    %480 = vmatprep.subr.bf16.mxu0 0
    %481 = vmatpush1.bf16.msra.mxu0 %v472
    %482 = vmatprep.subr.bf16.mxu0 0
    %483 = vmatpush1.bf16.msra.mxu0 0
    %484 = vmatprep.subr.bf16.mxu0 0
    %485 = vmatpush1.bf16.msra.mxu0 0
    %486 = vmatprep.subr.bf16.mxu0 0
    %487 = vmatpush1.bf16.msra.mxu0 0
    %488 = vmatprep.subr.bf16.mxu0 0
    %489 = vmatpush1.bf16.msra.mxu0 0
    %490 = vmatprep.subr.bf16.mxu0 0
    %491 = vmatpush1.bf16.msra.mxu0 0
    %492 = vmatprep.subr.bf16.mxu0 0
    %493 = vmatpush1.bf16.msra.mxu0 0
    %494 = vmatprep.subr.bf16.mxu0 0
    %495 = vmatpush1.bf16.msra.mxu0 0
    %496 = vmatprep.subr.bf16.mxu0 0
    %497 = vmatpush1.bf16.msra.mxu0 0
    %498 = vmatprep.subr.bf16.mxu0 0
    %499 = vmatpush1.bf16.msra.mxu0 0
    %500 = vmatprep.subr.bf16.mxu0 0
    %501 = vmatpush1.bf16.msra.mxu0 0
    %502 = vmatprep.subr.bf16.mxu0 0
    %503 = vmatpush1.bf16.msra.mxu0 0
    %504 = vmatprep.subr.bf16.mxu0 0
    %505 = vmatpush1.bf16.msra.mxu0 0
    %506 = vmatprep.subr.bf16.mxu0 0
    %507 = vmatpush1.bf16.msra.mxu0 0
    %508 = vmatprep.subr.bf16.mxu0 0
    %509 = vmatpush1.bf16.msra.mxu0 0
    %510 = vmatprep.mubr.bf16.mxu0 0
    %511 = vmatmul.mubr.bf16.gmra.mrb[0].mxu0 %v476
    %v512 = vpop.f32.mrb[0].mxu0
    %v513 = vadd.f32 %v461, %v512
    %v514 = vpop.f32.mrb[0].mxu0
    %v515 = vpop.f32.mrb[0].mxu0
    %v516 = vadd.f32 %v461, %v515
    %v517 = vpop.f32.mrb[0].mxu0
    %518 = vdwg.mxu0
    %v519 = vpack.c.bf16 %v516, %v513
    %v521 = vlaneseq
    %v522 = vshrl.u32 %v521, 7
    %v523 = vsub.s32 0, %v522
    %v524 = vrot.slane %v445, %v523
    %v530 = vunpack.c.l.b16 %v441
    %v531 = vunpack.c.l.b16 %v442
    %v532 = vunpack.c.l.b16 %v443
    %v533 = vunpack.c.l.b16 %v444
    %v534 = vpack.c.b16 %v531, %v530
    %v535 = vpack.c.b16 %v533, %v532
    %538 = vmatprep.subr.bf16.mxu0 0
    %539 = vmatpush1.bf16.msra.mxu0 %v534
    %540 = vmatprep.subr.bf16.mxu0 0
    %541 = vmatpush1.bf16.msra.mxu0 %v535
    %542 = vmatprep.subr.bf16.mxu0 0
    %543 = vmatpush1.bf16.msra.mxu0 0
    %544 = vmatprep.subr.bf16.mxu0 0
    %545 = vmatpush1.bf16.msra.mxu0 0
    %546 = vmatprep.subr.bf16.mxu0 0
    %547 = vmatpush1.bf16.msra.mxu0 0
    %548 = vmatprep.subr.bf16.mxu0 0
    %549 = vmatpush1.bf16.msra.mxu0 0
    %550 = vmatprep.subr.bf16.mxu0 0
    %551 = vmatpush1.bf16.msra.mxu0 0
    %552 = vmatprep.subr.bf16.mxu0 0
    %553 = vmatpush1.bf16.msra.mxu0 0
    %554 = vmatprep.subr.bf16.mxu0 0
    %555 = vmatpush1.bf16.msra.mxu0 0
    %556 = vmatprep.subr.bf16.mxu0 0
    %557 = vmatpush1.bf16.msra.mxu0 0
    %558 = vmatprep.subr.bf16.mxu0 0
    %559 = vmatpush1.bf16.msra.mxu0 0
    %560 = vmatprep.subr.bf16.mxu0 0
    %561 = vmatpush1.bf16.msra.mxu0 0
    %562 = vmatprep.subr.bf16.mxu0 0
    %563 = vmatpush1.bf16.msra.mxu0 0
    %564 = vmatprep.subr.bf16.mxu0 0
    %565 = vmatpush1.bf16.msra.mxu0 0
    %566 = vmatprep.subr.bf16.mxu0 0
    %567 = vmatpush1.bf16.msra.mxu0 0
    %568 = vmatprep.subr.bf16.mxu0 0
    %569 = vmatpush1.bf16.msra.mxu0 0
    %570 = vmatprep.mubr.bf16.mxu0 0
    %571 = vmatmul.mubr.bf16.gmra.mrb[0].mxu0 %v476
    %v572 = vpop.f32.mrb[0].mxu0
    %v573 = vadd.f32 %v524, %v572
    %v574 = vpop.f32.mrb[0].mxu0
    %v575 = vpop.f32.mrb[0].mxu0
    %v576 = vadd.f32 %v524, %v575
    %v577 = vpop.f32.mrb[0].mxu0
    %578 = vdwg.mxu0
    %v579 = vpack.c.bf16 %v576, %v573
    %v580 = vpack.c.bf16 %v386, %v385
    %v582 = vlaneseq
    %v583 = vshrl.u32 %v582, 7
    %v584 = vsub.s32 0, %v583
    %v585 = vrot.slane %v450, %v584
    %v591 = vunpack.c.l.b16 %v446
    %v592 = vunpack.c.l.b16 %v447
    %v593 = vunpack.c.l.b16 %v448
    %v594 = vunpack.c.l.b16 %v449
    %v595 = vpack.c.b16 %v592, %v591
    %v596 = vpack.c.b16 %v594, %v593
    %v600 = vsel %vm390, %v580, 0
    %602 = vmatprep.subr.bf16.mxu0 0
    %603 = vmatpush1.bf16.msra.mxu0 %v595
    %604 = vmatprep.subr.bf16.mxu0 0
    %605 = vmatpush1.bf16.msra.mxu0 %v596
    %606 = vmatprep.subr.bf16.mxu0 0
    %607 = vmatpush1.bf16.msra.mxu0 0
    %608 = vmatprep.subr.bf16.mxu0 0
    %609 = vmatpush1.bf16.msra.mxu0 0
    %610 = vmatprep.subr.bf16.mxu0 0
    %611 = vmatpush1.bf16.msra.mxu0 0
    %612 = vmatprep.subr.bf16.mxu0 0
    %613 = vmatpush1.bf16.msra.mxu0 0
    %614 = vmatprep.subr.bf16.mxu0 0
    %615 = vmatpush1.bf16.msra.mxu0 0
    %616 = vmatprep.subr.bf16.mxu0 0
    %617 = vmatpush1.bf16.msra.mxu0 0
    %618 = vmatprep.subr.bf16.mxu0 0
    %619 = vmatpush1.bf16.msra.mxu0 0
    %620 = vmatprep.subr.bf16.mxu0 0
    %621 = vmatpush1.bf16.msra.mxu0 0
    %622 = vmatprep.subr.bf16.mxu0 0
    %623 = vmatpush1.bf16.msra.mxu0 0
    %624 = vmatprep.subr.bf16.mxu0 0
    %625 = vmatpush1.bf16.msra.mxu0 0
    %626 = vmatprep.subr.bf16.mxu0 0
    %627 = vmatpush1.bf16.msra.mxu0 0
    %628 = vmatprep.subr.bf16.mxu0 0
    %629 = vmatpush1.bf16.msra.mxu0 0
    %630 = vmatprep.subr.bf16.mxu0 0
    %631 = vmatpush1.bf16.msra.mxu0 0
    %632 = vmatprep.subr.bf16.mxu0 0
    %633 = vmatpush1.bf16.msra.mxu0 0
    %634 = vmatprep.mubr.bf16.mxu0 0
    %635 = vmatmul.mubr.bf16.gmra.mrb[0].mxu0 %v600
    %v636 = vpop.f32.mrb[0].mxu0
    %v637 = vadd.f32 %v585, %v636
    %v638 = vpop.f32.mrb[0].mxu0
    %v639 = vpop.f32.mrb[0].mxu0
    %v640 = vadd.f32 %v585, %v639
    %v641 = vpop.f32.mrb[0].mxu0
    %642 = vdwg.mxu0
    %v643 = vpack.c.bf16 %v640, %v637
    %v645 = vunpack.c.l.b16 %v519
    %v646 = vunpack.c.h.b16 %v519
    %v647 = vpack.c.b16 %v645, %v645
    %v648 = vpack.c.b16 %v646, %v646
    %v650 = vunpack.c.l.b16 %v579
    %v651 = vunpack.c.h.b16 %v579
    %v652 = vpack.c.b16 %v650, %v650
    %v653 = vpack.c.b16 %v651, %v651
    %v655 = vunpack.c.l.b16 %v643
    %v656 = vunpack.c.h.b16 %v643
    %v657 = vpack.c.b16 %v655, %v655
    %v658 = vpack.c.b16 %v656, %v656
    %659 = vrot.lane.b32.xlu0 %v647, 120
    %v660 = vpop.permute.xlu0 %659
    %661 = vrot.lane.b32.xlu0 %v648, 120
    %v662 = vpop.permute.xlu0 %661
    %663 = vrot.lane.b32.xlu0 %v647, 112
    %v664 = vpop.permute.xlu0 %663
    %665 = vrot.lane.b32.xlu0 %v648, 112
    %v666 = vpop.permute.xlu0 %665
    %667 = vrot.lane.b32.xlu0 %v647, 104
    %v668 = vpop.permute.xlu0 %667
    %669 = vrot.lane.b32.xlu0 %v648, 104
    %v670 = vpop.permute.xlu0 %669
    %671 = vrot.lane.b32.xlu0 %v652, 120
    %v672 = vpop.permute.xlu0 %671
    %673 = vrot.lane.b32.xlu0 %v653, 120
    %v674 = vpop.permute.xlu0 %673
    %675 = vrot.lane.b32.xlu0 %v652, 112
    %v676 = vpop.permute.xlu0 %675
    %677 = vrot.lane.b32.xlu0 %v653, 112
    %v678 = vpop.permute.xlu0 %677
    %679 = vrot.lane.b32.xlu0 %v652, 104
    %v680 = vpop.permute.xlu0 %679
    %681 = vrot.lane.b32.xlu0 %v653, 104
    %v682 = vpop.permute.xlu0 %681
    %683 = vrot.lane.b32.xlu0 %v657, 120
    %v684 = vpop.permute.xlu0 %683
    %685 = vrot.lane.b32.xlu0 %v658, 120
    %v686 = vpop.permute.xlu0 %685
    %687 = vrot.lane.b32.xlu0 %v657, 112
    %v688 = vpop.permute.xlu0 %687
    %689 = vrot.lane.b32.xlu0 %v658, 112
    %v690 = vpop.permute.xlu0 %689
    %691 = vrot.lane.b32.xlu0 %v657, 104
    %v692 = vpop.permute.xlu0 %691
    %693 = vrot.lane.b32.xlu0 %v658, 104
    %v694 = vpop.permute.xlu0 %693
    %vm695 = vcmask 64512
    %v697 = vsel %vm695, %v647, 0
    %v700 = vsel %vm695, %v652, 0
    %702 = vmatprep.subr.bf16.mxu0 0
    %703 = vmatpush1.bf16.xpose.msra.mxu0 %v700
    %704 = vmatprep.subr.bf16.mxu0 0
    %705 = vmatpush1.bf16.xpose.msra.mxu0 0
    %706 = vmatprep.subr.bf16.mxu0 0
    %707 = vmatpush1.bf16.xpose.msra.mxu0 0
    %708 = vmatprep.subr.bf16.mxu0 0
    %709 = vmatpush1.bf16.xpose.msra.mxu0 0
    %710 = vmatprep.subr.bf16.mxu0 0
    %711 = vmatpush1.bf16.xpose.msra.mxu0 0
    %712 = vmatprep.subr.bf16.mxu0 0
    %713 = vmatpush1.bf16.xpose.msra.mxu0 0
    %714 = vmatprep.subr.bf16.mxu0 0
    %715 = vmatpush1.bf16.xpose.msra.mxu0 0
    %716 = vmatprep.subr.bf16.mxu0 0
    %717 = vmatpush1.bf16.xpose.msra.mxu0 0
    %718 = vmatprep.subr.bf16.mxu0 0
    %719 = vmatpush1.bf16.xpose.msra.mxu0 0
    %720 = vmatprep.subr.bf16.mxu0 0
    %721 = vmatpush1.bf16.xpose.msra.mxu0 0
    %722 = vmatprep.subr.bf16.mxu0 0
    %723 = vmatpush1.bf16.xpose.msra.mxu0 0
    %724 = vmatprep.subr.bf16.mxu0 0
    %725 = vmatpush1.bf16.xpose.msra.mxu0 0
    %726 = vmatprep.subr.bf16.mxu0 0
    %727 = vmatpush1.bf16.xpose.msra.mxu0 0
    %728 = vmatprep.subr.bf16.mxu0 0
    %729 = vmatpush1.bf16.xpose.msra.mxu0 0
    %730 = vmatprep.subr.bf16.mxu0 0
    %731 = vmatpush1.bf16.xpose.msra.mxu0 0
    %732 = vmatprep.subr.bf16.mxu0 0
    %733 = vmatpush1.bf16.xpose.msra.mxu0 0
    %734 = vmatprep.mubr.bf16.mxu0 0
    %735 = vmatmul.mubr.bf16.gmra.mrb[0].mxu0 %v697
    %v736 = vpop.f32.mrb[0].mxu0
    %v737 = vadd.f32 0.0, %v736
    %v738 = vpop.f32.mrb[0].mxu0
    %v739 = vpop.f32.mrb[0].mxu0
    %v740 = vpop.f32.mrb[0].mxu0
    %741 = vdwg.mxu0
    %v743 = vsel %vm695, %v648, 0
    %v746 = vsel %vm695, %v653, 0
    %748 = vmatprep.subr.bf16.mxu0 0
    %749 = vmatpush1.bf16.xpose.msra.mxu0 %v746
    %750 = vmatprep.subr.bf16.mxu0 0
    %751 = vmatpush1.bf16.xpose.msra.mxu0 0
    %752 = vmatprep.subr.bf16.mxu0 0
    %753 = vmatpush1.bf16.xpose.msra.mxu0 0
    %754 = vmatprep.subr.bf16.mxu0 0
    %755 = vmatpush1.bf16.xpose.msra.mxu0 0
    %756 = vmatprep.subr.bf16.mxu0 0
    %757 = vmatpush1.bf16.xpose.msra.mxu0 0
    %758 = vmatprep.subr.bf16.mxu0 0
    %759 = vmatpush1.bf16.xpose.msra.mxu0 0
    %760 = vmatprep.subr.bf16.mxu0 0
    %761 = vmatpush1.bf16.xpose.msra.mxu0 0
    %762 = vmatprep.subr.bf16.mxu0 0
    %763 = vmatpush1.bf16.xpose.msra.mxu0 0
    %764 = vmatprep.subr.bf16.mxu0 0
    %765 = vmatpush1.bf16.xpose.msra.mxu0 0
    %766 = vmatprep.subr.bf16.mxu0 0
    %767 = vmatpush1.bf16.xpose.msra.mxu0 0
    %768 = vmatprep.subr.bf16.mxu0 0
    %769 = vmatpush1.bf16.xpose.msra.mxu0 0
    %770 = vmatprep.subr.bf16.mxu0 0
    %771 = vmatpush1.bf16.xpose.msra.mxu0 0
    %772 = vmatprep.subr.bf16.mxu0 0
    %773 = vmatpush1.bf16.xpose.msra.mxu0 0
    %774 = vmatprep.subr.bf16.mxu0 0
    %775 = vmatpush1.bf16.xpose.msra.mxu0 0
    %776 = vmatprep.subr.bf16.mxu0 0
    %777 = vmatpush1.bf16.xpose.msra.mxu0 0
    %778 = vmatprep.subr.bf16.mxu0 0
    %779 = vmatpush1.bf16.xpose.msra.mxu0 0
    %780 = vmatprep.mubr.bf16.mxu0 0
    %781 = vmatmul.mubr.bf16.gmra.mrb[0].mxu0 %v743
    %v782 = vpop.f32.mrb[0].mxu0
    %v783 = vadd.f32 0.0, %v782
    %v784 = vpop.f32.mrb[0].mxu0
    %v785 = vpop.f32.mrb[0].mxu0
    %v786 = vpop.f32.mrb[0].mxu0
    %787 = vdwg.mxu0
    %v789 = vsel %vm695, %v660, 0
    %v792 = vsel %vm695, %v672, 0
    %794 = vmatprep.subr.bf16.mxu0 0
    %795 = vmatpush1.bf16.xpose.msra.mxu0 %v792
    %796 = vmatprep.subr.bf16.mxu0 0
    %797 = vmatpush1.bf16.xpose.msra.mxu0 0
    %798 = vmatprep.subr.bf16.mxu0 0
    %799 = vmatpush1.bf16.xpose.msra.mxu0 0
    %800 = vmatprep.subr.bf16.mxu0 0
    %801 = vmatpush1.bf16.xpose.msra.mxu0 0
    %802 = vmatprep.subr.bf16.mxu0 0
    %803 = vmatpush1.bf16.xpose.msra.mxu0 0
    %804 = vmatprep.subr.bf16.mxu0 0
    %805 = vmatpush1.bf16.xpose.msra.mxu0 0
    %806 = vmatprep.subr.bf16.mxu0 0
    %807 = vmatpush1.bf16.xpose.msra.mxu0 0
    %808 = vmatprep.subr.bf16.mxu0 0
    %809 = vmatpush1.bf16.xpose.msra.mxu0 0
    %810 = vmatprep.subr.bf16.mxu0 0
    %811 = vmatpush1.bf16.xpose.msra.mxu0 0
    %812 = vmatprep.subr.bf16.mxu0 0
    %813 = vmatpush1.bf16.xpose.msra.mxu0 0
    %814 = vmatprep.subr.bf16.mxu0 0
    %815 = vmatpush1.bf16.xpose.msra.mxu0 0
    %816 = vmatprep.subr.bf16.mxu0 0
    %817 = vmatpush1.bf16.xpose.msra.mxu0 0
    %818 = vmatprep.subr.bf16.mxu0 0
    %819 = vmatpush1.bf16.xpose.msra.mxu0 0
    %820 = vmatprep.subr.bf16.mxu0 0
    %821 = vmatpush1.bf16.xpose.msra.mxu0 0
    %822 = vmatprep.subr.bf16.mxu0 0
    %823 = vmatpush1.bf16.xpose.msra.mxu0 0
    %824 = vmatprep.subr.bf16.mxu0 0
    %825 = vmatpush1.bf16.xpose.msra.mxu0 0
    %826 = vmatprep.mubr.bf16.mxu0 0
    %827 = vmatmul.mubr.bf16.gmra.mrb[0].mxu0 %v789
    %v828 = vpop.f32.mrb[0].mxu0
    %v829 = vadd.f32 0.0, %v828
    %v830 = vpop.f32.mrb[0].mxu0
    %v831 = vpop.f32.mrb[0].mxu0
    %v832 = vpop.f32.mrb[0].mxu0
    %833 = vdwg.mxu0
    %v835 = vsel %vm695, %v662, 0
    %v838 = vsel %vm695, %v674, 0
    %840 = vmatprep.subr.bf16.mxu0 0
    %841 = vmatpush1.bf16.xpose.msra.mxu0 %v838
    %842 = vmatprep.subr.bf16.mxu0 0
    %843 = vmatpush1.bf16.xpose.msra.mxu0 0
    %844 = vmatprep.subr.bf16.mxu0 0
    %845 = vmatpush1.bf16.xpose.msra.mxu0 0
    %846 = vmatprep.subr.bf16.mxu0 0
    %847 = vmatpush1.bf16.xpose.msra.mxu0 0
    %848 = vmatprep.subr.bf16.mxu0 0
    %849 = vmatpush1.bf16.xpose.msra.mxu0 0
    %850 = vmatprep.subr.bf16.mxu0 0
    %851 = vmatpush1.bf16.xpose.msra.mxu0 0
    %852 = vmatprep.subr.bf16.mxu0 0
    %853 = vmatpush1.bf16.xpose.msra.mxu0 0
    %854 = vmatprep.subr.bf16.mxu0 0
    %855 = vmatpush1.bf16.xpose.msra.mxu0 0
    %856 = vmatprep.subr.bf16.mxu0 0
    %857 = vmatpush1.bf16.xpose.msra.mxu0 0
    %858 = vmatprep.subr.bf16.mxu0 0
    %859 = vmatpush1.bf16.xpose.msra.mxu0 0
    %860 = vmatprep.subr.bf16.mxu0 0
    %861 = vmatpush1.bf16.xpose.msra.mxu0 0
    %862 = vmatprep.subr.bf16.mxu0 0
    %863 = vmatpush1.bf16.xpose.msra.mxu0 0
    %864 = vmatprep.subr.bf16.mxu0 0
    %865 = vmatpush1.bf16.xpose.msra.mxu0 0
    %866 = vmatprep.subr.bf16.mxu0 0
    %867 = vmatpush1.bf16.xpose.msra.mxu0 0
    %868 = vmatprep.subr.bf16.mxu0 0
    %869 = vmatpush1.bf16.xpose.msra.mxu0 0
    %870 = vmatprep.subr.bf16.mxu0 0
    %871 = vmatpush1.bf16.xpose.msra.mxu0 0
    %872 = vmatprep.mubr.bf16.mxu0 0
    %873 = vmatmul.mubr.bf16.gmra.mrb[0].mxu0 %v835
    %v874 = vpop.f32.mrb[0].mxu0
    %v875 = vadd.f32 0.0, %v874
    %v876 = vpop.f32.mrb[0].mxu0
    %v877 = vpop.f32.mrb[0].mxu0
    %v878 = vpop.f32.mrb[0].mxu0
    %879 = vdwg.mxu0
    %v881 = vsel %vm695, %v664, 0
    %v884 = vsel %vm695, %v676, 0
    %886 = vmatprep.subr.bf16.mxu0 0
    %887 = vmatpush1.bf16.xpose.msra.mxu0 %v884
    %888 = vmatprep.subr.bf16.mxu0 0
    %889 = vmatpush1.bf16.xpose.msra.mxu0 0
    %890 = vmatprep.subr.bf16.mxu0 0
    %891 = vmatpush1.bf16.xpose.msra.mxu0 0
    %892 = vmatprep.subr.bf16.mxu0 0
    %893 = vmatpush1.bf16.xpose.msra.mxu0 0
    %894 = vmatprep.subr.bf16.mxu0 0
    %895 = vmatpush1.bf16.xpose.msra.mxu0 0
    %896 = vmatprep.subr.bf16.mxu0 0
    %897 = vmatpush1.bf16.xpose.msra.mxu0 0
    %898 = vmatprep.subr.bf16.mxu0 0
    %899 = vmatpush1.bf16.xpose.msra.mxu0 0
    %900 = vmatprep.subr.bf16.mxu0 0
    %901 = vmatpush1.bf16.xpose.msra.mxu0 0
    %902 = vmatprep.subr.bf16.mxu0 0
    %903 = vmatpush1.bf16.xpose.msra.mxu0 0
    %904 = vmatprep.subr.bf16.mxu0 0
    %905 = vmatpush1.bf16.xpose.msra.mxu0 0
    %906 = vmatprep.subr.bf16.mxu0 0
    %907 = vmatpush1.bf16.xpose.msra.mxu0 0
    %908 = vmatprep.subr.bf16.mxu0 0
    %909 = vmatpush1.bf16.xpose.msra.mxu0 0
    %910 = vmatprep.subr.bf16.mxu0 0
    %911 = vmatpush1.bf16.xpose.msra.mxu0 0
    %912 = vmatprep.subr.bf16.mxu0 0
    %913 = vmatpush1.bf16.xpose.msra.mxu0 0
    %914 = vmatprep.subr.bf16.mxu0 0
    %915 = vmatpush1.bf16.xpose.msra.mxu0 0
    %916 = vmatprep.subr.bf16.mxu0 0
    %917 = vmatpush1.bf16.xpose.msra.mxu0 0
    %918 = vmatprep.mubr.bf16.mxu0 0
    %919 = vmatmul.mubr.bf16.gmra.mrb[0].mxu0 %v881
    %v920 = vpop.f32.mrb[0].mxu0
    %v921 = vadd.f32 0.0, %v920
    %v922 = vpop.f32.mrb[0].mxu0
    %v923 = vpop.f32.mrb[0].mxu0
    %v924 = vpop.f32.mrb[0].mxu0
    %925 = vdwg.mxu0
    %v927 = vsel %vm695, %v666, 0
    %v930 = vsel %vm695, %v678, 0
    %932 = vmatprep.subr.bf16.mxu0 0
    %933 = vmatpush1.bf16.xpose.msra.mxu0 %v930
    %934 = vmatprep.subr.bf16.mxu0 0
    %935 = vmatpush1.bf16.xpose.msra.mxu0 0
    %936 = vmatprep.subr.bf16.mxu0 0
    %937 = vmatpush1.bf16.xpose.msra.mxu0 0
    %938 = vmatprep.subr.bf16.mxu0 0
    %939 = vmatpush1.bf16.xpose.msra.mxu0 0
    %940 = vmatprep.subr.bf16.mxu0 0
    %941 = vmatpush1.bf16.xpose.msra.mxu0 0
    %942 = vmatprep.subr.bf16.mxu0 0
    %943 = vmatpush1.bf16.xpose.msra.mxu0 0
    %944 = vmatprep.subr.bf16.mxu0 0
    %945 = vmatpush1.bf16.xpose.msra.mxu0 0
    %946 = vmatprep.subr.bf16.mxu0 0
    %947 = vmatpush1.bf16.xpose.msra.mxu0 0
    %948 = vmatprep.subr.bf16.mxu0 0
    %949 = vmatpush1.bf16.xpose.msra.mxu0 0
    %950 = vmatprep.subr.bf16.mxu0 0
    %951 = vmatpush1.bf16.xpose.msra.mxu0 0
    %952 = vmatprep.subr.bf16.mxu0 0
    %953 = vmatpush1.bf16.xpose.msra.mxu0 0
    %954 = vmatprep.subr.bf16.mxu0 0
    %955 = vmatpush1.bf16.xpose.msra.mxu0 0
    %956 = vmatprep.subr.bf16.mxu0 0
    %957 = vmatpush1.bf16.xpose.msra.mxu0 0
    %958 = vmatprep.subr.bf16.mxu0 0
    %959 = vmatpush1.bf16.xpose.msra.mxu0 0
    %960 = vmatprep.subr.bf16.mxu0 0
    %961 = vmatpush1.bf16.xpose.msra.mxu0 0
    %962 = vmatprep.subr.bf16.mxu0 0
    %963 = vmatpush1.bf16.xpose.msra.mxu0 0
    %964 = vmatprep.mubr.bf16.mxu0 0
    %965 = vmatmul.mubr.bf16.gmra.mrb[0].mxu0 %v927
    %v966 = vpop.f32.mrb[0].mxu0
    %v967 = vadd.f32 0.0, %v966
    %v968 = vpop.f32.mrb[0].mxu0
    %v969 = vpop.f32.mrb[0].mxu0
    %v970 = vpop.f32.mrb[0].mxu0
    %971 = vdwg.mxu0
    %v973 = vsel %vm695, %v668, 0
    %v976 = vsel %vm695, %v680, 0
    %978 = vmatprep.subr.bf16.mxu0 0
    %979 = vmatpush1.bf16.xpose.msra.mxu0 %v976
    %980 = vmatprep.subr.bf16.mxu0 0
    %981 = vmatpush1.bf16.xpose.msra.mxu0 0
    %982 = vmatprep.subr.bf16.mxu0 0
    %983 = vmatpush1.bf16.xpose.msra.mxu0 0
    %984 = vmatprep.subr.bf16.mxu0 0
    %985 = vmatpush1.bf16.xpose.msra.mxu0 0
    %986 = vmatprep.subr.bf16.mxu0 0
    %987 = vmatpush1.bf16.xpose.msra.mxu0 0
    %988 = vmatprep.subr.bf16.mxu0 0
    %989 = vmatpush1.bf16.xpose.msra.mxu0 0
    %990 = vmatprep.subr.bf16.mxu0 0
    %991 = vmatpush1.bf16.xpose.msra.mxu0 0
    %992 = vmatprep.subr.bf16.mxu0 0
    %993 = vmatpush1.bf16.xpose.msra.mxu0 0
    %994 = vmatprep.subr.bf16.mxu0 0
    %995 = vmatpush1.bf16.xpose.msra.mxu0 0
    %996 = vmatprep.subr.bf16.mxu0 0
    %997 = vmatpush1.bf16.xpose.msra.mxu0 0
    %998 = vmatprep.subr.bf16.mxu0 0
    %999 = vmatpush1.bf16.xpose.msra.mxu0 0
    %1000 = vmatprep.subr.bf16.mxu0 0
    %1001 = vmatpush1.bf16.xpose.msra.mxu0 0
    %1002 = vmatprep.subr.bf16.mxu0 0
    %1003 = vmatpush1.bf16.xpose.msra.mxu0 0
    %1004 = vmatprep.subr.bf16.mxu0 0
    %1005 = vmatpush1.bf16.xpose.msra.mxu0 0
    %1006 = vmatprep.subr.bf16.mxu0 0
    %1007 = vmatpush1.bf16.xpose.msra.mxu0 0
    %1008 = vmatprep.subr.bf16.mxu0 0
    %1009 = vmatpush1.bf16.xpose.msra.mxu0 0
    %1010 = vmatprep.mubr.bf16.mxu0 0
    %1011 = vmatmul.mubr.bf16.gmra.mrb[0].mxu0 %v973
    %v1012 = vpop.f32.mrb[0].mxu0
    %v1013 = vadd.f32 0.0, %v1012
    %v1014 = vpop.f32.mrb[0].mxu0
    %v1015 = vpop.f32.mrb[0].mxu0
    %v1016 = vpop.f32.mrb[0].mxu0
    %1017 = vdwg.mxu0
    %v1019 = vsel %vm695, %v670, 0
    %v1022 = vsel %vm695, %v682, 0
    %1024 = vmatprep.subr.bf16.mxu0 0
    %1025 = vmatpush1.bf16.xpose.msra.mxu0 %v1022
    %1026 = vmatprep.subr.bf16.mxu0 0
    %1027 = vmatpush1.bf16.xpose.msra.mxu0 0
    %1028 = vmatprep.subr.bf16.mxu0 0
    %1029 = vmatpush1.bf16.xpose.msra.mxu0 0
    %1030 = vmatprep.subr.bf16.mxu0 0
    %1031 = vmatpush1.bf16.xpose.msra.mxu0 0
    %1032 = vmatprep.subr.bf16.mxu0 0
    %1033 = vmatpush1.bf16.xpose.msra.mxu0 0
    %1034 = vmatprep.subr.bf16.mxu0 0
    %1035 = vmatpush1.bf16.xpose.msra.mxu0 0
    %1036 = vmatprep.subr.bf16.mxu0 0
    %1037 = vmatpush1.bf16.xpose.msra.mxu0 0
    %1038 = vmatprep.subr.bf16.mxu0 0
    %1039 = vmatpush1.bf16.xpose.msra.mxu0 0
    %1040 = vmatprep.subr.bf16.mxu0 0
    %1041 = vmatpush1.bf16.xpose.msra.mxu0 0
    %1042 = vmatprep.subr.bf16.mxu0 0
    %1043 = vmatpush1.bf16.xpose.msra.mxu0 0
    %1044 = vmatprep.subr.bf16.mxu0 0
    %1045 = vmatpush1.bf16.xpose.msra.mxu0 0
    %1046 = vmatprep.subr.bf16.mxu0 0
    %1047 = vmatpush1.bf16.xpose.msra.mxu0 0
    %1048 = vmatprep.subr.bf16.mxu0 0
    %1049 = vmatpush1.bf16.xpose.msra.mxu0 0
    %1050 = vmatprep.subr.bf16.mxu0 0
    %1051 = vmatpush1.bf16.xpose.msra.mxu0 0
    %1052 = vmatprep.subr.bf16.mxu0 0
    %1053 = vmatpush1.bf16.xpose.msra.mxu0 0
    %1054 = vmatprep.subr.bf16.mxu0 0
    %1055 = vmatpush1.bf16.xpose.msra.mxu0 0
    %1056 = vmatprep.mubr.bf16.mxu0 0
    %1057 = vmatmul.mubr.bf16.gmra.mrb[0].mxu0 %v1019
    %v1058 = vpop.f32.mrb[0].mxu0
    %v1059 = vadd.f32 0.0, %v1058
    %v1060 = vpop.f32.mrb[0].mxu0
    %v1061 = vpop.f32.mrb[0].mxu0
    %v1062 = vpop.f32.mrb[0].mxu0
    %1063 = vdwg.mxu0
    %v1064 = vsel %vm695, %v737, -inf
    %1065 = vmax.xlane.f32.xlu0 %v1064
    %v1066 = vpop.xlane.xlu0 %1065
    %v1067 = vsel %vm695, %v783, -inf
    %1068 = vmax.xlane.f32.xlu0 %v1067
    %v1069 = vpop.xlane.xlu0 %1068
    %v1070 = vsel %vm695, %v829, -inf
    %1071 = vmax.xlane.f32.xlu0 %v1070
    %v1072 = vpop.xlane.xlu0 %1071
    %v1073 = vsel %vm695, %v875, -inf
    %1074 = vmax.xlane.f32.xlu0 %v1073
    %v1075 = vpop.xlane.xlu0 %1074
    %v1076 = vsel %vm695, %v921, -inf
    %1077 = vmax.xlane.f32.xlu0 %v1076
    %v1078 = vpop.xlane.xlu0 %1077
    %v1079 = vsel %vm695, %v967, -inf
    %1080 = vmax.xlane.f32.xlu0 %v1079
    %v1081 = vpop.xlane.xlu0 %1080
    %v1082 = vsel %vm695, %v1013, -inf
    %1083 = vmax.xlane.f32.xlu0 %v1082
    %v1084 = vpop.xlane.xlu0 %1083
    %v1085 = vsel %vm695, %v1059, -inf
    %1086 = vmax.xlane.f32.xlu0 %v1085
    %v1087 = vpop.xlane.xlu0 %1086
    %v1088 = vsub.f32 %v737, %v1066
    %v1089 = vsub.f32 %v783, %v1069
    %v1090 = vsub.f32 %v829, %v1072
    %v1091 = vsub.f32 %v875, %v1075
    %v1092 = vsub.f32 %v921, %v1078
    %v1093 = vsub.f32 %v967, %v1081
    %v1094 = vsub.f32 %v1013, %v1084
    %v1095 = vsub.f32 %v1059, %v1087
    %v1096 = vmul.f32 %v1088, 1.442695
    %v1097 = vpow.pop %v1096
    %v1098 = vmul.f32 %v1089, 1.442695
    %v1099 = vpow.pop %v1098
    %v1100 = vmul.f32 %v1090, 1.442695
    %v1101 = vpow.pop %v1100
    %v1102 = vmul.f32 %v1091, 1.442695
    %v1103 = vpow.pop %v1102
    %v1104 = vmul.f32 %v1092, 1.442695
    %v1105 = vpow.pop %v1104
    %v1106 = vmul.f32 %v1093, 1.442695
    %v1107 = vpow.pop %v1106
    %v1108 = vmul.f32 %v1094, 1.442695
    %v1109 = vpow.pop %v1108
    %v1110 = vmul.f32 %v1095, 1.442695
    %v1111 = vpow.pop %v1110
    %v1112 = vsel %vm695, %v1097, 0.0
    %1113 = vadd.xlane.f32.xlu0 %v1112
    %v1114 = vpop.xlane.xlu0 %1113
    %v1115 = vsel %vm695, %v1099, 0.0
    %1116 = vadd.xlane.f32.xlu0 %v1115
    %v1117 = vpop.xlane.xlu0 %1116
    %v1118 = vsel %vm695, %v1101, 0.0
    %1119 = vadd.xlane.f32.xlu0 %v1118
    %v1120 = vpop.xlane.xlu0 %1119
    %v1121 = vsel %vm695, %v1103, 0.0
    %1122 = vadd.xlane.f32.xlu0 %v1121
    %v1123 = vpop.xlane.xlu0 %1122
    %v1124 = vsel %vm695, %v1105, 0.0
    %1125 = vadd.xlane.f32.xlu0 %v1124
    %v1126 = vpop.xlane.xlu0 %1125
    %v1127 = vsel %vm695, %v1107, 0.0
    %1128 = vadd.xlane.f32.xlu0 %v1127
    %v1129 = vpop.xlane.xlu0 %1128
    %v1130 = vsel %vm695, %v1109, 0.0
    %1131 = vadd.xlane.f32.xlu0 %v1130
    %v1132 = vpop.xlane.xlu0 %1131
    %v1133 = vsel %vm695, %v1111, 0.0
    %1134 = vadd.xlane.f32.xlu0 %v1133
    %v1135 = vpop.xlane.xlu0 %1134
    %v1136 = vrcp.pop %v1114
    %v1137 = vrcp.pop %v1117
    %v1138 = vrcp.pop %v1120
    %v1139 = vrcp.pop %v1123
    %v1140 = vrcp.pop %v1126
    %v1141 = vrcp.pop %v1129
    %v1142 = vrcp.pop %v1132
    %v1143 = vrcp.pop %v1135
    %v1144 = vmul.f32 %v1097, %v1136
    %v1145 = vmul.f32 %v1099, %v1137
    %v1146 = vmul.f32 %v1101, %v1138
    %v1147 = vmul.f32 %v1103, %v1139
    %v1148 = vmul.f32 %v1105, %v1140
    %v1149 = vmul.f32 %v1107, %v1141
    %v1150 = vmul.f32 %v1109, %v1142
    %v1151 = vmul.f32 %v1111, %v1143
    %v1152 = vpack.c.bf16 %v1144, %v1144
    %v1153 = vpack.c.bf16 %v1145, %v1145
    %v1154 = vpack.c.bf16 %v1146, %v1146
    %v1155 = vpack.c.bf16 %v1147, %v1147
    %v1156 = vpack.c.bf16 %v1148, %v1148
    %v1157 = vpack.c.bf16 %v1149, %v1149
    %v1158 = vpack.c.bf16 %v1150, %v1150
    %v1159 = vpack.c.bf16 %v1151, %v1151
    %v1161 = vsel %vm695, %v1152, 0
    %vm1163 = vcmask 1043456
    %v1165 = vsel %vm1163, %v657, 0
    %1167 = vmatprep.subr.bf16.mxu0 0
    %1168 = vmatpush1.bf16.msra.mxu0 %v1165
    %1169 = vmatprep.subr.bf16.mxu0 0
    %1170 = vmatpush1.bf16.msra.mxu0 0
    %1171 = vmatprep.subr.bf16.mxu0 0
    %1172 = vmatpush1.bf16.msra.mxu0 0
    %1173 = vmatprep.subr.bf16.mxu0 0
    %1174 = vmatpush1.bf16.msra.mxu0 0
    %1175 = vmatprep.subr.bf16.mxu0 0
    %1176 = vmatpush1.bf16.msra.mxu0 0
    %1177 = vmatprep.subr.bf16.mxu0 0
    %1178 = vmatpush1.bf16.msra.mxu0 0
    %1179 = vmatprep.subr.bf16.mxu0 0
    %1180 = vmatpush1.bf16.msra.mxu0 0
    %1181 = vmatprep.subr.bf16.mxu0 0
    %1182 = vmatpush1.bf16.msra.mxu0 0
    %1183 = vmatprep.subr.bf16.mxu0 0
    %1184 = vmatpush1.bf16.msra.mxu0 0
    %1185 = vmatprep.subr.bf16.mxu0 0
    %1186 = vmatpush1.bf16.msra.mxu0 0
    %1187 = vmatprep.subr.bf16.mxu0 0
    %1188 = vmatpush1.bf16.msra.mxu0 0
    %1189 = vmatprep.subr.bf16.mxu0 0
    %1190 = vmatpush1.bf16.msra.mxu0 0
    %1191 = vmatprep.subr.bf16.mxu0 0
    %1192 = vmatpush1.bf16.msra.mxu0 0
    %1193 = vmatprep.subr.bf16.mxu0 0
    %1194 = vmatpush1.bf16.msra.mxu0 0
    %1195 = vmatprep.subr.bf16.mxu0 0
    %1196 = vmatpush1.bf16.msra.mxu0 0
    %1197 = vmatprep.subr.bf16.mxu0 0
    %1198 = vmatpush1.bf16.msra.mxu0 0
    %1199 = vmatprep.mubr.bf16.mxu0 0
    %1200 = vmatmul.mubr.bf16.gmra.mrb[0].mxu0 %v1161
    %v1201 = vpop.f32.mrb[0].mxu0
    %v1202 = vadd.f32 0.0, %v1201
    %v1203 = vpop.f32.mrb[0].mxu0
    %v1204 = vpop.f32.mrb[0].mxu0
    %v1205 = vpop.f32.mrb[0].mxu0
    %1206 = vdwg.mxu0
    %v1208 = vsel %vm695, %v1153, 0
    %v1211 = vsel %vm1163, %v658, 0
    %1213 = vmatprep.subr.bf16.mxu0 0
    %1214 = vmatpush1.bf16.msra.mxu0 %v1211
    %1215 = vmatprep.subr.bf16.mxu0 0
    %1216 = vmatpush1.bf16.msra.mxu0 0
    %1217 = vmatprep.subr.bf16.mxu0 0
    %1218 = vmatpush1.bf16.msra.mxu0 0
    %1219 = vmatprep.subr.bf16.mxu0 0
    %1220 = vmatpush1.bf16.msra.mxu0 0
    %1221 = vmatprep.subr.bf16.mxu0 0
    %1222 = vmatpush1.bf16.msra.mxu0 0
    %1223 = vmatprep.subr.bf16.mxu0 0
    %1224 = vmatpush1.bf16.msra.mxu0 0
    %1225 = vmatprep.subr.bf16.mxu0 0
    %1226 = vmatpush1.bf16.msra.mxu0 0
    %1227 = vmatprep.subr.bf16.mxu0 0
    %1228 = vmatpush1.bf16.msra.mxu0 0
    %1229 = vmatprep.subr.bf16.mxu0 0
    %1230 = vmatpush1.bf16.msra.mxu0 0
    %1231 = vmatprep.subr.bf16.mxu0 0
    %1232 = vmatpush1.bf16.msra.mxu0 0
    %1233 = vmatprep.subr.bf16.mxu0 0
    %1234 = vmatpush1.bf16.msra.mxu0 0
    %1235 = vmatprep.subr.bf16.mxu0 0
    %1236 = vmatpush1.bf16.msra.mxu0 0
    %1237 = vmatprep.subr.bf16.mxu0 0
    %1238 = vmatpush1.bf16.msra.mxu0 0
    %1239 = vmatprep.subr.bf16.mxu0 0
    %1240 = vmatpush1.bf16.msra.mxu0 0
    %1241 = vmatprep.subr.bf16.mxu0 0
    %1242 = vmatpush1.bf16.msra.mxu0 0
    %1243 = vmatprep.subr.bf16.mxu0 0
    %1244 = vmatpush1.bf16.msra.mxu0 0
    %1245 = vmatprep.mubr.bf16.mxu0 0
    %1246 = vmatmul.mubr.bf16.gmra.mrb[0].mxu0 %v1208
    %v1247 = vpop.f32.mrb[0].mxu0
    %v1248 = vadd.f32 0.0, %v1247
    %v1249 = vpop.f32.mrb[0].mxu0
    %v1250 = vpop.f32.mrb[0].mxu0
    %v1251 = vpop.f32.mrb[0].mxu0
    %1252 = vdwg.mxu0
    %v1254 = vsel %vm695, %v1154, 0
    %v1257 = vsel %vm1163, %v684, 0
    %1259 = vmatprep.subr.bf16.mxu0 0
    %1260 = vmatpush1.bf16.msra.mxu0 %v1257
    %1261 = vmatprep.subr.bf16.mxu0 0
    %1262 = vmatpush1.bf16.msra.mxu0 0
    %1263 = vmatprep.subr.bf16.mxu0 0
    %1264 = vmatpush1.bf16.msra.mxu0 0
    %1265 = vmatprep.subr.bf16.mxu0 0
    %1266 = vmatpush1.bf16.msra.mxu0 0
    %1267 = vmatprep.subr.bf16.mxu0 0
    %1268 = vmatpush1.bf16.msra.mxu0 0
    %1269 = vmatprep.subr.bf16.mxu0 0
    %1270 = vmatpush1.bf16.msra.mxu0 0
    %1271 = vmatprep.subr.bf16.mxu0 0
    %1272 = vmatpush1.bf16.msra.mxu0 0
    %1273 = vmatprep.subr.bf16.mxu0 0
    %1274 = vmatpush1.bf16.msra.mxu0 0
    %1275 = vmatprep.subr.bf16.mxu0 0
    %1276 = vmatpush1.bf16.msra.mxu0 0
    %1277 = vmatprep.subr.bf16.mxu0 0
    %1278 = vmatpush1.bf16.msra.mxu0 0
    %1279 = vmatprep.subr.bf16.mxu0 0
    %1280 = vmatpush1.bf16.msra.mxu0 0
    %1281 = vmatprep.subr.bf16.mxu0 0
    %1282 = vmatpush1.bf16.msra.mxu0 0
    %1283 = vmatprep.subr.bf16.mxu0 0
    %1284 = vmatpush1.bf16.msra.mxu0 0
    %1285 = vmatprep.subr.bf16.mxu0 0
    %1286 = vmatpush1.bf16.msra.mxu0 0
    %1287 = vmatprep.subr.bf16.mxu0 0
    %1288 = vmatpush1.bf16.msra.mxu0 0
    %1289 = vmatprep.subr.bf16.mxu0 0
    %1290 = vmatpush1.bf16.msra.mxu0 0
    %1291 = vmatprep.mubr.bf16.mxu0 0
    %1292 = vmatmul.mubr.bf16.gmra.mrb[0].mxu0 %v1254
    %v1293 = vpop.f32.mrb[0].mxu0
    %v1294 = vadd.f32 0.0, %v1293
    %v1295 = vpop.f32.mrb[0].mxu0
    %v1296 = vpop.f32.mrb[0].mxu0
    %v1297 = vpop.f32.mrb[0].mxu0
    %1298 = vdwg.mxu0
    %v1300 = vsel %vm695, %v1155, 0
    %v1303 = vsel %vm1163, %v686, 0
    %1305 = vmatprep.subr.bf16.mxu0 0
    %1306 = vmatpush1.bf16.msra.mxu0 %v1303
    %1307 = vmatprep.subr.bf16.mxu0 0
    %1308 = vmatpush1.bf16.msra.mxu0 0
    %1309 = vmatprep.subr.bf16.mxu0 0
    %1310 = vmatpush1.bf16.msra.mxu0 0
    %1311 = vmatprep.subr.bf16.mxu0 0
    %1312 = vmatpush1.bf16.msra.mxu0 0
    %1313 = vmatprep.subr.bf16.mxu0 0
    %1314 = vmatpush1.bf16.msra.mxu0 0
    %1315 = vmatprep.subr.bf16.mxu0 0
    %1316 = vmatpush1.bf16.msra.mxu0 0
    %1317 = vmatprep.subr.bf16.mxu0 0
    %1318 = vmatpush1.bf16.msra.mxu0 0
    %1319 = vmatprep.subr.bf16.mxu0 0
    %1320 = vmatpush1.bf16.msra.mxu0 0
    %1321 = vmatprep.subr.bf16.mxu0 0
    %1322 = vmatpush1.bf16.msra.mxu0 0
    %1323 = vmatprep.subr.bf16.mxu0 0
    %1324 = vmatpush1.bf16.msra.mxu0 0
    %1325 = vmatprep.subr.bf16.mxu0 0
    %1326 = vmatpush1.bf16.msra.mxu0 0
    %1327 = vmatprep.subr.bf16.mxu0 0
    %1328 = vmatpush1.bf16.msra.mxu0 0
    %1329 = vmatprep.subr.bf16.mxu0 0
    %1330 = vmatpush1.bf16.msra.mxu0 0
    %1331 = vmatprep.subr.bf16.mxu0 0
    %1332 = vmatpush1.bf16.msra.mxu0 0
    %1333 = vmatprep.subr.bf16.mxu0 0
    %1334 = vmatpush1.bf16.msra.mxu0 0
    %1335 = vmatprep.subr.bf16.mxu0 0
    %1336 = vmatpush1.bf16.msra.mxu0 0
    %1337 = vmatprep.mubr.bf16.mxu0 0
    %1338 = vmatmul.mubr.bf16.gmra.mrb[0].mxu0 %v1300
    %v1339 = vpop.f32.mrb[0].mxu0
    %v1340 = vadd.f32 0.0, %v1339
    %v1341 = vpop.f32.mrb[0].mxu0
    %v1342 = vpop.f32.mrb[0].mxu0
    %v1343 = vpop.f32.mrb[0].mxu0
    %1344 = vdwg.mxu0
    %v1346 = vsel %vm695, %v1156, 0
    %v1349 = vsel %vm1163, %v688, 0
    %1351 = vmatprep.subr.bf16.mxu0 0
    %1352 = vmatpush1.bf16.msra.mxu0 %v1349
    %1353 = vmatprep.subr.bf16.mxu0 0
    %1354 = vmatpush1.bf16.msra.mxu0 0
    %1355 = vmatprep.subr.bf16.mxu0 0
    %1356 = vmatpush1.bf16.msra.mxu0 0
    %1357 = vmatprep.subr.bf16.mxu0 0
    %1358 = vmatpush1.bf16.msra.mxu0 0
    %1359 = vmatprep.subr.bf16.mxu0 0
    %1360 = vmatpush1.bf16.msra.mxu0 0
    %1361 = vmatprep.subr.bf16.mxu0 0
    %1362 = vmatpush1.bf16.msra.mxu0 0
    %1363 = vmatprep.subr.bf16.mxu0 0
    %1364 = vmatpush1.bf16.msra.mxu0 0
    %1365 = vmatprep.subr.bf16.mxu0 0
    %1366 = vmatpush1.bf16.msra.mxu0 0
    %1367 = vmatprep.subr.bf16.mxu0 0
    %1368 = vmatpush1.bf16.msra.mxu0 0
    %1369 = vmatprep.subr.bf16.mxu0 0
    %1370 = vmatpush1.bf16.msra.mxu0 0
    %1371 = vmatprep.subr.bf16.mxu0 0
    %1372 = vmatpush1.bf16.msra.mxu0 0
    %1373 = vmatprep.subr.bf16.mxu0 0
    %1374 = vmatpush1.bf16.msra.mxu0 0
    %1375 = vmatprep.subr.bf16.mxu0 0
    %1376 = vmatpush1.bf16.msra.mxu0 0
    %1377 = vmatprep.subr.bf16.mxu0 0
    %1378 = vmatpush1.bf16.msra.mxu0 0
    %1379 = vmatprep.subr.bf16.mxu0 0
    %1380 = vmatpush1.bf16.msra.mxu0 0
    %1381 = vmatprep.subr.bf16.mxu0 0
    %1382 = vmatpush1.bf16.msra.mxu0 0
    %1383 = vmatprep.mubr.bf16.mxu0 0
    %1384 = vmatmul.mubr.bf16.gmra.mrb[0].mxu0 %v1346
    %v1385 = vpop.f32.mrb[0].mxu0
    %v1386 = vadd.f32 0.0, %v1385
    %v1387 = vpop.f32.mrb[0].mxu0
    %v1388 = vpop.f32.mrb[0].mxu0
    %v1389 = vpop.f32.mrb[0].mxu0
    %1390 = vdwg.mxu0
    %v1392 = vsel %vm695, %v1157, 0
    %v1395 = vsel %vm1163, %v690, 0
    %1397 = vmatprep.subr.bf16.mxu0 0
    %1398 = vmatpush1.bf16.msra.mxu0 %v1395
    %1399 = vmatprep.subr.bf16.mxu0 0
    %1400 = vmatpush1.bf16.msra.mxu0 0
    %1401 = vmatprep.subr.bf16.mxu0 0
    %1402 = vmatpush1.bf16.msra.mxu0 0
    %1403 = vmatprep.subr.bf16.mxu0 0
    %1404 = vmatpush1.bf16.msra.mxu0 0
    %1405 = vmatprep.subr.bf16.mxu0 0
    %1406 = vmatpush1.bf16.msra.mxu0 0
    %1407 = vmatprep.subr.bf16.mxu0 0
    %1408 = vmatpush1.bf16.msra.mxu0 0
    %1409 = vmatprep.subr.bf16.mxu0 0
    %1410 = vmatpush1.bf16.msra.mxu0 0
    %1411 = vmatprep.subr.bf16.mxu0 0
    %1412 = vmatpush1.bf16.msra.mxu0 0
    %1413 = vmatprep.subr.bf16.mxu0 0
    %1414 = vmatpush1.bf16.msra.mxu0 0
    %1415 = vmatprep.subr.bf16.mxu0 0
    %1416 = vmatpush1.bf16.msra.mxu0 0
    %1417 = vmatprep.subr.bf16.mxu0 0
    %1418 = vmatpush1.bf16.msra.mxu0 0
    %1419 = vmatprep.subr.bf16.mxu0 0
    %1420 = vmatpush1.bf16.msra.mxu0 0
    %1421 = vmatprep.subr.bf16.mxu0 0
    %1422 = vmatpush1.bf16.msra.mxu0 0
    %1423 = vmatprep.subr.bf16.mxu0 0
    %1424 = vmatpush1.bf16.msra.mxu0 0
    %1425 = vmatprep.subr.bf16.mxu0 0
    %1426 = vmatpush1.bf16.msra.mxu0 0
    %1427 = vmatprep.subr.bf16.mxu0 0
    %1428 = vmatpush1.bf16.msra.mxu0 0
    %1429 = vmatprep.mubr.bf16.mxu0 0
    %1430 = vmatmul.mubr.bf16.gmra.mrb[0].mxu0 %v1392
    %v1431 = vpop.f32.mrb[0].mxu0
    %v1432 = vadd.f32 0.0, %v1431
    %v1433 = vpop.f32.mrb[0].mxu0
    %v1434 = vpop.f32.mrb[0].mxu0
    %v1435 = vpop.f32.mrb[0].mxu0
    %1436 = vdwg.mxu0
    %v1438 = vsel %vm695, %v1158, 0
    %v1441 = vsel %vm1163, %v692, 0
    %1443 = vmatprep.subr.bf16.mxu0 0
    %1444 = vmatpush1.bf16.msra.mxu0 %v1441
    %1445 = vmatprep.subr.bf16.mxu0 0
    %1446 = vmatpush1.bf16.msra.mxu0 0
    %1447 = vmatprep.subr.bf16.mxu0 0
    %1448 = vmatpush1.bf16.msra.mxu0 0
    %1449 = vmatprep.subr.bf16.mxu0 0
    %1450 = vmatpush1.bf16.msra.mxu0 0
    %1451 = vmatprep.subr.bf16.mxu0 0
    %1452 = vmatpush1.bf16.msra.mxu0 0
    %1453 = vmatprep.subr.bf16.mxu0 0
    %1454 = vmatpush1.bf16.msra.mxu0 0
    %1455 = vmatprep.subr.bf16.mxu0 0
    %1456 = vmatpush1.bf16.msra.mxu0 0
    %1457 = vmatprep.subr.bf16.mxu0 0
    %1458 = vmatpush1.bf16.msra.mxu0 0
    %1459 = vmatprep.subr.bf16.mxu0 0
    %1460 = vmatpush1.bf16.msra.mxu0 0
    %1461 = vmatprep.subr.bf16.mxu0 0
    %1462 = vmatpush1.bf16.msra.mxu0 0
    %1463 = vmatprep.subr.bf16.mxu0 0
    %1464 = vmatpush1.bf16.msra.mxu0 0
    %1465 = vmatprep.subr.bf16.mxu0 0
    %1466 = vmatpush1.bf16.msra.mxu0 0
    %1467 = vmatprep.subr.bf16.mxu0 0
    %1468 = vmatpush1.bf16.msra.mxu0 0
    %1469 = vmatprep.subr.bf16.mxu0 0
    %1470 = vmatpush1.bf16.msra.mxu0 0
    %1471 = vmatprep.subr.bf16.mxu0 0
    %1472 = vmatpush1.bf16.msra.mxu0 0
    %1473 = vmatprep.subr.bf16.mxu0 0
    %1474 = vmatpush1.bf16.msra.mxu0 0
    %1475 = vmatprep.mubr.bf16.mxu0 0
    %1476 = vmatmul.mubr.bf16.gmra.mrb[0].mxu0 %v1438
    %v1477 = vpop.f32.mrb[0].mxu0
    %v1478 = vadd.f32 0.0, %v1477
    %v1479 = vpop.f32.mrb[0].mxu0
    %v1480 = vpop.f32.mrb[0].mxu0
    %v1481 = vpop.f32.mrb[0].mxu0
    %1482 = vdwg.mxu0
    %v1484 = vsel %vm695, %v1159, 0
    %v1487 = vsel %vm1163, %v694, 0
    %1489 = vmatprep.subr.bf16.mxu0 0
    %1490 = vmatpush1.bf16.msra.mxu0 %v1487
    %1491 = vmatprep.subr.bf16.mxu0 0
    %1492 = vmatpush1.bf16.msra.mxu0 0
    %1493 = vmatprep.subr.bf16.mxu0 0
    %1494 = vmatpush1.bf16.msra.mxu0 0
    %1495 = vmatprep.subr.bf16.mxu0 0
    %1496 = vmatpush1.bf16.msra.mxu0 0
    %1497 = vmatprep.subr.bf16.mxu0 0
    %1498 = vmatpush1.bf16.msra.mxu0 0
    %1499 = vmatprep.subr.bf16.mxu0 0
    %1500 = vmatpush1.bf16.msra.mxu0 0
    %1501 = vmatprep.subr.bf16.mxu0 0
    %1502 = vmatpush1.bf16.msra.mxu0 0
    %1503 = vmatprep.subr.bf16.mxu0 0
    %1504 = vmatpush1.bf16.msra.mxu0 0
    %1505 = vmatprep.subr.bf16.mxu0 0
    %1506 = vmatpush1.bf16.msra.mxu0 0
    %1507 = vmatprep.subr.bf16.mxu0 0
    %1508 = vmatpush1.bf16.msra.mxu0 0
    %1509 = vmatprep.subr.bf16.mxu0 0
    %1510 = vmatpush1.bf16.msra.mxu0 0
    %1511 = vmatprep.subr.bf16.mxu0 0
    %1512 = vmatpush1.bf16.msra.mxu0 0
    %1513 = vmatprep.subr.bf16.mxu0 0
    %1514 = vmatpush1.bf16.msra.mxu0 0
    %1515 = vmatprep.subr.bf16.mxu0 0
    %1516 = vmatpush1.bf16.msra.mxu0 0
    %1517 = vmatprep.subr.bf16.mxu0 0
    %1518 = vmatpush1.bf16.msra.mxu0 0
    %1519 = vmatprep.subr.bf16.mxu0 0
    %1520 = vmatpush1.bf16.msra.mxu0 0
    %1521 = vmatprep.mubr.bf16.mxu0 0
    %1522 = vmatmul.mubr.bf16.gmra.mrb[0].mxu0 %v1484
    %v1523 = vpop.f32.mrb[0].mxu0
    %v1524 = vadd.f32 0.0, %v1523
    %v1525 = vpop.f32.mrb[0].mxu0
    %v1526 = vpop.f32.mrb[0].mxu0
    %v1527 = vpop.f32.mrb[0].mxu0
    %1528 = vdwg.mxu0
    %1531 = vrot.lane.b32.xlu0 %v1294, 8
    %v1532 = vpop.permute.xlu0 %1531
    %1533 = vrot.lane.b32.xlu0 %v1340, 8
    %v1534 = vpop.permute.xlu0 %1533
    %1539 = vrot.lane.b32.xlu0 %v1386, 16
    %v1540 = vpop.permute.xlu0 %1539
    %1541 = vrot.lane.b32.xlu0 %v1432, 16
    %v1542 = vpop.permute.xlu0 %1541
    %1547 = vrot.lane.b32.xlu0 %v1478, 24
    %v1548 = vpop.permute.xlu0 %1547
    %1549 = vrot.lane.b32.xlu0 %v1524, 24
    %v1550 = vpop.permute.xlu0 %1549
    %v1553 = vsel %vm695, %v1202, %v1532
    %v1554 = vsel %vm695, %v1248, %v1534
    %vm1555 = vcmask 130048
    %v1556 = vsel %vm1555, %v1553, %v1540
    %v1557 = vsel %vm1555, %v1554, %v1542
    %vm1558 = vcmask 195584
    %v1559 = vsel %vm1558, %v1556, %v1548
    %v1560 = vsel %vm1558, %v1557, %v1550
    %v1561 = vpack.c.bf16 %v1560, %v1559
    %v1563 = vlaneseq
    %v1564 = vshrl.u32 %v1563, 7
    %v1565 = vsub.s32 0, %v1564
    %v1566 = vrot.slane %v455, %v1565
    %v1572 = vunpack.c.l.b16 %v451
    %v1573 = vunpack.c.l.b16 %v452
    %v1574 = vunpack.c.l.b16 %v453
    %v1575 = vunpack.c.l.b16 %v454
    %v1576 = vpack.c.b16 %v1573, %v1572
    %v1577 = vpack.c.b16 %v1575, %v1574
    %v1581 = vsel %vm390, %v1561, 0
    %1583 = vmatprep.subr.bf16.mxu0 0
    %1584 = vmatpush1.bf16.msra.mxu0 %v1576
    %1585 = vmatprep.subr.bf16.mxu0 0
    %1586 = vmatpush1.bf16.msra.mxu0 %v1577
    %1587 = vmatprep.subr.bf16.mxu0 0
    %1588 = vmatpush1.bf16.msra.mxu0 0
    %1589 = vmatprep.subr.bf16.mxu0 0
    %1590 = vmatpush1.bf16.msra.mxu0 0
    %1591 = vmatprep.subr.bf16.mxu0 0
    %1592 = vmatpush1.bf16.msra.mxu0 0
    %1593 = vmatprep.subr.bf16.mxu0 0
    %1594 = vmatpush1.bf16.msra.mxu0 0
    %1595 = vmatprep.subr.bf16.mxu0 0
    %1596 = vmatpush1.bf16.msra.mxu0 0
    %1597 = vmatprep.subr.bf16.mxu0 0
    %1598 = vmatpush1.bf16.msra.mxu0 0
    %1599 = vmatprep.subr.bf16.mxu0 0
    %1600 = vmatpush1.bf16.msra.mxu0 0
    %1601 = vmatprep.subr.bf16.mxu0 0
    %1602 = vmatpush1.bf16.msra.mxu0 0
    %1603 = vmatprep.subr.bf16.mxu0 0
    %1604 = vmatpush1.bf16.msra.mxu0 0
    %1605 = vmatprep.subr.bf16.mxu0 0
    %1606 = vmatpush1.bf16.msra.mxu0 0
    %1607 = vmatprep.subr.bf16.mxu0 0
    %1608 = vmatpush1.bf16.msra.mxu0 0
    %1609 = vmatprep.subr.bf16.mxu0 0
    %1610 = vmatpush1.bf16.msra.mxu0 0
    %1611 = vmatprep.subr.bf16.mxu0 0
    %1612 = vmatpush1.bf16.msra.mxu0 0
    %1613 = vmatprep.subr.bf16.mxu0 0
    %1614 = vmatpush1.bf16.msra.mxu0 0
    %1615 = vmatprep.mubr.bf16.mxu0 0
    %1616 = vmatmul.mubr.bf16.gmra.mrb[0].mxu0 %v1581
    %v1617 = vpop.f32.mrb[0].mxu0
    %v1618 = vadd.f32 %v1566, %v1617
    %v1619 = vpop.f32.mrb[0].mxu0
    %v1620 = vpop.f32.mrb[0].mxu0
    %v1621 = vadd.f32 %v1566, %v1620
    %v1622 = vpop.f32.mrb[0].mxu0
    %1623 = vdwg.mxu0
    %v1624 = vadd.f32 %v385, %v1618
    %v1625 = vadd.f32 %v386, %v1621
    %v1626 = vld [vmem:[#allocation19] sm:$0x1]
    %v1627 = vld [vmem:[%s37] sm:$0x1]
    %v1628 = vsel %vm390, %v1624, 0.0
    %1629 = vadd.xlane.f32.xlu0 %v1628
    %v1630 = vpop.xlane.xlu0 %1629
    %v1631 = vsel %vm390, %v1625, 0.0
    %1632 = vadd.xlane.f32.xlu0 %v1631
    %v1633 = vpop.xlane.xlu0 %1632
    %v1634 = vmul.f32 %v1630, %v397
    %v1635 = vmul.f32 %v1633, %v397
    %v1636 = vsub.f32 %v1624, %v1634
    %v1637 = vsub.f32 %v1625, %v1635
    %v1638 = vmul.f32 %v1636, %v1636
    %v1639 = vmul.f32 %v1637, %v1637
    %v1640 = vsel %vm390, %v1638, 0.0
    %1641 = vadd.xlane.f32.xlu0 %v1640
    %v1642 = vpop.xlane.xlu0 %1641
    %v1643 = vsel %vm390, %v1639, 0.0
    %1644 = vadd.xlane.f32.xlu0 %v1643
    %v1645 = vpop.xlane.xlu0 %1644
    %v1646 = vmul.f32 %v1642, %v397
    %v1647 = vmul.f32 %v1645, %v397
    %v1648 = vadd.f32 %v1646, 1e-05
    %v1649 = vadd.f32 %v1647, 1e-05
    %v1650 = vrsqrt.pop %v1648
    %v1651 = vrsqrt.pop %v1649
    %v1652 = vmul.f32 %v1636, %v1650
    %v1653 = vmul.f32 %v1637, %v1651
    %v1655 = vlaneseq
    %v1656 = vshrl.u32 %v1655, 7
    %v1657 = vsub.s32 0, %v1656
    %v1658 = vrot.slane %v1626, %v1657
    %v1660 = vmul.f32 %v1652, %v1658
    %v1661 = vmul.f32 %v1653, %v1658
    %v1663 = vlaneseq
    %v1664 = vshrl.u32 %v1663, 7
    %v1665 = vsub.s32 0, %v1664
    %v1666 = vrot.slane %v1627, %v1665
    %v1668 = vadd.f32 %v1660, %v1666
    %v1669 = vadd.f32 %v1661, %v1666
    %v1670 = vadd.f32 %v1668, %v387
    %v1671 = vadd.f32 %v1669, %v387
    %v1672 = vld [vmem:[%s3] sm:$0xf]
    %v1673 = vld [vmem:[%s3 + $0x4] sm:$0xf]
    %v1674 = vld [vmem:[%s3 + $0x8] sm:$0xf]
    %v1675 = vld [vmem:[%s3 + $0xc] sm:$0xf]
    %v1676 = vld [vmem:[%s5] sm:$0xf]
    %v1677 = vld [vmem:[%s5 + $0x4] sm:$0xf]
    %v1678 = vld [vmem:[%s5 + $0x8] sm:$0xf]
    %v1679 = vld [vmem:[%s5 + $0xc] sm:$0xf]
    %v1684 = vunpack.c.l.b16 %v1672
    %v1685 = vunpack.c.l.b16 %v1673
    %v1686 = vunpack.c.l.b16 %v1674
    %v1687 = vunpack.c.l.b16 %v1675
    %v1688 = vpack.c.b16 %v1685, %v1684
    %v1689 = vpack.c.b16 %v1687, %v1686
    %v1696 = vunpack.c.l.b16 %v1676
    %v1697 = vunpack.c.l.b16 %v1677
    %v1698 = vunpack.c.l.b16 %v1678
    %v1699 = vunpack.c.l.b16 %v1679
    %v1700 = vpack.c.b16 %v1697, %v1696
    %v1701 = vpack.c.b16 %v1699, %v1698
    %v1704 = vunpack.c.l.bf16 %v1688
    %v1705 = vunpack.c.h.bf16 %v1688
    %v1706 = vunpack.c.l.bf16 %v1700
    %v1707 = vunpack.c.h.bf16 %v1700
    %v1708 = vunpack.c.l.bf16 %v1689
    %v1709 = vunpack.c.h.bf16 %v1689
    %v1710 = vunpack.c.l.bf16 %v1701
    %v1711 = vunpack.c.h.bf16 %v1701
    %v1712 = vld [vmem:[#allocation5] sm:$0x3]
    %v1713 = vld [vmem:[%s7] sm:$0xf]
    %v1714 = vld [vmem:[%s7 + $0x4] sm:$0xf]
    %v1715 = vld [vmem:[%s7 + $0x8] sm:$0xf]
    %v1716 = vld [vmem:[%s7 + $0xc] sm:$0xf]
    %v1717 = vunpack.c.l.bf16 %v1713
    %v1718 = vunpack.c.l.bf16 %v1714
    %v1719 = vunpack.c.l.bf16 %v1715
    %v1720 = vunpack.c.l.bf16 %v1716
    %v1721 = vlaneseq
    %v1722 = vshrl.u32 %v1721, 7
    %v1723 = vsub.s32 0, %v1722
    %v1724 = vrot.slane %v1712, %v1723
    %v1725 = vadd.f32 %v1717, %v1724
    %v1726 = vadd.f32 %v1718, %v1724
    %v1727 = vadd.f32 %v1719, %v1724
    %v1728 = vadd.f32 %v1720, %v1724
    %v1729 = vld [vmem:[%s9] sm:$0xf]
    %v1730 = vld [vmem:[%s9 + $0x4] sm:$0xf]
    %v1731 = vld [vmem:[%s9 + $0x8] sm:$0xf]
    %v1732 = vld [vmem:[%s9 + $0xc] sm:$0xf]
    %v1733 = vunpack.c.l.bf16 %v1729
    %v1734 = vunpack.c.l.bf16 %v1730
    %v1735 = vunpack.c.l.bf16 %v1731
    %v1736 = vunpack.c.l.bf16 %v1732
    %v1737 = vlaneseq
    %v1738 = vshrl.u32 %v1737, 7
    %v1739 = vsub.s32 1, %v1738
    %v1740 = vrot.slane %v1712, %v1739
    %v1741 = vadd.f32 %v1733, %v1740
    %v1742 = vadd.f32 %v1734, %v1740
    %v1743 = vadd.f32 %v1735, %v1740
    %v1744 = vadd.f32 %v1736, %v1740
    %v1745 = vld [vmem:[#allocation20] sm:$0x1]
    %v1746 = vld [vmem:[#allocation22] sm:$0x1]
    %v1747 = vsel %vm390, %v1704, 0.0
    %1748 = vadd.xlane.f32.xlu0 %v1747
    %v1749 = vpop.xlane.xlu0 %1748
    %v1750 = vsel %vm390, %v1705, 0.0
    %1751 = vadd.xlane.f32.xlu0 %v1750
    %v1752 = vpop.xlane.xlu0 %1751
    %v1753 = vsel %vm390, %v1706, 0.0
    %1754 = vadd.xlane.f32.xlu0 %v1753
    %v1755 = vpop.xlane.xlu0 %1754
    %v1756 = vsel %vm390, %v1707, 0.0
    %1757 = vadd.xlane.f32.xlu0 %v1756
    %v1758 = vpop.xlane.xlu0 %1757
    %v1759 = vsel %vm390, %v1708, 0.0
    %1760 = vadd.xlane.f32.xlu0 %v1759
    %v1761 = vpop.xlane.xlu0 %1760
    %v1762 = vsel %vm390, %v1709, 0.0
    %1763 = vadd.xlane.f32.xlu0 %v1762
    %v1764 = vpop.xlane.xlu0 %1763
    %v1765 = vsel %vm390, %v1710, 0.0
    %1766 = vadd.xlane.f32.xlu0 %v1765
    %v1767 = vpop.xlane.xlu0 %1766
    %v1768 = vsel %vm390, %v1711, 0.0
    %1769 = vadd.xlane.f32.xlu0 %v1768
    %v1770 = vpop.xlane.xlu0 %1769
    %v1771 = vmul.f32 %v1749, %v397
    %v1772 = vmul.f32 %v1752, %v397
    %v1773 = vmul.f32 %v1755, %v397
    %v1774 = vmul.f32 %v1758, %v397
    %v1775 = vmul.f32 %v1761, %v397
    %v1776 = vmul.f32 %v1764, %v397
    %v1777 = vmul.f32 %v1767, %v397
    %v1778 = vmul.f32 %v1770, %v397
    %v1779 = vsub.f32 %v1704, %v1771
    %v1780 = vsub.f32 %v1705, %v1772
    %v1781 = vsub.f32 %v1706, %v1773
    %v1782 = vsub.f32 %v1707, %v1774
    %v1783 = vsub.f32 %v1708, %v1775
    %v1784 = vsub.f32 %v1709, %v1776
    %v1785 = vsub.f32 %v1710, %v1777
    %v1786 = vsub.f32 %v1711, %v1778
    %v1787 = vmul.f32 %v1779, %v1779
    %v1788 = vmul.f32 %v1780, %v1780
    %v1789 = vmul.f32 %v1781, %v1781
    %v1790 = vmul.f32 %v1782, %v1782
    %v1791 = vmul.f32 %v1783, %v1783
    %v1792 = vmul.f32 %v1784, %v1784
    %v1793 = vmul.f32 %v1785, %v1785
    %v1794 = vmul.f32 %v1786, %v1786
    %v1795 = vsel %vm390, %v1787, 0.0
    %1796 = vadd.xlane.f32.xlu0 %v1795
    %v1797 = vpop.xlane.xlu0 %1796
    %v1798 = vsel %vm390, %v1788, 0.0
    %1799 = vadd.xlane.f32.xlu0 %v1798
    %v1800 = vpop.xlane.xlu0 %1799
    %v1801 = vsel %vm390, %v1789, 0.0
    %1802 = vadd.xlane.f32.xlu0 %v1801
    %v1803 = vpop.xlane.xlu0 %1802
    %v1804 = vsel %vm390, %v1790, 0.0
    %1805 = vadd.xlane.f32.xlu0 %v1804
    %v1806 = vpop.xlane.xlu0 %1805
    %v1807 = vsel %vm390, %v1791, 0.0
    %1808 = vadd.xlane.f32.xlu0 %v1807
    %v1809 = vpop.xlane.xlu0 %1808
    %v1810 = vsel %vm390, %v1792, 0.0
    %1811 = vadd.xlane.f32.xlu0 %v1810
    %v1812 = vpop.xlane.xlu0 %1811
    %v1813 = vsel %vm390, %v1793, 0.0
    %1814 = vadd.xlane.f32.xlu0 %v1813
    %v1815 = vpop.xlane.xlu0 %1814
    %v1816 = vsel %vm390, %v1794, 0.0
    %1817 = vadd.xlane.f32.xlu0 %v1816
    %v1818 = vpop.xlane.xlu0 %1817
    %v1819 = vmul.f32 %v1797, %v397
    %v1820 = vmul.f32 %v1800, %v397
    %v1821 = vmul.f32 %v1803, %v397
    %v1822 = vmul.f32 %v1806, %v397
    %v1823 = vmul.f32 %v1809, %v397
    %v1824 = vmul.f32 %v1812, %v397
    %v1825 = vmul.f32 %v1815, %v397
    %v1826 = vmul.f32 %v1818, %v397
    %v1827 = vadd.f32 %v1819, 1e-05
    %v1828 = vadd.f32 %v1820, 1e-05
    %v1829 = vadd.f32 %v1821, 1e-05
    %v1830 = vadd.f32 %v1822, 1e-05
    %v1831 = vadd.f32 %v1823, 1e-05
    %v1832 = vadd.f32 %v1824, 1e-05
    %v1833 = vadd.f32 %v1825, 1e-05
    %v1834 = vadd.f32 %v1826, 1e-05
    %v1835 = vrsqrt.pop %v1827
    %v1836 = vrsqrt.pop %v1828
    %v1837 = vrsqrt.pop %v1829
    %v1838 = vrsqrt.pop %v1830
    %v1839 = vrsqrt.pop %v1831
    %v1840 = vrsqrt.pop %v1832
    %v1841 = vrsqrt.pop %v1833
    %v1842 = vrsqrt.pop %v1834
    %v1843 = vmul.f32 %v1779, %v1835
    %v1844 = vmul.f32 %v1780, %v1836
    %v1845 = vmul.f32 %v1781, %v1837
    %v1846 = vmul.f32 %v1782, %v1838
    %v1847 = vmul.f32 %v1783, %v1839
    %v1848 = vmul.f32 %v1784, %v1840
    %v1849 = vmul.f32 %v1785, %v1841
    %v1850 = vmul.f32 %v1786, %v1842
    %v1852 = vlaneseq
    %v1853 = vshrl.u32 %v1852, 7
    %v1854 = vsub.s32 0, %v1853
    %v1855 = vrot.slane %v1745, %v1854
    %v1857 = vmul.f32 %v1843, %v1855
    %v1858 = vmul.f32 %v1844, %v1855
    %v1859 = vmul.f32 %v1845, %v1855
    %v1860 = vmul.f32 %v1846, %v1855
    %v1861 = vmul.f32 %v1847, %v1855
    %v1862 = vmul.f32 %v1848, %v1855
    %v1863 = vmul.f32 %v1849, %v1855
    %v1864 = vmul.f32 %v1850, %v1855
    %v1866 = vlaneseq
    %v1867 = vshrl.u32 %v1866, 7
    %v1868 = vsub.s32 0, %v1867
    %v1869 = vrot.slane %v1746, %v1868
    %v1871 = vadd.f32 %v1857, %v1869
    %v1872 = vadd.f32 %v1858, %v1869
    %v1873 = vadd.f32 %v1859, %v1869
    %v1874 = vadd.f32 %v1860, %v1869
    %v1875 = vadd.f32 %v1861, %v1869
    %v1876 = vadd.f32 %v1862, %v1869
    %v1877 = vadd.f32 %v1863, %v1869
    %v1878 = vadd.f32 %v1864, %v1869
    %v1879 = vadd.f32 %v1871, %v1725
    %v1880 = vadd.f32 %v1872, %v1726
    %v1881 = vadd.f32 %v1873, %v1741
    %v1882 = vadd.f32 %v1874, %v1742
    %v1883 = vadd.f32 %v1875, %v1727
    %v1884 = vadd.f32 %v1876, %v1728
    %v1885 = vadd.f32 %v1877, %v1743
    %v1886 = vadd.f32 %v1878, %v1744
    %v1887 = vld [vmem:[%s43] sm:$0xf]
    %v1888 = vld [vmem:[%s43 + $0x4] sm:$0xf]
    %v1889 = vld [vmem:[%s43 + $0x8] sm:$0xf]
    %v1890 = vld [vmem:[%s43 + $0xc] sm:$0xf]
    %v1891 = vld [vmem:[#allocation23] sm:$0x1]
    %v1892 = vld [vmem:[%s47] sm:$0xf]
    %v1893 = vld [vmem:[%s47 + $0x4] sm:$0xf]
    %v1894 = vld [vmem:[%s47 + $0x8] sm:$0xf]
    %v1895 = vld [vmem:[%s47 + $0xc] sm:$0xf]
    %v1896 = vld [vmem:[#allocation25] sm:$0x1]
    %v1897 = vld [vmem:[#allocation26] sm:$0xf]
    %v1898 = vld [vmem:[#allocation26 + $0x4] sm:$0xf]
    %v1899 = vld [vmem:[#allocation26 + $0x8] sm:$0xf]
    %v1900 = vld [vmem:[#allocation26 + $0xc] sm:$0xf]
    %v1901 = vld [vmem:[#allocation28] sm:$0x1]
    %v1902 = vld [vmem:[%s55] sm:$0xf]
    %v1903 = vld [vmem:[%s55 + $0x4] sm:$0xf]
    %v1904 = vld [vmem:[%s55 + $0x8] sm:$0xf]
    %v1905 = vld [vmem:[%s55 + $0xc] sm:$0xf]
    %v1906 = vld [vmem:[#allocation29] sm:$0x1]
    %v1907 = vpack.c.bf16 %v1671, %v1670
    %v1909 = vlaneseq
    %v1910 = vshrl.u32 %v1909, 7
    %v1911 = vsub.s32 0, %v1910
    %v1912 = vrot.slane %v1891, %v1911
    %v1918 = vunpack.c.l.b16 %v1887
    %v1919 = vunpack.c.l.b16 %v1888
    %v1920 = vunpack.c.l.b16 %v1889
    %v1921 = vunpack.c.l.b16 %v1890
    %v1922 = vpack.c.b16 %v1919, %v1918
    %v1923 = vpack.c.b16 %v1921, %v1920
    %v1927 = vsel %vm390, %v1907, 0
    %1929 = vmatprep.subr.bf16.mxu0 0
    %1930 = vmatpush1.bf16.msra.mxu0 %v1922
    %1931 = vmatprep.subr.bf16.mxu0 0
    %1932 = vmatpush1.bf16.msra.mxu0 %v1923
    %1933 = vmatprep.subr.bf16.mxu0 0
    %1934 = vmatpush1.bf16.msra.mxu0 0
    %1935 = vmatprep.subr.bf16.mxu0 0
    %1936 = vmatpush1.bf16.msra.mxu0 0
    %1937 = vmatprep.subr.bf16.mxu0 0
    %1938 = vmatpush1.bf16.msra.mxu0 0
    %1939 = vmatprep.subr.bf16.mxu0 0
    %1940 = vmatpush1.bf16.msra.mxu0 0
    %1941 = vmatprep.subr.bf16.mxu0 0
    %1942 = vmatpush1.bf16.msra.mxu0 0
    %1943 = vmatprep.subr.bf16.mxu0 0
    %1944 = vmatpush1.bf16.msra.mxu0 0
    %1945 = vmatprep.subr.bf16.mxu0 0
    %1946 = vmatpush1.bf16.msra.mxu0 0
    %1947 = vmatprep.subr.bf16.mxu0 0
    %1948 = vmatpush1.bf16.msra.mxu0 0
    %1949 = vmatprep.subr.bf16.mxu0 0
    %1950 = vmatpush1.bf16.msra.mxu0 0
    %1951 = vmatprep.subr.bf16.mxu0 0
    %1952 = vmatpush1.bf16.msra.mxu0 0
    %1953 = vmatprep.subr.bf16.mxu0 0
    %1954 = vmatpush1.bf16.msra.mxu0 0
    %1955 = vmatprep.subr.bf16.mxu0 0
    %1956 = vmatpush1.bf16.msra.mxu0 0
    %1957 = vmatprep.subr.bf16.mxu0 0
    %1958 = vmatpush1.bf16.msra.mxu0 0
    %1959 = vmatprep.subr.bf16.mxu0 0
    %1960 = vmatpush1.bf16.msra.mxu0 0
    %1961 = vmatprep.mubr.bf16.mxu0 0
    %1962 = vmatmul.mubr.bf16.gmra.mrb[0].mxu0 %v1927
    %v1963 = vpop.f32.mrb[0].mxu0
    %v1964 = vadd.f32 %v1912, %v1963
    %v1965 = vpop.f32.mrb[0].mxu0
    %v1966 = vpop.f32.mrb[0].mxu0
    %v1967 = vadd.f32 %v1912, %v1966
    %v1968 = vpop.f32.mrb[0].mxu0
    %1969 = vdwg.mxu0
    %v1970 = vpack.c.bf16 %v1967, %v1964
    %v1971 = vpack.c.bf16 %v1880, %v1879
    %v1972 = vpack.c.bf16 %v1882, %v1881
    %v1973 = vpack.c.bf16 %v1884, %v1883
    %v1974 = vpack.c.bf16 %v1886, %v1885
    %v1976 = vlaneseq
    %v1977 = vshrl.u32 %v1976, 7
    %v1978 = vsub.s32 0, %v1977
    %v1979 = vrot.slane %v1896, %v1978
    %v1985 = vunpack.c.l.b16 %v1892
    %v1986 = vunpack.c.l.b16 %v1893
    %v1987 = vunpack.c.l.b16 %v1894
    %v1988 = vunpack.c.l.b16 %v1895
    %v1989 = vpack.c.b16 %v1986, %v1985
    %v1990 = vpack.c.b16 %v1988, %v1987
    %v1994 = vsel %vm390, %v1971, 0
    %v1997 = vsel %vm390, %v1972, 0
    %v2000 = vsel %vm390, %v1973, 0
    %v2003 = vsel %vm390, %v1974, 0
    %2005 = vmatprep.subr.bf16.mxu0 0
    %2006 = vmatpush1.bf16.msra.mxu0 %v1989
    %2007 = vmatprep.subr.bf16.mxu0 0
    %2008 = vmatpush1.bf16.msra.mxu0 %v1990
    %2009 = vmatprep.subr.bf16.mxu0 0
    %2010 = vmatpush1.bf16.msra.mxu0 0
    %2011 = vmatprep.subr.bf16.mxu0 0
    %2012 = vmatpush1.bf16.msra.mxu0 0
    %2013 = vmatprep.subr.bf16.mxu0 0
    %2014 = vmatpush1.bf16.msra.mxu0 0
    %2015 = vmatprep.subr.bf16.mxu0 0
    %2016 = vmatpush1.bf16.msra.mxu0 0
    %2017 = vmatprep.subr.bf16.mxu0 0
    %2018 = vmatpush1.bf16.msra.mxu0 0
    %2019 = vmatprep.subr.bf16.mxu0 0
    %2020 = vmatpush1.bf16.msra.mxu0 0
    %2021 = vmatprep.subr.bf16.mxu0 0
    %2022 = vmatpush1.bf16.msra.mxu0 0
    %2023 = vmatprep.subr.bf16.mxu0 0
    %2024 = vmatpush1.bf16.msra.mxu0 0
    %2025 = vmatprep.subr.bf16.mxu0 0
    %2026 = vmatpush1.bf16.msra.mxu0 0
    %2027 = vmatprep.subr.bf16.mxu0 0
    %2028 = vmatpush1.bf16.msra.mxu0 0
    %2029 = vmatprep.subr.bf16.mxu0 0
    %2030 = vmatpush1.bf16.msra.mxu0 0
    %2031 = vmatprep.subr.bf16.mxu0 0
    %2032 = vmatpush1.bf16.msra.mxu0 0
    %2033 = vmatprep.subr.bf16.mxu0 0
    %2034 = vmatpush1.bf16.msra.mxu0 0
    %2035 = vmatprep.subr.bf16.mxu0 0
    %2036 = vmatpush1.bf16.msra.mxu0 0
    %2037 = vmatprep.mubr.bf16.mxu0 0
    %2038 = vmatmul.mubr.bf16.gmra.mrb[0].mxu0 %v1994
    %v2039 = vpop.f32.mrb[0].mxu0
    %v2040 = vadd.f32 %v1979, %v2039
    %v2041 = vpop.f32.mrb[0].mxu0
    %v2042 = vpop.f32.mrb[0].mxu0
    %v2043 = vadd.f32 %v1979, %v2042
    %v2044 = vpop.f32.mrb[0].mxu0
    %2045 = vmatprep.mubr.bf16.mxu0 0
    %2046 = vmatmul.mubr.bf16.gmra.mrb[0].mxu0 %v1997
    %v2047 = vpop.f32.mrb[0].mxu0
    %v2048 = vadd.f32 %v1979, %v2047
    %v2049 = vpop.f32.mrb[0].mxu0
    %v2050 = vpop.f32.mrb[0].mxu0
    %v2051 = vadd.f32 %v1979, %v2050
    %v2052 = vpop.f32.mrb[0].mxu0
    %2053 = vmatprep.mubr.bf16.mxu0 0
    %2054 = vmatmul.mubr.bf16.gmra.mrb[0].mxu0 %v2000
    %v2055 = vpop.f32.mrb[0].mxu0
    %v2056 = vadd.f32 %v1979, %v2055
    %v2057 = vpop.f32.mrb[0].mxu0
    %v2058 = vpop.f32.mrb[0].mxu0
    %v2059 = vadd.f32 %v1979, %v2058
    %v2060 = vpop.f32.mrb[0].mxu0
    %2061 = vmatprep.mubr.bf16.mxu0 0
    %2062 = vmatmul.mubr.bf16.gmra.mrb[0].mxu0 %v2003
    %v2063 = vpop.f32.mrb[0].mxu0
    %v2064 = vadd.f32 %v1979, %v2063
    %v2065 = vpop.f32.mrb[0].mxu0
    %v2066 = vpop.f32.mrb[0].mxu0
    %v2067 = vadd.f32 %v1979, %v2066
    %v2068 = vpop.f32.mrb[0].mxu0
    %2069 = vdwg.mxu0
    %v2070 = vpack.c.bf16 %v2043, %v2040
    %v2071 = vpack.c.bf16 %v2051, %v2048
    %v2072 = vpack.c.bf16 %v2059, %v2056
    %v2073 = vpack.c.bf16 %v2067, %v2064
    %v2074 = vpack.c.bf16 %v1705, %v1704
    %v2075 = vpack.c.bf16 %v1707, %v1706
    %v2076 = vpack.c.bf16 %v1709, %v1708
    %v2077 = vpack.c.bf16 %v1711, %v1710
    %v2079 = vlaneseq
    %v2080 = vshrl.u32 %v2079, 7
    %v2081 = vsub.s32 0, %v2080
    %v2082 = vrot.slane %v1901, %v2081
    %v2088 = vunpack.c.l.b16 %v1897
    %v2089 = vunpack.c.l.b16 %v1898
    %v2090 = vunpack.c.l.b16 %v1899
    %v2091 = vunpack.c.l.b16 %v1900
    %v2092 = vpack.c.b16 %v2089, %v2088
    %v2093 = vpack.c.b16 %v2091, %v2090
    %v2097 = vsel %vm390, %v2074, 0
    %v2100 = vsel %vm390, %v2075, 0
    %v2103 = vsel %vm390, %v2076, 0
    %v2106 = vsel %vm390, %v2077, 0
    %2108 = vmatprep.subr.bf16.mxu0 0
    %2109 = vmatpush1.bf16.msra.mxu0 %v2092
    %2110 = vmatprep.subr.bf16.mxu0 0
    %2111 = vmatpush1.bf16.msra.mxu0 %v2093
    %2112 = vmatprep.subr.bf16.mxu0 0
    %2113 = vmatpush1.bf16.msra.mxu0 0
    %2114 = vmatprep.subr.bf16.mxu0 0
    %2115 = vmatpush1.bf16.msra.mxu0 0
    %2116 = vmatprep.subr.bf16.mxu0 0
    %2117 = vmatpush1.bf16.msra.mxu0 0
    %2118 = vmatprep.subr.bf16.mxu0 0
    %2119 = vmatpush1.bf16.msra.mxu0 0
    %2120 = vmatprep.subr.bf16.mxu0 0
    %2121 = vmatpush1.bf16.msra.mxu0 0
    %2122 = vmatprep.subr.bf16.mxu0 0
    %2123 = vmatpush1.bf16.msra.mxu0 0
    %2124 = vmatprep.subr.bf16.mxu0 0
    %2125 = vmatpush1.bf16.msra.mxu0 0
    %2126 = vmatprep.subr.bf16.mxu0 0
    %2127 = vmatpush1.bf16.msra.mxu0 0
    %2128 = vmatprep.subr.bf16.mxu0 0
    %2129 = vmatpush1.bf16.msra.mxu0 0
    %2130 = vmatprep.subr.bf16.mxu0 0
    %2131 = vmatpush1.bf16.msra.mxu0 0
    %2132 = vmatprep.subr.bf16.mxu0 0
    %2133 = vmatpush1.bf16.msra.mxu0 0
    %2134 = vmatprep.subr.bf16.mxu0 0
    %2135 = vmatpush1.bf16.msra.mxu0 0
    %2136 = vmatprep.subr.bf16.mxu0 0
    %2137 = vmatpush1.bf16.msra.mxu0 0
    %2138 = vmatprep.subr.bf16.mxu0 0
    %2139 = vmatpush1.bf16.msra.mxu0 0
    %2140 = vmatprep.mubr.bf16.mxu0 0
    %2141 = vmatmul.mubr.bf16.gmra.mrb[0].mxu0 %v2097
    %v2142 = vpop.f32.mrb[0].mxu0
    %v2143 = vadd.f32 %v2082, %v2142
    %v2144 = vpop.f32.mrb[0].mxu0
    %v2145 = vpop.f32.mrb[0].mxu0
    %v2146 = vadd.f32 %v2082, %v2145
    %v2147 = vpop.f32.mrb[0].mxu0
    %2148 = vmatprep.mubr.bf16.mxu0 0
    %2149 = vmatmul.mubr.bf16.gmra.mrb[0].mxu0 %v2100
    %v2150 = vpop.f32.mrb[0].mxu0
    %v2151 = vadd.f32 %v2082, %v2150
    %v2152 = vpop.f32.mrb[0].mxu0
    %v2153 = vpop.f32.mrb[0].mxu0
    %v2154 = vadd.f32 %v2082, %v2153
    %v2155 = vpop.f32.mrb[0].mxu0
    %2156 = vmatprep.mubr.bf16.mxu0 0
    %2157 = vmatmul.mubr.bf16.gmra.mrb[0].mxu0 %v2103
    %v2158 = vpop.f32.mrb[0].mxu0
    %v2159 = vadd.f32 %v2082, %v2158
    %v2160 = vpop.f32.mrb[0].mxu0
    %v2161 = vpop.f32.mrb[0].mxu0
    %v2162 = vadd.f32 %v2082, %v2161
    %v2163 = vpop.f32.mrb[0].mxu0
    %2164 = vmatprep.mubr.bf16.mxu0 0
    %2165 = vmatmul.mubr.bf16.gmra.mrb[0].mxu0 %v2106
    %v2166 = vpop.f32.mrb[0].mxu0
    %v2167 = vadd.f32 %v2082, %v2166
    %v2168 = vpop.f32.mrb[0].mxu0
    %v2169 = vpop.f32.mrb[0].mxu0
    %v2170 = vadd.f32 %v2082, %v2169
    %v2171 = vpop.f32.mrb[0].mxu0
    %2172 = vdwg.mxu0
    %v2173 = vpack.c.bf16 %v2146, %v2143
    %v2174 = vpack.c.bf16 %v2154, %v2151
    %v2175 = vpack.c.bf16 %v2162, %v2159
    %v2176 = vpack.c.bf16 %v2170, %v2167
    %v2178 = vunpack.c.l.b16 %v1970
    %v2179 = vunpack.c.h.b16 %v1970
    %v2180 = vpack.c.b16 %v2178, %v2178
    %v2181 = vpack.c.b16 %v2179, %v2179
    %2182 = vrot.lane.b32.xlu0 %v2180, 120
    %v2183 = vpop.permute.xlu0 %2182
    %2184 = vrot.lane.b32.xlu0 %v2181, 120
    %v2185 = vpop.permute.xlu0 %2184
    %2186 = vrot.lane.b32.xlu0 %v2180, 112
    %v2187 = vpop.permute.xlu0 %2186
    %2188 = vrot.lane.b32.xlu0 %v2181, 112
    %v2189 = vpop.permute.xlu0 %2188
    %2190 = vrot.lane.b32.xlu0 %v2180, 104
    %v2191 = vpop.permute.xlu0 %2190
    %2192 = vrot.lane.b32.xlu0 %v2181, 104
    %v2193 = vpop.permute.xlu0 %2192
    %2198 = vrot.lane.b32.xlu0 %v2070, 120
    %v2199 = vpop.permute.xlu0 %2198
    %2200 = vrot.lane.b32.xlu0 %v2071, 120
    %v2201 = vpop.permute.xlu0 %2200
    %2202 = vrot.lane.b32.xlu0 %v2072, 120
    %v2203 = vpop.permute.xlu0 %2202
    %2204 = vrot.lane.b32.xlu0 %v2073, 120
    %v2205 = vpop.permute.xlu0 %2204
    %2206 = vrot.lane.b32.xlu0 %v2070, 112
    %v2207 = vpop.permute.xlu0 %2206
    %2208 = vrot.lane.b32.xlu0 %v2071, 112
    %v2209 = vpop.permute.xlu0 %2208
    %2210 = vrot.lane.b32.xlu0 %v2072, 112
    %v2211 = vpop.permute.xlu0 %2210
    %2212 = vrot.lane.b32.xlu0 %v2073, 112
    %v2213 = vpop.permute.xlu0 %2212
    %2214 = vrot.lane.b32.xlu0 %v2070, 104
    %v2215 = vpop.permute.xlu0 %2214
    %2216 = vrot.lane.b32.xlu0 %v2071, 104
    %v2217 = vpop.permute.xlu0 %2216
    %2218 = vrot.lane.b32.xlu0 %v2072, 104
    %v2219 = vpop.permute.xlu0 %2218
    %2220 = vrot.lane.b32.xlu0 %v2073, 104
    %v2221 = vpop.permute.xlu0 %2220
    %2226 = vrot.lane.b32.xlu0 %v2173, 120
    %v2227 = vpop.permute.xlu0 %2226
    %2228 = vrot.lane.b32.xlu0 %v2174, 120
    %v2229 = vpop.permute.xlu0 %2228
    %2230 = vrot.lane.b32.xlu0 %v2175, 120
    %v2231 = vpop.permute.xlu0 %2230
    %2232 = vrot.lane.b32.xlu0 %v2176, 120
    %v2233 = vpop.permute.xlu0 %2232
    %2238 = vrot.lane.b32.xlu0 %v2173, 112
    %v2239 = vpop.permute.xlu0 %2238
    %2240 = vrot.lane.b32.xlu0 %v2174, 112
    %v2241 = vpop.permute.xlu0 %2240
    %2242 = vrot.lane.b32.xlu0 %v2175, 112
    %v2243 = vpop.permute.xlu0 %2242
    %2244 = vrot.lane.b32.xlu0 %v2176, 112
    %v2245 = vpop.permute.xlu0 %2244
    %2250 = vrot.lane.b32.xlu0 %v2173, 104
    %v2251 = vpop.permute.xlu0 %2250
    %2252 = vrot.lane.b32.xlu0 %v2174, 104
    %v2253 = vpop.permute.xlu0 %2252
    %2254 = vrot.lane.b32.xlu0 %v2175, 104
    %v2255 = vpop.permute.xlu0 %2254
    %2256 = vrot.lane.b32.xlu0 %v2176, 104
    %v2257 = vpop.permute.xlu0 %2256
    %v2263 = vsel %vm695, %v2180, 0
    %v2266 = vsel %vm695, %v2070, 0
    %v2269 = vsel %vm695, %v2071, 0
    %2271 = vmatprep.subr.bf16.mxu0 0
    %2272 = vmatpush1.bf16.xpose.msra.mxu0 %v2266
    %2273 = vmatprep.subr.bf16.mxu0 0
    %2274 = vmatpush1.bf16.xpose.msra.mxu0 %v2269
    %2275 = vmatprep.subr.bf16.mxu0 0
    %2276 = vmatpush1.bf16.xpose.msra.mxu0 0
    %2277 = vmatprep.subr.bf16.mxu0 0
    %2278 = vmatpush1.bf16.xpose.msra.mxu0 0
    %2279 = vmatprep.subr.bf16.mxu0 0
    %2280 = vmatpush1.bf16.xpose.msra.mxu0 0
    %2281 = vmatprep.subr.bf16.mxu0 0
    %2282 = vmatpush1.bf16.xpose.msra.mxu0 0
    %2283 = vmatprep.subr.bf16.mxu0 0
    %2284 = vmatpush1.bf16.xpose.msra.mxu0 0
    %2285 = vmatprep.subr.bf16.mxu0 0
    %2286 = vmatpush1.bf16.xpose.msra.mxu0 0
    %2287 = vmatprep.subr.bf16.mxu0 0
    %2288 = vmatpush1.bf16.xpose.msra.mxu0 0
    %2289 = vmatprep.subr.bf16.mxu0 0
    %2290 = vmatpush1.bf16.xpose.msra.mxu0 0
    %2291 = vmatprep.subr.bf16.mxu0 0
    %2292 = vmatpush1.bf16.xpose.msra.mxu0 0
    %2293 = vmatprep.subr.bf16.mxu0 0
    %2294 = vmatpush1.bf16.xpose.msra.mxu0 0
    %2295 = vmatprep.subr.bf16.mxu0 0
    %2296 = vmatpush1.bf16.xpose.msra.mxu0 0
    %2297 = vmatprep.subr.bf16.mxu0 0
    %2298 = vmatpush1.bf16.xpose.msra.mxu0 0
    %2299 = vmatprep.subr.bf16.mxu0 0
    %2300 = vmatpush1.bf16.xpose.msra.mxu0 0
    %2301 = vmatprep.subr.bf16.mxu0 0
    %2302 = vmatpush1.bf16.xpose.msra.mxu0 0
    %2303 = vmatprep.mubr.bf16.mxu0 0
    %2304 = vmatmul.mubr.bf16.gmra.mrb[0].mxu0 %v2263
    %v2305 = vpop.f32.mrb[0].mxu0
    %v2306 = vadd.f32 0.0, %v2305
    %v2307 = vpop.f32.mrb[0].mxu0
    %v2308 = vpop.f32.mrb[0].mxu0
    %v2309 = vpop.f32.mrb[0].mxu0
    %2310 = vdwg.mxu0
    %v2312 = vsel %vm695, %v2181, 0
    %v2315 = vsel %vm695, %v2072, 0
    %v2318 = vsel %vm695, %v2073, 0
    %2320 = vmatprep.subr.bf16.mxu0 0
    %2321 = vmatpush1.bf16.xpose.msra.mxu0 %v2315
    %2322 = vmatprep.subr.bf16.mxu0 0
    %2323 = vmatpush1.bf16.xpose.msra.mxu0 %v2318
    %2324 = vmatprep.subr.bf16.mxu0 0
    %2325 = vmatpush1.bf16.xpose.msra.mxu0 0
    %2326 = vmatprep.subr.bf16.mxu0 0
    %2327 = vmatpush1.bf16.xpose.msra.mxu0 0
    %2328 = vmatprep.subr.bf16.mxu0 0
    %2329 = vmatpush1.bf16.xpose.msra.mxu0 0
    %2330 = vmatprep.subr.bf16.mxu0 0
    %2331 = vmatpush1.bf16.xpose.msra.mxu0 0
    %2332 = vmatprep.subr.bf16.mxu0 0
    %2333 = vmatpush1.bf16.xpose.msra.mxu0 0
    %2334 = vmatprep.subr.bf16.mxu0 0
    %2335 = vmatpush1.bf16.xpose.msra.mxu0 0
    %2336 = vmatprep.subr.bf16.mxu0 0
    %2337 = vmatpush1.bf16.xpose.msra.mxu0 0
    %2338 = vmatprep.subr.bf16.mxu0 0
    %2339 = vmatpush1.bf16.xpose.msra.mxu0 0
    %2340 = vmatprep.subr.bf16.mxu0 0
    %2341 = vmatpush1.bf16.xpose.msra.mxu0 0
    %2342 = vmatprep.subr.bf16.mxu0 0
    %2343 = vmatpush1.bf16.xpose.msra.mxu0 0
    %2344 = vmatprep.subr.bf16.mxu0 0
    %2345 = vmatpush1.bf16.xpose.msra.mxu0 0
    %2346 = vmatprep.subr.bf16.mxu0 0
    %2347 = vmatpush1.bf16.xpose.msra.mxu0 0
    %2348 = vmatprep.subr.bf16.mxu0 0
    %2349 = vmatpush1.bf16.xpose.msra.mxu0 0
    %2350 = vmatprep.subr.bf16.mxu0 0
    %2351 = vmatpush1.bf16.xpose.msra.mxu0 0
    %2352 = vmatprep.mubr.bf16.mxu0 0
    %2353 = vmatmul.mubr.bf16.gmra.mrb[0].mxu0 %v2312
    %v2354 = vpop.f32.mrb[0].mxu0
    %v2355 = vadd.f32 0.0, %v2354
    %v2356 = vpop.f32.mrb[0].mxu0
    %v2357 = vpop.f32.mrb[0].mxu0
    %v2358 = vpop.f32.mrb[0].mxu0
    %2359 = vdwg.mxu0
    %v2361 = vsel %vm695, %v2183, 0
    %v2364 = vsel %vm695, %v2199, 0
    %v2367 = vsel %vm695, %v2201, 0
    %2369 = vmatprep.subr.bf16.mxu0 0
    %2370 = vmatpush1.bf16.xpose.msra.mxu0 %v2364
    %2371 = vmatprep.subr.bf16.mxu0 0
    %2372 = vmatpush1.bf16.xpose.msra.mxu0 %v2367
    %2373 = vmatprep.subr.bf16.mxu0 0
    %2374 = vmatpush1.bf16.xpose.msra.mxu0 0
    %2375 = vmatprep.subr.bf16.mxu0 0
    %2376 = vmatpush1.bf16.xpose.msra.mxu0 0
    %2377 = vmatprep.subr.bf16.mxu0 0
    %2378 = vmatpush1.bf16.xpose.msra.mxu0 0
    %2379 = vmatprep.subr.bf16.mxu0 0
    %2380 = vmatpush1.bf16.xpose.msra.mxu0 0
    %2381 = vmatprep.subr.bf16.mxu0 0
    %2382 = vmatpush1.bf16.xpose.msra.mxu0 0
    %2383 = vmatprep.subr.bf16.mxu0 0
    %2384 = vmatpush1.bf16.xpose.msra.mxu0 0
    %2385 = vmatprep.subr.bf16.mxu0 0
    %2386 = vmatpush1.bf16.xpose.msra.mxu0 0
    %2387 = vmatprep.subr.bf16.mxu0 0
    %2388 = vmatpush1.bf16.xpose.msra.mxu0 0
    %2389 = vmatprep.subr.bf16.mxu0 0
    %2390 = vmatpush1.bf16.xpose.msra.mxu0 0
    %2391 = vmatprep.subr.bf16.mxu0 0
    %2392 = vmatpush1.bf16.xpose.msra.mxu0 0
    %2393 = vmatprep.subr.bf16.mxu0 0
    %2394 = vmatpush1.bf16.xpose.msra.mxu0 0
    %2395 = vmatprep.subr.bf16.mxu0 0
    %2396 = vmatpush1.bf16.xpose.msra.mxu0 0
    %2397 = vmatprep.subr.bf16.mxu0 0
    %2398 = vmatpush1.bf16.xpose.msra.mxu0 0
    %2399 = vmatprep.subr.bf16.mxu0 0
    %2400 = vmatpush1.bf16.xpose.msra.mxu0 0
    %2401 = vmatprep.mubr.bf16.mxu0 0
    %2402 = vmatmul.mubr.bf16.gmra.mrb[0].mxu0 %v2361
    %v2403 = vpop.f32.mrb[0].mxu0
    %v2404 = vadd.f32 0.0, %v2403
    %v2405 = vpop.f32.mrb[0].mxu0
    %v2406 = vpop.f32.mrb[0].mxu0
    %v2407 = vpop.f32.mrb[0].mxu0
    %2408 = vdwg.mxu0
    %v2410 = vsel %vm695, %v2185, 0
    %v2413 = vsel %vm695, %v2203, 0
    %v2416 = vsel %vm695, %v2205, 0
    %2418 = vmatprep.subr.bf16.mxu0 0
    %2419 = vmatpush1.bf16.xpose.msra.mxu0 %v2413
    %2420 = vmatprep.subr.bf16.mxu0 0
    %2421 = vmatpush1.bf16.xpose.msra.mxu0 %v2416
    %2422 = vmatprep.subr.bf16.mxu0 0
    %2423 = vmatpush1.bf16.xpose.msra.mxu0 0
    %2424 = vmatprep.subr.bf16.mxu0 0
    %2425 = vmatpush1.bf16.xpose.msra.mxu0 0
    %2426 = vmatprep.subr.bf16.mxu0 0
    %2427 = vmatpush1.bf16.xpose.msra.mxu0 0
    %2428 = vmatprep.subr.bf16.mxu0 0
    %2429 = vmatpush1.bf16.xpose.msra.mxu0 0
    %2430 = vmatprep.subr.bf16.mxu0 0
    %2431 = vmatpush1.bf16.xpose.msra.mxu0 0
    %2432 = vmatprep.subr.bf16.mxu0 0
    %2433 = vmatpush1.bf16.xpose.msra.mxu0 0
    %2434 = vmatprep.subr.bf16.mxu0 0
    %2435 = vmatpush1.bf16.xpose.msra.mxu0 0
    %2436 = vmatprep.subr.bf16.mxu0 0
    %2437 = vmatpush1.bf16.xpose.msra.mxu0 0
    %2438 = vmatprep.subr.bf16.mxu0 0
    %2439 = vmatpush1.bf16.xpose.msra.mxu0 0
    %2440 = vmatprep.subr.bf16.mxu0 0
    %2441 = vmatpush1.bf16.xpose.msra.mxu0 0
    %2442 = vmatprep.subr.bf16.mxu0 0
    %2443 = vmatpush1.bf16.xpose.msra.mxu0 0
    %2444 = vmatprep.subr.bf16.mxu0 0
    %2445 = vmatpush1.bf16.xpose.msra.mxu0 0
    %2446 = vmatprep.subr.bf16.mxu0 0
    %2447 = vmatpush1.bf16.xpose.msra.mxu0 0
    %2448 = vmatprep.subr.bf16.mxu0 0
    %2449 = vmatpush1.bf16.xpose.msra.mxu0 0
    %2450 = vmatprep.mubr.bf16.mxu0 0
    %2451 = vmatmul.mubr.bf16.gmra.mrb[0].mxu0 %v2410
    %v2452 = vpop.f32.mrb[0].mxu0
    %v2453 = vadd.f32 0.0, %v2452
    %v2454 = vpop.f32.mrb[0].mxu0
    %v2455 = vpop.f32.mrb[0].mxu0
    %v2456 = vpop.f32.mrb[0].mxu0
    %2457 = vdwg.mxu0
    %v2459 = vsel %vm695, %v2187, 0
    %v2462 = vsel %vm695, %v2207, 0
    %v2465 = vsel %vm695, %v2209, 0
    %2467 = vmatprep.subr.bf16.mxu0 0
    %2468 = vmatpush1.bf16.xpose.msra.mxu0 %v2462
    %2469 = vmatprep.subr.bf16.mxu0 0
    %2470 = vmatpush1.bf16.xpose.msra.mxu0 %v2465
    %2471 = vmatprep.subr.bf16.mxu0 0
    %2472 = vmatpush1.bf16.xpose.msra.mxu0 0
    %2473 = vmatprep.subr.bf16.mxu0 0
    %2474 = vmatpush1.bf16.xpose.msra.mxu0 0
    %2475 = vmatprep.subr.bf16.mxu0 0
    %2476 = vmatpush1.bf16.xpose.msra.mxu0 0
    %2477 = vmatprep.subr.bf16.mxu0 0
    %2478 = vmatpush1.bf16.xpose.msra.mxu0 0
    %2479 = vmatprep.subr.bf16.mxu0 0
    %2480 = vmatpush1.bf16.xpose.msra.mxu0 0
    %2481 = vmatprep.subr.bf16.mxu0 0
    %2482 = vmatpush1.bf16.xpose.msra.mxu0 0
    %2483 = vmatprep.subr.bf16.mxu0 0
    %2484 = vmatpush1.bf16.xpose.msra.mxu0 0
    %2485 = vmatprep.subr.bf16.mxu0 0
    %2486 = vmatpush1.bf16.xpose.msra.mxu0 0
    %2487 = vmatprep.subr.bf16.mxu0 0
    %2488 = vmatpush1.bf16.xpose.msra.mxu0 0
    %2489 = vmatprep.subr.bf16.mxu0 0
    %2490 = vmatpush1.bf16.xpose.msra.mxu0 0
    %2491 = vmatprep.subr.bf16.mxu0 0
    %2492 = vmatpush1.bf16.xpose.msra.mxu0 0
    %2493 = vmatprep.subr.bf16.mxu0 0
    %2494 = vmatpush1.bf16.xpose.msra.mxu0 0
    %2495 = vmatprep.subr.bf16.mxu0 0
    %2496 = vmatpush1.bf16.xpose.msra.mxu0 0
    %2497 = vmatprep.subr.bf16.mxu0 0
    %2498 = vmatpush1.bf16.xpose.msra.mxu0 0
    %2499 = vmatprep.mubr.bf16.mxu0 0
    %2500 = vmatmul.mubr.bf16.gmra.mrb[0].mxu0 %v2459
    %v2501 = vpop.f32.mrb[0].mxu0
    %v2502 = vadd.f32 0.0, %v2501
    %v2503 = vpop.f32.mrb[0].mxu0
    %v2504 = vpop.f32.mrb[0].mxu0
    %v2505 = vpop.f32.mrb[0].mxu0
    %2506 = vdwg.mxu0
    %v2508 = vsel %vm695, %v2189, 0
    %v2511 = vsel %vm695, %v2211, 0
    %v2514 = vsel %vm695, %v2213, 0
    %2516 = vmatprep.subr.bf16.mxu0 0
    %2517 = vmatpush1.bf16.xpose.msra.mxu0 %v2511
    %2518 = vmatprep.subr.bf16.mxu0 0
    %2519 = vmatpush1.bf16.xpose.msra.mxu0 %v2514
    %2520 = vmatprep.subr.bf16.mxu0 0
    %2521 = vmatpush1.bf16.xpose.msra.mxu0 0
    %2522 = vmatprep.subr.bf16.mxu0 0
    %2523 = vmatpush1.bf16.xpose.msra.mxu0 0
    %2524 = vmatprep.subr.bf16.mxu0 0
    %2525 = vmatpush1.bf16.xpose.msra.mxu0 0
    %2526 = vmatprep.subr.bf16.mxu0 0
    %2527 = vmatpush1.bf16.xpose.msra.mxu0 0
    %2528 = vmatprep.subr.bf16.mxu0 0
    %2529 = vmatpush1.bf16.xpose.msra.mxu0 0
    %2530 = vmatprep.subr.bf16.mxu0 0
    %2531 = vmatpush1.bf16.xpose.msra.mxu0 0
    %2532 = vmatprep.subr.bf16.mxu0 0
    %2533 = vmatpush1.bf16.xpose.msra.mxu0 0
    %2534 = vmatprep.subr.bf16.mxu0 0
    %2535 = vmatpush1.bf16.xpose.msra.mxu0 0
    %2536 = vmatprep.subr.bf16.mxu0 0
    %2537 = vmatpush1.bf16.xpose.msra.mxu0 0
    %2538 = vmatprep.subr.bf16.mxu0 0
    %2539 = vmatpush1.bf16.xpose.msra.mxu0 0
    %2540 = vmatprep.subr.bf16.mxu0 0
    %2541 = vmatpush1.bf16.xpose.msra.mxu0 0
    %2542 = vmatprep.subr.bf16.mxu0 0
    %2543 = vmatpush1.bf16.xpose.msra.mxu0 0
    %2544 = vmatprep.subr.bf16.mxu0 0
    %2545 = vmatpush1.bf16.xpose.msra.mxu0 0
    %2546 = vmatprep.subr.bf16.mxu0 0
    %2547 = vmatpush1.bf16.xpose.msra.mxu0 0
    %2548 = vmatprep.mubr.bf16.mxu0 0
    %2549 = vmatmul.mubr.bf16.gmra.mrb[0].mxu0 %v2508
    %v2550 = vpop.f32.mrb[0].mxu0
    %v2551 = vadd.f32 0.0, %v2550
    %v2552 = vpop.f32.mrb[0].mxu0
    %v2553 = vpop.f32.mrb[0].mxu0
    %v2554 = vpop.f32.mrb[0].mxu0
    %2555 = vdwg.mxu0
    %v2557 = vsel %vm695, %v2191, 0
    %v2560 = vsel %vm695, %v2215, 0
    %v2563 = vsel %vm695, %v2217, 0
    %2565 = vmatprep.subr.bf16.mxu0 0
    %2566 = vmatpush1.bf16.xpose.msra.mxu0 %v2560
    %2567 = vmatprep.subr.bf16.mxu0 0
    %2568 = vmatpush1.bf16.xpose.msra.mxu0 %v2563
    %2569 = vmatprep.subr.bf16.mxu0 0
    %2570 = vmatpush1.bf16.xpose.msra.mxu0 0
    %2571 = vmatprep.subr.bf16.mxu0 0
    %2572 = vmatpush1.bf16.xpose.msra.mxu0 0
    %2573 = vmatprep.subr.bf16.mxu0 0
    %2574 = vmatpush1.bf16.xpose.msra.mxu0 0
    %2575 = vmatprep.subr.bf16.mxu0 0
    %2576 = vmatpush1.bf16.xpose.msra.mxu0 0
    %2577 = vmatprep.subr.bf16.mxu0 0
    %2578 = vmatpush1.bf16.xpose.msra.mxu0 0
    %2579 = vmatprep.subr.bf16.mxu0 0
    %2580 = vmatpush1.bf16.xpose.msra.mxu0 0
    %2581 = vmatprep.subr.bf16.mxu0 0
    %2582 = vmatpush1.bf16.xpose.msra.mxu0 0
    %2583 = vmatprep.subr.bf16.mxu0 0
    %2584 = vmatpush1.bf16.xpose.msra.mxu0 0
    %2585 = vmatprep.subr.bf16.mxu0 0
    %2586 = vmatpush1.bf16.xpose.msra.mxu0 0
    %2587 = vmatprep.subr.bf16.mxu0 0
    %2588 = vmatpush1.bf16.xpose.msra.mxu0 0
    %2589 = vmatprep.subr.bf16.mxu0 0
    %2590 = vmatpush1.bf16.xpose.msra.mxu0 0
    %2591 = vmatprep.subr.bf16.mxu0 0
    %2592 = vmatpush1.bf16.xpose.msra.mxu0 0
    %2593 = vmatprep.subr.bf16.mxu0 0
    %2594 = vmatpush1.bf16.xpose.msra.mxu0 0
    %2595 = vmatprep.subr.bf16.mxu0 0
    %2596 = vmatpush1.bf16.xpose.msra.mxu0 0
    %2597 = vmatprep.mubr.bf16.mxu0 0
    %2598 = vmatmul.mubr.bf16.gmra.mrb[0].mxu0 %v2557
    %v2599 = vpop.f32.mrb[0].mxu0
    %v2600 = vadd.f32 0.0, %v2599
    %v2601 = vpop.f32.mrb[0].mxu0
    %v2602 = vpop.f32.mrb[0].mxu0
    %v2603 = vpop.f32.mrb[0].mxu0
    %2604 = vdwg.mxu0
    %v2606 = vsel %vm695, %v2193, 0
    %v2609 = vsel %vm695, %v2219, 0
    %v2612 = vsel %vm695, %v2221, 0
    %2614 = vmatprep.subr.bf16.mxu0 0
    %2615 = vmatpush1.bf16.xpose.msra.mxu0 %v2609
    %2616 = vmatprep.subr.bf16.mxu0 0
    %2617 = vmatpush1.bf16.xpose.msra.mxu0 %v2612
    %2618 = vmatprep.subr.bf16.mxu0 0
    %2619 = vmatpush1.bf16.xpose.msra.mxu0 0
    %2620 = vmatprep.subr.bf16.mxu0 0
    %2621 = vmatpush1.bf16.xpose.msra.mxu0 0
    %2622 = vmatprep.subr.bf16.mxu0 0
    %2623 = vmatpush1.bf16.xpose.msra.mxu0 0
    %2624 = vmatprep.subr.bf16.mxu0 0
    %2625 = vmatpush1.bf16.xpose.msra.mxu0 0
    %2626 = vmatprep.subr.bf16.mxu0 0
    %2627 = vmatpush1.bf16.xpose.msra.mxu0 0
    %2628 = vmatprep.subr.bf16.mxu0 0
    %2629 = vmatpush1.bf16.xpose.msra.mxu0 0
    %2630 = vmatprep.subr.bf16.mxu0 0
    %2631 = vmatpush1.bf16.xpose.msra.mxu0 0
    %2632 = vmatprep.subr.bf16.mxu0 0
    %2633 = vmatpush1.bf16.xpose.msra.mxu0 0
    %2634 = vmatprep.subr.bf16.mxu0 0
    %2635 = vmatpush1.bf16.xpose.msra.mxu0 0
    %2636 = vmatprep.subr.bf16.mxu0 0
    %2637 = vmatpush1.bf16.xpose.msra.mxu0 0
    %2638 = vmatprep.subr.bf16.mxu0 0
    %2639 = vmatpush1.bf16.xpose.msra.mxu0 0
    %2640 = vmatprep.subr.bf16.mxu0 0
    %2641 = vmatpush1.bf16.xpose.msra.mxu0 0
    %2642 = vmatprep.subr.bf16.mxu0 0
    %2643 = vmatpush1.bf16.xpose.msra.mxu0 0
    %2644 = vmatprep.subr.bf16.mxu0 0
    %2645 = vmatpush1.bf16.xpose.msra.mxu0 0
    %2646 = vmatprep.mubr.bf16.mxu0 0
    %2647 = vmatmul.mubr.bf16.gmra.mrb[0].mxu0 %v2606
    %v2648 = vpop.f32.mrb[0].mxu0
    %v2649 = vadd.f32 0.0, %v2648
    %v2650 = vpop.f32.mrb[0].mxu0
    %v2651 = vpop.f32.mrb[0].mxu0
    %v2652 = vpop.f32.mrb[0].mxu0
    %2653 = vdwg.mxu0
    %v2654 = vsel %vm390, %v2306, -inf
    %2655 = vmax.xlane.f32.xlu0 %v2654
    %v2656 = vpop.xlane.xlu0 %2655
    %v2657 = vsel %vm390, %v2355, -inf
    %2658 = vmax.xlane.f32.xlu0 %v2657
    %v2659 = vpop.xlane.xlu0 %2658
    %v2660 = vsel %vm390, %v2404, -inf
    %2661 = vmax.xlane.f32.xlu0 %v2660
    %v2662 = vpop.xlane.xlu0 %2661
    %v2663 = vsel %vm390, %v2453, -inf
    %2664 = vmax.xlane.f32.xlu0 %v2663
    %v2665 = vpop.xlane.xlu0 %2664
    %v2666 = vsel %vm390, %v2502, -inf
    %2667 = vmax.xlane.f32.xlu0 %v2666
    %v2668 = vpop.xlane.xlu0 %2667
    %v2669 = vsel %vm390, %v2551, -inf
    %2670 = vmax.xlane.f32.xlu0 %v2669
    %v2671 = vpop.xlane.xlu0 %2670
    %v2672 = vsel %vm390, %v2600, -inf
    %2673 = vmax.xlane.f32.xlu0 %v2672
    %v2674 = vpop.xlane.xlu0 %2673
    %v2675 = vsel %vm390, %v2649, -inf
    %2676 = vmax.xlane.f32.xlu0 %v2675
    %v2677 = vpop.xlane.xlu0 %2676
    %v2678 = vsub.f32 %v2306, %v2656
    %v2679 = vsub.f32 %v2355, %v2659
    %v2680 = vsub.f32 %v2404, %v2662
    %v2681 = vsub.f32 %v2453, %v2665
    %v2682 = vsub.f32 %v2502, %v2668
    %v2683 = vsub.f32 %v2551, %v2671
    %v2684 = vsub.f32 %v2600, %v2674
    %v2685 = vsub.f32 %v2649, %v2677
    %v2686 = vmul.f32 %v2678, 1.442695
    %v2687 = vpow.pop %v2686
    %v2688 = vmul.f32 %v2679, 1.442695
    %v2689 = vpow.pop %v2688
    %v2690 = vmul.f32 %v2680, 1.442695
    %v2691 = vpow.pop %v2690
    %v2692 = vmul.f32 %v2681, 1.442695
    %v2693 = vpow.pop %v2692
    %v2694 = vmul.f32 %v2682, 1.442695
    %v2695 = vpow.pop %v2694
    %v2696 = vmul.f32 %v2683, 1.442695
    %v2697 = vpow.pop %v2696
    %v2698 = vmul.f32 %v2684, 1.442695
    %v2699 = vpow.pop %v2698
    %v2700 = vmul.f32 %v2685, 1.442695
    %v2701 = vpow.pop %v2700
    %v2702 = vsel %vm390, %v2687, 0.0
    %2703 = vadd.xlane.f32.xlu0 %v2702
    %v2704 = vpop.xlane.xlu0 %2703
    %v2705 = vsel %vm390, %v2689, 0.0
    %2706 = vadd.xlane.f32.xlu0 %v2705
    %v2707 = vpop.xlane.xlu0 %2706
    %v2708 = vsel %vm390, %v2691, 0.0
    %2709 = vadd.xlane.f32.xlu0 %v2708
    %v2710 = vpop.xlane.xlu0 %2709
    %v2711 = vsel %vm390, %v2693, 0.0
    %2712 = vadd.xlane.f32.xlu0 %v2711
    %v2713 = vpop.xlane.xlu0 %2712
    %v2714 = vsel %vm390, %v2695, 0.0
    %2715 = vadd.xlane.f32.xlu0 %v2714
    %v2716 = vpop.xlane.xlu0 %2715
    %v2717 = vsel %vm390, %v2697, 0.0
    %2718 = vadd.xlane.f32.xlu0 %v2717
    %v2719 = vpop.xlane.xlu0 %2718
    %v2720 = vsel %vm390, %v2699, 0.0
    %2721 = vadd.xlane.f32.xlu0 %v2720
    %v2722 = vpop.xlane.xlu0 %2721
    %v2723 = vsel %vm390, %v2701, 0.0
    %2724 = vadd.xlane.f32.xlu0 %v2723
    %v2725 = vpop.xlane.xlu0 %2724
    %v2726 = vrcp.pop %v2704
    %v2727 = vrcp.pop %v2707
    %v2728 = vrcp.pop %v2710
    %v2729 = vrcp.pop %v2713
    %v2730 = vrcp.pop %v2716
    %v2731 = vrcp.pop %v2719
    %v2732 = vrcp.pop %v2722
    %v2733 = vrcp.pop %v2725
    %v2734 = vmul.f32 %v2687, %v2726
    %v2735 = vmul.f32 %v2689, %v2727
    %v2736 = vmul.f32 %v2691, %v2728
    %v2737 = vmul.f32 %v2693, %v2729
    %v2738 = vmul.f32 %v2695, %v2730
    %v2739 = vmul.f32 %v2697, %v2731
    %v2740 = vmul.f32 %v2699, %v2732
    %v2741 = vmul.f32 %v2701, %v2733
    %v2742 = vpack.c.bf16 %v2734, %v2734
    %v2743 = vpack.c.bf16 %v2735, %v2735
    %v2744 = vpack.c.bf16 %v2736, %v2736
    %v2745 = vpack.c.bf16 %v2737, %v2737
    %v2746 = vpack.c.bf16 %v2738, %v2738
    %v2747 = vpack.c.bf16 %v2739, %v2739
    %v2748 = vpack.c.bf16 %v2740, %v2740
    %v2749 = vpack.c.bf16 %v2741, %v2741
    %v2751 = vsel %vm390, %v2742, 0
    %2753 = vmatprep.subr.bf16.mxu0 0
    %2754 = vmatpush1.bf16.msra.mxu0 %v2173
    %2755 = vmatprep.subr.bf16.mxu0 0
    %2756 = vmatpush1.bf16.msra.mxu0 %v2174
    %2757 = vmatprep.subr.bf16.mxu0 0
    %2758 = vmatpush1.bf16.msra.mxu0 0
    %2759 = vmatprep.subr.bf16.mxu0 0
    %2760 = vmatpush1.bf16.msra.mxu0 0
    %2761 = vmatprep.subr.bf16.mxu0 0
    %2762 = vmatpush1.bf16.msra.mxu0 0
    %2763 = vmatprep.subr.bf16.mxu0 0
    %2764 = vmatpush1.bf16.msra.mxu0 0
    %2765 = vmatprep.subr.bf16.mxu0 0
    %2766 = vmatpush1.bf16.msra.mxu0 0
    %2767 = vmatprep.subr.bf16.mxu0 0
    %2768 = vmatpush1.bf16.msra.mxu0 0
    %2769 = vmatprep.subr.bf16.mxu0 0
    %2770 = vmatpush1.bf16.msra.mxu0 0
    %2771 = vmatprep.subr.bf16.mxu0 0
    %2772 = vmatpush1.bf16.msra.mxu0 0
    %2773 = vmatprep.subr.bf16.mxu0 0
    %2774 = vmatpush1.bf16.msra.mxu0 0
    %2775 = vmatprep.subr.bf16.mxu0 0
    %2776 = vmatpush1.bf16.msra.mxu0 0
    %2777 = vmatprep.subr.bf16.mxu0 0
    %2778 = vmatpush1.bf16.msra.mxu0 0
    %2779 = vmatprep.subr.bf16.mxu0 0
    %2780 = vmatpush1.bf16.msra.mxu0 0
    %2781 = vmatprep.subr.bf16.mxu0 0
    %2782 = vmatpush1.bf16.msra.mxu0 0
    %2783 = vmatprep.subr.bf16.mxu0 0
    %2784 = vmatpush1.bf16.msra.mxu0 0
    %2785 = vmatprep.mubr.bf16.mxu0 0
    %2786 = vmatmul.mubr.bf16.gmra.mrb[0].mxu0 %v2751
    %v2787 = vpop.f32.mrb[0].mxu0
    %v2788 = vadd.f32 0.0, %v2787
    %v2789 = vpop.f32.mrb[0].mxu0
    %v2790 = vpop.f32.mrb[0].mxu0
    %v2791 = vpop.f32.mrb[0].mxu0
    %2792 = vdwg.mxu0
    %v2794 = vsel %vm390, %v2743, 0
    %2796 = vmatprep.subr.bf16.mxu0 0
    %2797 = vmatpush1.bf16.msra.mxu0 %v2175
    %2798 = vmatprep.subr.bf16.mxu0 0
    %2799 = vmatpush1.bf16.msra.mxu0 %v2176
    %2800 = vmatprep.subr.bf16.mxu0 0
    %2801 = vmatpush1.bf16.msra.mxu0 0
    %2802 = vmatprep.subr.bf16.mxu0 0
    %2803 = vmatpush1.bf16.msra.mxu0 0
    %2804 = vmatprep.subr.bf16.mxu0 0
    %2805 = vmatpush1.bf16.msra.mxu0 0
    %2806 = vmatprep.subr.bf16.mxu0 0
    %2807 = vmatpush1.bf16.msra.mxu0 0
    %2808 = vmatprep.subr.bf16.mxu0 0
    %2809 = vmatpush1.bf16.msra.mxu0 0
    %2810 = vmatprep.subr.bf16.mxu0 0
    %2811 = vmatpush1.bf16.msra.mxu0 0
    %2812 = vmatprep.subr.bf16.mxu0 0
    %2813 = vmatpush1.bf16.msra.mxu0 0
    %2814 = vmatprep.subr.bf16.mxu0 0
    %2815 = vmatpush1.bf16.msra.mxu0 0
    %2816 = vmatprep.subr.bf16.mxu0 0
    %2817 = vmatpush1.bf16.msra.mxu0 0
    %2818 = vmatprep.subr.bf16.mxu0 0
    %2819 = vmatpush1.bf16.msra.mxu0 0
    %2820 = vmatprep.subr.bf16.mxu0 0
    %2821 = vmatpush1.bf16.msra.mxu0 0
    %2822 = vmatprep.subr.bf16.mxu0 0
    %2823 = vmatpush1.bf16.msra.mxu0 0
    %2824 = vmatprep.subr.bf16.mxu0 0
    %2825 = vmatpush1.bf16.msra.mxu0 0
    %2826 = vmatprep.subr.bf16.mxu0 0
    %2827 = vmatpush1.bf16.msra.mxu0 0
    %2828 = vmatprep.mubr.bf16.mxu0 0
    %2829 = vmatmul.mubr.bf16.gmra.mrb[0].mxu0 %v2794
    %v2830 = vpop.f32.mrb[0].mxu0
    %v2831 = vadd.f32 0.0, %v2830
    %v2832 = vpop.f32.mrb[0].mxu0
    %v2833 = vpop.f32.mrb[0].mxu0
    %v2834 = vpop.f32.mrb[0].mxu0
    %2835 = vdwg.mxu0
    %v2837 = vsel %vm390, %v2744, 0
    %2839 = vmatprep.subr.bf16.mxu0 0
    %2840 = vmatpush1.bf16.msra.mxu0 %v2227
    %2841 = vmatprep.subr.bf16.mxu0 0
    %2842 = vmatpush1.bf16.msra.mxu0 %v2229
    %2843 = vmatprep.subr.bf16.mxu0 0
    %2844 = vmatpush1.bf16.msra.mxu0 0
    %2845 = vmatprep.subr.bf16.mxu0 0
    %2846 = vmatpush1.bf16.msra.mxu0 0
    %2847 = vmatprep.subr.bf16.mxu0 0
    %2848 = vmatpush1.bf16.msra.mxu0 0
    %2849 = vmatprep.subr.bf16.mxu0 0
    %2850 = vmatpush1.bf16.msra.mxu0 0
    %2851 = vmatprep.subr.bf16.mxu0 0
    %2852 = vmatpush1.bf16.msra.mxu0 0
    %2853 = vmatprep.subr.bf16.mxu0 0
    %2854 = vmatpush1.bf16.msra.mxu0 0
    %2855 = vmatprep.subr.bf16.mxu0 0
    %2856 = vmatpush1.bf16.msra.mxu0 0
    %2857 = vmatprep.subr.bf16.mxu0 0
    %2858 = vmatpush1.bf16.msra.mxu0 0
    %2859 = vmatprep.subr.bf16.mxu0 0
    %2860 = vmatpush1.bf16.msra.mxu0 0
    %2861 = vmatprep.subr.bf16.mxu0 0
    %2862 = vmatpush1.bf16.msra.mxu0 0
    %2863 = vmatprep.subr.bf16.mxu0 0
    %2864 = vmatpush1.bf16.msra.mxu0 0
    %2865 = vmatprep.subr.bf16.mxu0 0
    %2866 = vmatpush1.bf16.msra.mxu0 0
    %2867 = vmatprep.subr.bf16.mxu0 0
    %2868 = vmatpush1.bf16.msra.mxu0 0
    %2869 = vmatprep.subr.bf16.mxu0 0
    %2870 = vmatpush1.bf16.msra.mxu0 0
    %2871 = vmatprep.mubr.bf16.mxu0 0
    %2872 = vmatmul.mubr.bf16.gmra.mrb[0].mxu0 %v2837
    %v2873 = vpop.f32.mrb[0].mxu0
    %v2874 = vadd.f32 0.0, %v2873
    %v2875 = vpop.f32.mrb[0].mxu0
    %v2876 = vpop.f32.mrb[0].mxu0
    %v2877 = vpop.f32.mrb[0].mxu0
    %2878 = vdwg.mxu0
    %v2880 = vsel %vm390, %v2745, 0
    %2882 = vmatprep.subr.bf16.mxu0 0
    %2883 = vmatpush1.bf16.msra.mxu0 %v2231
    %2884 = vmatprep.subr.bf16.mxu0 0
    %2885 = vmatpush1.bf16.msra.mxu0 %v2233
    %2886 = vmatprep.subr.bf16.mxu0 0
    %2887 = vmatpush1.bf16.msra.mxu0 0
    %2888 = vmatprep.subr.bf16.mxu0 0
    %2889 = vmatpush1.bf16.msra.mxu0 0
    %2890 = vmatprep.subr.bf16.mxu0 0
    %2891 = vmatpush1.bf16.msra.mxu0 0
    %2892 = vmatprep.subr.bf16.mxu0 0
    %2893 = vmatpush1.bf16.msra.mxu0 0
    %2894 = vmatprep.subr.bf16.mxu0 0
    %2895 = vmatpush1.bf16.msra.mxu0 0
    %2896 = vmatprep.subr.bf16.mxu0 0
    %2897 = vmatpush1.bf16.msra.mxu0 0
    %2898 = vmatprep.subr.bf16.mxu0 0
    %2899 = vmatpush1.bf16.msra.mxu0 0
    %2900 = vmatprep.subr.bf16.mxu0 0
    %2901 = vmatpush1.bf16.msra.mxu0 0
    %2902 = vmatprep.subr.bf16.mxu0 0
    %2903 = vmatpush1.bf16.msra.mxu0 0
    %2904 = vmatprep.subr.bf16.mxu0 0
    %2905 = vmatpush1.bf16.msra.mxu0 0
    %2906 = vmatprep.subr.bf16.mxu0 0
    %2907 = vmatpush1.bf16.msra.mxu0 0
    %2908 = vmatprep.subr.bf16.mxu0 0
    %2909 = vmatpush1.bf16.msra.mxu0 0
    %2910 = vmatprep.subr.bf16.mxu0 0
    %2911 = vmatpush1.bf16.msra.mxu0 0
    %2912 = vmatprep.subr.bf16.mxu0 0
    %2913 = vmatpush1.bf16.msra.mxu0 0
    %2914 = vmatprep.mubr.bf16.mxu0 0
    %2915 = vmatmul.mubr.bf16.gmra.mrb[0].mxu0 %v2880
    %v2916 = vpop.f32.mrb[0].mxu0
    %v2917 = vadd.f32 0.0, %v2916
    %v2918 = vpop.f32.mrb[0].mxu0
    %v2919 = vpop.f32.mrb[0].mxu0
    %v2920 = vpop.f32.mrb[0].mxu0
    %2921 = vdwg.mxu0
    %v2923 = vsel %vm390, %v2746, 0
    %2925 = vmatprep.subr.bf16.mxu0 0
    %2926 = vmatpush1.bf16.msra.mxu0 %v2239
    %2927 = vmatprep.subr.bf16.mxu0 0
    %2928 = vmatpush1.bf16.msra.mxu0 %v2241
    %2929 = vmatprep.subr.bf16.mxu0 0
    %2930 = vmatpush1.bf16.msra.mxu0 0
    %2931 = vmatprep.subr.bf16.mxu0 0
    %2932 = vmatpush1.bf16.msra.mxu0 0
    %2933 = vmatprep.subr.bf16.mxu0 0
    %2934 = vmatpush1.bf16.msra.mxu0 0
    %2935 = vmatprep.subr.bf16.mxu0 0
    %2936 = vmatpush1.bf16.msra.mxu0 0
    %2937 = vmatprep.subr.bf16.mxu0 0
    %2938 = vmatpush1.bf16.msra.mxu0 0
    %2939 = vmatprep.subr.bf16.mxu0 0
    %2940 = vmatpush1.bf16.msra.mxu0 0
    %2941 = vmatprep.subr.bf16.mxu0 0
    %2942 = vmatpush1.bf16.msra.mxu0 0
    %2943 = vmatprep.subr.bf16.mxu0 0
    %2944 = vmatpush1.bf16.msra.mxu0 0
    %2945 = vmatprep.subr.bf16.mxu0 0
    %2946 = vmatpush1.bf16.msra.mxu0 0
    %2947 = vmatprep.subr.bf16.mxu0 0
    %2948 = vmatpush1.bf16.msra.mxu0 0
    %2949 = vmatprep.subr.bf16.mxu0 0
    %2950 = vmatpush1.bf16.msra.mxu0 0
    %2951 = vmatprep.subr.bf16.mxu0 0
    %2952 = vmatpush1.bf16.msra.mxu0 0
    %2953 = vmatprep.subr.bf16.mxu0 0
    %2954 = vmatpush1.bf16.msra.mxu0 0
    %2955 = vmatprep.subr.bf16.mxu0 0
    %2956 = vmatpush1.bf16.msra.mxu0 0
    %2957 = vmatprep.mubr.bf16.mxu0 0
    %2958 = vmatmul.mubr.bf16.gmra.mrb[0].mxu0 %v2923
    %v2959 = vpop.f32.mrb[0].mxu0
    %v2960 = vadd.f32 0.0, %v2959
    %v2961 = vpop.f32.mrb[0].mxu0
    %v2962 = vpop.f32.mrb[0].mxu0
    %v2963 = vpop.f32.mrb[0].mxu0
    %2964 = vdwg.mxu0
    %v2966 = vsel %vm390, %v2747, 0
    %2968 = vmatprep.subr.bf16.mxu0 0
    %2969 = vmatpush1.bf16.msra.mxu0 %v2243
    %2970 = vmatprep.subr.bf16.mxu0 0
    %2971 = vmatpush1.bf16.msra.mxu0 %v2245
    %2972 = vmatprep.subr.bf16.mxu0 0
    %2973 = vmatpush1.bf16.msra.mxu0 0
    %2974 = vmatprep.subr.bf16.mxu0 0
    %2975 = vmatpush1.bf16.msra.mxu0 0
    %2976 = vmatprep.subr.bf16.mxu0 0
    %2977 = vmatpush1.bf16.msra.mxu0 0
    %2978 = vmatprep.subr.bf16.mxu0 0
    %2979 = vmatpush1.bf16.msra.mxu0 0
    %2980 = vmatprep.subr.bf16.mxu0 0
    %2981 = vmatpush1.bf16.msra.mxu0 0
    %2982 = vmatprep.subr.bf16.mxu0 0
    %2983 = vmatpush1.bf16.msra.mxu0 0
    %2984 = vmatprep.subr.bf16.mxu0 0
    %2985 = vmatpush1.bf16.msra.mxu0 0
    %2986 = vmatprep.subr.bf16.mxu0 0
    %2987 = vmatpush1.bf16.msra.mxu0 0
    %2988 = vmatprep.subr.bf16.mxu0 0
    %2989 = vmatpush1.bf16.msra.mxu0 0
    %2990 = vmatprep.subr.bf16.mxu0 0
    %2991 = vmatpush1.bf16.msra.mxu0 0
    %2992 = vmatprep.subr.bf16.mxu0 0
    %2993 = vmatpush1.bf16.msra.mxu0 0
    %2994 = vmatprep.subr.bf16.mxu0 0
    %2995 = vmatpush1.bf16.msra.mxu0 0
    %2996 = vmatprep.subr.bf16.mxu0 0
    %2997 = vmatpush1.bf16.msra.mxu0 0
    %2998 = vmatprep.subr.bf16.mxu0 0
    %2999 = vmatpush1.bf16.msra.mxu0 0
    %3000 = vmatprep.mubr.bf16.mxu0 0
    %3001 = vmatmul.mubr.bf16.gmra.mrb[0].mxu0 %v2966
    %v3002 = vpop.f32.mrb[0].mxu0
    %v3003 = vadd.f32 0.0, %v3002
    %v3004 = vpop.f32.mrb[0].mxu0
    %v3005 = vpop.f32.mrb[0].mxu0
    %v3006 = vpop.f32.mrb[0].mxu0
    %3007 = vdwg.mxu0
    %v3009 = vsel %vm390, %v2748, 0
    %3011 = vmatprep.subr.bf16.mxu0 0
    %3012 = vmatpush1.bf16.msra.mxu0 %v2251
    %3013 = vmatprep.subr.bf16.mxu0 0
    %3014 = vmatpush1.bf16.msra.mxu0 %v2253
    %3015 = vmatprep.subr.bf16.mxu0 0
    %3016 = vmatpush1.bf16.msra.mxu0 0
    %3017 = vmatprep.subr.bf16.mxu0 0
    %3018 = vmatpush1.bf16.msra.mxu0 0
    %3019 = vmatprep.subr.bf16.mxu0 0
    %3020 = vmatpush1.bf16.msra.mxu0 0
    %3021 = vmatprep.subr.bf16.mxu0 0
    %3022 = vmatpush1.bf16.msra.mxu0 0
    %3023 = vmatprep.subr.bf16.mxu0 0
    %3024 = vmatpush1.bf16.msra.mxu0 0
    %3025 = vmatprep.subr.bf16.mxu0 0
    %3026 = vmatpush1.bf16.msra.mxu0 0
    %3027 = vmatprep.subr.bf16.mxu0 0
    %3028 = vmatpush1.bf16.msra.mxu0 0
    %3029 = vmatprep.subr.bf16.mxu0 0
    %3030 = vmatpush1.bf16.msra.mxu0 0
    %3031 = vmatprep.subr.bf16.mxu0 0
    %3032 = vmatpush1.bf16.msra.mxu0 0
    %3033 = vmatprep.subr.bf16.mxu0 0
    %3034 = vmatpush1.bf16.msra.mxu0 0
    %3035 = vmatprep.subr.bf16.mxu0 0
    %3036 = vmatpush1.bf16.msra.mxu0 0
    %3037 = vmatprep.subr.bf16.mxu0 0
    %3038 = vmatpush1.bf16.msra.mxu0 0
    %3039 = vmatprep.subr.bf16.mxu0 0
    %3040 = vmatpush1.bf16.msra.mxu0 0
    %3041 = vmatprep.subr.bf16.mxu0 0
    %3042 = vmatpush1.bf16.msra.mxu0 0
    %3043 = vmatprep.mubr.bf16.mxu0 0
    %3044 = vmatmul.mubr.bf16.gmra.mrb[0].mxu0 %v3009
    %v3045 = vpop.f32.mrb[0].mxu0
    %v3046 = vadd.f32 0.0, %v3045
    %v3047 = vpop.f32.mrb[0].mxu0
    %v3048 = vpop.f32.mrb[0].mxu0
    %v3049 = vpop.f32.mrb[0].mxu0
    %3050 = vdwg.mxu0
    %v3052 = vsel %vm390, %v2749, 0
    %3054 = vmatprep.subr.bf16.mxu0 0
    %3055 = vmatpush1.bf16.msra.mxu0 %v2255
    %3056 = vmatprep.subr.bf16.mxu0 0
    %3057 = vmatpush1.bf16.msra.mxu0 %v2257
    %3058 = vmatprep.subr.bf16.mxu0 0
    %3059 = vmatpush1.bf16.msra.mxu0 0
    %3060 = vmatprep.subr.bf16.mxu0 0
    %3061 = vmatpush1.bf16.msra.mxu0 0
    %3062 = vmatprep.subr.bf16.mxu0 0
    %3063 = vmatpush1.bf16.msra.mxu0 0
    %3064 = vmatprep.subr.bf16.mxu0 0
    %3065 = vmatpush1.bf16.msra.mxu0 0
    %3066 = vmatprep.subr.bf16.mxu0 0
    %3067 = vmatpush1.bf16.msra.mxu0 0
    %3068 = vmatprep.subr.bf16.mxu0 0
    %3069 = vmatpush1.bf16.msra.mxu0 0
    %3070 = vmatprep.subr.bf16.mxu0 0
    %3071 = vmatpush1.bf16.msra.mxu0 0
    %3072 = vmatprep.subr.bf16.mxu0 0
    %3073 = vmatpush1.bf16.msra.mxu0 0
    %3074 = vmatprep.subr.bf16.mxu0 0
    %3075 = vmatpush1.bf16.msra.mxu0 0
    %3076 = vmatprep.subr.bf16.mxu0 0
    %3077 = vmatpush1.bf16.msra.mxu0 0
    %3078 = vmatprep.subr.bf16.mxu0 0
    %3079 = vmatpush1.bf16.msra.mxu0 0
    %3080 = vmatprep.subr.bf16.mxu0 0
    %3081 = vmatpush1.bf16.msra.mxu0 0
    %3082 = vmatprep.subr.bf16.mxu0 0
    %3083 = vmatpush1.bf16.msra.mxu0 0
    %3084 = vmatprep.subr.bf16.mxu0 0
    %3085 = vmatpush1.bf16.msra.mxu0 0
    %3086 = vmatprep.mubr.bf16.mxu0 0
    %3087 = vmatmul.mubr.bf16.gmra.mrb[0].mxu0 %v3052
    %v3088 = vpop.f32.mrb[0].mxu0
    %v3089 = vadd.f32 0.0, %v3088
    %v3090 = vpop.f32.mrb[0].mxu0
    %v3091 = vpop.f32.mrb[0].mxu0
    %v3092 = vpop.f32.mrb[0].mxu0
    %3093 = vdwg.mxu0
    %3096 = vrot.lane.b32.xlu0 %v2874, 8
    %v3097 = vpop.permute.xlu0 %3096
    %3098 = vrot.lane.b32.xlu0 %v2917, 8
    %v3099 = vpop.permute.xlu0 %3098
    %3104 = vrot.lane.b32.xlu0 %v2960, 16
    %v3105 = vpop.permute.xlu0 %3104
    %3106 = vrot.lane.b32.xlu0 %v3003, 16
    %v3107 = vpop.permute.xlu0 %3106
    %3112 = vrot.lane.b32.xlu0 %v3046, 24
    %v3113 = vpop.permute.xlu0 %3112
    %3114 = vrot.lane.b32.xlu0 %v3089, 24
    %v3115 = vpop.permute.xlu0 %3114
    %v3118 = vsel %vm695, %v2788, %v3097
    %v3119 = vsel %vm695, %v2831, %v3099
    %v3120 = vsel %vm1555, %v3118, %v3105
    %v3121 = vsel %vm1555, %v3119, %v3107
    %v3122 = vsel %vm1558, %v3120, %v3113
    %v3123 = vsel %vm1558, %v3121, %v3115
    %v3124 = vpack.c.bf16 %v3123, %v3122
    %v3126 = vlaneseq
    %v3127 = vshrl.u32 %v3126, 7
    %v3128 = vsub.s32 0, %v3127
    %v3129 = vrot.slane %v1906, %v3128
    %v3135 = vunpack.c.l.b16 %v1902
    %v3136 = vunpack.c.l.b16 %v1903
    %v3137 = vunpack.c.l.b16 %v1904
    %v3138 = vunpack.c.l.b16 %v1905
    %v3139 = vpack.c.b16 %v3136, %v3135
    %v3140 = vpack.c.b16 %v3138, %v3137
    %v3144 = vsel %vm390, %v3124, 0
    %3146 = vmatprep.subr.bf16.mxu0 0
    %3147 = vmatpush1.bf16.msra.mxu0 %v3139
    %3148 = vmatprep.subr.bf16.mxu0 0
    %3149 = vmatpush1.bf16.msra.mxu0 %v3140
    %3150 = vmatprep.subr.bf16.mxu0 0
    %3151 = vmatpush1.bf16.msra.mxu0 0
    %3152 = vmatprep.subr.bf16.mxu0 0
    %3153 = vmatpush1.bf16.msra.mxu0 0
    %3154 = vmatprep.subr.bf16.mxu0 0
    %3155 = vmatpush1.bf16.msra.mxu0 0
    %3156 = vmatprep.subr.bf16.mxu0 0
    %3157 = vmatpush1.bf16.msra.mxu0 0
    %3158 = vmatprep.subr.bf16.mxu0 0
    %3159 = vmatpush1.bf16.msra.mxu0 0
    %3160 = vmatprep.subr.bf16.mxu0 0
    %3161 = vmatpush1.bf16.msra.mxu0 0
    %3162 = vmatprep.subr.bf16.mxu0 0
    %3163 = vmatpush1.bf16.msra.mxu0 0
    %3164 = vmatprep.subr.bf16.mxu0 0
    %3165 = vmatpush1.bf16.msra.mxu0 0
    %3166 = vmatprep.subr.bf16.mxu0 0
    %3167 = vmatpush1.bf16.msra.mxu0 0
    %3168 = vmatprep.subr.bf16.mxu0 0
    %3169 = vmatpush1.bf16.msra.mxu0 0
    %3170 = vmatprep.subr.bf16.mxu0 0
    %3171 = vmatpush1.bf16.msra.mxu0 0
    %3172 = vmatprep.subr.bf16.mxu0 0
    %3173 = vmatpush1.bf16.msra.mxu0 0
    %3174 = vmatprep.subr.bf16.mxu0 0
    %3175 = vmatpush1.bf16.msra.mxu0 0
    %3176 = vmatprep.subr.bf16.mxu0 0
    %3177 = vmatpush1.bf16.msra.mxu0 0
    %3178 = vmatprep.mubr.bf16.mxu0 0
    %3179 = vmatmul.mubr.bf16.gmra.mrb[0].mxu0 %v3144
    %v3180 = vpop.f32.mrb[0].mxu0
    %v3181 = vadd.f32 %v3129, %v3180
    %v3182 = vpop.f32.mrb[0].mxu0
    %v3183 = vpop.f32.mrb[0].mxu0
    %v3184 = vadd.f32 %v3129, %v3183
    %v3185 = vpop.f32.mrb[0].mxu0
    %3186 = vdwg.mxu0
    %v3187 = vadd.f32 %v1624, %v3181
    %v3188 = vadd.f32 %v1625, %v3184
    %v3189 = vld [vmem:[#allocation31] sm:$0x1]
    %v3190 = vld [vmem:[#allocation32] sm:$0x1]
    %v3191 = vsel %vm390, %v3187, 0.0
    %3192 = vadd.xlane.f32.xlu0 %v3191
    %v3193 = vpop.xlane.xlu0 %3192
    %v3194 = vsel %vm390, %v3188, 0.0
    %3195 = vadd.xlane.f32.xlu0 %v3194
    %v3196 = vpop.xlane.xlu0 %3195
    %v3197 = vmul.f32 %v3193, %v397
    %v3198 = vmul.f32 %v3196, %v397
    %v3199 = vsub.f32 %v3187, %v3197
    %v3200 = vsub.f32 %v3188, %v3198
    %v3201 = vmul.f32 %v3199, %v3199
    %v3202 = vmul.f32 %v3200, %v3200
    %v3203 = vsel %vm390, %v3201, 0.0
    %3204 = vadd.xlane.f32.xlu0 %v3203
    %v3205 = vpop.xlane.xlu0 %3204
    %v3206 = vsel %vm390, %v3202, 0.0
    %3207 = vadd.xlane.f32.xlu0 %v3206
    %v3208 = vpop.xlane.xlu0 %3207
    %v3209 = vmul.f32 %v3205, %v397
    %v3210 = vmul.f32 %v3208, %v397
    %v3211 = vadd.f32 %v3209, 1e-05
    %v3212 = vadd.f32 %v3210, 1e-05
    %v3213 = vrsqrt.pop %v3211
    %v3214 = vrsqrt.pop %v3212
    %v3215 = vmul.f32 %v3199, %v3213
    %v3216 = vmul.f32 %v3200, %v3214
    %v3218 = vlaneseq
    %v3219 = vshrl.u32 %v3218, 7
    %v3220 = vsub.s32 0, %v3219
    %v3221 = vrot.slane %v3189, %v3220
    %v3223 = vmul.f32 %v3215, %v3221
    %v3224 = vmul.f32 %v3216, %v3221
    %v3226 = vlaneseq
    %v3227 = vshrl.u32 %v3226, 7
    %v3228 = vsub.s32 0, %v3227
    %v3229 = vrot.slane %v3190, %v3228
    %v3231 = vadd.f32 %v3223, %v3229
    %v3232 = vadd.f32 %v3224, %v3229
    %v3233 = vpack.c.bf16 %v3232, %v3231
    %v3234 = vld [vmem:[%s63] sm:$0xf]
    %v3235 = vld [vmem:[%s63 + $0x4] sm:$0xf]
    %v3236 = vld [vmem:[%s63 + $0x8] sm:$0xf]
    %v3237 = vld [vmem:[%s63 + $0xc] sm:$0xf]
    %v3238 = vld [vmem:[%s65] sm:$0x1]
    %v3240 = vlaneseq
    %v3241 = vshrl.u32 %v3240, 7
    %v3242 = vsub.s32 0, %v3241
    %v3243 = vrot.slane %v3238, %v3242
    %v3249 = vunpack.c.l.b16 %v3234
    %v3250 = vunpack.c.l.b16 %v3235
    %v3251 = vunpack.c.l.b16 %v3236
    %v3252 = vunpack.c.l.b16 %v3237
    %v3253 = vpack.c.b16 %v3250, %v3249
    %v3254 = vpack.c.b16 %v3252, %v3251
    %v3258 = vsel %vm390, %v3233, 0
    %3260 = vmatprep.subr.bf16.mxu0 0
    %3261 = vmatpush1.bf16.msra.mxu0 %v3253
    %3262 = vmatprep.subr.bf16.mxu0 0
    %3263 = vmatpush1.bf16.msra.mxu0 %v3254
    %3264 = vmatprep.subr.bf16.mxu0 0
    %3265 = vmatpush1.bf16.msra.mxu0 0
    %3266 = vmatprep.subr.bf16.mxu0 0
    %3267 = vmatpush1.bf16.msra.mxu0 0
    %3268 = vmatprep.subr.bf16.mxu0 0
    %3269 = vmatpush1.bf16.msra.mxu0 0
    %3270 = vmatprep.subr.bf16.mxu0 0
    %3271 = vmatpush1.bf16.msra.mxu0 0
    %3272 = vmatprep.subr.bf16.mxu0 0
    %3273 = vmatpush1.bf16.msra.mxu0 0
    %3274 = vmatprep.subr.bf16.mxu0 0
    %3275 = vmatpush1.bf16.msra.mxu0 0
    %3276 = vmatprep.subr.bf16.mxu0 0
    %3277 = vmatpush1.bf16.msra.mxu0 0
    %3278 = vmatprep.subr.bf16.mxu0 0
    %3279 = vmatpush1.bf16.msra.mxu0 0
    %3280 = vmatprep.subr.bf16.mxu0 0
    %3281 = vmatpush1.bf16.msra.mxu0 0
    %3282 = vmatprep.subr.bf16.mxu0 0
    %3283 = vmatpush1.bf16.msra.mxu0 0
    %3284 = vmatprep.subr.bf16.mxu0 0
    %3285 = vmatpush1.bf16.msra.mxu0 0
    %3286 = vmatprep.subr.bf16.mxu0 0
    %3287 = vmatpush1.bf16.msra.mxu0 0
    %3288 = vmatprep.subr.bf16.mxu0 0
    %3289 = vmatpush1.bf16.msra.mxu0 0
    %3290 = vmatprep.subr.bf16.mxu0 0
    %3291 = vmatpush1.bf16.msra.mxu0 0
    %3292 = vmatprep.mubr.bf16.mxu0 0
    %3293 = vmatmul.mubr.bf16.gmra.mrb[0].mxu0 %v3258
    %v3294 = vpop.f32.mrb[0].mxu0
    %v3295 = vadd.f32 %v3243, %v3294
    %v3296 = vpop.f32.mrb[0].mxu0
    %v3297 = vpop.f32.mrb[0].mxu0
    %v3298 = vadd.f32 %v3243, %v3297
    %v3299 = vpop.f32.mrb[0].mxu0
    %3300 = vdwg.mxu0
    %v3301 = vmul.f32 %v3295, 0.5
    %v3302 = vmul.f32 %v3298, 0.5
    %v3303 = vmul.f32 %v3295, 0.044715
    %v3304 = vmul.f32 %v3298, 0.044715
    %v3305 = vmul.f32 %v3303, %v3295
    %v3306 = vmul.f32 %v3304, %v3298
    %v3307 = vmul.f32 %v3305, %v3295
    %v3308 = vmul.f32 %v3306, %v3298
    %v3309 = vadd.f32 %v3295, %v3307
    %v3310 = vadd.f32 %v3298, %v3308
    %v3311 = vmul.f32 %v3309, 0.7978846
    %v3312 = vmul.f32 %v3310, 0.7978846
    %v3313 = vtanh.pop %v3311
    %v3314 = vtanh.pop %v3312
    %v3315 = vadd.f32 %v3313, 1.0
    %v3316 = vadd.f32 %v3314, 1.0
    %v3317 = vmul.f32 %v3301, %v3315
    %v3318 = vmul.f32 %v3302, %v3316
    %v3319 = vpack.c.bf16 %v3318, %v3317
    %v3320 = vld [vmem:[%s67] sm:$0xf]
    %v3321 = vld [vmem:[%s67 + $0x4] sm:$0xf]
    %v3322 = vld [vmem:[%s67 + $0x8] sm:$0xf]
    %v3323 = vld [vmem:[%s67 + $0xc] sm:$0xf]
    %v3324 = vld [vmem:[%s67 + $0x10] sm:$0xf]
    %v3325 = vld [vmem:[%s67 + $0x14] sm:$0xf]
    %v3326 = vld [vmem:[%s67 + $0x18] sm:$0xf]
    %v3327 = vld [vmem:[%s67 + $0x1c] sm:$0xf]
    %v3328 = vld [vmem:[%s67 + $0x20] sm:$0xf]
    %v3329 = vld [vmem:[%s67 + $0x24] sm:$0xf]
    %v3330 = vld [vmem:[%s67 + $0x28] sm:$0xf]
    %v3331 = vld [vmem:[%s67 + $0x2c] sm:$0xf]
    %v3332 = vld [vmem:[%s67 + $0x30] sm:$0xf]
    %v3333 = vld [vmem:[%s67 + $0x34] sm:$0xf]
    %v3334 = vld [vmem:[%s67 + $0x38] sm:$0xf]
    %v3335 = vld [vmem:[%s67 + $0x3c] sm:$0xf]
    %v3336 = vld [vmem:[%s69] sm:$0x1]
    %v3338 = vlaneseq
    %v3339 = vshrl.u32 %v3338, 7
    %v3340 = vsub.s32 0, %v3339
    %v3341 = vrot.slane %v3336, %v3340
    %v3359 = vunpack.c.l.b16 %v3320
    %v3360 = vunpack.c.l.b16 %v3321
    %v3361 = vunpack.c.l.b16 %v3322
    %v3362 = vunpack.c.l.b16 %v3323
    %v3363 = vunpack.c.l.b16 %v3324
    %v3364 = vunpack.c.l.b16 %v3325
    %v3365 = vunpack.c.l.b16 %v3326
    %v3366 = vunpack.c.l.b16 %v3327
    %v3367 = vunpack.c.l.b16 %v3328
    %v3368 = vunpack.c.l.b16 %v3329
    %v3369 = vunpack.c.l.b16 %v3330
    %v3370 = vunpack.c.l.b16 %v3331
    %v3371 = vunpack.c.l.b16 %v3332
    %v3372 = vunpack.c.l.b16 %v3333
    %v3373 = vunpack.c.l.b16 %v3334
    %v3374 = vunpack.c.l.b16 %v3335
    %v3375 = vpack.c.b16 %v3360, %v3359
    %v3376 = vpack.c.b16 %v3362, %v3361
    %v3377 = vpack.c.b16 %v3364, %v3363
    %v3378 = vpack.c.b16 %v3366, %v3365
    %v3379 = vpack.c.b16 %v3368, %v3367
    %v3380 = vpack.c.b16 %v3370, %v3369
    %v3381 = vpack.c.b16 %v3372, %v3371
    %v3382 = vpack.c.b16 %v3374, %v3373
    %3391 = vmatprep.subr.bf16.mxu0 0
    %3392 = vmatpush1.bf16.msra.mxu0 %v3375
    %3393 = vmatprep.subr.bf16.mxu0 0
    %3394 = vmatpush1.bf16.msra.mxu0 %v3376
    %3395 = vmatprep.subr.bf16.mxu0 0
    %3396 = vmatpush1.bf16.msra.mxu0 %v3377
    %3397 = vmatprep.subr.bf16.mxu0 0
    %3398 = vmatpush1.bf16.msra.mxu0 %v3378
    %3399 = vmatprep.subr.bf16.mxu0 0
    %3400 = vmatpush1.bf16.msra.mxu0 %v3379
    %3401 = vmatprep.subr.bf16.mxu0 0
    %3402 = vmatpush1.bf16.msra.mxu0 %v3380
    %3403 = vmatprep.subr.bf16.mxu0 0
    %3404 = vmatpush1.bf16.msra.mxu0 %v3381
    %3405 = vmatprep.subr.bf16.mxu0 0
    %3406 = vmatpush1.bf16.msra.mxu0 %v3382
    %3407 = vmatprep.subr.bf16.mxu0 0
    %3408 = vmatpush1.bf16.msra.mxu0 0
    %3409 = vmatprep.subr.bf16.mxu0 0
    %3410 = vmatpush1.bf16.msra.mxu0 0
    %3411 = vmatprep.subr.bf16.mxu0 0
    %3412 = vmatpush1.bf16.msra.mxu0 0
    %3413 = vmatprep.subr.bf16.mxu0 0
    %3414 = vmatpush1.bf16.msra.mxu0 0
    %3415 = vmatprep.subr.bf16.mxu0 0
    %3416 = vmatpush1.bf16.msra.mxu0 0
    %3417 = vmatprep.subr.bf16.mxu0 0
    %3418 = vmatpush1.bf16.msra.mxu0 0
    %3419 = vmatprep.subr.bf16.mxu0 0
    %3420 = vmatpush1.bf16.msra.mxu0 0
    %3421 = vmatprep.subr.bf16.mxu0 0
    %3422 = vmatpush1.bf16.msra.mxu0 0
    %3423 = vmatprep.mubr.bf16.mxu0 0
    %3424 = vmatmul.mubr.bf16.gmra.mrb[0].mxu0 %v3319
    %v3425 = vpop.f32.mrb[0].mxu0
    %v3426 = vadd.f32 %v3341, %v3425
    %v3427 = vpop.f32.mrb[0].mxu0
    %v3428 = vpop.f32.mrb[0].mxu0
    %v3429 = vadd.f32 %v3341, %v3428
    %v3430 = vpop.f32.mrb[0].mxu0
    %3431 = vdwg.mxu0
    %v3432 = vadd.f32 %v3187, %v3426
    %v3433 = vadd.f32 %v3188, %v3429
    %3434 = vst.msk [vmem:[#allocation34] sm:$0xff] %vm390, %v3432
    %3435 = vst.msk [vmem:[#allocation34 + $0x8] sm:$0xff] %vm390, %v3433
    // Predicated region
    $region222: #{tpu_custom_call.1} parent=1 // pred_check
      _
    $region223: #{tpu_custom_call.1} parent=1 // pred_check_branch
      %3437 = sbr.rel (0) target = $region225
    $region224: #{tpu_custom_call.1} parent=1 // pred_region
      %s3439 = ssub.s32 256, 256
      %3440 = vsyncadd [#allocation4], %s3439
      %s3441 = sshll.u32 [#allocation34], 4
      %s3442 = int_to_ptr.vmem [resolvable:$true] %s3441
      %3447 = dma.vmem_to_hbm [thread:$0]  %s3442, 256, %s71, [#allocation4], 128, 128, 8
    $region225: #{tpu_custom_call.1} parent=1 // pred_fallthru
      _
    // Predicated region
    $region226: #{tpu_custom_call.1} parent=1 // pred_check
      _
    $region227: #{tpu_custom_call.1} parent=1 // pred_check_branch
      %3449 = sbr.rel (0) target = $region229
    $region228: #{tpu_custom_call.1} parent=1 // pred_region
      %3450 = dma.done [#allocation4], 256
    $region229: #{tpu_custom_call.1} parent=1 // pred_fallthru
      _
    %3451 = vsyncpa [#allocation3], 1
    %3452 = vsyncpa [#allocation6], 1
    %3453 = vsyncpa [#allocation9], 1
    %3454 = vsyncpa [#allocation12], 1
    %3455 = vsyncpa [#allocation15], 1
    %3456 = vsyncpa [#allocation18], 1
    %3457 = vsyncpa [#allocation21], 1
    %3458 = vsyncpa [#allocation24], 1
    %3459 = vsyncpa [#allocation27], 1
    %3460 = vsyncpa [#allocation30], 1
    %3461 = vsyncpa [#allocation33], 1
    %3462 = vsyncpa [#allocation4], 1

</llo_original>
